<compile_context>
chip_gen: v7x
topology: tpu7x:2x2x1
jax: 0.10.0
libtpu: 0.0.40
codegen_flags: <defaults>
</compile_context>

<pallas_src>
import functools

import jax
import jax.numpy as jnp
from jax.experimental import pallas as pl
from jax.experimental.pallas import tpu as pltpu


# ---------------------------------------------------------------------------
# Fused stride-1 KxK conv (+ in-kernel zero padding) + bias + shortcut + ReLU
# ---------------------------------------------------------------------------
def _make_conv_kernel(K, P, Hin, Win, Cin, Ho, Wo, Cout, relu, mode, Cin_sc):
    """mode: 'none' | 'identity' (residual add) | 'proj' (fused 1x1 shortcut)."""
    Ha, Wa = Hin + 2 * P, Win + 2 * P
    assert Ha - K + 1 == Ho and Wa - K + 1 == Wo
    n_extra = {"none": 0, "identity": 1, "proj": 3}[mode]

    def kernel(*refs):
        x_ref, w_ref, b_ref = refs[:3]
        extra = refs[3:3 + n_extra]
        o_ref = refs[3 + n_extra]
        scratch = refs[3 + n_extra + 1:]

        if P > 0:
            # In-kernel padding: zero a VMEM scratch, copy the interior.
            xpad_ref = scratch[0]
            xpad_ref[...] = jnp.zeros((Ha, Wa, Cin), xpad_ref.dtype)
            xpad_ref[pl.ds(P, Hin), pl.ds(P, Win), :] = x_ref[0]

            def read_slab(dh):                       # (Ho, Wa, Cin) contiguous
                return xpad_ref[pl.ds(dh, Ho), :, :]
        else:
            def read_slab(dh):
                return x_ref[0, pl.ds(dh, Ho), :, :]

        # One f32 accumulator per dw tap, kept at the full padded width so every
        # ref slice / reshape is contiguous (no compaction copies).  The dw
        # shift is applied once per tap on the accumulator at the end; the K-1
        # junk columns are simply dropped.
        accs = [jnp.zeros((Ho * Wa, Cout), jnp.float32) for _ in range(K)]
        for dh in range(K):
            slab2d = read_slab(dh).reshape(Ho * Wa, Cin)          # bf16 view
            for dw in range(K):
                accs[dw] = accs[dw] + jnp.dot(
                    slab2d, w_ref[dh, dw], preferred_element_type=jnp.float32)

        y = jnp.zeros((Ho, Wo, Cout), jnp.float32)
        for dw in range(K):
            y = y + accs[dw].reshape(Ho, Wa, Cout)[:, dw:dw + Wo, :]

        y = y + b_ref[...]                         # folded-BN bias (f32)

        if mode == "proj":                         # fused 1x1-conv shortcut
            xs_ref, wsc_ref, bsc_ref = extra
            sc = jnp.dot(xs_ref[0].reshape(Ho * Wo, Cin_sc), wsc_ref[...],
                         preferred_element_type=jnp.float32)
            y = y + sc.reshape(Ho, Wo, Cout) + bsc_ref[...]
        elif mode == "identity":
            y = y + extra[0][0].astype(jnp.float32)

        if relu:
            y = jnp.maximum(y, 0.0)
        o_ref[...] = y.reshape(1, Ho, Wo, Cout).astype(o_ref.dtype)

    return kernel


def conv_bn_act(x, w, b, *, padding, relu, shortcut=None, out_dtype=jnp.float32):
    """Stride-1 KxK conv + folded-BN bias + optional shortcut + optional ReLU.

    x: (N, Hin, Win, Cin) bf16
    w: (K, K, Cin, Cout) bf16 with BN scale already folded in
    b: (Cout,) f32 folded-BN bias
    shortcut: None | ('identity', res) | ('proj', xs, wsc, bsc)
    """
    N, Hin, Win, Cin = x.shape
    K, _, _, Cout = w.shape
    Ho = Hin + 2 * padding - K + 1
    Wo = Win + 2 * padding - K + 1

    mode = "none" if shortcut is None else shortcut[0]
    Cin_sc = None

    in_specs = [
        pl.BlockSpec((1, Hin, Win, Cin), lambda n: (n, 0, 0, 0)),
        pl.BlockSpec((K, K, Cin, Cout), lambda n: (0, 0, 0, 0)),
        pl.BlockSpec((1, Cout), lambda n: (0, 0)),
    ]
    args = [x, w, b.reshape(1, Cout)]

    if mode == "identity":
        res = shortcut[1]
        assert res.shape == (N, Ho, Wo, Cout), res.shape
        in_specs.append(pl.BlockSpec((1, Ho, Wo, Cout), lambda n: (n, 0, 0, 0)))
        args.append(res)
    elif mode == "proj":
        xs, wsc, bsc = shortcut[1:]
        Cin_sc = xs.shape[-1]
        assert xs.shape == (N, Ho, Wo, Cin_sc), xs.shape
        assert wsc.shape == (Cin_sc, Cout), wsc.shape
        in_specs += [
            pl.BlockSpec((1, Ho, Wo, Cin_sc), lambda n: (n, 0, 0, 0)),
            pl.BlockSpec((Cin_sc, Cout), lambda n: (0, 0)),
            pl.BlockSpec((1, Cout), lambda n: (0, 0)),
        ]
        args += [xs, wsc, bsc.reshape(1, Cout)]

    scratch_shapes = []
    if padding > 0:
        scratch_shapes.append(
            pltpu.VMEM((Hin + 2 * padding, Win + 2 * padding, Cin), x.dtype))

    kernel = _make_conv_kernel(K, padding, Hin, Win, Cin, Ho, Wo, Cout,
                               relu, mode, Cin_sc)

    return pl.pallas_call(
        kernel,
        out_shape=jax.ShapeDtypeStruct((N, Ho, Wo, Cout), out_dtype),
        grid=(N,),
        in_specs=in_specs,
        out_specs=pl.BlockSpec((1, Ho, Wo, Cout), lambda n: (n, 0, 0, 0)),
        scratch_shapes=scratch_shapes,
        compiler_params=pltpu.CompilerParams(dimension_semantics=("parallel",)),
    )(*args)


# ---------------------------------------------------------------------------
# Stride-s conv  ->  stride-1 conv via space-to-depth (wrapper, input-sized op)
# ---------------------------------------------------------------------------
def _space_to_depth(x, w, stride, padding):
    """Rewrite a stride-s KxK conv as a stride-1 ceil(K/s)xceil(K/s) conv over
    the s*s phase-decomposed input (channels concatenated).  Out-of-range taps
    get zero weights, so the result is exact and the kernel never computes the
    full stride-1 output."""
    s = stride
    N, H, W, Cin = x.shape
    K, _, _, Cout = w.shape
    Kp = -(-K // s)                                   # ceil(K/s)
    Ho = (H + 2 * padding - K) // s + 1
    Wo = (W + 2 * padding - K) // s + 1
    Ht, Wt = s * (Ho + Kp - 1), s * (Wo + Kp - 1)     # padded, multiple of s
    assert Ht >= H + padding and Wt >= W + padding
    xp = jnp.pad(x, ((0, 0), (padding, Ht - H - padding),
                     (padding, Wt - W - padding), (0, 0)))
    phases = [xp[:, ph::s, pw::s, :] for ph in range(s) for pw in range(s)]
    xe = jnp.concatenate(phases, axis=-1)             # (N, Ho+Kp-1, Wo+Kp-1, s*s*Cin)

    we = jnp.zeros((Kp, Kp, s * s * Cin, Cout), w.dtype)
    for ah in range(Kp):
        for aw in range(Kp):
            for ph in range(s):
                for pw in range(s):
                    dh, dw = s * ah + ph, s * aw + pw
                    if dh < K and dw < K:
                        blk = (ph * s + pw) * Cin
                        we = we.at[ah, aw, blk:blk + Cin, :].set(w[dh, dw])
    return xe, we


# ---------------------------------------------------------------------------
# Parameters (synthetic, deterministic) — mirrors BasicBlock.__init__ shapes
# ---------------------------------------------------------------------------
_BN_EPS = 1e-5


def _fold_bn(key, c):
    k1, k2, k3, k4 = jax.random.split(key, 4)
    gamma = 1.0 + 0.1 * jax.random.normal(k1, (c,), jnp.float32)
    beta = 0.1 * jax.random.normal(k2, (c,), jnp.float32)
    running_mean = 0.1 * jax.random.normal(k3, (c,), jnp.float32)
    running_var = jnp.abs(jax.random.normal(k4, (c,), jnp.float32)) + 0.5
    scale = gamma / jnp.sqrt(running_var + _BN_EPS)
    bias = beta - running_mean * scale
    return scale, bias


def init_basic_block_params(key, in_channels, out_channels, stride):
    ks = jax.random.split(key, 6)
    p = {}
    p["w1"] = 0.1 * jax.random.normal(ks[0], (3, 3, in_channels, out_channels), jnp.float32)
    p["s1"], p["b1"] = _fold_bn(ks[1], out_channels)
    p["w2"] = 0.1 * jax.random.normal(ks[2], (3, 3, out_channels, out_channels), jnp.float32)
    p["s2"], p["b2"] = _fold_bn(ks[3], out_channels)
    if stride != 1 or in_channels != out_channels:
        p["wsc"] = 0.1 * jax.random.normal(ks[4], (1, 1, in_channels, out_channels), jnp.float32)
        p["ssc"], p["bsc"] = _fold_bn(ks[5], out_channels)
    return p


# ---------------------------------------------------------------------------
# BasicBlock forward (Pallas) and pure-JAX reference
# ---------------------------------------------------------------------------
@functools.partial(jax.jit, static_argnames=("stride",))
def basic_block_forward(params, x_nchw, *, stride=1):
    x = jnp.transpose(x_nchw, (0, 2, 3, 1)).astype(jnp.bfloat16)   # NCHW -> NHWC, bf16

    # Fold BN scale into the conv weights (one-time, wrapper side).
    w1 = (params["w1"] * params["s1"]).astype(jnp.bfloat16)
    w2 = (params["w2"] * params["s2"]).astype(jnp.bfloat16)

    if stride == 1:
        out1 = conv_bn_act(x, w1, params["b1"], padding=1, relu=True,
                           out_dtype=jnp.bfloat16)
    else:
        xe, w1e = _space_to_depth(x, w1, stride, padding=1)
        out1 = conv_bn_act(xe, w1e, params["b1"], padding=0, relu=True,
                           out_dtype=jnp.bfloat16)

    if "wsc" in params:
        # 1x1 stride-s projection shortcut == matmul on the subsampled input;
        # fused into conv2's kernel (no HBM round trip for the shortcut map).
        xs = x[:, ::stride, ::stride, :]
        wsc = (params["wsc"][0, 0] * params["ssc"]).astype(jnp.bfloat16)
        shortcut = ("proj", xs, wsc, params["bsc"])
    else:
        shortcut = ("identity", x)

    out = conv_bn_act(out1, w2, params["b2"], padding=1, relu=True,
                      out_dtype=jnp.float32, shortcut=shortcut)
    return jnp.transpose(out, (0, 3, 1, 2))                        # NHWC -> NCHW


def _conv_ref(x, w, stride, padding):
    return jax.lax.conv_general_dilated(
        x, w, window_strides=(stride, stride),
        padding=((padding, padding), (padding, padding)),
        dimension_numbers=("NHWC", "HWIO", "NHWC"))


def basic_block_ref(params, x_nchw, *, stride=1):
    x = jnp.transpose(x_nchw, (0, 2, 3, 1))
    out1 = jnp.maximum(_conv_ref(x, params["w1"], stride, 1) * params["s1"] + params["b1"], 0.0)
    if "wsc" in params:
        sc = _conv_ref(x, params["wsc"], stride, 0) * params["ssc"] + params["bsc"]
    else:
        sc = x
    out2 = _conv_ref(out1, params["w2"], 1, 1) * params["s2"] + params["b2"]
    out = jnp.maximum(out2 + sc, 0.0)
    return jnp.transpose(out, (0, 3, 1, 2))


# ---------------------------------------------------------------------------
if __name__ == "__main__":
    key = jax.random.PRNGKey(0)
    kx, kp, kx2, kp2 = jax.random.split(key, 4)

    # Case 1: stride-2 block with 1x1 projection shortcut.
    N, Cin, H, W = 2, 4, 16, 16
    Cout, stride = 8, 2
    x_nchw = jax.random.normal(kx, (N, Cin, H, W), jnp.float32)
    params = init_basic_block_params(kp, Cin, Cout, stride)

    out = jax.block_until_ready(basic_block_forward(params, x_nchw, stride=stride))
    ref = basic_block_ref(params, x_nchw, stride=stride)
    assert out.shape == (N, Cout, H // stride, W // stride), out.shape
    # bf16 MXU inputs + folded BN scale => ~1e-2-level deltas vs the f32 reference.
    if not jnp.allclose(out, ref, rtol=3e-2, atol=3e-2):
        raise AssertionError("Pallas BasicBlock (stride=2) does not match reference, "
                             f"max abs err {float(jnp.max(jnp.abs(out - ref)))}")

    # Case 2: stride-1 block with identity shortcut.
    N2, C2, H2 = 2, 8, 8
    x2 = jax.random.normal(kx2, (N2, C2, H2, H2), jnp.float32)
    params2 = init_basic_block_params(kp2, C2, C2, 1)
    out2 = jax.block_until_ready(basic_block_forward(params2, x2, stride=1))
    ref2 = basic_block_ref(params2, x2, stride=1)
    assert out2.shape == (N2, C2, H2, H2), out2.shape
    if not jnp.allclose(out2, ref2, rtol=3e-2, atol=3e-2):
        raise AssertionError("Pallas BasicBlock (stride=1) does not match reference, "
                             f"max abs err {float(jnp.max(jnp.abs(out2 - ref2)))}")

    print("KERNEL_OK")
</pallas_src>

<mosaic_0001>
module attributes {stable_mosaic.version = 11 : i64} {
  func.func @kernel(%arg0: i32, %arg1: memref<1x9x9x16xbf16, #tpu.memory_space<vmem>>, %arg2: memref<2x2x16x8xbf16, #tpu.memory_space<vmem>>, %arg3: memref<1x8xf32, #tpu.memory_space<vmem>>, %arg4: memref<1x8x8x8xbf16, #tpu.memory_space<vmem>>) attributes {dimension_semantics = [#tpu.dimension_semantics<parallel>], iteration_bounds = array<i64: 2>, scalar_prefetch = 0 : i64, scratch_operands = 0 : i64, tpu.core_type = #tpu.core_type<tc>, window_params = [{transform_indices = @transform_0, window_bounds = array<i64: 1, 9, 9, 16>}, {pipeline_mode = #tpu.pipeline_mode<synchronous>, transform_indices = @transform_1, window_bounds = array<i64: 2, 2, 16, 8>}, {pipeline_mode = #tpu.pipeline_mode<synchronous>, transform_indices = @transform_2, window_bounds = array<i64: 1, 8>}, {transform_indices = @transform_3, window_bounds = array<i64: 1, 8, 8, 8>}]} {
    %cst = arith.constant 0.000000e+00 : f32
    %0 = vector.broadcast %cst : f32 to vector<72x8xf32>
    %cst_0 = arith.constant 0.000000e+00 : f32
    %1 = vector.broadcast %cst_0 : f32 to vector<72x8xf32>
    %c0 = arith.constant 0 : index
    %c0_1 = arith.constant 0 : index
    %c0_2 = arith.constant 0 : index
    %c0_3 = arith.constant 0 : index
    %2 = vector.load %arg1[%c0, %c0_1, %c0_2, %c0_3] : memref<1x9x9x16xbf16, #tpu.memory_space<vmem>>, vector<1x8x9x16xbf16>
    %3 = vector.shape_cast %2 : vector<1x8x9x16xbf16> to vector<8x9x16xbf16>
    %4 = vector.shape_cast %3 : vector<8x9x16xbf16> to vector<72x16xbf16>
    %c0_4 = arith.constant 0 : index
    %c0_5 = arith.constant 0 : index
    %c0_6 = arith.constant 0 : index
    %c0_7 = arith.constant 0 : index
    %5 = vector.load %arg2[%c0_4, %c0_5, %c0_6, %c0_7] : memref<2x2x16x8xbf16, #tpu.memory_space<vmem>>, vector<1x1x16x8xbf16>
    %6 = vector.shape_cast %5 : vector<1x1x16x8xbf16> to vector<16x8xbf16>
    %cst_8 = arith.constant dense<0.000000e+00> : vector<72x8xf32>
    %7 = tpu.matmul %4, %6, %cst_8 {dimension_numbers = #tpu.dot_dimension_numbers<[1], [0], [0], [1], [0, 0, 1, 1], [], []>} : vector<72x16xbf16>, vector<16x8xbf16>, vector<72x8xf32> -> vector<72x8xf32>
    %8 = arith.addf %0, %7 : vector<72x8xf32>
    %c0_9 = arith.constant 0 : index
    %c1 = arith.constant 1 : index
    %c0_10 = arith.constant 0 : index
    %c0_11 = arith.constant 0 : index
    %9 = vector.load %arg2[%c0_9, %c1, %c0_10, %c0_11] : memref<2x2x16x8xbf16, #tpu.memory_space<vmem>>, vector<1x1x16x8xbf16>
    %10 = vector.shape_cast %9 : vector<1x1x16x8xbf16> to vector<16x8xbf16>
    %cst_12 = arith.constant dense<0.000000e+00> : vector<72x8xf32>
    %11 = tpu.matmul %4, %10, %cst_12 {dimension_numbers = #tpu.dot_dimension_numbers<[1], [0], [0], [1], [0, 0, 1, 1], [], []>} : vector<72x16xbf16>, vector<16x8xbf16>, vector<72x8xf32> -> vector<72x8xf32>
    %12 = arith.addf %1, %11 : vector<72x8xf32>
    %c0_13 = arith.constant 0 : index
    %c1_14 = arith.constant 1 : index
    %c0_15 = arith.constant 0 : index
    %c0_16 = arith.constant 0 : index
    %13 = vector.load %arg1[%c0_13, %c1_14, %c0_15, %c0_16] : memref<1x9x9x16xbf16, #tpu.memory_space<vmem>>, vector<1x8x9x16xbf16>
    %14 = vector.shape_cast %13 : vector<1x8x9x16xbf16> to vector<8x9x16xbf16>
    %15 = vector.shape_cast %14 : vector<8x9x16xbf16> to vector<72x16xbf16>
    %c1_17 = arith.constant 1 : index
    %c0_18 = arith.constant 0 : index
    %c0_19 = arith.constant 0 : index
    %c0_20 = arith.constant 0 : index
    %16 = vector.load %arg2[%c1_17, %c0_18, %c0_19, %c0_20] : memref<2x2x16x8xbf16, #tpu.memory_space<vmem>>, vector<1x1x16x8xbf16>
    %17 = vector.shape_cast %16 : vector<1x1x16x8xbf16> to vector<16x8xbf16>
    %cst_21 = arith.constant dense<0.000000e+00> : vector<72x8xf32>
    %18 = tpu.matmul %15, %17, %cst_21 {dimension_numbers = #tpu.dot_dimension_numbers<[1], [0], [0], [1], [0, 0, 1, 1], [], []>} : vector<72x16xbf16>, vector<16x8xbf16>, vector<72x8xf32> -> vector<72x8xf32>
    %19 = arith.addf %8, %18 : vector<72x8xf32>
    %c1_22 = arith.constant 1 : index
    %c1_23 = arith.constant 1 : index
    %c0_24 = arith.constant 0 : index
    %c0_25 = arith.constant 0 : index
    %20 = vector.load %arg2[%c1_22, %c1_23, %c0_24, %c0_25] : memref<2x2x16x8xbf16, #tpu.memory_space<vmem>>, vector<1x1x16x8xbf16>
    %21 = vector.shape_cast %20 : vector<1x1x16x8xbf16> to vector<16x8xbf16>
    %cst_26 = arith.constant dense<0.000000e+00> : vector<72x8xf32>
    %22 = tpu.matmul %15, %21, %cst_26 {dimension_numbers = #tpu.dot_dimension_numbers<[1], [0], [0], [1], [0, 0, 1, 1], [], []>} : vector<72x16xbf16>, vector<16x8xbf16>, vector<72x8xf32> -> vector<72x8xf32>
    %23 = arith.addf %12, %22 : vector<72x8xf32>
    %cst_27 = arith.constant 0.000000e+00 : f32
    %24 = vector.broadcast %cst_27 : f32 to vector<8x8x8xf32>
    %25 = vector.shape_cast %19 : vector<72x8xf32> to vector<8x9x8xf32>
    %26 = vector.extract_strided_slice %25 {offsets = [0, 0, 0], sizes = [8, 8, 8], strides = [1, 1, 1]} : vector<8x9x8xf32> to vector<8x8x8xf32>
    %27 = arith.addf %24, %26 : vector<8x8x8xf32>
    %28 = vector.shape_cast %23 : vector<72x8xf32> to vector<8x9x8xf32>
    %29 = vector.extract_strided_slice %28 {offsets = [0, 1, 0], sizes = [8, 8, 8], strides = [1, 1, 1]} : vector<8x9x8xf32> to vector<8x8x8xf32>
    %30 = arith.addf %27, %29 : vector<8x8x8xf32>
    %c0_28 = arith.constant 0 : index
    %c0_29 = arith.constant 0 : index
    %31 = vector.load %arg3[%c0_28, %c0_29] : memref<1x8xf32, #tpu.memory_space<vmem>>, vector<1x8xf32>
    %32 = vector.shape_cast %31 : vector<1x8xf32> to vector<1x1x8xf32>
    %33 = vector.broadcast %32 : vector<1x1x8xf32> to vector<8x8x8xf32>
    %34 = arith.addf %30, %33 : vector<8x8x8xf32>
    %cst_30 = arith.constant 0.000000e+00 : f32
    %35 = vector.broadcast %cst_30 : f32 to vector<8x8x8xf32>
    %36 = arith.maximumf %34, %35 : vector<8x8x8xf32>
    %37 = vector.shape_cast %36 : vector<8x8x8xf32> to vector<1x8x8x8xf32>
    %38 = arith.truncf %37 : vector<1x8x8x8xf32> to vector<1x8x8x8xbf16>
    %c0_31 = arith.constant 0 : index
    %c0_32 = arith.constant 0 : index
    %c0_33 = arith.constant 0 : index
    %c0_34 = arith.constant 0 : index
    %39 = vector.load %arg4[%c0_31, %c0_32, %c0_33, %c0_34] : memref<1x8x8x8xbf16, #tpu.memory_space<vmem>>, vector<1x8x8x8xbf16>
    tpu.vector_store %arg4[%c0_31, %c0_32, %c0_33, %c0_34], %38 {strides = array<i32>} : memref<1x8x8x8xbf16, #tpu.memory_space<vmem>>, vector<1x8x8x8xbf16>,
    return
  }
  func.func @transform_0(%arg0: i32) -> (i32, i32, i32, i32) {
    %c0_i32 = arith.constant 0 : i32
    %c0_i32_0 = arith.constant 0 : i32
    %c0_i32_1 = arith.constant 0 : i32
    %c0_i32_2 = arith.constant 0 : i32
    return %arg0, %c0_i32, %c0_i32_0, %c0_i32_1 : i32, i32, i32, i32
  }
  func.func @transform_1(%arg0: i32) -> (i32, i32, i32, i32) {
    %c0_i32 = arith.constant 0 : i32
    %c0_i32_0 = arith.constant 0 : i32
    %c0_i32_1 = arith.constant 0 : i32
    %c0_i32_2 = arith.constant 0 : i32
    %c0_i32_3 = arith.constant 0 : i32
    return %c0_i32, %c0_i32_0, %c0_i32_1, %c0_i32_2 : i32, i32, i32, i32
  }
  func.func @transform_2(%arg0: i32) -> (i32, i32) {
    %c0_i32 = arith.constant 0 : i32
    %c0_i32_0 = arith.constant 0 : i32
    %c0_i32_1 = arith.constant 0 : i32
    return %c0_i32, %c0_i32_0 : i32, i32
  }
  func.func @transform_3(%arg0: i32) -> (i32, i32, i32, i32) {
    %c0_i32 = arith.constant 0 : i32
    %c0_i32_0 = arith.constant 0 : i32
    %c0_i32_1 = arith.constant 0 : i32
    %c0_i32_2 = arith.constant 0 : i32
    return %arg0, %c0_i32, %c0_i32_0, %c0_i32_1 : i32, i32, i32, i32
  }
}

module attributes {stable_mosaic.version = 11 : i64} {
  func.func @kernel(%arg0: i32, %arg1: memref<1x8x8x8xbf16, #tpu.memory_space<vmem>>, %arg2: memref<3x3x8x8xbf16, #tpu.memory_space<vmem>>, %arg3: memref<1x8xf32, #tpu.memory_space<vmem>>, %arg4: memref<1x8x8x4xbf16, #tpu.memory_space<vmem>>, %arg5: memref<4x8xbf16, #tpu.memory_space<vmem>>, %arg6: memref<1x8xf32, #tpu.memory_space<vmem>>, %arg7: memref<1x8x8x8xf32, #tpu.memory_space<vmem>>, %arg8: memref<10x10x8xbf16, #tpu.memory_space<vmem>>) attributes {dimension_semantics = [#tpu.dimension_semantics<parallel>], iteration_bounds = array<i64: 2>, scalar_prefetch = 0 : i64, scratch_operands = 1 : i64, tpu.core_type = #tpu.core_type<tc>, window_params = [{transform_indices = @transform_0, window_bounds = array<i64: 1, 8, 8, 8>}, {pipeline_mode = #tpu.pipeline_mode<synchronous>, transform_indices = @transform_1, window_bounds = array<i64: 3, 3, 8, 8>}, {pipeline_mode = #tpu.pipeline_mode<synchronous>, transform_indices = @transform_2, window_bounds = array<i64: 1, 8>}, {transform_indices = @transform_3, window_bounds = array<i64: 1, 8, 8, 4>}, {pipeline_mode = #tpu.pipeline_mode<synchronous>, transform_indices = @transform_4, window_bounds = array<i64: 4, 8>}, {pipeline_mode = #tpu.pipeline_mode<synchronous>, transform_indices = @transform_5, window_bounds = array<i64: 1, 8>}, {transform_indices = @transform_6, window_bounds = array<i64: 1, 8, 8, 8>}]} {
    %cst = arith.constant 0.000000e+00 : bf16
    %0 = vector.broadcast %cst : bf16 to vector<10x10x8xbf16>
    %c0 = arith.constant 0 : index
    %c0_0 = arith.constant 0 : index
    %c0_1 = arith.constant 0 : index
    %1 = vector.load %arg8[%c0, %c0_0, %c0_1] : memref<10x10x8xbf16, #tpu.memory_space<vmem>>, vector<10x10x8xbf16>
    tpu.vector_store %arg8[%c0, %c0_0, %c0_1], %0 {strides = array<i32>} : memref<10x10x8xbf16, #tpu.memory_space<vmem>>, vector<10x10x8xbf16>,
    %c0_2 = arith.constant 0 : index
    %c0_3 = arith.constant 0 : index
    %c0_4 = arith.constant 0 : index
    %c0_5 = arith.constant 0 : index
    %2 = vector.load %arg1[%c0_2, %c0_3, %c0_4, %c0_5] : memref<1x8x8x8xbf16, #tpu.memory_space<vmem>>, vector<1x8x8x8xbf16>
    %3 = vector.shape_cast %2 : vector<1x8x8x8xbf16> to vector<8x8x8xbf16>
    %c1 = arith.constant 1 : index
    %c1_6 = arith.constant 1 : index
    %c0_7 = arith.constant 0 : index
    %4 = vector.load %arg8[%c1, %c1_6, %c0_7] : memref<10x10x8xbf16, #tpu.memory_space<vmem>>, vector<8x8x8xbf16>
    tpu.vector_store %arg8[%c1, %c1_6, %c0_7], %3 {strides = array<i32>} : memref<10x10x8xbf16, #tpu.memory_space<vmem>>, vector<8x8x8xbf16>,
    %cst_8 = arith.constant 0.000000e+00 : f32
    %5 = vector.broadcast %cst_8 : f32 to vector<80x8xf32>
    %cst_9 = arith.constant 0.000000e+00 : f32
    %6 = vector.broadcast %cst_9 : f32 to vector<80x8xf32>
    %cst_10 = arith.constant 0.000000e+00 : f32
    %7 = vector.broadcast %cst_10 : f32 to vector<80x8xf32>
    %c0_11 = arith.constant 0 : index
    %c0_12 = arith.constant 0 : index
    %c0_13 = arith.constant 0 : index
    %8 = vector.load %arg8[%c0_11, %c0_12, %c0_13] : memref<10x10x8xbf16, #tpu.memory_space<vmem>>, vector<8x10x8xbf16>
    %9 = vector.shape_cast %8 : vector<8x10x8xbf16> to vector<80x8xbf16>
    %c0_14 = arith.constant 0 : index
    %c0_15 = arith.constant 0 : index
    %c0_16 = arith.constant 0 : index
    %c0_17 = arith.constant 0 : index
    %10 = vector.load %arg2[%c0_14, %c0_15, %c0_16, %c0_17] : memref<3x3x8x8xbf16, #tpu.memory_space<vmem>>, vector<1x1x8x8xbf16>
    %11 = vector.shape_cast %10 : vector<1x1x8x8xbf16> to vector<8x8xbf16>
    %cst_18 = arith.constant dense<0.000000e+00> : vector<80x8xf32>
    %12 = tpu.matmul %9, %11, %cst_18 {dimension_numbers = #tpu.dot_dimension_numbers<[1], [0], [0], [1], [0, 0, 1, 1], [], []>} : vector<80x8xbf16>, vector<8x8xbf16>, vector<80x8xf32> -> vector<80x8xf32>
    %13 = arith.addf %5, %12 : vector<80x8xf32>
    %c0_19 = arith.constant 0 : index
    %c1_20 = arith.constant 1 : index
    %c0_21 = arith.constant 0 : index
    %c0_22 = arith.constant 0 : index
    %14 = vector.load %arg2[%c0_19, %c1_20, %c0_21, %c0_22] : memref<3x3x8x8xbf16, #tpu.memory_space<vmem>>, vector<1x1x8x8xbf16>
    %15 = vector.shape_cast %14 : vector<1x1x8x8xbf16> to vector<8x8xbf16>
    %cst_23 = arith.constant dense<0.000000e+00> : vector<80x8xf32>
    %16 = tpu.matmul %9, %15, %cst_23 {dimension_numbers = #tpu.dot_dimension_numbers<[1], [0], [0], [1], [0, 0, 1, 1], [], []>} : vector<80x8xbf16>, vector<8x8xbf16>, vector<80x8xf32> -> vector<80x8xf32>
    %17 = arith.addf %6, %16 : vector<80x8xf32>
    %c0_24 = arith.constant 0 : index
    %c2 = arith.constant 2 : index
    %c0_25 = arith.constant 0 : index
    %c0_26 = arith.constant 0 : index
    %18 = vector.load %arg2[%c0_24, %c2, %c0_25, %c0_26] : memref<3x3x8x8xbf16, #tpu.memory_space<vmem>>, vector<1x1x8x8xbf16>
    %19 = vector.shape_cast %18 : vector<1x1x8x8xbf16> to vector<8x8xbf16>
    %cst_27 = arith.constant dense<0.000000e+00> : vector<80x8xf32>
    %20 = tpu.matmul %9, %19, %cst_27 {dimension_numbers = #tpu.dot_dimension_numbers<[1], [0], [0], [1], [0, 0, 1, 1], [], []>} : vector<80x8xbf16>, vector<8x8xbf16>, vector<80x8xf32> -> vector<80x8xf32>
    %21 = arith.addf %7, %20 : vector<80x8xf32>
    %c1_28 = arith.constant 1 : index
    %c0_29 = arith.constant 0 : index
    %c0_30 = arith.constant 0 : index
    %22 = vector.load %arg8[%c1_28, %c0_29, %c0_30] : memref<10x10x8xbf16, #tpu.memory_space<vmem>>, vector<8x10x8xbf16>
    %23 = vector.shape_cast %22 : vector<8x10x8xbf16> to vector<80x8xbf16>
    %c1_31 = arith.constant 1 : index
    %c0_32 = arith.constant 0 : index
    %c0_33 = arith.constant 0 : index
    %c0_34 = arith.constant 0 : index
    %24 = vector.load %arg2[%c1_31, %c0_32, %c0_33, %c0_34] : memref<3x3x8x8xbf16, #tpu.memory_space<vmem>>, vector<1x1x8x8xbf16>
    %25 = vector.shape_cast %24 : vector<1x1x8x8xbf16> to vector<8x8xbf16>
    %cst_35 = arith.constant dense<0.000000e+00> : vector<80x8xf32>
    %26 = tpu.matmul %23, %25, %cst_35 {dimension_numbers = #tpu.dot_dimension_numbers<[1], [0], [0], [1], [0, 0, 1, 1], [], []>} : vector<80x8xbf16>, vector<8x8xbf16>, vector<80x8xf32> -> vector<80x8xf32>
    %27 = arith.addf %13, %26 : vector<80x8xf32>
    %c1_36 = arith.constant 1 : index
    %c1_37 = arith.constant 1 : index
    %c0_38 = arith.constant 0 : index
    %c0_39 = arith.constant 0 : index
    %28 = vector.load %arg2[%c1_36, %c1_37, %c0_38, %c0_39] : memref<3x3x8x8xbf16, #tpu.memory_space<vmem>>, vector<1x1x8x8xbf16>
    %29 = vector.shape_cast %28 : vector<1x1x8x8xbf16> to vector<8x8xbf16>
    %cst_40 = arith.constant dense<0.000000e+00> : vector<80x8xf32>
    %30 = tpu.matmul %23, %29, %cst_40 {dimension_numbers = #tpu.dot_dimension_numbers<[1], [0], [0], [1], [0, 0, 1, 1], [], []>} : vector<80x8xbf16>, vector<8x8xbf16>, vector<80x8xf32> -> vector<80x8xf32>
    %31 = arith.addf %17, %30 : vector<80x8xf32>
    %c1_41 = arith.constant 1 : index
    %c2_42 = arith.constant 2 : index
    %c0_43 = arith.constant 0 : index
    %c0_44 = arith.constant 0 : index
    %32 = vector.load %arg2[%c1_41, %c2_42, %c0_43, %c0_44] : memref<3x3x8x8xbf16, #tpu.memory_space<vmem>>, vector<1x1x8x8xbf16>
    %33 = vector.shape_cast %32 : vector<1x1x8x8xbf16> to vector<8x8xbf16>
    %cst_45 = arith.constant dense<0.000000e+00> : vector<80x8xf32>
    %34 = tpu.matmul %23, %33, %cst_45 {dimension_numbers = #tpu.dot_dimension_numbers<[1], [0], [0], [1], [0, 0, 1, 1], [], []>} : vector<80x8xbf16>, vector<8x8xbf16>, vector<80x8xf32> -> vector<80x8xf32>
    %35 = arith.addf %21, %34 : vector<80x8xf32>
    %c2_46 = arith.constant 2 : index
    %c0_47 = arith.constant 0 : index
    %c0_48 = arith.constant 0 : index
    %36 = vector.load %arg8[%c2_46, %c0_47, %c0_48] : memref<10x10x8xbf16, #tpu.memory_space<vmem>>, vector<8x10x8xbf16>
    %37 = vector.shape_cast %36 : vector<8x10x8xbf16> to vector<80x8xbf16>
    %c2_49 = arith.constant 2 : index
    %c0_50 = arith.constant 0 : index
    %c0_51 = arith.constant 0 : index
    %c0_52 = arith.constant 0 : index
    %38 = vector.load %arg2[%c2_49, %c0_50, %c0_51, %c0_52] : memref<3x3x8x8xbf16, #tpu.memory_space<vmem>>, vector<1x1x8x8xbf16>
    %39 = vector.shape_cast %38 : vector<1x1x8x8xbf16> to vector<8x8xbf16>
    %cst_53 = arith.constant dense<0.000000e+00> : vector<80x8xf32>
    %40 = tpu.matmul %37, %39, %cst_53 {dimension_numbers = #tpu.dot_dimension_numbers<[1], [0], [0], [1], [0, 0, 1, 1], [], []>} : vector<80x8xbf16>, vector<8x8xbf16>, vector<80x8xf32> -> vector<80x8xf32>
    %41 = arith.addf %27, %40 : vector<80x8xf32>
    %c2_54 = arith.constant 2 : index
    %c1_55 = arith.constant 1 : index
    %c0_56 = arith.constant 0 : index
    %c0_57 = arith.constant 0 : index
    %42 = vector.load %arg2[%c2_54, %c1_55, %c0_56, %c0_57] : memref<3x3x8x8xbf16, #tpu.memory_space<vmem>>, vector<1x1x8x8xbf16>
    %43 = vector.shape_cast %42 : vector<1x1x8x8xbf16> to vector<8x8xbf16>
    %cst_58 = arith.constant dense<0.000000e+00> : vector<80x8xf32>
    %44 = tpu.matmul %37, %43, %cst_58 {dimension_numbers = #tpu.dot_dimension_numbers<[1], [0], [0], [1], [0, 0, 1, 1], [], []>} : vector<80x8xbf16>, vector<8x8xbf16>, vector<80x8xf32> -> vector<80x8xf32>
    %45 = arith.addf %31, %44 : vector<80x8xf32>
    %c2_59 = arith.constant 2 : index
    %c2_60 = arith.constant 2 : index
    %c0_61 = arith.constant 0 : index
    %c0_62 = arith.constant 0 : index
    %46 = vector.load %arg2[%c2_59, %c2_60, %c0_61, %c0_62] : memref<3x3x8x8xbf16, #tpu.memory_space<vmem>>, vector<1x1x8x8xbf16>
    %47 = vector.shape_cast %46 : vector<1x1x8x8xbf16> to vector<8x8xbf16>
    %cst_63 = arith.constant dense<0.000000e+00> : vector<80x8xf32>
    %48 = tpu.matmul %37, %47, %cst_63 {dimension_numbers = #tpu.dot_dimension_numbers<[1], [0], [0], [1], [0, 0, 1, 1], [], []>} : vector<80x8xbf16>, vector<8x8xbf16>, vector<80x8xf32> -> vector<80x8xf32>
    %49 = arith.addf %35, %48 : vector<80x8xf32>
    %cst_64 = arith.constant 0.000000e+00 : f32
    %50 = vector.broadcast %cst_64 : f32 to vector<8x8x8xf32>
    %51 = vector.shape_cast %41 : vector<80x8xf32> to vector<8x10x8xf32>
    %52 = vector.extract_strided_slice %51 {offsets = [0, 0, 0], sizes = [8, 8, 8], strides = [1, 1, 1]} : vector<8x10x8xf32> to vector<8x8x8xf32>
    %53 = arith.addf %50, %52 : vector<8x8x8xf32>
    %54 = vector.shape_cast %45 : vector<80x8xf32> to vector<8x10x8xf32>
    %55 = vector.extract_strided_slice %54 {offsets = [0, 1, 0], sizes = [8, 8, 8], strides = [1, 1, 1]} : vector<8x10x8xf32> to vector<8x8x8xf32>
    %56 = arith.addf %53, %55 : vector<8x8x8xf32>
    %57 = vector.shape_cast %49 : vector<80x8xf32> to vector<8x10x8xf32>
    %58 = vector.extract_strided_slice %57 {offsets = [0, 2, 0], sizes = [8, 8, 8], strides = [1, 1, 1]} : vector<8x10x8xf32> to vector<8x8x8xf32>
    %59 = arith.addf %56, %58 : vector<8x8x8xf32>
    %c0_65 = arith.constant 0 : index
    %c0_66 = arith.constant 0 : index
    %60 = vector.load %arg3[%c0_65, %c0_66] : memref<1x8xf32, #tpu.memory_space<vmem>>, vector<1x8xf32>
    %61 = vector.shape_cast %60 : vector<1x8xf32> to vector<1x1x8xf32>
    %62 = vector.broadcast %61 : vector<1x1x8xf32> to vector<8x8x8xf32>
    %63 = arith.addf %59, %62 : vector<8x8x8xf32>
    %c0_67 = arith.constant 0 : index
    %c0_68 = arith.constant 0 : index
    %c0_69 = arith.constant 0 : index
    %c0_70 = arith.constant 0 : index
    %64 = vector.load %arg4[%c0_67, %c0_68, %c0_69, %c0_70] : memref<1x8x8x4xbf16, #tpu.memory_space<vmem>>, vector<1x8x8x4xbf16>
    %65 = vector.shape_cast %64 : vector<1x8x8x4xbf16> to vector<8x8x4xbf16>
    %66 = vector.shape_cast %65 : vector<8x8x4xbf16> to vector<64x4xbf16>
    %c0_71 = arith.constant 0 : index
    %c0_72 = arith.constant 0 : index
    %67 = vector.load %arg5[%c0_71, %c0_72] : memref<4x8xbf16, #tpu.memory_space<vmem>>, vector<4x8xbf16>
    %cst_73 = arith.constant dense<0.000000e+00> : vector<64x8xf32>
    %68 = tpu.matmul %66, %67, %cst_73 {dimension_numbers = #tpu.dot_dimension_numbers<[1], [0], [0], [1], [0, 0, 1, 1], [], []>} : vector<64x4xbf16>, vector<4x8xbf16>, vector<64x8xf32> -> vector<64x8xf32>
    %69 = vector.shape_cast %68 : vector<64x8xf32> to vector<8x8x8xf32>
    %70 = arith.addf %63, %69 : vector<8x8x8xf32>
    %c0_74 = arith.constant 0 : index
    %c0_75 = arith.constant 0 : index
    %71 = vector.load %arg6[%c0_74, %c0_75] : memref<1x8xf32, #tpu.memory_space<vmem>>, vector<1x8xf32>
    %72 = vector.shape_cast %71 : vector<1x8xf32> to vector<1x1x8xf32>
    %73 = vector.broadcast %72 : vector<1x1x8xf32> to vector<8x8x8xf32>
    %74 = arith.addf %70, %73 : vector<8x8x8xf32>
    %cst_76 = arith.constant 0.000000e+00 : f32
    %75 = vector.broadcast %cst_76 : f32 to vector<8x8x8xf32>
    %76 = arith.maximumf %74, %75 : vector<8x8x8xf32>
    %77 = vector.shape_cast %76 : vector<8x8x8xf32> to vector<1x8x8x8xf32>
    %c0_77 = arith.constant 0 : index
    %c0_78 = arith.constant 0 : index
    %c0_79 = arith.constant 0 : index
    %c0_80 = arith.constant 0 : index
    %78 = vector.load %arg7[%c0_77, %c0_78, %c0_79, %c0_80] : memref<1x8x8x8xf32, #tpu.memory_space<vmem>>, vector<1x8x8x8xf32>
    tpu.vector_store %arg7[%c0_77, %c0_78, %c0_79, %c0_80], %77 {strides = array<i32>} : memref<1x8x8x8xf32, #tpu.memory_space<vmem>>, vector<1x8x8x8xf32>,
    return
  }
  func.func @transform_0(%arg0: i32) -> (i32, i32, i32, i32) {
    %c0_i32 = arith.constant 0 : i32
    %c0_i32_0 = arith.constant 0 : i32
    %c0_i32_1 = arith.constant 0 : i32
    %c0_i32_2 = arith.constant 0 : i32
    return %arg0, %c0_i32, %c0_i32_0, %c0_i32_1 : i32, i32, i32, i32
  }
  func.func @transform_1(%arg0: i32) -> (i32, i32, i32, i32) {
    %c0_i32 = arith.constant 0 : i32
    %c0_i32_0 = arith.constant 0 : i32
    %c0_i32_1 = arith.constant 0 : i32
    %c0_i32_2 = arith.constant 0 : i32
    %c0_i32_3 = arith.constant 0 : i32
    return %c0_i32, %c0_i32_0, %c0_i32_1, %c0_i32_2 : i32, i32, i32, i32
  }
  func.func @transform_2(%arg0: i32) -> (i32, i32) {
    %c0_i32 = arith.constant 0 : i32
    %c0_i32_0 = arith.constant 0 : i32
    %c0_i32_1 = arith.constant 0 : i32
    return %c0_i32, %c0_i32_0 : i32, i32
  }
  func.func @transform_3(%arg0: i32) -> (i32, i32, i32, i32) {
    %c0_i32 = arith.constant 0 : i32
    %c0_i32_0 = arith.constant 0 : i32
    %c0_i32_1 = arith.constant 0 : i32
    %c0_i32_2 = arith.constant 0 : i32
    return %arg0, %c0_i32, %c0_i32_0, %c0_i32_1 : i32, i32, i32, i32
  }
  func.func @transform_4(%arg0: i32) -> (i32, i32) {
    %c0_i32 = arith.constant 0 : i32
    %c0_i32_0 = arith.constant 0 : i32
    %c0_i32_1 = arith.constant 0 : i32
    return %c0_i32, %c0_i32_0 : i32, i32
  }
  func.func @transform_5(%arg0: i32) -> (i32, i32) {
    %c0_i32 = arith.constant 0 : i32
    %c0_i32_0 = arith.constant 0 : i32
    %c0_i32_1 = arith.constant 0 : i32
    return %c0_i32, %c0_i32_0 : i32, i32
  }
  func.func @transform_6(%arg0: i32) -> (i32, i32, i32, i32) {
    %c0_i32 = arith.constant 0 : i32
    %c0_i32_0 = arith.constant 0 : i32
    %c0_i32_1 = arith.constant 0 : i32
    %c0_i32_2 = arith.constant 0 : i32
    return %arg0, %c0_i32, %c0_i32_0, %c0_i32_1 : i32, i32, i32, i32
  }
}

</mosaic_0001>

<llo_original>
// kernel: basic_block_forward.2
$region0: #{basic_block_forward.2}
  #allocation0 [shape = 'u32[]', space=smem, size = 0x4, offset = 0x4, fixed_abs, tag = 'smem constant byte address 0x4 - core index']
  #allocation1 [shape = 'u32[144,128]{1,0:T(1,128)}', space=vmem, size = 0x12000, scoped, tag = 'internal scratch']
  %s0 = inlined_call_operand.vmem [shape: bf16[2,9,9,16], index: 0, kind: input, shape index: {}]
  %s1 = inlined_call_operand.vmem [shape: bf16[2,2,16,8], index: 1, kind: input, shape index: {}]
  %s2 = inlined_call_operand.vmem [shape: f32[1,8], index: 2, kind: input, shape index: {}]
  %s3 = inlined_call_operand.vmem [shape: bf16[2,8,8,8], index: 3, kind: output, shape index: {}]
  %s4 = sld [smem:[#allocation0]]
  $region45: #{basic_block_forward.2} parent=0
    _
  %s6 = ssub.s32 1, %s4
  %s7 = scalar_select 0, %s6, %s4
  loop: start=0, step=1, limit=4
  $region2: #{basic_block_forward.2} parent=0 // loop_pre_header
    _
  $region3: #{basic_block_forward.2} parent=0 // loop_header
    %s9 = sphi 0, %s13
    %p10 = scmp.ge.s32.totalorder %s9, 4
    %s19 = sphi 0, %s21
    %s22 = sphi 0, %s19
    %s23 = sphi 0, %s22
    %s39 = sphi 0, %s23
    %s43 = sphi 0, %s43
    %s45 = sphi 0, %s43
    %s46 = sphi 0, %s45
    %s60 = sphi 0, %s46
    %s64 = sphi 0, %s64
    %s66 = sphi 0, %s64
    %s67 = sphi 0, %s66
    %s81 = sphi 0, %s67
    %s87 = sphi 0, %s89
    %s90 = sphi 0, %s87
    %s91 = sphi 0, %s90
    %s107 = sphi 0, %s91
  $region4: #{basic_block_forward.2} parent=0 // loop_header_branch
    %12 = sbr.rel (%p10) target = $region8
  $region5: #{basic_block_forward.2} parent=0 // loop_body
    %s14 = ssub.s32 %s9, 1
    %s15 = ssub.s32 %s9, 2
    %s16 = sadd.s32 %s9, 1
    %s17 = ssub.s32 %s9, %s16
    %p18 = scmp.eq.s32.totalorder %s17, 0
    %s20 = sadd.s32 %s19, 1
    %s21 = scalar_select %p18, %s19, %s20
    %p24 = pneg %p18
    %p25 = scmp.eq.s32.totalorder %s9, 1
    %p26 = por %p24, %p25
    %p27 = scmp.ne.s32.totalorder %s19, %s22
    %p28 = scmp.eq.s32.totalorder %s9, 0
    %p29 = por %p27, %p28
    %p30 = scmp.ne.s32.totalorder %s19, %s22
    %p31 = scmp.eq.s32.totalorder %s14, 1
    %p32 = por %p30, %p31
    %p33 = scmp.ne.s32.totalorder %s22, %s23
    %p34 = scmp.eq.s32.totalorder %s14, 0
    %p35 = por %p33, %p34
    %p36 = scmp.ne.s32.totalorder %s22, %s23
    %p37 = scmp.eq.s32.totalorder %s15, 1
    %p38 = por %p36, %p37
    %p40 = scmp.ne.s32.totalorder %s23, %s39
    %p41 = scmp.eq.s32.totalorder %s15, 0
    %p42 = por %p40, %p41
    %s44 = sadd.s32 %s43, 1
    %p47 = scmp.eq.s32.totalorder %s9, 1
    %p48 = scmp.ne.s32.totalorder %s43, %s45
    %p49 = scmp.eq.s32.totalorder %s9, 0
    %p50 = por %p48, %p49
    %p51 = scmp.ne.s32.totalorder %s43, %s45
    %p52 = scmp.eq.s32.totalorder %s14, 1
    %p53 = por %p51, %p52
    %p54 = scmp.ne.s32.totalorder %s45, %s46
    %p55 = scmp.eq.s32.totalorder %s14, 0
    %p56 = por %p54, %p55
    %p57 = scmp.ne.s32.totalorder %s45, %s46
    %p58 = scmp.eq.s32.totalorder %s15, 1
    %p59 = por %p57, %p58
    %p61 = scmp.ne.s32.totalorder %s46, %s60
    %p62 = scmp.eq.s32.totalorder %s15, 0
    %p63 = por %p61, %p62
    %s65 = sadd.s32 %s64, 1
    %p68 = scmp.eq.s32.totalorder %s9, 1
    %p69 = scmp.ne.s32.totalorder %s64, %s66
    %p70 = scmp.eq.s32.totalorder %s9, 0
    %p71 = por %p69, %p70
    %p72 = scmp.ne.s32.totalorder %s64, %s66
    %p73 = scmp.eq.s32.totalorder %s14, 1
    %p74 = por %p72, %p73
    %p75 = scmp.ne.s32.totalorder %s66, %s67
    %p76 = scmp.eq.s32.totalorder %s14, 0
    %p77 = por %p75, %p76
    %p78 = scmp.ne.s32.totalorder %s66, %s67
    %p79 = scmp.eq.s32.totalorder %s15, 1
    %p80 = por %p78, %p79
    %p82 = scmp.ne.s32.totalorder %s67, %s81
    %p83 = scmp.eq.s32.totalorder %s15, 0
    %p84 = por %p82, %p83
    %s85 = ssub.s32 %s9, %s16
    %p86 = scmp.eq.s32.totalorder %s85, 0
    %s88 = sadd.s32 %s87, 1
    %s89 = scalar_select %p86, %s87, %s88
    %p92 = pneg %p86
    %p93 = scmp.eq.s32.totalorder %s9, 1
    %p94 = por %p92, %p93
    %p95 = scmp.ne.s32.totalorder %s87, %s90
    %p96 = scmp.eq.s32.totalorder %s9, 0
    %p97 = por %p95, %p96
    %p98 = scmp.ne.s32.totalorder %s87, %s90
    %p99 = scmp.eq.s32.totalorder %s14, 1
    %p100 = por %p98, %p99
    %p101 = scmp.ne.s32.totalorder %s90, %s91
    %p102 = scmp.eq.s32.totalorder %s14, 0
    %p103 = por %p101, %p102
    %p104 = scmp.ne.s32.totalorder %s90, %s91
    %p105 = scmp.eq.s32.totalorder %s15, 1
    %p106 = por %p104, %p105
    %p108 = scmp.ne.s32.totalorder %s91, %s107
    %p109 = scmp.eq.s32.totalorder %s15, 0
    %p110 = por %p108, %p109
    %p111 = scmp.le.s32.totalorder 1, %s9
    %p112 = scmp.lt.s32.totalorder %s9, 3
    %p113 = pnand %p111, %p112
    %p114 = pneg %p113
    // Predicated region
    $region9: #{basic_block_forward.2} parent=5 // pred_check
      _
    $region10: #{basic_block_forward.2} parent=5 // pred_check_branch
      %116 = sbr.rel (%p113) target = $region12
    $region11: #{basic_block_forward.2} parent=5 // pred_region
      %s117 = ssub.s32 %s9, 1
      // Predicated region
      $region13: #{basic_block_forward.2} parent=11 // pred_check
        %p118 = pneg %p56
      $region14: #{basic_block_forward.2} parent=11 // pred_check_branch
        %120 = sbr.rel (%p118) target = $region16
      $region15: #{basic_block_forward.2} parent=11 // pred_region
        _
      $region16: #{basic_block_forward.2} parent=11 // pred_fallthru
        _
      // Predicated region
      $region17: #{basic_block_forward.2} parent=11 // pred_check
        %p121 = pneg %p77
      $region18: #{basic_block_forward.2} parent=11 // pred_check_branch
        %123 = sbr.rel (%p121) target = $region20
      $region19: #{basic_block_forward.2} parent=11 // pred_region
        _
      $region20: #{basic_block_forward.2} parent=11 // pred_fallthru
        _
    $region12: #{basic_block_forward.2} parent=5 // pred_fallthru
      _
    %p124 = scmp.lt.s32.totalorder %s9, 2
    // Predicated region
    $region21: #{basic_block_forward.2} parent=5 // pred_check
      %p125 = pneg %p124
    $region22: #{basic_block_forward.2} parent=5 // pred_check_branch
      %127 = sbr.rel (%p125) target = $region24
    $region23: #{basic_block_forward.2} parent=5 // pred_region
      // Predicated region
      $region25: #{basic_block_forward.2} parent=23 // pred_check
        %p128 = pneg %p29
      $region26: #{basic_block_forward.2} parent=23 // pred_check_branch
        %130 = sbr.rel (%p128) target = $region28
      $region27: #{basic_block_forward.2} parent=23 // pred_region
        %p131 = scmp.lt.s32.totalorder %s9, 1
        %s132 = scalar_select %p131, %s9, 1
        %s133 = smul.addr %s132, 18
        %s134 = smul.addr %s133, 4
        %s135 = scalar_lea.vmem %s0, %s134
      $region28: #{basic_block_forward.2} parent=23 // pred_fallthru
        _
    $region24: #{basic_block_forward.2} parent=5 // pred_fallthru
      _
    %p136 = scmp.le.s32.totalorder 1, %s9
    %p137 = scmp.lt.s32.totalorder %s9, 3
    %p138 = pnand %p136, %p137
    %p139 = pneg %p138
    // Predicated region
    $region29: #{basic_block_forward.2} parent=5 // pred_check
      _
    $region30: #{basic_block_forward.2} parent=5 // pred_check_branch
      %141 = sbr.rel (%p138) target = $region32
    $region31: #{basic_block_forward.2} parent=5 // pred_region
      %s142 = ssub.s32 %s9, 1
      %p143 = scmp.lt.s32.totalorder %s14, 1
      %s144 = scalar_select %p143, %s14, 1
      %s145 = smul.addr %s144, 18
      %s146 = smul.addr %s145, 4
      %s147 = scalar_lea.vmem %s0, %s146
      %p148 = pneg %p35
      %p149 = pneg %p32
      %p150 = pneg %p56
      %p151 = pneg %p53
      %p152 = pneg %p77
      %p153 = pneg %p74
      %p154 = pneg %p103
      %p155 = pneg %p100
      %p156 = scmp.lt.s32.totalorder %s14, 1
      %s157 = scalar_select %p156, %s14, 1
      %s158 = smul.addr %s157, 8
      %s159 = smul.addr %s158, 4
      %s160 = scalar_lea.vmem %s3, %s159
      %p161 = scmp.lt.s32.totalorder %s14, 1
      %s162 = scalar_select %p161, %s14, 1
      %s163 = smul.addr %s162, 18
      %s164 = smul.addr %s163, 4
      %s165 = scalar_lea.vmem %s0, %s164
      %p166 = scmp.lt.s32.totalorder %s14, 1
      %s167 = scalar_select %p166, %s14, 1
      %s168 = smul.addr %s167, 8
      %s169 = smul.addr %s168, 4
      %s170 = scalar_lea.vmem %s3, %s169
      %v172 = vld [vmem:[%s165] sm:$0xf]
      %v173 = vld [vmem:[%s165 + $0x4] sm:$0x1]
      %v174 = vld [vmem:[%s165 + $0x8] sm:$0xf]
      %v175 = vld [vmem:[%s165 + $0xc] sm:$0x1]
      %v176 = vld [vmem:[%s165 + $0x10] sm:$0xf]
      %v177 = vld [vmem:[%s165 + $0x14] sm:$0x1]
      %v178 = vld [vmem:[%s165 + $0x18] sm:$0xf]
      %v179 = vld [vmem:[%s165 + $0x1c] sm:$0x1]
      %v180 = vld [vmem:[%s165 + $0x20] sm:$0xf]
      %v181 = vld [vmem:[%s165 + $0x24] sm:$0x1]
      %v182 = vld [vmem:[%s165 + $0x28] sm:$0xf]
      %v183 = vld [vmem:[%s165 + $0x2c] sm:$0x1]
      %v184 = vld [vmem:[%s165 + $0x30] sm:$0xf]
      %v185 = vld [vmem:[%s165 + $0x34] sm:$0x1]
      %v186 = vld [vmem:[%s165 + $0x38] sm:$0xf]
      %v187 = vld [vmem:[%s165 + $0x3c] sm:$0x1]
      %v205 = vunpack.c.l.s4 1966171168
      %v206 = vunpack.c.0.s8 %v205
      %v207 = vlaneseq
      %v208 = vshrl.u32 %v207, 7
      %v209 = vsub.s32 %v206, %v208
      %v210 = vrot.slane %v172, %v209
      %v211 = vcombine.high %v210, %v210
      %v213 = vunpack.c.l.s4 1966171168
      %v214 = vunpack.c.0.s8 %v213
      %v215 = vlaneseq
      %v216 = vshrl.u32 %v215, 7
      %v217 = vsub.s32 %v214, %v216
      %v218 = vrot.slane %v210, %v217
      %v220 = vunpack.c.l.s4 1966171168
      %v221 = vunpack.c.0.s8 %v220
      %v222 = vlaneseq
      %v223 = vshrl.u32 %v222, 7
      %v224 = vsub.s32 %v221, %v223
      %v225 = vrot.slane %v211, %v224
      %v226 = vcombine.high %v218, %v218
      %v227 = vcombine.high %v225, %v225
      %v229 = vunpack.c.l.s4 1966171168
      %v230 = vunpack.c.0.s8 %v229
      %v231 = vlaneseq
      %v232 = vshrl.u32 %v231, 7
      %v233 = vsub.s32 %v230, %v232
      %v234 = vrot.slane %v173, %v233
      %v236 = vunpack.c.l.s4 1966171168
      %v237 = vunpack.c.0.s8 %v236
      %v238 = vlaneseq
      %v239 = vshrl.u32 %v238, 7
      %v240 = vsub.s32 %v237, %v239
      %v241 = vrot.slane %v234, %v240
      %v243 = vunpack.c.l.s4 1966171168
      %v244 = vunpack.c.0.s8 %v243
      %v245 = vlaneseq
      %v246 = vshrl.u32 %v245, 7
      %v247 = vsub.s32 %v244, %v246
      %v248 = vrot.slane %v174, %v247
      %v249 = vcombine.high %v248, %v248
      %v251 = vunpack.c.l.s4 1966171168
      %v252 = vunpack.c.0.s8 %v251
      %v253 = vlaneseq
      %v254 = vshrl.u32 %v253, 7
      %v255 = vsub.s32 %v252, %v254
      %v256 = vrot.slane %v248, %v255
      %v258 = vunpack.c.l.s4 1966171168
      %v259 = vunpack.c.0.s8 %v258
      %v260 = vlaneseq
      %v261 = vshrl.u32 %v260, 7
      %v262 = vsub.s32 %v259, %v261
      %v263 = vrot.slane %v249, %v262
      %v264 = vcombine.high %v256, %v256
      %v265 = vcombine.high %v263, %v263
      %v267 = vunpack.c.l.s4 1966171168
      %v268 = vunpack.c.0.s8 %v267
      %v269 = vlaneseq
      %v270 = vshrl.u32 %v269, 7
      %v271 = vsub.s32 %v268, %v270
      %v272 = vrot.slane %v175, %v271
      %v274 = vunpack.c.l.s4 1966171168
      %v275 = vunpack.c.0.s8 %v274
      %v276 = vlaneseq
      %v277 = vshrl.u32 %v276, 7
      %v278 = vsub.s32 %v275, %v277
      %v279 = vrot.slane %v272, %v278
      %v281 = vunpack.c.l.s4 1966171168
      %v282 = vunpack.c.0.s8 %v281
      %v283 = vlaneseq
      %v284 = vshrl.u32 %v283, 7
      %v285 = vsub.s32 %v282, %v284
      %v286 = vrot.slane %v176, %v285
      %v287 = vcombine.high %v286, %v286
      %v289 = vunpack.c.l.s4 1966171168
      %v290 = vunpack.c.0.s8 %v289
      %v291 = vlaneseq
      %v292 = vshrl.u32 %v291, 7
      %v293 = vsub.s32 %v290, %v292
      %v294 = vrot.slane %v286, %v293
      %v296 = vunpack.c.l.s4 1966171168
      %v297 = vunpack.c.0.s8 %v296
      %v298 = vlaneseq
      %v299 = vshrl.u32 %v298, 7
      %v300 = vsub.s32 %v297, %v299
      %v301 = vrot.slane %v287, %v300
      %v302 = vcombine.high %v294, %v294
      %v303 = vcombine.high %v301, %v301
      %v305 = vunpack.c.l.s4 1966171168
      %v306 = vunpack.c.0.s8 %v305
      %v307 = vlaneseq
      %v308 = vshrl.u32 %v307, 7
      %v309 = vsub.s32 %v306, %v308
      %v310 = vrot.slane %v177, %v309
      %v312 = vunpack.c.l.s4 1966171168
      %v313 = vunpack.c.0.s8 %v312
      %v314 = vlaneseq
      %v315 = vshrl.u32 %v314, 7
      %v316 = vsub.s32 %v313, %v315
      %v317 = vrot.slane %v310, %v316
      %v319 = vunpack.c.l.s4 1966171168
      %v320 = vunpack.c.0.s8 %v319
      %v321 = vlaneseq
      %v322 = vshrl.u32 %v321, 7
      %v323 = vsub.s32 %v320, %v322
      %v324 = vrot.slane %v178, %v323
      %v325 = vcombine.high %v324, %v324
      %v327 = vunpack.c.l.s4 1966171168
      %v328 = vunpack.c.0.s8 %v327
      %v329 = vlaneseq
      %v330 = vshrl.u32 %v329, 7
      %v331 = vsub.s32 %v328, %v330
      %v332 = vrot.slane %v324, %v331
      %v334 = vunpack.c.l.s4 1966171168
      %v335 = vunpack.c.0.s8 %v334
      %v336 = vlaneseq
      %v337 = vshrl.u32 %v336, 7
      %v338 = vsub.s32 %v335, %v337
      %v339 = vrot.slane %v325, %v338
      %v340 = vcombine.high %v332, %v332
      %v341 = vcombine.high %v339, %v339
      %v343 = vunpack.c.l.s4 1966171168
      %v344 = vunpack.c.0.s8 %v343
      %v345 = vlaneseq
      %v346 = vshrl.u32 %v345, 7
      %v347 = vsub.s32 %v344, %v346
      %v348 = vrot.slane %v179, %v347
      %v350 = vunpack.c.l.s4 1966171168
      %v351 = vunpack.c.0.s8 %v350
      %v352 = vlaneseq
      %v353 = vshrl.u32 %v352, 7
      %v354 = vsub.s32 %v351, %v353
      %v355 = vrot.slane %v348, %v354
      %v357 = vunpack.c.l.s4 1966171168
      %v358 = vunpack.c.0.s8 %v357
      %v359 = vlaneseq
      %v360 = vshrl.u32 %v359, 7
      %v361 = vsub.s32 %v358, %v360
      %v362 = vrot.slane %v180, %v361
      %v363 = vcombine.high %v362, %v362
      %v365 = vunpack.c.l.s4 1966171168
      %v366 = vunpack.c.0.s8 %v365
      %v367 = vlaneseq
      %v368 = vshrl.u32 %v367, 7
      %v369 = vsub.s32 %v366, %v368
      %v370 = vrot.slane %v362, %v369
      %v372 = vunpack.c.l.s4 1966171168
      %v373 = vunpack.c.0.s8 %v372
      %v374 = vlaneseq
      %v375 = vshrl.u32 %v374, 7
      %v376 = vsub.s32 %v373, %v375
      %v377 = vrot.slane %v363, %v376
      %v378 = vcombine.high %v370, %v370
      %v379 = vcombine.high %v377, %v377
      %v381 = vunpack.c.l.s4 1966171168
      %v382 = vunpack.c.0.s8 %v381
      %v383 = vlaneseq
      %v384 = vshrl.u32 %v383, 7
      %v385 = vsub.s32 %v382, %v384
      %v386 = vrot.slane %v181, %v385
      %v388 = vunpack.c.l.s4 1966171168
      %v389 = vunpack.c.0.s8 %v388
      %v390 = vlaneseq
      %v391 = vshrl.u32 %v390, 7
      %v392 = vsub.s32 %v389, %v391
      %v393 = vrot.slane %v386, %v392
      %v395 = vunpack.c.l.s4 1966171168
      %v396 = vunpack.c.0.s8 %v395
      %v397 = vlaneseq
      %v398 = vshrl.u32 %v397, 7
      %v399 = vsub.s32 %v396, %v398
      %v400 = vrot.slane %v182, %v399
      %v401 = vcombine.high %v400, %v400
      %v403 = vunpack.c.l.s4 1966171168
      %v404 = vunpack.c.0.s8 %v403
      %v405 = vlaneseq
      %v406 = vshrl.u32 %v405, 7
      %v407 = vsub.s32 %v404, %v406
      %v408 = vrot.slane %v400, %v407
      %v410 = vunpack.c.l.s4 1966171168
      %v411 = vunpack.c.0.s8 %v410
      %v412 = vlaneseq
      %v413 = vshrl.u32 %v412, 7
      %v414 = vsub.s32 %v411, %v413
      %v415 = vrot.slane %v401, %v414
      %v416 = vcombine.high %v408, %v408
      %v417 = vcombine.high %v415, %v415
      %v419 = vunpack.c.l.s4 1966171168
      %v420 = vunpack.c.0.s8 %v419
      %v421 = vlaneseq
      %v422 = vshrl.u32 %v421, 7
      %v423 = vsub.s32 %v420, %v422
      %v424 = vrot.slane %v183, %v423
      %v426 = vunpack.c.l.s4 1966171168
      %v427 = vunpack.c.0.s8 %v426
      %v428 = vlaneseq
      %v429 = vshrl.u32 %v428, 7
      %v430 = vsub.s32 %v427, %v429
      %v431 = vrot.slane %v424, %v430
      %v433 = vunpack.c.l.s4 1966171168
      %v434 = vunpack.c.0.s8 %v433
      %v435 = vlaneseq
      %v436 = vshrl.u32 %v435, 7
      %v437 = vsub.s32 %v434, %v436
      %v438 = vrot.slane %v184, %v437
      %v439 = vcombine.high %v438, %v438
      %v441 = vunpack.c.l.s4 1966171168
      %v442 = vunpack.c.0.s8 %v441
      %v443 = vlaneseq
      %v444 = vshrl.u32 %v443, 7
      %v445 = vsub.s32 %v442, %v444
      %v446 = vrot.slane %v438, %v445
      %v448 = vunpack.c.l.s4 1966171168
      %v449 = vunpack.c.0.s8 %v448
      %v450 = vlaneseq
      %v451 = vshrl.u32 %v450, 7
      %v452 = vsub.s32 %v449, %v451
      %v453 = vrot.slane %v439, %v452
      %v454 = vcombine.high %v446, %v446
      %v455 = vcombine.high %v453, %v453
      %v457 = vunpack.c.l.s4 1966171168
      %v458 = vunpack.c.0.s8 %v457
      %v459 = vlaneseq
      %v460 = vshrl.u32 %v459, 7
      %v461 = vsub.s32 %v458, %v460
      %v462 = vrot.slane %v185, %v461
      %v464 = vunpack.c.l.s4 1966171168
      %v465 = vunpack.c.0.s8 %v464
      %v466 = vlaneseq
      %v467 = vshrl.u32 %v466, 7
      %v468 = vsub.s32 %v465, %v467
      %v469 = vrot.slane %v462, %v468
      %v471 = vunpack.c.l.s4 1966171168
      %v472 = vunpack.c.0.s8 %v471
      %v473 = vlaneseq
      %v474 = vshrl.u32 %v473, 7
      %v475 = vsub.s32 %v472, %v474
      %v476 = vrot.slane %v186, %v475
      %v477 = vcombine.high %v476, %v476
      %v479 = vunpack.c.l.s4 1966171168
      %v480 = vunpack.c.0.s8 %v479
      %v481 = vlaneseq
      %v482 = vshrl.u32 %v481, 7
      %v483 = vsub.s32 %v480, %v482
      %v484 = vrot.slane %v476, %v483
      %v486 = vunpack.c.l.s4 1966171168
      %v487 = vunpack.c.0.s8 %v486
      %v488 = vlaneseq
      %v489 = vshrl.u32 %v488, 7
      %v490 = vsub.s32 %v487, %v489
      %v491 = vrot.slane %v477, %v490
      %v492 = vcombine.high %v484, %v484
      %v493 = vcombine.high %v491, %v491
      %v495 = vunpack.c.l.s4 1966171168
      %v496 = vunpack.c.0.s8 %v495
      %v497 = vlaneseq
      %v498 = vshrl.u32 %v497, 7
      %v499 = vsub.s32 %v496, %v498
      %v500 = vrot.slane %v187, %v499
      %v502 = vunpack.c.l.s4 1966171168
      %v503 = vunpack.c.0.s8 %v502
      %v504 = vlaneseq
      %v505 = vshrl.u32 %v504, 7
      %v506 = vsub.s32 %v503, %v505
      %v507 = vrot.slane %v500, %v506
      %v508 = vunpack.i.l.s16 %v218
      %v509 = vunpack.i.h.s16 %v218
      %v510 = vunpack.i.l.s16 %v225
      %v511 = vunpack.i.h.s16 %v225
      %v512 = vunpack.i.l.s16 %v226
      %v513 = vunpack.i.h.s16 %v226
      %v514 = vunpack.i.l.s16 %v227
      %v515 = vunpack.i.h.s16 %v227
      %v516 = vunpack.i.l.s16 %v241
      %v517 = vunpack.i.l.s16 %v256
      %v518 = vunpack.i.h.s16 %v256
      %v519 = vunpack.i.l.s16 %v263
      %v520 = vunpack.i.h.s16 %v263
      %v521 = vunpack.i.l.s16 %v264
      %v522 = vunpack.i.h.s16 %v264
      %v523 = vunpack.i.l.s16 %v265
      %v524 = vunpack.i.h.s16 %v265
      %v525 = vunpack.i.l.s16 %v279
      %v526 = vunpack.i.l.s16 %v294
      %v527 = vunpack.i.h.s16 %v294
      %v528 = vunpack.i.l.s16 %v301
      %v529 = vunpack.i.h.s16 %v301
      %v530 = vunpack.i.l.s16 %v302
      %v531 = vunpack.i.h.s16 %v302
      %v532 = vunpack.i.l.s16 %v303
      %v533 = vunpack.i.h.s16 %v303
      %v534 = vunpack.i.l.s16 %v317
      %v535 = vunpack.i.l.s16 %v332
      %v536 = vunpack.i.h.s16 %v332
      %v537 = vunpack.i.l.s16 %v339
      %v538 = vunpack.i.h.s16 %v339
      %v539 = vunpack.i.l.s16 %v340
      %v540 = vunpack.i.h.s16 %v340
      %v541 = vunpack.i.l.s16 %v341
      %v542 = vunpack.i.h.s16 %v341
      %v543 = vunpack.i.l.s16 %v355
      %v544 = vunpack.i.l.s16 %v370
      %v545 = vunpack.i.h.s16 %v370
      %v546 = vunpack.i.l.s16 %v377
      %v547 = vunpack.i.h.s16 %v377
      %v548 = vunpack.i.l.s16 %v378
      %v549 = vunpack.i.h.s16 %v378
      %v550 = vunpack.i.l.s16 %v379
      %v551 = vunpack.i.h.s16 %v379
      %v552 = vunpack.i.l.s16 %v393
      %v553 = vunpack.i.l.s16 %v408
      %v554 = vunpack.i.h.s16 %v408
      %v555 = vunpack.i.l.s16 %v415
      %v556 = vunpack.i.h.s16 %v415
      %v557 = vunpack.i.l.s16 %v416
      %v558 = vunpack.i.h.s16 %v416
      %v559 = vunpack.i.l.s16 %v417
      %v560 = vunpack.i.h.s16 %v417
      %v561 = vunpack.i.l.s16 %v431
      %v562 = vunpack.i.l.s16 %v446
      %v563 = vunpack.i.h.s16 %v446
      %v564 = vunpack.i.l.s16 %v453
      %v565 = vunpack.i.h.s16 %v453
      %v566 = vunpack.i.l.s16 %v454
      %v567 = vunpack.i.h.s16 %v454
      %v568 = vunpack.i.l.s16 %v455
      %v569 = vunpack.i.h.s16 %v455
      %v570 = vunpack.i.l.s16 %v469
      %v571 = vunpack.i.l.s16 %v484
      %v572 = vunpack.i.h.s16 %v484
      %v573 = vunpack.i.l.s16 %v491
      %v574 = vunpack.i.h.s16 %v491
      %v575 = vunpack.i.l.s16 %v492
      %v576 = vunpack.i.h.s16 %v492
      %v577 = vunpack.i.l.s16 %v493
      %v578 = vunpack.i.h.s16 %v493
      %v579 = vunpack.i.l.s16 %v507
      %v580 = vld [vmem:[%s1] sm:$0xf]
      %v581 = vld [vmem:[%s1 + $0x4] sm:$0xf]
      %s582 = scalar_lea.vmem %s1, 8
      %v583 = vld [vmem:[%s582] sm:$0xf]
      %v584 = vld [vmem:[%s582 + $0x4] sm:$0xf]
      %s585 = scalar_lea.vmem %s165, 8
      %v586 = vld [vmem:[%s585] sm:$0xf]
      %v587 = vld [vmem:[%s585 + $0x4] sm:$0x1]
      %v588 = vld [vmem:[%s585 + $0x8] sm:$0xf]
      %v589 = vld [vmem:[%s585 + $0xc] sm:$0x1]
      %v590 = vld [vmem:[%s585 + $0x10] sm:$0xf]
      %v591 = vld [vmem:[%s585 + $0x14] sm:$0x1]
      %v592 = vld [vmem:[%s585 + $0x18] sm:$0xf]
      %v593 = vld [vmem:[%s585 + $0x1c] sm:$0x1]
      %v594 = vld [vmem:[%s585 + $0x20] sm:$0xf]
      %v595 = vld [vmem:[%s585 + $0x24] sm:$0x1]
      %v596 = vld [vmem:[%s585 + $0x28] sm:$0xf]
      %v597 = vld [vmem:[%s585 + $0x2c] sm:$0x1]
      %v598 = vld [vmem:[%s585 + $0x30] sm:$0xf]
      %v599 = vld [vmem:[%s585 + $0x34] sm:$0x1]
      %v600 = vld [vmem:[%s585 + $0x38] sm:$0xf]
      %v601 = vld [vmem:[%s585 + $0x3c] sm:$0x1]
      %v619 = vunpack.c.l.s4 1966171168
      %v620 = vunpack.c.0.s8 %v619
      %v621 = vlaneseq
      %v622 = vshrl.u32 %v621, 7
      %v623 = vsub.s32 %v620, %v622
      %v624 = vrot.slane %v586, %v623
      %v625 = vcombine.high %v624, %v624
      %v627 = vunpack.c.l.s4 1966171168
      %v628 = vunpack.c.0.s8 %v627
      %v629 = vlaneseq
      %v630 = vshrl.u32 %v629, 7
      %v631 = vsub.s32 %v628, %v630
      %v632 = vrot.slane %v624, %v631
      %v634 = vunpack.c.l.s4 1966171168
      %v635 = vunpack.c.0.s8 %v634
      %v636 = vlaneseq
      %v637 = vshrl.u32 %v636, 7
      %v638 = vsub.s32 %v635, %v637
      %v639 = vrot.slane %v625, %v638
      %v640 = vcombine.high %v632, %v632
      %v641 = vcombine.high %v639, %v639
      %v643 = vunpack.c.l.s4 1966171168
      %v644 = vunpack.c.0.s8 %v643
      %v645 = vlaneseq
      %v646 = vshrl.u32 %v645, 7
      %v647 = vsub.s32 %v644, %v646
      %v648 = vrot.slane %v587, %v647
      %v650 = vunpack.c.l.s4 1966171168
      %v651 = vunpack.c.0.s8 %v650
      %v652 = vlaneseq
      %v653 = vshrl.u32 %v652, 7
      %v654 = vsub.s32 %v651, %v653
      %v655 = vrot.slane %v648, %v654
      %v657 = vunpack.c.l.s4 1966171168
      %v658 = vunpack.c.0.s8 %v657
      %v659 = vlaneseq
      %v660 = vshrl.u32 %v659, 7
      %v661 = vsub.s32 %v658, %v660
      %v662 = vrot.slane %v588, %v661
      %v663 = vcombine.high %v662, %v662
      %v665 = vunpack.c.l.s4 1966171168
      %v666 = vunpack.c.0.s8 %v665
      %v667 = vlaneseq
      %v668 = vshrl.u32 %v667, 7
      %v669 = vsub.s32 %v666, %v668
      %v670 = vrot.slane %v662, %v669
      %v672 = vunpack.c.l.s4 1966171168
      %v673 = vunpack.c.0.s8 %v672
      %v674 = vlaneseq
      %v675 = vshrl.u32 %v674, 7
      %v676 = vsub.s32 %v673, %v675
      %v677 = vrot.slane %v663, %v676
      %v678 = vcombine.high %v670, %v670
      %v679 = vcombine.high %v677, %v677
      %v681 = vunpack.c.l.s4 1966171168
      %v682 = vunpack.c.0.s8 %v681
      %v683 = vlaneseq
      %v684 = vshrl.u32 %v683, 7
      %v685 = vsub.s32 %v682, %v684
      %v686 = vrot.slane %v589, %v685
      %v688 = vunpack.c.l.s4 1966171168
      %v689 = vunpack.c.0.s8 %v688
      %v690 = vlaneseq
      %v691 = vshrl.u32 %v690, 7
      %v692 = vsub.s32 %v689, %v691
      %v693 = vrot.slane %v686, %v692
      %v695 = vunpack.c.l.s4 1966171168
      %v696 = vunpack.c.0.s8 %v695
      %v697 = vlaneseq
      %v698 = vshrl.u32 %v697, 7
      %v699 = vsub.s32 %v696, %v698
      %v700 = vrot.slane %v590, %v699
      %v701 = vcombine.high %v700, %v700
      %v703 = vunpack.c.l.s4 1966171168
      %v704 = vunpack.c.0.s8 %v703
      %v705 = vlaneseq
      %v706 = vshrl.u32 %v705, 7
      %v707 = vsub.s32 %v704, %v706
      %v708 = vrot.slane %v700, %v707
      %v710 = vunpack.c.l.s4 1966171168
      %v711 = vunpack.c.0.s8 %v710
      %v712 = vlaneseq
      %v713 = vshrl.u32 %v712, 7
      %v714 = vsub.s32 %v711, %v713
      %v715 = vrot.slane %v701, %v714
      %v716 = vcombine.high %v708, %v708
      %v717 = vcombine.high %v715, %v715
      %v719 = vunpack.c.l.s4 1966171168
      %v720 = vunpack.c.0.s8 %v719
      %v721 = vlaneseq
      %v722 = vshrl.u32 %v721, 7
      %v723 = vsub.s32 %v720, %v722
      %v724 = vrot.slane %v591, %v723
      %v726 = vunpack.c.l.s4 1966171168
      %v727 = vunpack.c.0.s8 %v726
      %v728 = vlaneseq
      %v729 = vshrl.u32 %v728, 7
      %v730 = vsub.s32 %v727, %v729
      %v731 = vrot.slane %v724, %v730
      %v733 = vunpack.c.l.s4 1966171168
      %v734 = vunpack.c.0.s8 %v733
      %v735 = vlaneseq
      %v736 = vshrl.u32 %v735, 7
      %v737 = vsub.s32 %v734, %v736
      %v738 = vrot.slane %v592, %v737
      %v739 = vcombine.high %v738, %v738
      %v741 = vunpack.c.l.s4 1966171168
      %v742 = vunpack.c.0.s8 %v741
      %v743 = vlaneseq
      %v744 = vshrl.u32 %v743, 7
      %v745 = vsub.s32 %v742, %v744
      %v746 = vrot.slane %v738, %v745
      %v748 = vunpack.c.l.s4 1966171168
      %v749 = vunpack.c.0.s8 %v748
      %v750 = vlaneseq
      %v751 = vshrl.u32 %v750, 7
      %v752 = vsub.s32 %v749, %v751
      %v753 = vrot.slane %v739, %v752
      %v754 = vcombine.high %v746, %v746
      %v755 = vcombine.high %v753, %v753
      %v757 = vunpack.c.l.s4 1966171168
      %v758 = vunpack.c.0.s8 %v757
      %v759 = vlaneseq
      %v760 = vshrl.u32 %v759, 7
      %v761 = vsub.s32 %v758, %v760
      %v762 = vrot.slane %v593, %v761
      %v764 = vunpack.c.l.s4 1966171168
      %v765 = vunpack.c.0.s8 %v764
      %v766 = vlaneseq
      %v767 = vshrl.u32 %v766, 7
      %v768 = vsub.s32 %v765, %v767
      %v769 = vrot.slane %v762, %v768
      %v771 = vunpack.c.l.s4 1966171168
      %v772 = vunpack.c.0.s8 %v771
      %v773 = vlaneseq
      %v774 = vshrl.u32 %v773, 7
      %v775 = vsub.s32 %v772, %v774
      %v776 = vrot.slane %v594, %v775
      %v777 = vcombine.high %v776, %v776
      %v779 = vunpack.c.l.s4 1966171168
      %v780 = vunpack.c.0.s8 %v779
      %v781 = vlaneseq
      %v782 = vshrl.u32 %v781, 7
      %v783 = vsub.s32 %v780, %v782
      %v784 = vrot.slane %v776, %v783
      %v786 = vunpack.c.l.s4 1966171168
      %v787 = vunpack.c.0.s8 %v786
      %v788 = vlaneseq
      %v789 = vshrl.u32 %v788, 7
      %v790 = vsub.s32 %v787, %v789
      %v791 = vrot.slane %v777, %v790
      %v792 = vcombine.high %v784, %v784
      %v793 = vcombine.high %v791, %v791
      %v795 = vunpack.c.l.s4 1966171168
      %v796 = vunpack.c.0.s8 %v795
      %v797 = vlaneseq
      %v798 = vshrl.u32 %v797, 7
      %v799 = vsub.s32 %v796, %v798
      %v800 = vrot.slane %v595, %v799
      %v802 = vunpack.c.l.s4 1966171168
      %v803 = vunpack.c.0.s8 %v802
      %v804 = vlaneseq
      %v805 = vshrl.u32 %v804, 7
      %v806 = vsub.s32 %v803, %v805
      %v807 = vrot.slane %v800, %v806
      %v809 = vunpack.c.l.s4 1966171168
      %v810 = vunpack.c.0.s8 %v809
      %v811 = vlaneseq
      %v812 = vshrl.u32 %v811, 7
      %v813 = vsub.s32 %v810, %v812
      %v814 = vrot.slane %v596, %v813
      %v815 = vcombine.high %v814, %v814
      %v817 = vunpack.c.l.s4 1966171168
      %v818 = vunpack.c.0.s8 %v817
      %v819 = vlaneseq
      %v820 = vshrl.u32 %v819, 7
      %v821 = vsub.s32 %v818, %v820
      %v822 = vrot.slane %v814, %v821
      %v824 = vunpack.c.l.s4 1966171168
      %v825 = vunpack.c.0.s8 %v824
      %v826 = vlaneseq
      %v827 = vshrl.u32 %v826, 7
      %v828 = vsub.s32 %v825, %v827
      %v829 = vrot.slane %v815, %v828
      %v830 = vcombine.high %v822, %v822
      %v831 = vcombine.high %v829, %v829
      %v833 = vunpack.c.l.s4 1966171168
      %v834 = vunpack.c.0.s8 %v833
      %v835 = vlaneseq
      %v836 = vshrl.u32 %v835, 7
      %v837 = vsub.s32 %v834, %v836
      %v838 = vrot.slane %v597, %v837
      %v840 = vunpack.c.l.s4 1966171168
      %v841 = vunpack.c.0.s8 %v840
      %v842 = vlaneseq
      %v843 = vshrl.u32 %v842, 7
      %v844 = vsub.s32 %v841, %v843
      %v845 = vrot.slane %v838, %v844
      %v847 = vunpack.c.l.s4 1966171168
      %v848 = vunpack.c.0.s8 %v847
      %v849 = vlaneseq
      %v850 = vshrl.u32 %v849, 7
      %v851 = vsub.s32 %v848, %v850
      %v852 = vrot.slane %v598, %v851
      %v853 = vcombine.high %v852, %v852
      %v855 = vunpack.c.l.s4 1966171168
      %v856 = vunpack.c.0.s8 %v855
      %v857 = vlaneseq
      %v858 = vshrl.u32 %v857, 7
      %v859 = vsub.s32 %v856, %v858
      %v860 = vrot.slane %v852, %v859
      %v862 = vunpack.c.l.s4 1966171168
      %v863 = vunpack.c.0.s8 %v862
      %v864 = vlaneseq
      %v865 = vshrl.u32 %v864, 7
      %v866 = vsub.s32 %v863, %v865
      %v867 = vrot.slane %v853, %v866
      %v868 = vcombine.high %v860, %v860
      %v869 = vcombine.high %v867, %v867
      %v871 = vunpack.c.l.s4 1966171168
      %v872 = vunpack.c.0.s8 %v871
      %v873 = vlaneseq
      %v874 = vshrl.u32 %v873, 7
      %v875 = vsub.s32 %v872, %v874
      %v876 = vrot.slane %v599, %v875
      %v878 = vunpack.c.l.s4 1966171168
      %v879 = vunpack.c.0.s8 %v878
      %v880 = vlaneseq
      %v881 = vshrl.u32 %v880, 7
      %v882 = vsub.s32 %v879, %v881
      %v883 = vrot.slane %v876, %v882
      %v885 = vunpack.c.l.s4 1966171168
      %v886 = vunpack.c.0.s8 %v885
      %v887 = vlaneseq
      %v888 = vshrl.u32 %v887, 7
      %v889 = vsub.s32 %v886, %v888
      %v890 = vrot.slane %v600, %v889
      %v891 = vcombine.high %v890, %v890
      %v893 = vunpack.c.l.s4 1966171168
      %v894 = vunpack.c.0.s8 %v893
      %v895 = vlaneseq
      %v896 = vshrl.u32 %v895, 7
      %v897 = vsub.s32 %v894, %v896
      %v898 = vrot.slane %v890, %v897
      %v900 = vunpack.c.l.s4 1966171168
      %v901 = vunpack.c.0.s8 %v900
      %v902 = vlaneseq
      %v903 = vshrl.u32 %v902, 7
      %v904 = vsub.s32 %v901, %v903
      %v905 = vrot.slane %v891, %v904
      %v906 = vcombine.high %v898, %v898
      %v907 = vcombine.high %v905, %v905
      %v909 = vunpack.c.l.s4 1966171168
      %v910 = vunpack.c.0.s8 %v909
      %v911 = vlaneseq
      %v912 = vshrl.u32 %v911, 7
      %v913 = vsub.s32 %v910, %v912
      %v914 = vrot.slane %v601, %v913
      %v916 = vunpack.c.l.s4 1966171168
      %v917 = vunpack.c.0.s8 %v916
      %v918 = vlaneseq
      %v919 = vshrl.u32 %v918, 7
      %v920 = vsub.s32 %v917, %v919
      %v921 = vrot.slane %v914, %v920
      %v922 = vunpack.i.l.s16 %v632
      %v923 = vunpack.i.h.s16 %v632
      %v924 = vunpack.i.l.s16 %v639
      %v925 = vunpack.i.h.s16 %v639
      %v926 = vunpack.i.l.s16 %v640
      %v927 = vunpack.i.h.s16 %v640
      %v928 = vunpack.i.l.s16 %v641
      %v929 = vunpack.i.h.s16 %v641
      %v930 = vunpack.i.l.s16 %v655
      %v931 = vunpack.i.l.s16 %v670
      %v932 = vunpack.i.h.s16 %v670
      %v933 = vunpack.i.l.s16 %v677
      %v934 = vunpack.i.h.s16 %v677
      %v935 = vunpack.i.l.s16 %v678
      %v936 = vunpack.i.h.s16 %v678
      %v937 = vunpack.i.l.s16 %v679
      %v938 = vunpack.i.h.s16 %v679
      %v939 = vunpack.i.l.s16 %v693
      %v940 = vunpack.i.l.s16 %v708
      %v941 = vunpack.i.h.s16 %v708
      %v942 = vunpack.i.l.s16 %v715
      %v943 = vunpack.i.h.s16 %v715
      %v944 = vunpack.i.l.s16 %v716
      %v945 = vunpack.i.h.s16 %v716
      %v946 = vunpack.i.l.s16 %v717
      %v947 = vunpack.i.h.s16 %v717
      %v948 = vunpack.i.l.s16 %v731
      %v949 = vunpack.i.l.s16 %v746
      %v950 = vunpack.i.h.s16 %v746
      %v951 = vunpack.i.l.s16 %v753
      %v952 = vunpack.i.h.s16 %v753
      %v953 = vunpack.i.l.s16 %v754
      %v954 = vunpack.i.h.s16 %v754
      %v955 = vunpack.i.l.s16 %v755
      %v956 = vunpack.i.h.s16 %v755
      %v957 = vunpack.i.l.s16 %v769
      %v958 = vunpack.i.l.s16 %v784
      %v959 = vunpack.i.h.s16 %v784
      %v960 = vunpack.i.l.s16 %v791
      %v961 = vunpack.i.h.s16 %v791
      %v962 = vunpack.i.l.s16 %v792
      %v963 = vunpack.i.h.s16 %v792
      %v964 = vunpack.i.l.s16 %v793
      %v965 = vunpack.i.h.s16 %v793
      %v966 = vunpack.i.l.s16 %v807
      %v967 = vunpack.i.l.s16 %v822
      %v968 = vunpack.i.h.s16 %v822
      %v969 = vunpack.i.l.s16 %v829
      %v970 = vunpack.i.h.s16 %v829
      %v971 = vunpack.i.l.s16 %v830
      %v972 = vunpack.i.h.s16 %v830
      %v973 = vunpack.i.l.s16 %v831
      %v974 = vunpack.i.h.s16 %v831
      %v975 = vunpack.i.l.s16 %v845
      %v976 = vunpack.i.l.s16 %v860
      %v977 = vunpack.i.h.s16 %v860
      %v978 = vunpack.i.l.s16 %v867
      %v979 = vunpack.i.h.s16 %v867
      %v980 = vunpack.i.l.s16 %v868
      %v981 = vunpack.i.h.s16 %v868
      %v982 = vunpack.i.l.s16 %v869
      %v983 = vunpack.i.h.s16 %v869
      %v984 = vunpack.i.l.s16 %v883
      %v985 = vunpack.i.l.s16 %v898
      %v986 = vunpack.i.h.s16 %v898
      %v987 = vunpack.i.l.s16 %v905
      %v988 = vunpack.i.h.s16 %v905
      %v989 = vunpack.i.l.s16 %v906
      %v990 = vunpack.i.h.s16 %v906
      %v991 = vunpack.i.l.s16 %v907
      %v992 = vunpack.i.h.s16 %v907
      %v993 = vunpack.i.l.s16 %v921
      %s994 = scalar_lea.vmem %s1, 16
      %v995 = vld [vmem:[%s994] sm:$0xf]
      %v996 = vld [vmem:[%s994 + $0x4] sm:$0xf]
      %v997 = vpack.i.b16 %v923, %v922
      %v998 = vpack.i.b16 %v925, %v924
      %v999 = vpack.i.b16 %v927, %v926
      %v1000 = vpack.i.b16 %v929, %v928
      %v1001 = vpack.i.b16 %v931, %v930
      %v1002 = vpack.i.b16 %v933, %v932
      %v1003 = vpack.i.b16 %v935, %v934
      %v1004 = vpack.i.b16 %v937, %v936
      %v1005 = vpack.i.b16 %v939, %v938
      %v1006 = vpack.i.b16 %v941, %v940
      %v1007 = vpack.i.b16 %v943, %v942
      %v1008 = vpack.i.b16 %v945, %v944
      %v1009 = vpack.i.b16 %v947, %v946
      %v1010 = vpack.i.b16 %v949, %v948
      %v1011 = vpack.i.b16 %v951, %v950
      %v1012 = vpack.i.b16 %v953, %v952
      %v1013 = vpack.i.b16 %v955, %v954
      %v1014 = vpack.i.b16 %v957, %v956
      %v1015 = vpack.i.b16 %v959, %v958
      %v1016 = vpack.i.b16 %v961, %v960
      %v1017 = vpack.i.b16 %v963, %v962
      %v1018 = vpack.i.b16 %v965, %v964
      %v1019 = vpack.i.b16 %v967, %v966
      %v1020 = vpack.i.b16 %v969, %v968
      %v1021 = vpack.i.b16 %v971, %v970
      %v1022 = vpack.i.b16 %v973, %v972
      %v1023 = vpack.i.b16 %v975, %v974
      %v1024 = vpack.i.b16 %v977, %v976
      %v1025 = vpack.i.b16 %v979, %v978
      %v1026 = vpack.i.b16 %v981, %v980
      %v1027 = vpack.i.b16 %v983, %v982
      %v1028 = vpack.i.b16 %v985, %v984
      %v1029 = vpack.i.b16 %v987, %v986
      %v1030 = vpack.i.b16 %v989, %v988
      %v1031 = vpack.i.b16 %v991, %v990
      %v1032 = vpack.i.b16 %v993, %v992
      %v1033 = vcombine.low %v997, %v998
      %v1034 = vcombine.low %v999, %v1000
      %v1035 = vcombine.low %v1001, %v1002
      %v1036 = vcombine.low %v1003, %v1004
      %v1038 = vunpack.c.l.s4 1966171168
      %v1039 = vunpack.c.0.s8 %v1038
      %v1040 = vlaneseq
      %v1041 = vshrl.u32 %v1040, 7
      %v1042 = vsub.s32 %v1039, %v1041
      %v1043 = vrot.slane %v1033, %v1042
      %v1045 = vunpack.c.l.s4 1966171168
      %v1046 = vunpack.c.0.s8 %v1045
      %v1047 = vlaneseq
      %v1048 = vshrl.u32 %v1047, 7
      %v1049 = vsub.s32 %v1046, %v1048
      %v1050 = vrot.slane %v1034, %v1049
      %v1052 = vunpack.c.l.s4 1966171168
      %v1053 = vunpack.c.0.s8 %v1052
      %v1054 = vlaneseq
      %v1055 = vshrl.u32 %v1054, 7
      %v1056 = vsub.s32 %v1053, %v1055
      %v1057 = vrot.slane %v1035, %v1056
      %v1059 = vunpack.c.l.s4 1966171168
      %v1060 = vunpack.c.0.s8 %v1059
      %v1061 = vlaneseq
      %v1062 = vshrl.u32 %v1061, 7
      %v1063 = vsub.s32 %v1060, %v1062
      %v1064 = vrot.slane %v1036, %v1063
      %v1065 = vcombine.low %v1043, %v1050
      %v1066 = vcombine.low %v1057, %v1064
      %v1068 = vunpack.c.l.s4 1966171168
      %v1069 = vunpack.c.0.s8 %v1068
      %v1070 = vlaneseq
      %v1071 = vshrl.u32 %v1070, 7
      %v1072 = vsub.s32 %v1069, %v1071
      %v1073 = vrot.slane %v1065, %v1072
      %v1075 = vunpack.c.l.s4 1966171168
      %v1076 = vunpack.c.0.s8 %v1075
      %v1077 = vlaneseq
      %v1078 = vshrl.u32 %v1077, 7
      %v1079 = vsub.s32 %v1076, %v1078
      %v1080 = vrot.slane %v1066, %v1079
      %v1081 = vcombine.low %v1073, %v1080
      %v1082 = vcombine.low %v1005, %v1006
      %v1083 = vcombine.low %v1007, %v1008
      %v1084 = vcombine.low %v1009, %v1010
      %v1085 = vcombine.low %v1011, %v1012
      %v1087 = vunpack.c.l.s4 1966171168
      %v1088 = vunpack.c.0.s8 %v1087
      %v1089 = vlaneseq
      %v1090 = vshrl.u32 %v1089, 7
      %v1091 = vsub.s32 %v1088, %v1090
      %v1092 = vrot.slane %v1082, %v1091
      %v1094 = vunpack.c.l.s4 1966171168
      %v1095 = vunpack.c.0.s8 %v1094
      %v1096 = vlaneseq
      %v1097 = vshrl.u32 %v1096, 7
      %v1098 = vsub.s32 %v1095, %v1097
      %v1099 = vrot.slane %v1083, %v1098
      %v1101 = vunpack.c.l.s4 1966171168
      %v1102 = vunpack.c.0.s8 %v1101
      %v1103 = vlaneseq
      %v1104 = vshrl.u32 %v1103, 7
      %v1105 = vsub.s32 %v1102, %v1104
      %v1106 = vrot.slane %v1084, %v1105
      %v1108 = vunpack.c.l.s4 1966171168
      %v1109 = vunpack.c.0.s8 %v1108
      %v1110 = vlaneseq
      %v1111 = vshrl.u32 %v1110, 7
      %v1112 = vsub.s32 %v1109, %v1111
      %v1113 = vrot.slane %v1085, %v1112
      %v1114 = vcombine.low %v1092, %v1099
      %v1115 = vcombine.low %v1106, %v1113
      %v1117 = vunpack.c.l.s4 1966171168
      %v1118 = vunpack.c.0.s8 %v1117
      %v1119 = vlaneseq
      %v1120 = vshrl.u32 %v1119, 7
      %v1121 = vsub.s32 %v1118, %v1120
      %v1122 = vrot.slane %v1114, %v1121
      %v1124 = vunpack.c.l.s4 1966171168
      %v1125 = vunpack.c.0.s8 %v1124
      %v1126 = vlaneseq
      %v1127 = vshrl.u32 %v1126, 7
      %v1128 = vsub.s32 %v1125, %v1127
      %v1129 = vrot.slane %v1115, %v1128
      %v1130 = vcombine.low %v1122, %v1129
      %v1131 = vcombine.low %v1013, %v1014
      %v1132 = vcombine.low %v1015, %v1016
      %v1133 = vcombine.low %v1017, %v1018
      %v1134 = vcombine.low %v1019, %v1020
      %v1136 = vunpack.c.l.s4 1966171168
      %v1137 = vunpack.c.0.s8 %v1136
      %v1138 = vlaneseq
      %v1139 = vshrl.u32 %v1138, 7
      %v1140 = vsub.s32 %v1137, %v1139
      %v1141 = vrot.slane %v1131, %v1140
      %v1143 = vunpack.c.l.s4 1966171168
      %v1144 = vunpack.c.0.s8 %v1143
      %v1145 = vlaneseq
      %v1146 = vshrl.u32 %v1145, 7
      %v1147 = vsub.s32 %v1144, %v1146
      %v1148 = vrot.slane %v1132, %v1147
      %v1150 = vunpack.c.l.s4 1966171168
      %v1151 = vunpack.c.0.s8 %v1150
      %v1152 = vlaneseq
      %v1153 = vshrl.u32 %v1152, 7
      %v1154 = vsub.s32 %v1151, %v1153
      %v1155 = vrot.slane %v1133, %v1154
      %v1157 = vunpack.c.l.s4 1966171168
      %v1158 = vunpack.c.0.s8 %v1157
      %v1159 = vlaneseq
      %v1160 = vshrl.u32 %v1159, 7
      %v1161 = vsub.s32 %v1158, %v1160
      %v1162 = vrot.slane %v1134, %v1161
      %v1163 = vcombine.low %v1141, %v1148
      %v1164 = vcombine.low %v1155, %v1162
      %v1166 = vunpack.c.l.s4 1966171168
      %v1167 = vunpack.c.0.s8 %v1166
      %v1168 = vlaneseq
      %v1169 = vshrl.u32 %v1168, 7
      %v1170 = vsub.s32 %v1167, %v1169
      %v1171 = vrot.slane %v1163, %v1170
      %v1173 = vunpack.c.l.s4 1966171168
      %v1174 = vunpack.c.0.s8 %v1173
      %v1175 = vlaneseq
      %v1176 = vshrl.u32 %v1175, 7
      %v1177 = vsub.s32 %v1174, %v1176
      %v1178 = vrot.slane %v1164, %v1177
      %v1179 = vcombine.low %v1171, %v1178
      %v1180 = vcombine.low %v1021, %v1022
      %v1181 = vcombine.low %v1023, %v1024
      %v1182 = vcombine.low %v1025, %v1026
      %v1183 = vcombine.low %v1027, %v1028
      %v1185 = vunpack.c.l.s4 1966171168
      %v1186 = vunpack.c.0.s8 %v1185
      %v1187 = vlaneseq
      %v1188 = vshrl.u32 %v1187, 7
      %v1189 = vsub.s32 %v1186, %v1188
      %v1190 = vrot.slane %v1180, %v1189
      %v1192 = vunpack.c.l.s4 1966171168
      %v1193 = vunpack.c.0.s8 %v1192
      %v1194 = vlaneseq
      %v1195 = vshrl.u32 %v1194, 7
      %v1196 = vsub.s32 %v1193, %v1195
      %v1197 = vrot.slane %v1181, %v1196
      %v1199 = vunpack.c.l.s4 1966171168
      %v1200 = vunpack.c.0.s8 %v1199
      %v1201 = vlaneseq
      %v1202 = vshrl.u32 %v1201, 7
      %v1203 = vsub.s32 %v1200, %v1202
      %v1204 = vrot.slane %v1182, %v1203
      %v1206 = vunpack.c.l.s4 1966171168
      %v1207 = vunpack.c.0.s8 %v1206
      %v1208 = vlaneseq
      %v1209 = vshrl.u32 %v1208, 7
      %v1210 = vsub.s32 %v1207, %v1209
      %v1211 = vrot.slane %v1183, %v1210
      %v1212 = vcombine.low %v1190, %v1197
      %v1213 = vcombine.low %v1204, %v1211
      %v1215 = vunpack.c.l.s4 1966171168
      %v1216 = vunpack.c.0.s8 %v1215
      %v1217 = vlaneseq
      %v1218 = vshrl.u32 %v1217, 7
      %v1219 = vsub.s32 %v1216, %v1218
      %v1220 = vrot.slane %v1212, %v1219
      %v1222 = vunpack.c.l.s4 1966171168
      %v1223 = vunpack.c.0.s8 %v1222
      %v1224 = vlaneseq
      %v1225 = vshrl.u32 %v1224, 7
      %v1226 = vsub.s32 %v1223, %v1225
      %v1227 = vrot.slane %v1213, %v1226
      %v1228 = vcombine.low %v1220, %v1227
      %v1229 = vcombine.low %v1029, %v1030
      %v1230 = vcombine.low %v1031, %v1032
      %v1232 = vunpack.c.l.s4 1966171168
      %v1233 = vunpack.c.0.s8 %v1232
      %v1234 = vlaneseq
      %v1235 = vshrl.u32 %v1234, 7
      %v1236 = vsub.s32 %v1233, %v1235
      %v1237 = vrot.slane %v1229, %v1236
      %v1239 = vunpack.c.l.s4 1966171168
      %v1240 = vunpack.c.0.s8 %v1239
      %v1241 = vlaneseq
      %v1242 = vshrl.u32 %v1241, 7
      %v1243 = vsub.s32 %v1240, %v1242
      %v1244 = vrot.slane %v1230, %v1243
      %v1245 = vcombine.low %v1237, %v1244
      %v1247 = vunpack.c.l.s4 1966171168
      %v1248 = vunpack.c.0.s8 %v1247
      %v1249 = vlaneseq
      %v1250 = vshrl.u32 %v1249, 7
      %v1251 = vsub.s32 %v1248, %v1250
      %v1252 = vrot.slane %v1245, %v1251
      %v1255 = vunpack.c.l.b16 %v995
      %v1256 = vunpack.c.l.b16 %v996
      %v1257 = vpack.c.b16 %v1256, %v1255
      %vm1259 = vcmask 130048
      %v1261 = vsel %vm1259, %v1081, 0
      %v1264 = vsel %vm1259, %v1130, 0
      %v1267 = vsel %vm1259, %v1179, 0
      %v1270 = vsel %vm1259, %v1228, 0
      %v1273 = vsel %vm1259, %v1252, 0
      %1275 = vmatprep.subr.bf16.mxu0 0
      %1276 = vmatpush1.bf16.msra.mxu0 %v1257
      %1277 = vmatprep.subr.bf16.mxu0 0
      %1278 = vmatpush1.bf16.msra.mxu0 0
      %1279 = vmatprep.subr.bf16.mxu0 0
      %1280 = vmatpush1.bf16.msra.mxu0 0
      %1281 = vmatprep.subr.bf16.mxu0 0
      %1282 = vmatpush1.bf16.msra.mxu0 0
      %1283 = vmatprep.subr.bf16.mxu0 0
      %1284 = vmatpush1.bf16.msra.mxu0 0
      %1285 = vmatprep.subr.bf16.mxu0 0
      %1286 = vmatpush1.bf16.msra.mxu0 0
      %1287 = vmatprep.subr.bf16.mxu0 0
      %1288 = vmatpush1.bf16.msra.mxu0 0
      %1289 = vmatprep.subr.bf16.mxu0 0
      %1290 = vmatpush1.bf16.msra.mxu0 0
      %1291 = vmatprep.subr.bf16.mxu0 0
      %1292 = vmatpush1.bf16.msra.mxu0 0
      %1293 = vmatprep.subr.bf16.mxu0 0
      %1294 = vmatpush1.bf16.msra.mxu0 0
      %1295 = vmatprep.subr.bf16.mxu0 0
      %1296 = vmatpush1.bf16.msra.mxu0 0
      %1297 = vmatprep.subr.bf16.mxu0 0
      %1298 = vmatpush1.bf16.msra.mxu0 0
      %1299 = vmatprep.subr.bf16.mxu0 0
      %1300 = vmatpush1.bf16.msra.mxu0 0
      %1301 = vmatprep.subr.bf16.mxu0 0
      %1302 = vmatpush1.bf16.msra.mxu0 0
      %1303 = vmatprep.subr.bf16.mxu0 0
      %1304 = vmatpush1.bf16.msra.mxu0 0
      %1305 = vmatprep.subr.bf16.mxu0 0
      %1306 = vmatpush1.bf16.msra.mxu0 0
      %1307 = vmatprep.mubr.bf16.mxu0 0
      %1308 = vmatmul.mubr.bf16.gmra.mrb[0].mxu0 %v1261
      %v1309 = vpop.f32.mrb[0].mxu0
      %v1310 = vadd.f32 0.0, %v1309
      %v1311 = vpop.f32.mrb[0].mxu0
      %v1312 = vpop.f32.mrb[0].mxu0
      %v1313 = vadd.f32 0.0, %v1312
      %v1314 = vpop.f32.mrb[0].mxu0
      %1315 = vmatprep.mubr.bf16.mxu0 0
      %1316 = vmatmul.mubr.bf16.gmra.mrb[0].mxu0 %v1264
      %v1317 = vpop.f32.mrb[0].mxu0
      %v1318 = vadd.f32 0.0, %v1317
      %v1319 = vpop.f32.mrb[0].mxu0
      %v1320 = vpop.f32.mrb[0].mxu0
      %v1321 = vadd.f32 0.0, %v1320
      %v1322 = vpop.f32.mrb[0].mxu0
      %1323 = vmatprep.mubr.bf16.mxu0 0
      %1324 = vmatmul.mubr.bf16.gmra.mrb[0].mxu0 %v1267
      %v1325 = vpop.f32.mrb[0].mxu0
      %v1326 = vadd.f32 0.0, %v1325
      %v1327 = vpop.f32.mrb[0].mxu0
      %v1328 = vpop.f32.mrb[0].mxu0
      %v1329 = vadd.f32 0.0, %v1328
      %v1330 = vpop.f32.mrb[0].mxu0
      %1331 = vmatprep.mubr.bf16.mxu0 0
      %1332 = vmatmul.mubr.bf16.gmra.mrb[0].mxu0 %v1270
      %v1333 = vpop.f32.mrb[0].mxu0
      %v1334 = vadd.f32 0.0, %v1333
      %v1335 = vpop.f32.mrb[0].mxu0
      %v1336 = vpop.f32.mrb[0].mxu0
      %v1337 = vadd.f32 0.0, %v1336
      %v1338 = vpop.f32.mrb[0].mxu0
      %1339 = vmatprep.mubr.bf16.mxu0 0
      %1340 = vmatmul.mubr.bf16.gmra.mrb[0].mxu0 %v1273
      %v1341 = vpop.f32.mrb[0].mxu0
      %v1342 = vadd.f32 0.0, %v1341
      %v1343 = vpop.f32.mrb[0].mxu0
      %v1344 = vpop.f32.mrb[0].mxu0
      %v1345 = vpop.f32.mrb[0].mxu0
      %1346 = vdwg.mxu0
      %v1347 = vpack.i.b16 %v509, %v508
      %v1348 = vpack.i.b16 %v511, %v510
      %v1349 = vpack.i.b16 %v513, %v512
      %v1350 = vpack.i.b16 %v515, %v514
      %v1351 = vpack.i.b16 %v517, %v516
      %v1352 = vpack.i.b16 %v519, %v518
      %v1353 = vpack.i.b16 %v521, %v520
      %v1354 = vpack.i.b16 %v523, %v522
      %v1355 = vpack.i.b16 %v525, %v524
      %v1356 = vpack.i.b16 %v527, %v526
      %v1357 = vpack.i.b16 %v529, %v528
      %v1358 = vpack.i.b16 %v531, %v530
      %v1359 = vpack.i.b16 %v533, %v532
      %v1360 = vpack.i.b16 %v535, %v534
      %v1361 = vpack.i.b16 %v537, %v536
      %v1362 = vpack.i.b16 %v539, %v538
      %v1363 = vpack.i.b16 %v541, %v540
      %v1364 = vpack.i.b16 %v543, %v542
      %v1365 = vpack.i.b16 %v545, %v544
      %v1366 = vpack.i.b16 %v547, %v546
      %v1367 = vpack.i.b16 %v549, %v548
      %v1368 = vpack.i.b16 %v551, %v550
      %v1369 = vpack.i.b16 %v553, %v552
      %v1370 = vpack.i.b16 %v555, %v554
      %v1371 = vpack.i.b16 %v557, %v556
      %v1372 = vpack.i.b16 %v559, %v558
      %v1373 = vpack.i.b16 %v561, %v560
      %v1374 = vpack.i.b16 %v563, %v562
      %v1375 = vpack.i.b16 %v565, %v564
      %v1376 = vpack.i.b16 %v567, %v566
      %v1377 = vpack.i.b16 %v569, %v568
      %v1378 = vpack.i.b16 %v571, %v570
      %v1379 = vpack.i.b16 %v573, %v572
      %v1380 = vpack.i.b16 %v575, %v574
      %v1381 = vpack.i.b16 %v577, %v576
      %v1382 = vpack.i.b16 %v579, %v578
      %v1383 = vcombine.low %v1347, %v1348
      %v1384 = vcombine.low %v1349, %v1350
      %v1385 = vcombine.low %v1351, %v1352
      %v1386 = vcombine.low %v1353, %v1354
      %v1388 = vunpack.c.l.s4 1966171168
      %v1389 = vunpack.c.0.s8 %v1388
      %v1390 = vlaneseq
      %v1391 = vshrl.u32 %v1390, 7
      %v1392 = vsub.s32 %v1389, %v1391
      %v1393 = vrot.slane %v1383, %v1392
      %v1395 = vunpack.c.l.s4 1966171168
      %v1396 = vunpack.c.0.s8 %v1395
      %v1397 = vlaneseq
      %v1398 = vshrl.u32 %v1397, 7
      %v1399 = vsub.s32 %v1396, %v1398
      %v1400 = vrot.slane %v1384, %v1399
      %v1402 = vunpack.c.l.s4 1966171168
      %v1403 = vunpack.c.0.s8 %v1402
      %v1404 = vlaneseq
      %v1405 = vshrl.u32 %v1404, 7
      %v1406 = vsub.s32 %v1403, %v1405
      %v1407 = vrot.slane %v1385, %v1406
      %v1409 = vunpack.c.l.s4 1966171168
      %v1410 = vunpack.c.0.s8 %v1409
      %v1411 = vlaneseq
      %v1412 = vshrl.u32 %v1411, 7
      %v1413 = vsub.s32 %v1410, %v1412
      %v1414 = vrot.slane %v1386, %v1413
      %v1415 = vcombine.low %v1393, %v1400
      %v1416 = vcombine.low %v1407, %v1414
      %v1418 = vunpack.c.l.s4 1966171168
      %v1419 = vunpack.c.0.s8 %v1418
      %v1420 = vlaneseq
      %v1421 = vshrl.u32 %v1420, 7
      %v1422 = vsub.s32 %v1419, %v1421
      %v1423 = vrot.slane %v1415, %v1422
      %v1425 = vunpack.c.l.s4 1966171168
      %v1426 = vunpack.c.0.s8 %v1425
      %v1427 = vlaneseq
      %v1428 = vshrl.u32 %v1427, 7
      %v1429 = vsub.s32 %v1426, %v1428
      %v1430 = vrot.slane %v1416, %v1429
      %v1431 = vcombine.low %v1423, %v1430
      %v1432 = vcombine.low %v1355, %v1356
      %v1433 = vcombine.low %v1357, %v1358
      %v1434 = vcombine.low %v1359, %v1360
      %v1435 = vcombine.low %v1361, %v1362
      %v1437 = vunpack.c.l.s4 1966171168
      %v1438 = vunpack.c.0.s8 %v1437
      %v1439 = vlaneseq
      %v1440 = vshrl.u32 %v1439, 7
      %v1441 = vsub.s32 %v1438, %v1440
      %v1442 = vrot.slane %v1432, %v1441
      %v1444 = vunpack.c.l.s4 1966171168
      %v1445 = vunpack.c.0.s8 %v1444
      %v1446 = vlaneseq
      %v1447 = vshrl.u32 %v1446, 7
      %v1448 = vsub.s32 %v1445, %v1447
      %v1449 = vrot.slane %v1433, %v1448
      %v1451 = vunpack.c.l.s4 1966171168
      %v1452 = vunpack.c.0.s8 %v1451
      %v1453 = vlaneseq
      %v1454 = vshrl.u32 %v1453, 7
      %v1455 = vsub.s32 %v1452, %v1454
      %v1456 = vrot.slane %v1434, %v1455
      %v1458 = vunpack.c.l.s4 1966171168
      %v1459 = vunpack.c.0.s8 %v1458
      %v1460 = vlaneseq
      %v1461 = vshrl.u32 %v1460, 7
      %v1462 = vsub.s32 %v1459, %v1461
      %v1463 = vrot.slane %v1435, %v1462
      %v1464 = vcombine.low %v1442, %v1449
      %v1465 = vcombine.low %v1456, %v1463
      %v1467 = vunpack.c.l.s4 1966171168
      %v1468 = vunpack.c.0.s8 %v1467
      %v1469 = vlaneseq
      %v1470 = vshrl.u32 %v1469, 7
      %v1471 = vsub.s32 %v1468, %v1470
      %v1472 = vrot.slane %v1464, %v1471
      %v1474 = vunpack.c.l.s4 1966171168
      %v1475 = vunpack.c.0.s8 %v1474
      %v1476 = vlaneseq
      %v1477 = vshrl.u32 %v1476, 7
      %v1478 = vsub.s32 %v1475, %v1477
      %v1479 = vrot.slane %v1465, %v1478
      %v1480 = vcombine.low %v1472, %v1479
      %v1481 = vcombine.low %v1363, %v1364
      %v1482 = vcombine.low %v1365, %v1366
      %v1483 = vcombine.low %v1367, %v1368
      %v1484 = vcombine.low %v1369, %v1370
      %v1486 = vunpack.c.l.s4 1966171168
      %v1487 = vunpack.c.0.s8 %v1486
      %v1488 = vlaneseq
      %v1489 = vshrl.u32 %v1488, 7
      %v1490 = vsub.s32 %v1487, %v1489
      %v1491 = vrot.slane %v1481, %v1490
      %v1493 = vunpack.c.l.s4 1966171168
      %v1494 = vunpack.c.0.s8 %v1493
      %v1495 = vlaneseq
      %v1496 = vshrl.u32 %v1495, 7
      %v1497 = vsub.s32 %v1494, %v1496
      %v1498 = vrot.slane %v1482, %v1497
      %v1500 = vunpack.c.l.s4 1966171168
      %v1501 = vunpack.c.0.s8 %v1500
      %v1502 = vlaneseq
      %v1503 = vshrl.u32 %v1502, 7
      %v1504 = vsub.s32 %v1501, %v1503
      %v1505 = vrot.slane %v1483, %v1504
      %v1507 = vunpack.c.l.s4 1966171168
      %v1508 = vunpack.c.0.s8 %v1507
      %v1509 = vlaneseq
      %v1510 = vshrl.u32 %v1509, 7
      %v1511 = vsub.s32 %v1508, %v1510
      %v1512 = vrot.slane %v1484, %v1511
      %v1513 = vcombine.low %v1491, %v1498
      %v1514 = vcombine.low %v1505, %v1512
      %v1516 = vunpack.c.l.s4 1966171168
      %v1517 = vunpack.c.0.s8 %v1516
      %v1518 = vlaneseq
      %v1519 = vshrl.u32 %v1518, 7
      %v1520 = vsub.s32 %v1517, %v1519
      %v1521 = vrot.slane %v1513, %v1520
      %v1523 = vunpack.c.l.s4 1966171168
      %v1524 = vunpack.c.0.s8 %v1523
      %v1525 = vlaneseq
      %v1526 = vshrl.u32 %v1525, 7
      %v1527 = vsub.s32 %v1524, %v1526
      %v1528 = vrot.slane %v1514, %v1527
      %v1529 = vcombine.low %v1521, %v1528
      %v1530 = vcombine.low %v1371, %v1372
      %v1531 = vcombine.low %v1373, %v1374
      %v1532 = vcombine.low %v1375, %v1376
      %v1533 = vcombine.low %v1377, %v1378
      %v1535 = vunpack.c.l.s4 1966171168
      %v1536 = vunpack.c.0.s8 %v1535
      %v1537 = vlaneseq
      %v1538 = vshrl.u32 %v1537, 7
      %v1539 = vsub.s32 %v1536, %v1538
      %v1540 = vrot.slane %v1530, %v1539
      %v1542 = vunpack.c.l.s4 1966171168
      %v1543 = vunpack.c.0.s8 %v1542
      %v1544 = vlaneseq
      %v1545 = vshrl.u32 %v1544, 7
      %v1546 = vsub.s32 %v1543, %v1545
      %v1547 = vrot.slane %v1531, %v1546
      %v1549 = vunpack.c.l.s4 1966171168
      %v1550 = vunpack.c.0.s8 %v1549
      %v1551 = vlaneseq
      %v1552 = vshrl.u32 %v1551, 7
      %v1553 = vsub.s32 %v1550, %v1552
      %v1554 = vrot.slane %v1532, %v1553
      %v1556 = vunpack.c.l.s4 1966171168
      %v1557 = vunpack.c.0.s8 %v1556
      %v1558 = vlaneseq
      %v1559 = vshrl.u32 %v1558, 7
      %v1560 = vsub.s32 %v1557, %v1559
      %v1561 = vrot.slane %v1533, %v1560
      %v1562 = vcombine.low %v1540, %v1547
      %v1563 = vcombine.low %v1554, %v1561
      %v1565 = vunpack.c.l.s4 1966171168
      %v1566 = vunpack.c.0.s8 %v1565
      %v1567 = vlaneseq
      %v1568 = vshrl.u32 %v1567, 7
      %v1569 = vsub.s32 %v1566, %v1568
      %v1570 = vrot.slane %v1562, %v1569
      %v1572 = vunpack.c.l.s4 1966171168
      %v1573 = vunpack.c.0.s8 %v1572
      %v1574 = vlaneseq
      %v1575 = vshrl.u32 %v1574, 7
      %v1576 = vsub.s32 %v1573, %v1575
      %v1577 = vrot.slane %v1563, %v1576
      %v1578 = vcombine.low %v1570, %v1577
      %v1579 = vcombine.low %v1379, %v1380
      %v1580 = vcombine.low %v1381, %v1382
      %v1582 = vunpack.c.l.s4 1966171168
      %v1583 = vunpack.c.0.s8 %v1582
      %v1584 = vlaneseq
      %v1585 = vshrl.u32 %v1584, 7
      %v1586 = vsub.s32 %v1583, %v1585
      %v1587 = vrot.slane %v1579, %v1586
      %v1589 = vunpack.c.l.s4 1966171168
      %v1590 = vunpack.c.0.s8 %v1589
      %v1591 = vlaneseq
      %v1592 = vshrl.u32 %v1591, 7
      %v1593 = vsub.s32 %v1590, %v1592
      %v1594 = vrot.slane %v1580, %v1593
      %v1595 = vcombine.low %v1587, %v1594
      %v1597 = vunpack.c.l.s4 1966171168
      %v1598 = vunpack.c.0.s8 %v1597
      %v1599 = vlaneseq
      %v1600 = vshrl.u32 %v1599, 7
      %v1601 = vsub.s32 %v1598, %v1600
      %v1602 = vrot.slane %v1595, %v1601
      %v1605 = vunpack.c.l.b16 %v580
      %v1606 = vunpack.c.l.b16 %v581
      %v1607 = vpack.c.b16 %v1606, %v1605
      %v1610 = vsel %vm1259, %v1431, 0
      %v1613 = vsel %vm1259, %v1480, 0
      %v1616 = vsel %vm1259, %v1529, 0
      %v1619 = vsel %vm1259, %v1578, 0
      %v1622 = vsel %vm1259, %v1602, 0
      %1624 = vmatprep.subr.bf16.mxu0 0
      %1625 = vmatpush1.bf16.msra.mxu0 %v1607
      %1626 = vmatprep.subr.bf16.mxu0 0
      %1627 = vmatpush1.bf16.msra.mxu0 0
      %1628 = vmatprep.subr.bf16.mxu0 0
      %1629 = vmatpush1.bf16.msra.mxu0 0
      %1630 = vmatprep.subr.bf16.mxu0 0
      %1631 = vmatpush1.bf16.msra.mxu0 0
      %1632 = vmatprep.subr.bf16.mxu0 0
      %1633 = vmatpush1.bf16.msra.mxu0 0
      %1634 = vmatprep.subr.bf16.mxu0 0
      %1635 = vmatpush1.bf16.msra.mxu0 0
      %1636 = vmatprep.subr.bf16.mxu0 0
      %1637 = vmatpush1.bf16.msra.mxu0 0
      %1638 = vmatprep.subr.bf16.mxu0 0
      %1639 = vmatpush1.bf16.msra.mxu0 0
      %1640 = vmatprep.subr.bf16.mxu0 0
      %1641 = vmatpush1.bf16.msra.mxu0 0
      %1642 = vmatprep.subr.bf16.mxu0 0
      %1643 = vmatpush1.bf16.msra.mxu0 0
      %1644 = vmatprep.subr.bf16.mxu0 0
      %1645 = vmatpush1.bf16.msra.mxu0 0
      %1646 = vmatprep.subr.bf16.mxu0 0
      %1647 = vmatpush1.bf16.msra.mxu0 0
      %1648 = vmatprep.subr.bf16.mxu0 0
      %1649 = vmatpush1.bf16.msra.mxu0 0
      %1650 = vmatprep.subr.bf16.mxu0 0
      %1651 = vmatpush1.bf16.msra.mxu0 0
      %1652 = vmatprep.subr.bf16.mxu0 0
      %1653 = vmatpush1.bf16.msra.mxu0 0
      %1654 = vmatprep.subr.bf16.mxu0 0
      %1655 = vmatpush1.bf16.msra.mxu0 0
      %1656 = vmatprep.mubr.bf16.mxu0 0
      %1657 = vmatmul.mubr.bf16.gmra.mrb[0].mxu0 %v1610
      %v1658 = vpop.f32.mrb[0].mxu0
      %v1659 = vadd.f32 %v1310, %v1658
      %v1660 = vpop.f32.mrb[0].mxu0
      %v1661 = vpop.f32.mrb[0].mxu0
      %v1662 = vadd.f32 %v1313, %v1661
      %v1663 = vpop.f32.mrb[0].mxu0
      %1664 = vmatprep.mubr.bf16.mxu0 0
      %1665 = vmatmul.mubr.bf16.gmra.mrb[0].mxu0 %v1613
      %v1666 = vpop.f32.mrb[0].mxu0
      %v1667 = vadd.f32 %v1318, %v1666
      %v1668 = vpop.f32.mrb[0].mxu0
      %v1669 = vpop.f32.mrb[0].mxu0
      %v1670 = vadd.f32 %v1321, %v1669
      %v1671 = vpop.f32.mrb[0].mxu0
      %1672 = vmatprep.mubr.bf16.mxu0 0
      %1673 = vmatmul.mubr.bf16.gmra.mrb[0].mxu0 %v1616
      %v1674 = vpop.f32.mrb[0].mxu0
      %v1675 = vadd.f32 %v1326, %v1674
      %v1676 = vpop.f32.mrb[0].mxu0
      %v1677 = vpop.f32.mrb[0].mxu0
      %v1678 = vadd.f32 %v1329, %v1677
      %v1679 = vpop.f32.mrb[0].mxu0
      %1680 = vmatprep.mubr.bf16.mxu0 0
      %1681 = vmatmul.mubr.bf16.gmra.mrb[0].mxu0 %v1619
      %v1682 = vpop.f32.mrb[0].mxu0
      %v1683 = vadd.f32 %v1334, %v1682
      %v1684 = vpop.f32.mrb[0].mxu0
      %v1685 = vpop.f32.mrb[0].mxu0
      %v1686 = vadd.f32 %v1337, %v1685
      %v1687 = vpop.f32.mrb[0].mxu0
      %1688 = vmatprep.mubr.bf16.mxu0 0
      %1689 = vmatmul.mubr.bf16.gmra.mrb[0].mxu0 %v1622
      %v1690 = vpop.f32.mrb[0].mxu0
      %v1691 = vadd.f32 %v1342, %v1690
      %v1692 = vpop.f32.mrb[0].mxu0
      %v1693 = vpop.f32.mrb[0].mxu0
      %v1694 = vpop.f32.mrb[0].mxu0
      %1695 = vdwg.mxu0
      %s1696 = scalar_lea.vmem %s1, 24
      %v1697 = vld [vmem:[%s1696] sm:$0xf]
      %v1698 = vld [vmem:[%s1696 + $0x4] sm:$0xf]
      %v1701 = vunpack.c.l.b16 %v1697
      %v1702 = vunpack.c.l.b16 %v1698
      %v1703 = vpack.c.b16 %v1702, %v1701
      %1705 = vmatprep.subr.bf16.mxu0 0
      %1706 = vmatpush1.bf16.msra.mxu0 %v1703
      %1707 = vmatprep.subr.bf16.mxu0 0
      %1708 = vmatpush1.bf16.msra.mxu0 0
      %1709 = vmatprep.subr.bf16.mxu0 0
      %1710 = vmatpush1.bf16.msra.mxu0 0
      %1711 = vmatprep.subr.bf16.mxu0 0
      %1712 = vmatpush1.bf16.msra.mxu0 0
      %1713 = vmatprep.subr.bf16.mxu0 0
      %1714 = vmatpush1.bf16.msra.mxu0 0
      %1715 = vmatprep.subr.bf16.mxu0 0
      %1716 = vmatpush1.bf16.msra.mxu0 0
      %1717 = vmatprep.subr.bf16.mxu0 0
      %1718 = vmatpush1.bf16.msra.mxu0 0
      %1719 = vmatprep.subr.bf16.mxu0 0
      %1720 = vmatpush1.bf16.msra.mxu0 0
      %1721 = vmatprep.subr.bf16.mxu0 0
      %1722 = vmatpush1.bf16.msra.mxu0 0
      %1723 = vmatprep.subr.bf16.mxu0 0
      %1724 = vmatpush1.bf16.msra.mxu0 0
      %1725 = vmatprep.subr.bf16.mxu0 0
      %1726 = vmatpush1.bf16.msra.mxu0 0
      %1727 = vmatprep.subr.bf16.mxu0 0
      %1728 = vmatpush1.bf16.msra.mxu0 0
      %1729 = vmatprep.subr.bf16.mxu0 0
      %1730 = vmatpush1.bf16.msra.mxu0 0
      %1731 = vmatprep.subr.bf16.mxu0 0
      %1732 = vmatpush1.bf16.msra.mxu0 0
      %1733 = vmatprep.subr.bf16.mxu0 0
      %1734 = vmatpush1.bf16.msra.mxu0 0
      %1735 = vmatprep.subr.bf16.mxu0 0
      %1736 = vmatpush1.bf16.msra.mxu0 0
      %1737 = vmatprep.mubr.bf16.mxu0 0
      %1738 = vmatmul.mubr.bf16.gmra.mrb[0].mxu0 %v1261
      %v1739 = vpop.f32.mrb[0].mxu0
      %v1740 = vadd.f32 0.0, %v1739
      %v1741 = vpop.f32.mrb[0].mxu0
      %v1742 = vpop.f32.mrb[0].mxu0
      %v1743 = vadd.f32 0.0, %v1742
      %v1744 = vpop.f32.mrb[0].mxu0
      %1745 = vmatprep.mubr.bf16.mxu0 0
      %1746 = vmatmul.mubr.bf16.gmra.mrb[0].mxu0 %v1264
      %v1747 = vpop.f32.mrb[0].mxu0
      %v1748 = vadd.f32 0.0, %v1747
      %v1749 = vpop.f32.mrb[0].mxu0
      %v1750 = vpop.f32.mrb[0].mxu0
      %v1751 = vadd.f32 0.0, %v1750
      %v1752 = vpop.f32.mrb[0].mxu0
      %1753 = vmatprep.mubr.bf16.mxu0 0
      %1754 = vmatmul.mubr.bf16.gmra.mrb[0].mxu0 %v1267
      %v1755 = vpop.f32.mrb[0].mxu0
      %v1756 = vadd.f32 0.0, %v1755
      %v1757 = vpop.f32.mrb[0].mxu0
      %v1758 = vpop.f32.mrb[0].mxu0
      %v1759 = vadd.f32 0.0, %v1758
      %v1760 = vpop.f32.mrb[0].mxu0
      %1761 = vmatprep.mubr.bf16.mxu0 0
      %1762 = vmatmul.mubr.bf16.gmra.mrb[0].mxu0 %v1270
      %v1763 = vpop.f32.mrb[0].mxu0
      %v1764 = vadd.f32 0.0, %v1763
      %v1765 = vpop.f32.mrb[0].mxu0
      %v1766 = vpop.f32.mrb[0].mxu0
      %v1767 = vadd.f32 0.0, %v1766
      %v1768 = vpop.f32.mrb[0].mxu0
      %1769 = vmatprep.mubr.bf16.mxu0 0
      %1770 = vmatmul.mubr.bf16.gmra.mrb[0].mxu0 %v1273
      %v1771 = vpop.f32.mrb[0].mxu0
      %v1772 = vadd.f32 0.0, %v1771
      %v1773 = vpop.f32.mrb[0].mxu0
      %v1774 = vpop.f32.mrb[0].mxu0
      %v1775 = vpop.f32.mrb[0].mxu0
      %1776 = vdwg.mxu0
      %v1779 = vunpack.c.l.b16 %v583
      %v1780 = vunpack.c.l.b16 %v584
      %v1781 = vpack.c.b16 %v1780, %v1779
      %1783 = vmatprep.subr.bf16.mxu0 0
      %1784 = vmatpush1.bf16.msra.mxu0 %v1781
      %1785 = vmatprep.subr.bf16.mxu0 0
      %1786 = vmatpush1.bf16.msra.mxu0 0
      %1787 = vmatprep.subr.bf16.mxu0 0
      %1788 = vmatpush1.bf16.msra.mxu0 0
      %1789 = vmatprep.subr.bf16.mxu0 0
      %1790 = vmatpush1.bf16.msra.mxu0 0
      %1791 = vmatprep.subr.bf16.mxu0 0
      %1792 = vmatpush1.bf16.msra.mxu0 0
      %1793 = vmatprep.subr.bf16.mxu0 0
      %1794 = vmatpush1.bf16.msra.mxu0 0
      %1795 = vmatprep.subr.bf16.mxu0 0
      %1796 = vmatpush1.bf16.msra.mxu0 0
      %1797 = vmatprep.subr.bf16.mxu0 0
      %1798 = vmatpush1.bf16.msra.mxu0 0
      %1799 = vmatprep.subr.bf16.mxu0 0
      %1800 = vmatpush1.bf16.msra.mxu0 0
      %1801 = vmatprep.subr.bf16.mxu0 0
      %1802 = vmatpush1.bf16.msra.mxu0 0
      %1803 = vmatprep.subr.bf16.mxu0 0
      %1804 = vmatpush1.bf16.msra.mxu0 0
      %1805 = vmatprep.subr.bf16.mxu0 0
      %1806 = vmatpush1.bf16.msra.mxu0 0
      %1807 = vmatprep.subr.bf16.mxu0 0
      %1808 = vmatpush1.bf16.msra.mxu0 0
      %1809 = vmatprep.subr.bf16.mxu0 0
      %1810 = vmatpush1.bf16.msra.mxu0 0
      %1811 = vmatprep.subr.bf16.mxu0 0
      %1812 = vmatpush1.bf16.msra.mxu0 0
      %1813 = vmatprep.subr.bf16.mxu0 0
      %1814 = vmatpush1.bf16.msra.mxu0 0
      %1815 = vmatprep.mubr.bf16.mxu0 0
      %1816 = vmatmul.mubr.bf16.gmra.mrb[0].mxu0 %v1610
      %v1817 = vpop.f32.mrb[0].mxu0
      %v1818 = vadd.f32 %v1740, %v1817
      %v1819 = vpop.f32.mrb[0].mxu0
      %v1820 = vpop.f32.mrb[0].mxu0
      %v1821 = vadd.f32 %v1743, %v1820
      %v1822 = vpop.f32.mrb[0].mxu0
      %1823 = vmatprep.mubr.bf16.mxu0 0
      %1824 = vmatmul.mubr.bf16.gmra.mrb[0].mxu0 %v1613
      %v1825 = vpop.f32.mrb[0].mxu0
      %v1826 = vadd.f32 %v1748, %v1825
      %v1827 = vpop.f32.mrb[0].mxu0
      %v1828 = vpop.f32.mrb[0].mxu0
      %v1829 = vadd.f32 %v1751, %v1828
      %v1830 = vpop.f32.mrb[0].mxu0
      %1831 = vmatprep.mubr.bf16.mxu0 0
      %1832 = vmatmul.mubr.bf16.gmra.mrb[0].mxu0 %v1616
      %v1833 = vpop.f32.mrb[0].mxu0
      %v1834 = vadd.f32 %v1756, %v1833
      %v1835 = vpop.f32.mrb[0].mxu0
      %v1836 = vpop.f32.mrb[0].mxu0
      %v1837 = vadd.f32 %v1759, %v1836
      %v1838 = vpop.f32.mrb[0].mxu0
      %1839 = vmatprep.mubr.bf16.mxu0 0
      %1840 = vmatmul.mubr.bf16.gmra.mrb[0].mxu0 %v1619
      %v1841 = vpop.f32.mrb[0].mxu0
      %v1842 = vadd.f32 %v1764, %v1841
      %v1843 = vpop.f32.mrb[0].mxu0
      %v1844 = vpop.f32.mrb[0].mxu0
      %v1845 = vadd.f32 %v1767, %v1844
      %v1846 = vpop.f32.mrb[0].mxu0
      %1847 = vmatprep.mubr.bf16.mxu0 0
      %1848 = vmatmul.mubr.bf16.gmra.mrb[0].mxu0 %v1622
      %v1849 = vpop.f32.mrb[0].mxu0
      %v1850 = vadd.f32 %v1772, %v1849
      %v1851 = vpop.f32.mrb[0].mxu0
      %v1852 = vpop.f32.mrb[0].mxu0
      %v1853 = vpop.f32.mrb[0].mxu0
      %1854 = vdwg.mxu0
      %v1864 = vcombine.high %v1659, %v1659
      %v1866 = vunpack.c.l.s4 1966171168
      %v1867 = vunpack.c.0.s8 %v1866
      %v1868 = vlaneseq
      %v1869 = vshrl.u32 %v1868, 7
      %v1870 = vsub.s32 %v1867, %v1869
      %v1871 = vrot.slane %v1659, %v1870
      %v1873 = vunpack.c.l.s4 1966171168
      %v1874 = vunpack.c.0.s8 %v1873
      %v1875 = vlaneseq
      %v1876 = vshrl.u32 %v1875, 7
      %v1877 = vsub.s32 %v1874, %v1876
      %v1878 = vrot.slane %v1864, %v1877
      %v1879 = vcombine.high %v1871, %v1871
      %v1880 = vcombine.high %v1878, %v1878
      %v1882 = vunpack.c.l.s4 1966171168
      %v1883 = vunpack.c.0.s8 %v1882
      %v1884 = vlaneseq
      %v1885 = vshrl.u32 %v1884, 7
      %v1886 = vsub.s32 %v1883, %v1885
      %v1887 = vrot.slane %v1871, %v1886
      %v1889 = vunpack.c.l.s4 1966171168
      %v1890 = vunpack.c.0.s8 %v1889
      %v1891 = vlaneseq
      %v1892 = vshrl.u32 %v1891, 7
      %v1893 = vsub.s32 %v1890, %v1892
      %v1894 = vrot.slane %v1878, %v1893
      %v1896 = vunpack.c.l.s4 1966171168
      %v1897 = vunpack.c.0.s8 %v1896
      %v1898 = vlaneseq
      %v1899 = vshrl.u32 %v1898, 7
      %v1900 = vsub.s32 %v1897, %v1899
      %v1901 = vrot.slane %v1879, %v1900
      %v1903 = vunpack.c.l.s4 1966171168
      %v1904 = vunpack.c.0.s8 %v1903
      %v1905 = vlaneseq
      %v1906 = vshrl.u32 %v1905, 7
      %v1907 = vsub.s32 %v1904, %v1906
      %v1908 = vrot.slane %v1880, %v1907
      %v1909 = vcombine.high %v1887, %v1887
      %v1910 = vcombine.high %v1894, %v1894
      %v1911 = vcombine.high %v1901, %v1901
      %v1912 = vcombine.high %v1908, %v1908
      %v1913 = vcombine.high %v1662, %v1662
      %v1915 = vunpack.c.l.s4 1966171168
      %v1916 = vunpack.c.0.s8 %v1915
      %v1917 = vlaneseq
      %v1918 = vshrl.u32 %v1917, 7
      %v1919 = vsub.s32 %v1916, %v1918
      %v1920 = vrot.slane %v1662, %v1919
      %v1922 = vunpack.c.l.s4 1966171168
      %v1923 = vunpack.c.0.s8 %v1922
      %v1924 = vlaneseq
      %v1925 = vshrl.u32 %v1924, 7
      %v1926 = vsub.s32 %v1923, %v1925
      %v1927 = vrot.slane %v1913, %v1926
      %v1928 = vcombine.high %v1920, %v1920
      %v1929 = vcombine.high %v1927, %v1927
      %v1931 = vunpack.c.l.s4 1966171168
      %v1932 = vunpack.c.0.s8 %v1931
      %v1933 = vlaneseq
      %v1934 = vshrl.u32 %v1933, 7
      %v1935 = vsub.s32 %v1932, %v1934
      %v1936 = vrot.slane %v1920, %v1935
      %v1938 = vunpack.c.l.s4 1966171168
      %v1939 = vunpack.c.0.s8 %v1938
      %v1940 = vlaneseq
      %v1941 = vshrl.u32 %v1940, 7
      %v1942 = vsub.s32 %v1939, %v1941
      %v1943 = vrot.slane %v1927, %v1942
      %v1945 = vunpack.c.l.s4 1966171168
      %v1946 = vunpack.c.0.s8 %v1945
      %v1947 = vlaneseq
      %v1948 = vshrl.u32 %v1947, 7
      %v1949 = vsub.s32 %v1946, %v1948
      %v1950 = vrot.slane %v1928, %v1949
      %v1952 = vunpack.c.l.s4 1966171168
      %v1953 = vunpack.c.0.s8 %v1952
      %v1954 = vlaneseq
      %v1955 = vshrl.u32 %v1954, 7
      %v1956 = vsub.s32 %v1953, %v1955
      %v1957 = vrot.slane %v1929, %v1956
      %v1958 = vcombine.high %v1936, %v1936
      %v1959 = vcombine.high %v1943, %v1943
      %v1960 = vcombine.high %v1950, %v1950
      %v1961 = vcombine.high %v1957, %v1957
      %v1962 = vcombine.high %v1667, %v1667
      %v1964 = vunpack.c.l.s4 1966171168
      %v1965 = vunpack.c.0.s8 %v1964
      %v1966 = vlaneseq
      %v1967 = vshrl.u32 %v1966, 7
      %v1968 = vsub.s32 %v1965, %v1967
      %v1969 = vrot.slane %v1667, %v1968
      %v1971 = vunpack.c.l.s4 1966171168
      %v1972 = vunpack.c.0.s8 %v1971
      %v1973 = vlaneseq
      %v1974 = vshrl.u32 %v1973, 7
      %v1975 = vsub.s32 %v1972, %v1974
      %v1976 = vrot.slane %v1962, %v1975
      %v1977 = vcombine.high %v1969, %v1969
      %v1978 = vcombine.high %v1976, %v1976
      %v1980 = vunpack.c.l.s4 1966171168
      %v1981 = vunpack.c.0.s8 %v1980
      %v1982 = vlaneseq
      %v1983 = vshrl.u32 %v1982, 7
      %v1984 = vsub.s32 %v1981, %v1983
      %v1985 = vrot.slane %v1969, %v1984
      %v1987 = vunpack.c.l.s4 1966171168
      %v1988 = vunpack.c.0.s8 %v1987
      %v1989 = vlaneseq
      %v1990 = vshrl.u32 %v1989, 7
      %v1991 = vsub.s32 %v1988, %v1990
      %v1992 = vrot.slane %v1976, %v1991
      %v1994 = vunpack.c.l.s4 1966171168
      %v1995 = vunpack.c.0.s8 %v1994
      %v1996 = vlaneseq
      %v1997 = vshrl.u32 %v1996, 7
      %v1998 = vsub.s32 %v1995, %v1997
      %v1999 = vrot.slane %v1977, %v1998
      %v2001 = vunpack.c.l.s4 1966171168
      %v2002 = vunpack.c.0.s8 %v2001
      %v2003 = vlaneseq
      %v2004 = vshrl.u32 %v2003, 7
      %v2005 = vsub.s32 %v2002, %v2004
      %v2006 = vrot.slane %v1978, %v2005
      %v2007 = vcombine.high %v1985, %v1985
      %v2008 = vcombine.high %v1992, %v1992
      %v2009 = vcombine.high %v1999, %v1999
      %v2010 = vcombine.high %v2006, %v2006
      %v2011 = vcombine.high %v1670, %v1670
      %v2013 = vunpack.c.l.s4 1966171168
      %v2014 = vunpack.c.0.s8 %v2013
      %v2015 = vlaneseq
      %v2016 = vshrl.u32 %v2015, 7
      %v2017 = vsub.s32 %v2014, %v2016
      %v2018 = vrot.slane %v1670, %v2017
      %v2020 = vunpack.c.l.s4 1966171168
      %v2021 = vunpack.c.0.s8 %v2020
      %v2022 = vlaneseq
      %v2023 = vshrl.u32 %v2022, 7
      %v2024 = vsub.s32 %v2021, %v2023
      %v2025 = vrot.slane %v2011, %v2024
      %v2026 = vcombine.high %v2018, %v2018
      %v2027 = vcombine.high %v2025, %v2025
      %v2029 = vunpack.c.l.s4 1966171168
      %v2030 = vunpack.c.0.s8 %v2029
      %v2031 = vlaneseq
      %v2032 = vshrl.u32 %v2031, 7
      %v2033 = vsub.s32 %v2030, %v2032
      %v2034 = vrot.slane %v2018, %v2033
      %v2036 = vunpack.c.l.s4 1966171168
      %v2037 = vunpack.c.0.s8 %v2036
      %v2038 = vlaneseq
      %v2039 = vshrl.u32 %v2038, 7
      %v2040 = vsub.s32 %v2037, %v2039
      %v2041 = vrot.slane %v2025, %v2040
      %v2043 = vunpack.c.l.s4 1966171168
      %v2044 = vunpack.c.0.s8 %v2043
      %v2045 = vlaneseq
      %v2046 = vshrl.u32 %v2045, 7
      %v2047 = vsub.s32 %v2044, %v2046
      %v2048 = vrot.slane %v2026, %v2047
      %v2050 = vunpack.c.l.s4 1966171168
      %v2051 = vunpack.c.0.s8 %v2050
      %v2052 = vlaneseq
      %v2053 = vshrl.u32 %v2052, 7
      %v2054 = vsub.s32 %v2051, %v2053
      %v2055 = vrot.slane %v2027, %v2054
      %v2056 = vcombine.high %v2041, %v2041
      %v2057 = vcombine.high %v2048, %v2048
      %v2058 = vcombine.high %v2055, %v2055
      %v2059 = vcombine.high %v1675, %v1675
      %v2061 = vunpack.c.l.s4 1966171168
      %v2062 = vunpack.c.0.s8 %v2061
      %v2063 = vlaneseq
      %v2064 = vshrl.u32 %v2063, 7
      %v2065 = vsub.s32 %v2062, %v2064
      %v2066 = vrot.slane %v1675, %v2065
      %v2068 = vunpack.c.l.s4 1966171168
      %v2069 = vunpack.c.0.s8 %v2068
      %v2070 = vlaneseq
      %v2071 = vshrl.u32 %v2070, 7
      %v2072 = vsub.s32 %v2069, %v2071
      %v2073 = vrot.slane %v2059, %v2072
      %v2074 = vcombine.high %v2066, %v2066
      %v2075 = vcombine.high %v2073, %v2073
      %v2077 = vunpack.c.l.s4 1966171168
      %v2078 = vunpack.c.0.s8 %v2077
      %v2079 = vlaneseq
      %v2080 = vshrl.u32 %v2079, 7
      %v2081 = vsub.s32 %v2078, %v2080
      %v2082 = vrot.slane %v2066, %v2081
      %v2084 = vunpack.c.l.s4 1966171168
      %v2085 = vunpack.c.0.s8 %v2084
      %v2086 = vlaneseq
      %v2087 = vshrl.u32 %v2086, 7
      %v2088 = vsub.s32 %v2085, %v2087
      %v2089 = vrot.slane %v2073, %v2088
      %v2091 = vunpack.c.l.s4 1966171168
      %v2092 = vunpack.c.0.s8 %v2091
      %v2093 = vlaneseq
      %v2094 = vshrl.u32 %v2093, 7
      %v2095 = vsub.s32 %v2092, %v2094
      %v2096 = vrot.slane %v2074, %v2095
      %v2098 = vunpack.c.l.s4 1966171168
      %v2099 = vunpack.c.0.s8 %v2098
      %v2100 = vlaneseq
      %v2101 = vshrl.u32 %v2100, 7
      %v2102 = vsub.s32 %v2099, %v2101
      %v2103 = vrot.slane %v2075, %v2102
      %v2104 = vcombine.high %v2082, %v2082
      %v2105 = vcombine.high %v2089, %v2089
      %v2106 = vcombine.high %v2103, %v2103
      %v2107 = vcombine.high %v1678, %v1678
      %v2109 = vunpack.c.l.s4 1966171168
      %v2110 = vunpack.c.0.s8 %v2109
      %v2111 = vlaneseq
      %v2112 = vshrl.u32 %v2111, 7
      %v2113 = vsub.s32 %v2110, %v2112
      %v2114 = vrot.slane %v1678, %v2113
      %v2116 = vunpack.c.l.s4 1966171168
      %v2117 = vunpack.c.0.s8 %v2116
      %v2118 = vlaneseq
      %v2119 = vshrl.u32 %v2118, 7
      %v2120 = vsub.s32 %v2117, %v2119
      %v2121 = vrot.slane %v2107, %v2120
      %v2122 = vcombine.high %v2114, %v2114
      %v2123 = vcombine.high %v2121, %v2121
      %v2125 = vunpack.c.l.s4 1966171168
      %v2126 = vunpack.c.0.s8 %v2125
      %v2127 = vlaneseq
      %v2128 = vshrl.u32 %v2127, 7
      %v2129 = vsub.s32 %v2126, %v2128
      %v2130 = vrot.slane %v2114, %v2129
      %v2132 = vunpack.c.l.s4 1966171168
      %v2133 = vunpack.c.0.s8 %v2132
      %v2134 = vlaneseq
      %v2135 = vshrl.u32 %v2134, 7
      %v2136 = vsub.s32 %v2133, %v2135
      %v2137 = vrot.slane %v2121, %v2136
      %v2139 = vunpack.c.l.s4 1966171168
      %v2140 = vunpack.c.0.s8 %v2139
      %v2141 = vlaneseq
      %v2142 = vshrl.u32 %v2141, 7
      %v2143 = vsub.s32 %v2140, %v2142
      %v2144 = vrot.slane %v2122, %v2143
      %v2146 = vunpack.c.l.s4 1966171168
      %v2147 = vunpack.c.0.s8 %v2146
      %v2148 = vlaneseq
      %v2149 = vshrl.u32 %v2148, 7
      %v2150 = vsub.s32 %v2147, %v2149
      %v2151 = vrot.slane %v2123, %v2150
      %v2152 = vcombine.high %v2130, %v2130
      %v2153 = vcombine.high %v2137, %v2137
      %v2154 = vcombine.high %v2144, %v2144
      %v2155 = vcombine.high %v2151, %v2151
      %v2156 = vcombine.high %v1683, %v1683
      %v2158 = vunpack.c.l.s4 1966171168
      %v2159 = vunpack.c.0.s8 %v2158
      %v2160 = vlaneseq
      %v2161 = vshrl.u32 %v2160, 7
      %v2162 = vsub.s32 %v2159, %v2161
      %v2163 = vrot.slane %v1683, %v2162
      %v2165 = vunpack.c.l.s4 1966171168
      %v2166 = vunpack.c.0.s8 %v2165
      %v2167 = vlaneseq
      %v2168 = vshrl.u32 %v2167, 7
      %v2169 = vsub.s32 %v2166, %v2168
      %v2170 = vrot.slane %v2156, %v2169
      %v2171 = vcombine.high %v2163, %v2163
      %v2172 = vcombine.high %v2170, %v2170
      %v2174 = vunpack.c.l.s4 1966171168
      %v2175 = vunpack.c.0.s8 %v2174
      %v2176 = vlaneseq
      %v2177 = vshrl.u32 %v2176, 7
      %v2178 = vsub.s32 %v2175, %v2177
      %v2179 = vrot.slane %v2163, %v2178
      %v2181 = vunpack.c.l.s4 1966171168
      %v2182 = vunpack.c.0.s8 %v2181
      %v2183 = vlaneseq
      %v2184 = vshrl.u32 %v2183, 7
      %v2185 = vsub.s32 %v2182, %v2184
      %v2186 = vrot.slane %v2170, %v2185
      %v2188 = vunpack.c.l.s4 1966171168
      %v2189 = vunpack.c.0.s8 %v2188
      %v2190 = vlaneseq
      %v2191 = vshrl.u32 %v2190, 7
      %v2192 = vsub.s32 %v2189, %v2191
      %v2193 = vrot.slane %v2171, %v2192
      %v2195 = vunpack.c.l.s4 1966171168
      %v2196 = vunpack.c.0.s8 %v2195
      %v2197 = vlaneseq
      %v2198 = vshrl.u32 %v2197, 7
      %v2199 = vsub.s32 %v2196, %v2198
      %v2200 = vrot.slane %v2172, %v2199
      %v2201 = vcombine.high %v2179, %v2179
      %v2202 = vcombine.high %v2186, %v2186
      %v2203 = vcombine.high %v2193, %v2193
      %v2204 = vcombine.high %v2200, %v2200
      %v2205 = vcombine.high %v1686, %v1686
      %v2207 = vunpack.c.l.s4 1966171168
      %v2208 = vunpack.c.0.s8 %v2207
      %v2209 = vlaneseq
      %v2210 = vshrl.u32 %v2209, 7
      %v2211 = vsub.s32 %v2208, %v2210
      %v2212 = vrot.slane %v1686, %v2211
      %v2214 = vunpack.c.l.s4 1966171168
      %v2215 = vunpack.c.0.s8 %v2214
      %v2216 = vlaneseq
      %v2217 = vshrl.u32 %v2216, 7
      %v2218 = vsub.s32 %v2215, %v2217
      %v2219 = vrot.slane %v2205, %v2218
      %v2220 = vcombine.high %v2212, %v2212
      %v2221 = vcombine.high %v2219, %v2219
      %v2223 = vunpack.c.l.s4 1966171168
      %v2224 = vunpack.c.0.s8 %v2223
      %v2225 = vlaneseq
      %v2226 = vshrl.u32 %v2225, 7
      %v2227 = vsub.s32 %v2224, %v2226
      %v2228 = vrot.slane %v2212, %v2227
      %v2230 = vunpack.c.l.s4 1966171168
      %v2231 = vunpack.c.0.s8 %v2230
      %v2232 = vlaneseq
      %v2233 = vshrl.u32 %v2232, 7
      %v2234 = vsub.s32 %v2231, %v2233
      %v2235 = vrot.slane %v2219, %v2234
      %v2237 = vunpack.c.l.s4 1966171168
      %v2238 = vunpack.c.0.s8 %v2237
      %v2239 = vlaneseq
      %v2240 = vshrl.u32 %v2239, 7
      %v2241 = vsub.s32 %v2238, %v2240
      %v2242 = vrot.slane %v2220, %v2241
      %v2244 = vunpack.c.l.s4 1966171168
      %v2245 = vunpack.c.0.s8 %v2244
      %v2246 = vlaneseq
      %v2247 = vshrl.u32 %v2246, 7
      %v2248 = vsub.s32 %v2245, %v2247
      %v2249 = vrot.slane %v2221, %v2248
      %v2250 = vcombine.high %v2228, %v2228
      %v2251 = vcombine.high %v2242, %v2242
      %v2252 = vcombine.high %v2249, %v2249
      %v2253 = vcombine.high %v1691, %v1691
      %v2255 = vunpack.c.l.s4 1966171168
      %v2256 = vunpack.c.0.s8 %v2255
      %v2257 = vlaneseq
      %v2258 = vshrl.u32 %v2257, 7
      %v2259 = vsub.s32 %v2256, %v2258
      %v2260 = vrot.slane %v1691, %v2259
      %v2262 = vunpack.c.l.s4 1966171168
      %v2263 = vunpack.c.0.s8 %v2262
      %v2264 = vlaneseq
      %v2265 = vshrl.u32 %v2264, 7
      %v2266 = vsub.s32 %v2263, %v2265
      %v2267 = vrot.slane %v2253, %v2266
      %v2268 = vcombine.high %v2260, %v2260
      %v2269 = vcombine.high %v2267, %v2267
      %v2271 = vunpack.c.l.s4 1966171168
      %v2272 = vunpack.c.0.s8 %v2271
      %v2273 = vlaneseq
      %v2274 = vshrl.u32 %v2273, 7
      %v2275 = vsub.s32 %v2272, %v2274
      %v2276 = vrot.slane %v2260, %v2275
      %v2278 = vunpack.c.l.s4 1966171168
      %v2279 = vunpack.c.0.s8 %v2278
      %v2280 = vlaneseq
      %v2281 = vshrl.u32 %v2280, 7
      %v2282 = vsub.s32 %v2279, %v2281
      %v2283 = vrot.slane %v2267, %v2282
      %v2285 = vunpack.c.l.s4 1966171168
      %v2286 = vunpack.c.0.s8 %v2285
      %v2287 = vlaneseq
      %v2288 = vshrl.u32 %v2287, 7
      %v2289 = vsub.s32 %v2286, %v2288
      %v2290 = vrot.slane %v2268, %v2289
      %v2292 = vunpack.c.l.s4 1966171168
      %v2293 = vunpack.c.0.s8 %v2292
      %v2294 = vlaneseq
      %v2295 = vshrl.u32 %v2294, 7
      %v2296 = vsub.s32 %v2293, %v2295
      %v2297 = vrot.slane %v2269, %v2296
      %v2298 = vcombine.high %v2276, %v2276
      %v2299 = vcombine.high %v2283, %v2283
      %v2300 = vcombine.high %v2290, %v2290
      %v2365 = vadd.f32 %v1887, 0.0
      %v2366 = vadd.f32 %v1901, 0.0
      %v2367 = vadd.f32 %v1909, 0.0
      %v2368 = vadd.f32 %v1911, 0.0
      %v2369 = vadd.f32 %v1894, 0.0
      %v2370 = vadd.f32 %v1908, 0.0
      %v2371 = vadd.f32 %v1910, 0.0
      %v2372 = vadd.f32 %v1912, 0.0
      %v2373 = vadd.f32 %v1950, 0.0
      %v2374 = vadd.f32 %v1958, 0.0
      %v2375 = vadd.f32 %v1960, 0.0
      %v2376 = vadd.f32 %v1943, 0.0
      %v2377 = vadd.f32 %v1957, 0.0
      %v2378 = vadd.f32 %v1959, 0.0
      %v2379 = vadd.f32 %v1961, 0.0
      %v2380 = vadd.f32 %v1985, 0.0
      %v2381 = vadd.f32 %v2007, 0.0
      %v2382 = vadd.f32 %v2009, 0.0
      %v2383 = vadd.f32 %v1992, 0.0
      %v2384 = vadd.f32 %v2006, 0.0
      %v2385 = vadd.f32 %v2008, 0.0
      %v2386 = vadd.f32 %v2010, 0.0
      %v2387 = vadd.f32 %v2034, 0.0
      %v2388 = vadd.f32 %v2048, 0.0
      %v2389 = vadd.f32 %v2057, 0.0
      %v2390 = vadd.f32 %v2041, 0.0
      %v2391 = vadd.f32 %v2055, 0.0
      %v2392 = vadd.f32 %v2056, 0.0
      %v2393 = vadd.f32 %v2058, 0.0
      %v2394 = vadd.f32 %v2082, 0.0
      %v2395 = vadd.f32 %v2096, 0.0
      %v2396 = vadd.f32 %v2104, 0.0
      %v2397 = vadd.f32 %v2089, 0.0
      %v2398 = vadd.f32 %v2103, 0.0
      %v2399 = vadd.f32 %v2105, 0.0
      %v2400 = vadd.f32 %v2106, 0.0
      %v2401 = vadd.f32 %v2130, 0.0
      %v2402 = vadd.f32 %v2144, 0.0
      %v2403 = vadd.f32 %v2152, 0.0
      %v2404 = vadd.f32 %v2154, 0.0
      %v2405 = vadd.f32 %v2151, 0.0
      %v2406 = vadd.f32 %v2153, 0.0
      %v2407 = vadd.f32 %v2155, 0.0
      %v2408 = vadd.f32 %v2179, 0.0
      %v2409 = vadd.f32 %v2193, 0.0
      %v2410 = vadd.f32 %v2201, 0.0
      %v2411 = vadd.f32 %v2203, 0.0
      %v2412 = vadd.f32 %v2186, 0.0
      %v2413 = vadd.f32 %v2202, 0.0
      %v2414 = vadd.f32 %v2204, 0.0
      %v2415 = vadd.f32 %v2228, 0.0
      %v2416 = vadd.f32 %v2242, 0.0
      %v2417 = vadd.f32 %v2250, 0.0
      %v2418 = vadd.f32 %v2251, 0.0
      %v2419 = vadd.f32 %v2235, 0.0
      %v2420 = vadd.f32 %v2249, 0.0
      %v2421 = vadd.f32 %v2252, 0.0
      %v2422 = vadd.f32 %v2276, 0.0
      %v2423 = vadd.f32 %v2290, 0.0
      %v2424 = vadd.f32 %v2298, 0.0
      %v2425 = vadd.f32 %v2300, 0.0
      %v2426 = vadd.f32 %v2283, 0.0
      %v2427 = vadd.f32 %v2297, 0.0
      %v2428 = vadd.f32 %v2299, 0.0
      %v2438 = vcombine.high %v1818, %v1818
      %v2440 = vunpack.c.l.s4 1966171168
      %v2441 = vunpack.c.0.s8 %v2440
      %v2442 = vlaneseq
      %v2443 = vshrl.u32 %v2442, 7
      %v2444 = vsub.s32 %v2441, %v2443
      %v2445 = vrot.slane %v1818, %v2444
      %v2447 = vunpack.c.l.s4 1966171168
      %v2448 = vunpack.c.0.s8 %v2447
      %v2449 = vlaneseq
      %v2450 = vshrl.u32 %v2449, 7
      %v2451 = vsub.s32 %v2448, %v2450
      %v2452 = vrot.slane %v2438, %v2451
      %v2453 = vcombine.high %v2445, %v2445
      %v2454 = vcombine.high %v2452, %v2452
      %v2456 = vunpack.c.l.s4 1966171168
      %v2457 = vunpack.c.0.s8 %v2456
      %v2458 = vlaneseq
      %v2459 = vshrl.u32 %v2458, 7
      %v2460 = vsub.s32 %v2457, %v2459
      %v2461 = vrot.slane %v2445, %v2460
      %v2463 = vunpack.c.l.s4 1966171168
      %v2464 = vunpack.c.0.s8 %v2463
      %v2465 = vlaneseq
      %v2466 = vshrl.u32 %v2465, 7
      %v2467 = vsub.s32 %v2464, %v2466
      %v2468 = vrot.slane %v2452, %v2467
      %v2470 = vunpack.c.l.s4 1966171168
      %v2471 = vunpack.c.0.s8 %v2470
      %v2472 = vlaneseq
      %v2473 = vshrl.u32 %v2472, 7
      %v2474 = vsub.s32 %v2471, %v2473
      %v2475 = vrot.slane %v2453, %v2474
      %v2477 = vunpack.c.l.s4 1966171168
      %v2478 = vunpack.c.0.s8 %v2477
      %v2479 = vlaneseq
      %v2480 = vshrl.u32 %v2479, 7
      %v2481 = vsub.s32 %v2478, %v2480
      %v2482 = vrot.slane %v2454, %v2481
      %v2483 = vcombine.high %v2461, %v2461
      %v2484 = vcombine.high %v2468, %v2468
      %v2485 = vcombine.high %v2475, %v2475
      %v2486 = vcombine.high %v2482, %v2482
      %v2487 = vcombine.high %v1821, %v1821
      %v2489 = vunpack.c.l.s4 1966171168
      %v2490 = vunpack.c.0.s8 %v2489
      %v2491 = vlaneseq
      %v2492 = vshrl.u32 %v2491, 7
      %v2493 = vsub.s32 %v2490, %v2492
      %v2494 = vrot.slane %v1821, %v2493
      %v2496 = vunpack.c.l.s4 1966171168
      %v2497 = vunpack.c.0.s8 %v2496
      %v2498 = vlaneseq
      %v2499 = vshrl.u32 %v2498, 7
      %v2500 = vsub.s32 %v2497, %v2499
      %v2501 = vrot.slane %v2487, %v2500
      %v2502 = vcombine.high %v2494, %v2494
      %v2503 = vcombine.high %v2501, %v2501
      %v2505 = vunpack.c.l.s4 1966171168
      %v2506 = vunpack.c.0.s8 %v2505
      %v2507 = vlaneseq
      %v2508 = vshrl.u32 %v2507, 7
      %v2509 = vsub.s32 %v2506, %v2508
      %v2510 = vrot.slane %v2494, %v2509
      %v2512 = vunpack.c.l.s4 1966171168
      %v2513 = vunpack.c.0.s8 %v2512
      %v2514 = vlaneseq
      %v2515 = vshrl.u32 %v2514, 7
      %v2516 = vsub.s32 %v2513, %v2515
      %v2517 = vrot.slane %v2501, %v2516
      %v2519 = vunpack.c.l.s4 1966171168
      %v2520 = vunpack.c.0.s8 %v2519
      %v2521 = vlaneseq
      %v2522 = vshrl.u32 %v2521, 7
      %v2523 = vsub.s32 %v2520, %v2522
      %v2524 = vrot.slane %v2502, %v2523
      %v2526 = vunpack.c.l.s4 1966171168
      %v2527 = vunpack.c.0.s8 %v2526
      %v2528 = vlaneseq
      %v2529 = vshrl.u32 %v2528, 7
      %v2530 = vsub.s32 %v2527, %v2529
      %v2531 = vrot.slane %v2503, %v2530
      %v2532 = vcombine.high %v2510, %v2510
      %v2533 = vcombine.high %v2517, %v2517
      %v2534 = vcombine.high %v2524, %v2524
      %v2535 = vcombine.high %v2531, %v2531
      %v2536 = vcombine.high %v1826, %v1826
      %v2538 = vunpack.c.l.s4 1966171168
      %v2539 = vunpack.c.0.s8 %v2538
      %v2540 = vlaneseq
      %v2541 = vshrl.u32 %v2540, 7
      %v2542 = vsub.s32 %v2539, %v2541
      %v2543 = vrot.slane %v1826, %v2542
      %v2545 = vunpack.c.l.s4 1966171168
      %v2546 = vunpack.c.0.s8 %v2545
      %v2547 = vlaneseq
      %v2548 = vshrl.u32 %v2547, 7
      %v2549 = vsub.s32 %v2546, %v2548
      %v2550 = vrot.slane %v2536, %v2549
      %v2551 = vcombine.high %v2543, %v2543
      %v2552 = vcombine.high %v2550, %v2550
      %v2554 = vunpack.c.l.s4 1966171168
      %v2555 = vunpack.c.0.s8 %v2554
      %v2556 = vlaneseq
      %v2557 = vshrl.u32 %v2556, 7
      %v2558 = vsub.s32 %v2555, %v2557
      %v2559 = vrot.slane %v2543, %v2558
      %v2561 = vunpack.c.l.s4 1966171168
      %v2562 = vunpack.c.0.s8 %v2561
      %v2563 = vlaneseq
      %v2564 = vshrl.u32 %v2563, 7
      %v2565 = vsub.s32 %v2562, %v2564
      %v2566 = vrot.slane %v2550, %v2565
      %v2568 = vunpack.c.l.s4 1966171168
      %v2569 = vunpack.c.0.s8 %v2568
      %v2570 = vlaneseq
      %v2571 = vshrl.u32 %v2570, 7
      %v2572 = vsub.s32 %v2569, %v2571
      %v2573 = vrot.slane %v2551, %v2572
      %v2575 = vunpack.c.l.s4 1966171168
      %v2576 = vunpack.c.0.s8 %v2575
      %v2577 = vlaneseq
      %v2578 = vshrl.u32 %v2577, 7
      %v2579 = vsub.s32 %v2576, %v2578
      %v2580 = vrot.slane %v2552, %v2579
      %v2581 = vcombine.high %v2566, %v2566
      %v2582 = vcombine.high %v2573, %v2573
      %v2583 = vcombine.high %v2580, %v2580
      %v2584 = vcombine.high %v1829, %v1829
      %v2586 = vunpack.c.l.s4 1966171168
      %v2587 = vunpack.c.0.s8 %v2586
      %v2588 = vlaneseq
      %v2589 = vshrl.u32 %v2588, 7
      %v2590 = vsub.s32 %v2587, %v2589
      %v2591 = vrot.slane %v1829, %v2590
      %v2593 = vunpack.c.l.s4 1966171168
      %v2594 = vunpack.c.0.s8 %v2593
      %v2595 = vlaneseq
      %v2596 = vshrl.u32 %v2595, 7
      %v2597 = vsub.s32 %v2594, %v2596
      %v2598 = vrot.slane %v2584, %v2597
      %v2599 = vcombine.high %v2591, %v2591
      %v2600 = vcombine.high %v2598, %v2598
      %v2602 = vunpack.c.l.s4 1966171168
      %v2603 = vunpack.c.0.s8 %v2602
      %v2604 = vlaneseq
      %v2605 = vshrl.u32 %v2604, 7
      %v2606 = vsub.s32 %v2603, %v2605
      %v2607 = vrot.slane %v2591, %v2606
      %v2609 = vunpack.c.l.s4 1966171168
      %v2610 = vunpack.c.0.s8 %v2609
      %v2611 = vlaneseq
      %v2612 = vshrl.u32 %v2611, 7
      %v2613 = vsub.s32 %v2610, %v2612
      %v2614 = vrot.slane %v2598, %v2613
      %v2616 = vunpack.c.l.s4 1966171168
      %v2617 = vunpack.c.0.s8 %v2616
      %v2618 = vlaneseq
      %v2619 = vshrl.u32 %v2618, 7
      %v2620 = vsub.s32 %v2617, %v2619
      %v2621 = vrot.slane %v2599, %v2620
      %v2623 = vunpack.c.l.s4 1966171168
      %v2624 = vunpack.c.0.s8 %v2623
      %v2625 = vlaneseq
      %v2626 = vshrl.u32 %v2625, 7
      %v2627 = vsub.s32 %v2624, %v2626
      %v2628 = vrot.slane %v2600, %v2627
      %v2629 = vcombine.high %v2607, %v2607
      %v2630 = vcombine.high %v2614, %v2614
      %v2631 = vcombine.high %v2628, %v2628
      %v2632 = vcombine.high %v1834, %v1834
      %v2634 = vunpack.c.l.s4 1966171168
      %v2635 = vunpack.c.0.s8 %v2634
      %v2636 = vlaneseq
      %v2637 = vshrl.u32 %v2636, 7
      %v2638 = vsub.s32 %v2635, %v2637
      %v2639 = vrot.slane %v1834, %v2638
      %v2641 = vunpack.c.l.s4 1966171168
      %v2642 = vunpack.c.0.s8 %v2641
      %v2643 = vlaneseq
      %v2644 = vshrl.u32 %v2643, 7
      %v2645 = vsub.s32 %v2642, %v2644
      %v2646 = vrot.slane %v2632, %v2645
      %v2647 = vcombine.high %v2639, %v2639
      %v2648 = vcombine.high %v2646, %v2646
      %v2650 = vunpack.c.l.s4 1966171168
      %v2651 = vunpack.c.0.s8 %v2650
      %v2652 = vlaneseq
      %v2653 = vshrl.u32 %v2652, 7
      %v2654 = vsub.s32 %v2651, %v2653
      %v2655 = vrot.slane %v2639, %v2654
      %v2657 = vunpack.c.l.s4 1966171168
      %v2658 = vunpack.c.0.s8 %v2657
      %v2659 = vlaneseq
      %v2660 = vshrl.u32 %v2659, 7
      %v2661 = vsub.s32 %v2658, %v2660
      %v2662 = vrot.slane %v2646, %v2661
      %v2664 = vunpack.c.l.s4 1966171168
      %v2665 = vunpack.c.0.s8 %v2664
      %v2666 = vlaneseq
      %v2667 = vshrl.u32 %v2666, 7
      %v2668 = vsub.s32 %v2665, %v2667
      %v2669 = vrot.slane %v2647, %v2668
      %v2671 = vunpack.c.l.s4 1966171168
      %v2672 = vunpack.c.0.s8 %v2671
      %v2673 = vlaneseq
      %v2674 = vshrl.u32 %v2673, 7
      %v2675 = vsub.s32 %v2672, %v2674
      %v2676 = vrot.slane %v2648, %v2675
      %v2677 = vcombine.high %v2655, %v2655
      %v2678 = vcombine.high %v2662, %v2662
      %v2679 = vcombine.high %v2669, %v2669
      %v2680 = vcombine.high %v2676, %v2676
      %v2681 = vcombine.high %v1837, %v1837
      %v2683 = vunpack.c.l.s4 1966171168
      %v2684 = vunpack.c.0.s8 %v2683
      %v2685 = vlaneseq
      %v2686 = vshrl.u32 %v2685, 7
      %v2687 = vsub.s32 %v2684, %v2686
      %v2688 = vrot.slane %v1837, %v2687
      %v2690 = vunpack.c.l.s4 1966171168
      %v2691 = vunpack.c.0.s8 %v2690
      %v2692 = vlaneseq
      %v2693 = vshrl.u32 %v2692, 7
      %v2694 = vsub.s32 %v2691, %v2693
      %v2695 = vrot.slane %v2681, %v2694
      %v2696 = vcombine.high %v2688, %v2688
      %v2697 = vcombine.high %v2695, %v2695
      %v2699 = vunpack.c.l.s4 1966171168
      %v2700 = vunpack.c.0.s8 %v2699
      %v2701 = vlaneseq
      %v2702 = vshrl.u32 %v2701, 7
      %v2703 = vsub.s32 %v2700, %v2702
      %v2704 = vrot.slane %v2688, %v2703
      %v2706 = vunpack.c.l.s4 1966171168
      %v2707 = vunpack.c.0.s8 %v2706
      %v2708 = vlaneseq
      %v2709 = vshrl.u32 %v2708, 7
      %v2710 = vsub.s32 %v2707, %v2709
      %v2711 = vrot.slane %v2695, %v2710
      %v2713 = vunpack.c.l.s4 1966171168
      %v2714 = vunpack.c.0.s8 %v2713
      %v2715 = vlaneseq
      %v2716 = vshrl.u32 %v2715, 7
      %v2717 = vsub.s32 %v2714, %v2716
      %v2718 = vrot.slane %v2696, %v2717
      %v2720 = vunpack.c.l.s4 1966171168
      %v2721 = vunpack.c.0.s8 %v2720
      %v2722 = vlaneseq
      %v2723 = vshrl.u32 %v2722, 7
      %v2724 = vsub.s32 %v2721, %v2723
      %v2725 = vrot.slane %v2697, %v2724
      %v2726 = vcombine.high %v2704, %v2704
      %v2727 = vcombine.high %v2711, %v2711
      %v2728 = vcombine.high %v2718, %v2718
      %v2729 = vcombine.high %v2725, %v2725
      %v2730 = vcombine.high %v1842, %v1842
      %v2732 = vunpack.c.l.s4 1966171168
      %v2733 = vunpack.c.0.s8 %v2732
      %v2734 = vlaneseq
      %v2735 = vshrl.u32 %v2734, 7
      %v2736 = vsub.s32 %v2733, %v2735
      %v2737 = vrot.slane %v1842, %v2736
      %v2739 = vunpack.c.l.s4 1966171168
      %v2740 = vunpack.c.0.s8 %v2739
      %v2741 = vlaneseq
      %v2742 = vshrl.u32 %v2741, 7
      %v2743 = vsub.s32 %v2740, %v2742
      %v2744 = vrot.slane %v2730, %v2743
      %v2745 = vcombine.high %v2737, %v2737
      %v2746 = vcombine.high %v2744, %v2744
      %v2748 = vunpack.c.l.s4 1966171168
      %v2749 = vunpack.c.0.s8 %v2748
      %v2750 = vlaneseq
      %v2751 = vshrl.u32 %v2750, 7
      %v2752 = vsub.s32 %v2749, %v2751
      %v2753 = vrot.slane %v2737, %v2752
      %v2755 = vunpack.c.l.s4 1966171168
      %v2756 = vunpack.c.0.s8 %v2755
      %v2757 = vlaneseq
      %v2758 = vshrl.u32 %v2757, 7
      %v2759 = vsub.s32 %v2756, %v2758
      %v2760 = vrot.slane %v2744, %v2759
      %v2762 = vunpack.c.l.s4 1966171168
      %v2763 = vunpack.c.0.s8 %v2762
      %v2764 = vlaneseq
      %v2765 = vshrl.u32 %v2764, 7
      %v2766 = vsub.s32 %v2763, %v2765
      %v2767 = vrot.slane %v2745, %v2766
      %v2769 = vunpack.c.l.s4 1966171168
      %v2770 = vunpack.c.0.s8 %v2769
      %v2771 = vlaneseq
      %v2772 = vshrl.u32 %v2771, 7
      %v2773 = vsub.s32 %v2770, %v2772
      %v2774 = vrot.slane %v2746, %v2773
      %v2775 = vcombine.high %v2753, %v2753
      %v2776 = vcombine.high %v2767, %v2767
      %v2777 = vcombine.high %v2774, %v2774
      %v2778 = vcombine.high %v1845, %v1845
      %v2780 = vunpack.c.l.s4 1966171168
      %v2781 = vunpack.c.0.s8 %v2780
      %v2782 = vlaneseq
      %v2783 = vshrl.u32 %v2782, 7
      %v2784 = vsub.s32 %v2781, %v2783
      %v2785 = vrot.slane %v1845, %v2784
      %v2787 = vunpack.c.l.s4 1966171168
      %v2788 = vunpack.c.0.s8 %v2787
      %v2789 = vlaneseq
      %v2790 = vshrl.u32 %v2789, 7
      %v2791 = vsub.s32 %v2788, %v2790
      %v2792 = vrot.slane %v2778, %v2791
      %v2793 = vcombine.high %v2785, %v2785
      %v2794 = vcombine.high %v2792, %v2792
      %v2796 = vunpack.c.l.s4 1966171168
      %v2797 = vunpack.c.0.s8 %v2796
      %v2798 = vlaneseq
      %v2799 = vshrl.u32 %v2798, 7
      %v2800 = vsub.s32 %v2797, %v2799
      %v2801 = vrot.slane %v2785, %v2800
      %v2803 = vunpack.c.l.s4 1966171168
      %v2804 = vunpack.c.0.s8 %v2803
      %v2805 = vlaneseq
      %v2806 = vshrl.u32 %v2805, 7
      %v2807 = vsub.s32 %v2804, %v2806
      %v2808 = vrot.slane %v2792, %v2807
      %v2810 = vunpack.c.l.s4 1966171168
      %v2811 = vunpack.c.0.s8 %v2810
      %v2812 = vlaneseq
      %v2813 = vshrl.u32 %v2812, 7
      %v2814 = vsub.s32 %v2811, %v2813
      %v2815 = vrot.slane %v2793, %v2814
      %v2817 = vunpack.c.l.s4 1966171168
      %v2818 = vunpack.c.0.s8 %v2817
      %v2819 = vlaneseq
      %v2820 = vshrl.u32 %v2819, 7
      %v2821 = vsub.s32 %v2818, %v2820
      %v2822 = vrot.slane %v2794, %v2821
      %v2823 = vcombine.high %v2801, %v2801
      %v2824 = vcombine.high %v2808, %v2808
      %v2825 = vcombine.high %v2815, %v2815
      %v2826 = vcombine.high %v1850, %v1850
      %v2828 = vunpack.c.l.s4 1966171168
      %v2829 = vunpack.c.0.s8 %v2828
      %v2830 = vlaneseq
      %v2831 = vshrl.u32 %v2830, 7
      %v2832 = vsub.s32 %v2829, %v2831
      %v2833 = vrot.slane %v1850, %v2832
      %v2835 = vunpack.c.l.s4 1966171168
      %v2836 = vunpack.c.0.s8 %v2835
      %v2837 = vlaneseq
      %v2838 = vshrl.u32 %v2837, 7
      %v2839 = vsub.s32 %v2836, %v2838
      %v2840 = vrot.slane %v2826, %v2839
      %v2841 = vcombine.high %v2833, %v2833
      %v2842 = vcombine.high %v2840, %v2840
      %v2844 = vunpack.c.l.s4 1966171168
      %v2845 = vunpack.c.0.s8 %v2844
      %v2846 = vlaneseq
      %v2847 = vshrl.u32 %v2846, 7
      %v2848 = vsub.s32 %v2845, %v2847
      %v2849 = vrot.slane %v2833, %v2848
      %v2851 = vunpack.c.l.s4 1966171168
      %v2852 = vunpack.c.0.s8 %v2851
      %v2853 = vlaneseq
      %v2854 = vshrl.u32 %v2853, 7
      %v2855 = vsub.s32 %v2852, %v2854
      %v2856 = vrot.slane %v2840, %v2855
      %v2858 = vunpack.c.l.s4 1966171168
      %v2859 = vunpack.c.0.s8 %v2858
      %v2860 = vlaneseq
      %v2861 = vshrl.u32 %v2860, 7
      %v2862 = vsub.s32 %v2859, %v2861
      %v2863 = vrot.slane %v2841, %v2862
      %v2865 = vunpack.c.l.s4 1966171168
      %v2866 = vunpack.c.0.s8 %v2865
      %v2867 = vlaneseq
      %v2868 = vshrl.u32 %v2867, 7
      %v2869 = vsub.s32 %v2866, %v2868
      %v2870 = vrot.slane %v2842, %v2869
      %v2871 = vcombine.high %v2849, %v2849
      %v2872 = vcombine.high %v2856, %v2856
      %v2873 = vcombine.high %v2863, %v2863
      %v2874 = vcombine.high %v2870, %v2870
      %v2939 = vadd.f32 %v2365, %v2475
      %v2940 = vadd.f32 %v2366, %v2483
      %v2941 = vadd.f32 %v2367, %v2485
      %v2942 = vadd.f32 %v2368, %v2468
      %v2943 = vadd.f32 %v2369, %v2482
      %v2944 = vadd.f32 %v2370, %v2484
      %v2945 = vadd.f32 %v2371, %v2486
      %v2946 = vadd.f32 %v2372, %v2510
      %v2947 = vadd.f32 %v2373, %v2532
      %v2948 = vadd.f32 %v2374, %v2534
      %v2949 = vadd.f32 %v2375, %v2517
      %v2950 = vadd.f32 %v2376, %v2531
      %v2951 = vadd.f32 %v2377, %v2533
      %v2952 = vadd.f32 %v2378, %v2535
      %v2953 = vadd.f32 %v2379, %v2559
      %v2954 = vadd.f32 %v2380, %v2573
      %v2955 = vadd.f32 %v2381, %v2582
      %v2956 = vadd.f32 %v2382, %v2566
      %v2957 = vadd.f32 %v2383, %v2580
      %v2958 = vadd.f32 %v2384, %v2581
      %v2959 = vadd.f32 %v2385, %v2583
      %v2960 = vadd.f32 %v2386, %v2607
      %v2961 = vadd.f32 %v2387, %v2621
      %v2962 = vadd.f32 %v2388, %v2629
      %v2963 = vadd.f32 %v2389, %v2614
      %v2964 = vadd.f32 %v2390, %v2628
      %v2965 = vadd.f32 %v2391, %v2630
      %v2966 = vadd.f32 %v2392, %v2631
      %v2967 = vadd.f32 %v2393, %v2655
      %v2968 = vadd.f32 %v2394, %v2669
      %v2969 = vadd.f32 %v2395, %v2677
      %v2970 = vadd.f32 %v2396, %v2679
      %v2971 = vadd.f32 %v2397, %v2676
      %v2972 = vadd.f32 %v2398, %v2678
      %v2973 = vadd.f32 %v2399, %v2680
      %v2974 = vadd.f32 %v2400, %v2704
      %v2975 = vadd.f32 %v2401, %v2718
      %v2976 = vadd.f32 %v2402, %v2726
      %v2977 = vadd.f32 %v2403, %v2728
      %v2978 = vadd.f32 %v2404, %v2711
      %v2979 = vadd.f32 %v2405, %v2727
      %v2980 = vadd.f32 %v2406, %v2729
      %v2981 = vadd.f32 %v2407, %v2753
      %v2982 = vadd.f32 %v2408, %v2767
      %v2983 = vadd.f32 %v2409, %v2775
      %v2984 = vadd.f32 %v2410, %v2776
      %v2985 = vadd.f32 %v2411, %v2760
      %v2986 = vadd.f32 %v2412, %v2774
      %v2987 = vadd.f32 %v2413, %v2777
      %v2988 = vadd.f32 %v2414, %v2801
      %v2989 = vadd.f32 %v2415, %v2815
      %v2990 = vadd.f32 %v2416, %v2823
      %v2991 = vadd.f32 %v2417, %v2825
      %v2992 = vadd.f32 %v2418, %v2808
      %v2993 = vadd.f32 %v2419, %v2822
      %v2994 = vadd.f32 %v2420, %v2824
      %v2995 = vadd.f32 %v2421, %v2849
      %v2996 = vadd.f32 %v2422, %v2863
      %v2997 = vadd.f32 %v2423, %v2871
      %v2998 = vadd.f32 %v2424, %v2873
      %v2999 = vadd.f32 %v2425, %v2856
      %v3000 = vadd.f32 %v2426, %v2870
      %v3001 = vadd.f32 %v2427, %v2872
      %v3002 = vadd.f32 %v2428, %v2874
      %v3003 = vld [vmem:[%s2] sm:$0x1]
      %v3005 = vlaneseq
      %v3006 = vshrl.u32 %v3005, 7
      %v3007 = vsub.s32 0, %v3006
      %v3008 = vrot.slane %v3003, %v3007
      %v3009 = vcombine.high %v3008, %v3008
      %v3011 = vunpack.c.l.s4 1966171168
      %v3012 = vunpack.c.0.s8 %v3011
      %v3013 = vlaneseq
      %v3014 = vshrl.u32 %v3013, 7
      %v3015 = vsub.s32 %v3012, %v3014
      %v3016 = vrot.slane %v3008, %v3015
      %v3018 = vunpack.c.l.s4 1966171168
      %v3019 = vunpack.c.0.s8 %v3018
      %v3020 = vlaneseq
      %v3021 = vshrl.u32 %v3020, 7
      %v3022 = vsub.s32 %v3019, %v3021
      %v3023 = vrot.slane %v3009, %v3022
      %v3024 = vcombine.high %v3016, %v3016
      %v3025 = vcombine.high %v3023, %v3023
      %v3027 = vunpack.c.l.s4 1966171168
      %v3028 = vunpack.c.0.s8 %v3027
      %v3029 = vlaneseq
      %v3030 = vshrl.u32 %v3029, 7
      %v3031 = vsub.s32 %v3028, %v3030
      %v3032 = vrot.slane %v3016, %v3031
      %v3034 = vunpack.c.l.s4 1966171168
      %v3035 = vunpack.c.0.s8 %v3034
      %v3036 = vlaneseq
      %v3037 = vshrl.u32 %v3036, 7
      %v3038 = vsub.s32 %v3035, %v3037
      %v3039 = vrot.slane %v3023, %v3038
      %v3041 = vunpack.c.l.s4 1966171168
      %v3042 = vunpack.c.0.s8 %v3041
      %v3043 = vlaneseq
      %v3044 = vshrl.u32 %v3043, 7
      %v3045 = vsub.s32 %v3042, %v3044
      %v3046 = vrot.slane %v3024, %v3045
      %v3048 = vunpack.c.l.s4 1966171168
      %v3049 = vunpack.c.0.s8 %v3048
      %v3050 = vlaneseq
      %v3051 = vshrl.u32 %v3050, 7
      %v3052 = vsub.s32 %v3049, %v3051
      %v3053 = vrot.slane %v3025, %v3052
      %v3054 = vcombine.high %v3032, %v3032
      %v3055 = vcombine.high %v3039, %v3039
      %v3056 = vcombine.high %v3046, %v3046
      %v3057 = vcombine.high %v3053, %v3053
      %v3066 = vadd.f32 %v2939, %v3032
      %v3067 = vadd.f32 %v2940, %v3046
      %v3068 = vadd.f32 %v2941, %v3054
      %v3069 = vadd.f32 %v2942, %v3056
      %v3070 = vadd.f32 %v2943, %v3039
      %v3071 = vadd.f32 %v2944, %v3053
      %v3072 = vadd.f32 %v2945, %v3055
      %v3073 = vadd.f32 %v2946, %v3057
      %v3074 = vadd.f32 %v2947, %v3032
      %v3075 = vadd.f32 %v2948, %v3046
      %v3076 = vadd.f32 %v2949, %v3054
      %v3077 = vadd.f32 %v2950, %v3056
      %v3078 = vadd.f32 %v2951, %v3039
      %v3079 = vadd.f32 %v2952, %v3053
      %v3080 = vadd.f32 %v2953, %v3055
      %v3081 = vadd.f32 %v2954, %v3057
      %v3082 = vadd.f32 %v2955, %v3032
      %v3083 = vadd.f32 %v2956, %v3046
      %v3084 = vadd.f32 %v2957, %v3054
      %v3085 = vadd.f32 %v2958, %v3056
      %v3086 = vadd.f32 %v2959, %v3039
      %v3087 = vadd.f32 %v2960, %v3053
      %v3088 = vadd.f32 %v2961, %v3055
      %v3089 = vadd.f32 %v2962, %v3057
      %v3090 = vadd.f32 %v2963, %v3032
      %v3091 = vadd.f32 %v2964, %v3046
      %v3092 = vadd.f32 %v2965, %v3054
      %v3093 = vadd.f32 %v2966, %v3056
      %v3094 = vadd.f32 %v2967, %v3039
      %v3095 = vadd.f32 %v2968, %v3053
      %v3096 = vadd.f32 %v2969, %v3055
      %v3097 = vadd.f32 %v2970, %v3057
      %v3098 = vadd.f32 %v2971, %v3032
      %v3099 = vadd.f32 %v2972, %v3046
      %v3100 = vadd.f32 %v2973, %v3054
      %v3101 = vadd.f32 %v2974, %v3056
      %v3102 = vadd.f32 %v2975, %v3039
      %v3103 = vadd.f32 %v2976, %v3053
      %v3104 = vadd.f32 %v2977, %v3055
      %v3105 = vadd.f32 %v2978, %v3057
      %v3106 = vadd.f32 %v2979, %v3032
      %v3107 = vadd.f32 %v2980, %v3046
      %v3108 = vadd.f32 %v2981, %v3054
      %v3109 = vadd.f32 %v2982, %v3056
      %v3110 = vadd.f32 %v2983, %v3039
      %v3111 = vadd.f32 %v2984, %v3053
      %v3112 = vadd.f32 %v2985, %v3055
      %v3113 = vadd.f32 %v2986, %v3057
      %v3114 = vadd.f32 %v2987, %v3032
      %v3115 = vadd.f32 %v2988, %v3046
      %v3116 = vadd.f32 %v2989, %v3054
      %v3117 = vadd.f32 %v2990, %v3056
      %v3118 = vadd.f32 %v2991, %v3039
      %v3119 = vadd.f32 %v2992, %v3053
      %v3120 = vadd.f32 %v2993, %v3055
      %v3121 = vadd.f32 %v2994, %v3057
      %v3122 = vadd.f32 %v2995, %v3032
      %v3123 = vadd.f32 %v2996, %v3046
      %v3124 = vadd.f32 %v2997, %v3054
      %v3125 = vadd.f32 %v2998, %v3056
      %v3126 = vadd.f32 %v2999, %v3039
      %v3127 = vadd.f32 %v3000, %v3053
      %v3128 = vadd.f32 %v3001, %v3055
      %v3129 = vadd.f32 %v3002, %v3057
      %v3130 = vmax.f32 %v3066, 0.0
      %v3131 = vmax.f32 %v3067, 0.0
      %v3132 = vmax.f32 %v3068, 0.0
      %v3133 = vmax.f32 %v3069, 0.0
      %v3134 = vmax.f32 %v3070, 0.0
      %v3135 = vmax.f32 %v3071, 0.0
      %v3136 = vmax.f32 %v3072, 0.0
      %v3137 = vmax.f32 %v3073, 0.0
      %v3138 = vmax.f32 %v3074, 0.0
      %v3139 = vmax.f32 %v3075, 0.0
      %v3140 = vmax.f32 %v3076, 0.0
      %v3141 = vmax.f32 %v3077, 0.0
      %v3142 = vmax.f32 %v3078, 0.0
      %v3143 = vmax.f32 %v3079, 0.0
      %v3144 = vmax.f32 %v3080, 0.0
      %v3145 = vmax.f32 %v3081, 0.0
      %v3146 = vmax.f32 %v3082, 0.0
      %v3147 = vmax.f32 %v3083, 0.0
      %v3148 = vmax.f32 %v3084, 0.0
      %v3149 = vmax.f32 %v3085, 0.0
      %v3150 = vmax.f32 %v3086, 0.0
      %v3151 = vmax.f32 %v3087, 0.0
      %v3152 = vmax.f32 %v3088, 0.0
      %v3153 = vmax.f32 %v3089, 0.0
      %v3154 = vmax.f32 %v3090, 0.0
      %v3155 = vmax.f32 %v3091, 0.0
      %v3156 = vmax.f32 %v3092, 0.0
      %v3157 = vmax.f32 %v3093, 0.0
      %v3158 = vmax.f32 %v3094, 0.0
      %v3159 = vmax.f32 %v3095, 0.0
      %v3160 = vmax.f32 %v3096, 0.0
      %v3161 = vmax.f32 %v3097, 0.0
      %v3162 = vmax.f32 %v3098, 0.0
      %v3163 = vmax.f32 %v3099, 0.0
      %v3164 = vmax.f32 %v3100, 0.0
      %v3165 = vmax.f32 %v3101, 0.0
      %v3166 = vmax.f32 %v3102, 0.0
      %v3167 = vmax.f32 %v3103, 0.0
      %v3168 = vmax.f32 %v3104, 0.0
      %v3169 = vmax.f32 %v3105, 0.0
      %v3170 = vmax.f32 %v3106, 0.0
      %v3171 = vmax.f32 %v3107, 0.0
      %v3172 = vmax.f32 %v3108, 0.0
      %v3173 = vmax.f32 %v3109, 0.0
      %v3174 = vmax.f32 %v3110, 0.0
      %v3175 = vmax.f32 %v3111, 0.0
      %v3176 = vmax.f32 %v3112, 0.0
      %v3177 = vmax.f32 %v3113, 0.0
      %v3178 = vmax.f32 %v3114, 0.0
      %v3179 = vmax.f32 %v3115, 0.0
      %v3180 = vmax.f32 %v3116, 0.0
      %v3181 = vmax.f32 %v3117, 0.0
      %v3182 = vmax.f32 %v3118, 0.0
      %v3183 = vmax.f32 %v3119, 0.0
      %v3184 = vmax.f32 %v3120, 0.0
      %v3185 = vmax.f32 %v3121, 0.0
      %v3186 = vmax.f32 %v3122, 0.0
      %v3187 = vmax.f32 %v3123, 0.0
      %v3188 = vmax.f32 %v3124, 0.0
      %v3189 = vmax.f32 %v3125, 0.0
      %v3190 = vmax.f32 %v3126, 0.0
      %v3191 = vmax.f32 %v3127, 0.0
      %v3192 = vmax.f32 %v3128, 0.0
      %v3193 = vmax.f32 %v3129, 0.0
      %v3258 = vcombine.low %v3130, %v3131
      %v3259 = vcombine.low %v3132, %v3133
      %v3260 = vcombine.low %v3134, %v3135
      %v3261 = vcombine.low %v3136, %v3137
      %v3263 = vunpack.c.l.s4 1966171168
      %v3264 = vunpack.c.0.s8 %v3263
      %v3265 = vlaneseq
      %v3266 = vshrl.u32 %v3265, 7
      %v3267 = vsub.s32 %v3264, %v3266
      %v3268 = vrot.slane %v3258, %v3267
      %v3270 = vunpack.c.l.s4 1966171168
      %v3271 = vunpack.c.0.s8 %v3270
      %v3272 = vlaneseq
      %v3273 = vshrl.u32 %v3272, 7
      %v3274 = vsub.s32 %v3271, %v3273
      %v3275 = vrot.slane %v3259, %v3274
      %v3277 = vunpack.c.l.s4 1966171168
      %v3278 = vunpack.c.0.s8 %v3277
      %v3279 = vlaneseq
      %v3280 = vshrl.u32 %v3279, 7
      %v3281 = vsub.s32 %v3278, %v3280
      %v3282 = vrot.slane %v3260, %v3281
      %v3284 = vunpack.c.l.s4 1966171168
      %v3285 = vunpack.c.0.s8 %v3284
      %v3286 = vlaneseq
      %v3287 = vshrl.u32 %v3286, 7
      %v3288 = vsub.s32 %v3285, %v3287
      %v3289 = vrot.slane %v3261, %v3288
      %v3290 = vcombine.low %v3268, %v3275
      %v3291 = vcombine.low %v3282, %v3289
      %v3293 = vunpack.c.l.s4 1966171168
      %v3294 = vunpack.c.0.s8 %v3293
      %v3295 = vlaneseq
      %v3296 = vshrl.u32 %v3295, 7
      %v3297 = vsub.s32 %v3294, %v3296
      %v3298 = vrot.slane %v3290, %v3297
      %v3300 = vunpack.c.l.s4 1966171168
      %v3301 = vunpack.c.0.s8 %v3300
      %v3302 = vlaneseq
      %v3303 = vshrl.u32 %v3302, 7
      %v3304 = vsub.s32 %v3301, %v3303
      %v3305 = vrot.slane %v3291, %v3304
      %v3306 = vcombine.low %v3298, %v3305
      %v3307 = vcombine.low %v3138, %v3139
      %v3308 = vcombine.low %v3140, %v3141
      %v3309 = vcombine.low %v3142, %v3143
      %v3310 = vcombine.low %v3144, %v3145
      %v3312 = vunpack.c.l.s4 1966171168
      %v3313 = vunpack.c.0.s8 %v3312
      %v3314 = vlaneseq
      %v3315 = vshrl.u32 %v3314, 7
      %v3316 = vsub.s32 %v3313, %v3315
      %v3317 = vrot.slane %v3307, %v3316
      %v3319 = vunpack.c.l.s4 1966171168
      %v3320 = vunpack.c.0.s8 %v3319
      %v3321 = vlaneseq
      %v3322 = vshrl.u32 %v3321, 7
      %v3323 = vsub.s32 %v3320, %v3322
      %v3324 = vrot.slane %v3308, %v3323
      %v3326 = vunpack.c.l.s4 1966171168
      %v3327 = vunpack.c.0.s8 %v3326
      %v3328 = vlaneseq
      %v3329 = vshrl.u32 %v3328, 7
      %v3330 = vsub.s32 %v3327, %v3329
      %v3331 = vrot.slane %v3309, %v3330
      %v3333 = vunpack.c.l.s4 1966171168
      %v3334 = vunpack.c.0.s8 %v3333
      %v3335 = vlaneseq
      %v3336 = vshrl.u32 %v3335, 7
      %v3337 = vsub.s32 %v3334, %v3336
      %v3338 = vrot.slane %v3310, %v3337
      %v3339 = vcombine.low %v3317, %v3324
      %v3340 = vcombine.low %v3331, %v3338
      %v3342 = vunpack.c.l.s4 1966171168
      %v3343 = vunpack.c.0.s8 %v3342
      %v3344 = vlaneseq
      %v3345 = vshrl.u32 %v3344, 7
      %v3346 = vsub.s32 %v3343, %v3345
      %v3347 = vrot.slane %v3339, %v3346
      %v3349 = vunpack.c.l.s4 1966171168
      %v3350 = vunpack.c.0.s8 %v3349
      %v3351 = vlaneseq
      %v3352 = vshrl.u32 %v3351, 7
      %v3353 = vsub.s32 %v3350, %v3352
      %v3354 = vrot.slane %v3340, %v3353
      %v3355 = vcombine.low %v3347, %v3354
      %v3356 = vcombine.low %v3146, %v3147
      %v3357 = vcombine.low %v3148, %v3149
      %v3358 = vcombine.low %v3150, %v3151
      %v3359 = vcombine.low %v3152, %v3153
      %v3361 = vunpack.c.l.s4 1966171168
      %v3362 = vunpack.c.0.s8 %v3361
      %v3363 = vlaneseq
      %v3364 = vshrl.u32 %v3363, 7
      %v3365 = vsub.s32 %v3362, %v3364
      %v3366 = vrot.slane %v3356, %v3365
      %v3368 = vunpack.c.l.s4 1966171168
      %v3369 = vunpack.c.0.s8 %v3368
      %v3370 = vlaneseq
      %v3371 = vshrl.u32 %v3370, 7
      %v3372 = vsub.s32 %v3369, %v3371
      %v3373 = vrot.slane %v3357, %v3372
      %v3375 = vunpack.c.l.s4 1966171168
      %v3376 = vunpack.c.0.s8 %v3375
      %v3377 = vlaneseq
      %v3378 = vshrl.u32 %v3377, 7
      %v3379 = vsub.s32 %v3376, %v3378
      %v3380 = vrot.slane %v3358, %v3379
      %v3382 = vunpack.c.l.s4 1966171168
      %v3383 = vunpack.c.0.s8 %v3382
      %v3384 = vlaneseq
      %v3385 = vshrl.u32 %v3384, 7
      %v3386 = vsub.s32 %v3383, %v3385
      %v3387 = vrot.slane %v3359, %v3386
      %v3388 = vcombine.low %v3366, %v3373
      %v3389 = vcombine.low %v3380, %v3387
      %v3391 = vunpack.c.l.s4 1966171168
      %v3392 = vunpack.c.0.s8 %v3391
      %v3393 = vlaneseq
      %v3394 = vshrl.u32 %v3393, 7
      %v3395 = vsub.s32 %v3392, %v3394
      %v3396 = vrot.slane %v3388, %v3395
      %v3398 = vunpack.c.l.s4 1966171168
      %v3399 = vunpack.c.0.s8 %v3398
      %v3400 = vlaneseq
      %v3401 = vshrl.u32 %v3400, 7
      %v3402 = vsub.s32 %v3399, %v3401
      %v3403 = vrot.slane %v3389, %v3402
      %v3404 = vcombine.low %v3396, %v3403
      %v3405 = vcombine.low %v3154, %v3155
      %v3406 = vcombine.low %v3156, %v3157
      %v3407 = vcombine.low %v3158, %v3159
      %v3408 = vcombine.low %v3160, %v3161
      %v3410 = vunpack.c.l.s4 1966171168
      %v3411 = vunpack.c.0.s8 %v3410
      %v3412 = vlaneseq
      %v3413 = vshrl.u32 %v3412, 7
      %v3414 = vsub.s32 %v3411, %v3413
      %v3415 = vrot.slane %v3405, %v3414
      %v3417 = vunpack.c.l.s4 1966171168
      %v3418 = vunpack.c.0.s8 %v3417
      %v3419 = vlaneseq
      %v3420 = vshrl.u32 %v3419, 7
      %v3421 = vsub.s32 %v3418, %v3420
      %v3422 = vrot.slane %v3406, %v3421
      %v3424 = vunpack.c.l.s4 1966171168
      %v3425 = vunpack.c.0.s8 %v3424
      %v3426 = vlaneseq
      %v3427 = vshrl.u32 %v3426, 7
      %v3428 = vsub.s32 %v3425, %v3427
      %v3429 = vrot.slane %v3407, %v3428
      %v3431 = vunpack.c.l.s4 1966171168
      %v3432 = vunpack.c.0.s8 %v3431
      %v3433 = vlaneseq
      %v3434 = vshrl.u32 %v3433, 7
      %v3435 = vsub.s32 %v3432, %v3434
      %v3436 = vrot.slane %v3408, %v3435
      %v3437 = vcombine.low %v3415, %v3422
      %v3438 = vcombine.low %v3429, %v3436
      %v3440 = vunpack.c.l.s4 1966171168
      %v3441 = vunpack.c.0.s8 %v3440
      %v3442 = vlaneseq
      %v3443 = vshrl.u32 %v3442, 7
      %v3444 = vsub.s32 %v3441, %v3443
      %v3445 = vrot.slane %v3437, %v3444
      %v3447 = vunpack.c.l.s4 1966171168
      %v3448 = vunpack.c.0.s8 %v3447
      %v3449 = vlaneseq
      %v3450 = vshrl.u32 %v3449, 7
      %v3451 = vsub.s32 %v3448, %v3450
      %v3452 = vrot.slane %v3438, %v3451
      %v3453 = vcombine.low %v3445, %v3452
      %v3454 = vcombine.low %v3162, %v3163
      %v3455 = vcombine.low %v3164, %v3165
      %v3456 = vcombine.low %v3166, %v3167
      %v3457 = vcombine.low %v3168, %v3169
      %v3459 = vunpack.c.l.s4 1966171168
      %v3460 = vunpack.c.0.s8 %v3459
      %v3461 = vlaneseq
      %v3462 = vshrl.u32 %v3461, 7
      %v3463 = vsub.s32 %v3460, %v3462
      %v3464 = vrot.slane %v3454, %v3463
      %v3466 = vunpack.c.l.s4 1966171168
      %v3467 = vunpack.c.0.s8 %v3466
      %v3468 = vlaneseq
      %v3469 = vshrl.u32 %v3468, 7
      %v3470 = vsub.s32 %v3467, %v3469
      %v3471 = vrot.slane %v3455, %v3470
      %v3473 = vunpack.c.l.s4 1966171168
      %v3474 = vunpack.c.0.s8 %v3473
      %v3475 = vlaneseq
      %v3476 = vshrl.u32 %v3475, 7
      %v3477 = vsub.s32 %v3474, %v3476
      %v3478 = vrot.slane %v3456, %v3477
      %v3480 = vunpack.c.l.s4 1966171168
      %v3481 = vunpack.c.0.s8 %v3480
      %v3482 = vlaneseq
      %v3483 = vshrl.u32 %v3482, 7
      %v3484 = vsub.s32 %v3481, %v3483
      %v3485 = vrot.slane %v3457, %v3484
      %v3486 = vcombine.low %v3464, %v3471
      %v3487 = vcombine.low %v3478, %v3485
      %v3489 = vunpack.c.l.s4 1966171168
      %v3490 = vunpack.c.0.s8 %v3489
      %v3491 = vlaneseq
      %v3492 = vshrl.u32 %v3491, 7
      %v3493 = vsub.s32 %v3490, %v3492
      %v3494 = vrot.slane %v3486, %v3493
      %v3496 = vunpack.c.l.s4 1966171168
      %v3497 = vunpack.c.0.s8 %v3496
      %v3498 = vlaneseq
      %v3499 = vshrl.u32 %v3498, 7
      %v3500 = vsub.s32 %v3497, %v3499
      %v3501 = vrot.slane %v3487, %v3500
      %v3502 = vcombine.low %v3494, %v3501
      %v3503 = vcombine.low %v3170, %v3171
      %v3504 = vcombine.low %v3172, %v3173
      %v3505 = vcombine.low %v3174, %v3175
      %v3506 = vcombine.low %v3176, %v3177
      %v3508 = vunpack.c.l.s4 1966171168
      %v3509 = vunpack.c.0.s8 %v3508
      %v3510 = vlaneseq
      %v3511 = vshrl.u32 %v3510, 7
      %v3512 = vsub.s32 %v3509, %v3511
      %v3513 = vrot.slane %v3503, %v3512
      %v3515 = vunpack.c.l.s4 1966171168
      %v3516 = vunpack.c.0.s8 %v3515
      %v3517 = vlaneseq
      %v3518 = vshrl.u32 %v3517, 7
      %v3519 = vsub.s32 %v3516, %v3518
      %v3520 = vrot.slane %v3504, %v3519
      %v3522 = vunpack.c.l.s4 1966171168
      %v3523 = vunpack.c.0.s8 %v3522
      %v3524 = vlaneseq
      %v3525 = vshrl.u32 %v3524, 7
      %v3526 = vsub.s32 %v3523, %v3525
      %v3527 = vrot.slane %v3505, %v3526
      %v3529 = vunpack.c.l.s4 1966171168
      %v3530 = vunpack.c.0.s8 %v3529
      %v3531 = vlaneseq
      %v3532 = vshrl.u32 %v3531, 7
      %v3533 = vsub.s32 %v3530, %v3532
      %v3534 = vrot.slane %v3506, %v3533
      %v3535 = vcombine.low %v3513, %v3520
      %v3536 = vcombine.low %v3527, %v3534
      %v3538 = vunpack.c.l.s4 1966171168
      %v3539 = vunpack.c.0.s8 %v3538
      %v3540 = vlaneseq
      %v3541 = vshrl.u32 %v3540, 7
      %v3542 = vsub.s32 %v3539, %v3541
      %v3543 = vrot.slane %v3535, %v3542
      %v3545 = vunpack.c.l.s4 1966171168
      %v3546 = vunpack.c.0.s8 %v3545
      %v3547 = vlaneseq
      %v3548 = vshrl.u32 %v3547, 7
      %v3549 = vsub.s32 %v3546, %v3548
      %v3550 = vrot.slane %v3536, %v3549
      %v3551 = vcombine.low %v3543, %v3550
      %v3552 = vcombine.low %v3178, %v3179
      %v3553 = vcombine.low %v3180, %v3181
      %v3554 = vcombine.low %v3182, %v3183
      %v3555 = vcombine.low %v3184, %v3185
      %v3557 = vunpack.c.l.s4 1966171168
      %v3558 = vunpack.c.0.s8 %v3557
      %v3559 = vlaneseq
      %v3560 = vshrl.u32 %v3559, 7
      %v3561 = vsub.s32 %v3558, %v3560
      %v3562 = vrot.slane %v3552, %v3561
      %v3564 = vunpack.c.l.s4 1966171168
      %v3565 = vunpack.c.0.s8 %v3564
      %v3566 = vlaneseq
      %v3567 = vshrl.u32 %v3566, 7
      %v3568 = vsub.s32 %v3565, %v3567
      %v3569 = vrot.slane %v3553, %v3568
      %v3571 = vunpack.c.l.s4 1966171168
      %v3572 = vunpack.c.0.s8 %v3571
      %v3573 = vlaneseq
      %v3574 = vshrl.u32 %v3573, 7
      %v3575 = vsub.s32 %v3572, %v3574
      %v3576 = vrot.slane %v3554, %v3575
      %v3578 = vunpack.c.l.s4 1966171168
      %v3579 = vunpack.c.0.s8 %v3578
      %v3580 = vlaneseq
      %v3581 = vshrl.u32 %v3580, 7
      %v3582 = vsub.s32 %v3579, %v3581
      %v3583 = vrot.slane %v3555, %v3582
      %v3584 = vcombine.low %v3562, %v3569
      %v3585 = vcombine.low %v3576, %v3583
      %v3587 = vunpack.c.l.s4 1966171168
      %v3588 = vunpack.c.0.s8 %v3587
      %v3589 = vlaneseq
      %v3590 = vshrl.u32 %v3589, 7
      %v3591 = vsub.s32 %v3588, %v3590
      %v3592 = vrot.slane %v3584, %v3591
      %v3594 = vunpack.c.l.s4 1966171168
      %v3595 = vunpack.c.0.s8 %v3594
      %v3596 = vlaneseq
      %v3597 = vshrl.u32 %v3596, 7
      %v3598 = vsub.s32 %v3595, %v3597
      %v3599 = vrot.slane %v3585, %v3598
      %v3600 = vcombine.low %v3592, %v3599
      %v3601 = vcombine.low %v3186, %v3187
      %v3602 = vcombine.low %v3188, %v3189
      %v3603 = vcombine.low %v3190, %v3191
      %v3604 = vcombine.low %v3192, %v3193
      %v3606 = vunpack.c.l.s4 1966171168
      %v3607 = vunpack.c.0.s8 %v3606
      %v3608 = vlaneseq
      %v3609 = vshrl.u32 %v3608, 7
      %v3610 = vsub.s32 %v3607, %v3609
      %v3611 = vrot.slane %v3601, %v3610
      %v3613 = vunpack.c.l.s4 1966171168
      %v3614 = vunpack.c.0.s8 %v3613
      %v3615 = vlaneseq
      %v3616 = vshrl.u32 %v3615, 7
      %v3617 = vsub.s32 %v3614, %v3616
      %v3618 = vrot.slane %v3602, %v3617
      %v3620 = vunpack.c.l.s4 1966171168
      %v3621 = vunpack.c.0.s8 %v3620
      %v3622 = vlaneseq
      %v3623 = vshrl.u32 %v3622, 7
      %v3624 = vsub.s32 %v3621, %v3623
      %v3625 = vrot.slane %v3603, %v3624
      %v3627 = vunpack.c.l.s4 1966171168
      %v3628 = vunpack.c.0.s8 %v3627
      %v3629 = vlaneseq
      %v3630 = vshrl.u32 %v3629, 7
      %v3631 = vsub.s32 %v3628, %v3630
      %v3632 = vrot.slane %v3604, %v3631
      %v3633 = vcombine.low %v3611, %v3618
      %v3634 = vcombine.low %v3625, %v3632
      %v3636 = vunpack.c.l.s4 1966171168
      %v3637 = vunpack.c.0.s8 %v3636
      %v3638 = vlaneseq
      %v3639 = vshrl.u32 %v3638, 7
      %v3640 = vsub.s32 %v3637, %v3639
      %v3641 = vrot.slane %v3633, %v3640
      %v3643 = vunpack.c.l.s4 1966171168
      %v3644 = vunpack.c.0.s8 %v3643
      %v3645 = vlaneseq
      %v3646 = vshrl.u32 %v3645, 7
      %v3647 = vsub.s32 %v3644, %v3646
      %v3648 = vrot.slane %v3634, %v3647
      %v3649 = vcombine.low %v3641, %v3648
      %v3658 = vpack.c.bf16 %v3306, %v3306
      %v3659 = vpack.c.bf16 %v3355, %v3355
      %v3660 = vpack.c.bf16 %v3404, %v3404
      %v3661 = vpack.c.bf16 %v3453, %v3453
      %v3662 = vpack.c.bf16 %v3502, %v3502
      %v3663 = vpack.c.bf16 %v3551, %v3551
      %v3664 = vpack.c.bf16 %v3600, %v3600
      %v3665 = vpack.c.bf16 %v3649, %v3649
      %vm3666 = vcmask 60416
      %3667 = vst.msk [vmem:[%s170] sm:$0xf] %vm3666, %v3658
      %3668 = vst.msk [vmem:[%s170 + $0x4] sm:$0xf] %vm3666, %v3659
      %3669 = vst.msk [vmem:[%s170 + $0x8] sm:$0xf] %vm3666, %v3660
      %3670 = vst.msk [vmem:[%s170 + $0xc] sm:$0xf] %vm3666, %v3661
      %3671 = vst.msk [vmem:[%s170 + $0x10] sm:$0xf] %vm3666, %v3662
      %3672 = vst.msk [vmem:[%s170 + $0x14] sm:$0xf] %vm3666, %v3663
      %3673 = vst.msk [vmem:[%s170 + $0x18] sm:$0xf] %vm3666, %v3664
      %3674 = vst.msk [vmem:[%s170 + $0x1c] sm:$0xf] %vm3666, %v3665
      %p3675 = scmp.lt.s32.totalorder %s14, 1
      %s3676 = scalar_select %p3675, %s14, 1
      %s3677 = smul.addr %s3676, 8
      %s3678 = smul.addr %s3677, 4
      %s3679 = scalar_lea.vmem %s3, %s3678
      // Predicated region
      $region33: #{basic_block_forward.2} parent=31 // pred_check
        %p3680 = pneg %p100
      $region34: #{basic_block_forward.2} parent=31 // pred_check_branch
        %3682 = sbr.rel (%p3680) target = $region36
      $region35: #{basic_block_forward.2} parent=31 // pred_region
        _
      $region36: #{basic_block_forward.2} parent=31 // pred_fallthru
        _
    $region32: #{basic_block_forward.2} parent=5 // pred_fallthru
      _
    %p3683 = scmp.le.s32.totalorder 2, %s9
    // Predicated region
    $region37: #{basic_block_forward.2} parent=5 // pred_check
      %p3684 = pneg %p3683
    $region38: #{basic_block_forward.2} parent=5 // pred_check_branch
      %3686 = sbr.rel (%p3684) target = $region40
    $region39: #{basic_block_forward.2} parent=5 // pred_region
      %s3687 = ssub.s32 %s9, 2
      // Predicated region
      $region41: #{basic_block_forward.2} parent=39 // pred_check
        %p3688 = pneg %p106
      $region42: #{basic_block_forward.2} parent=39 // pred_check_branch
        %3690 = sbr.rel (%p3688) target = $region44
      $region43: #{basic_block_forward.2} parent=39 // pred_region
        %p3691 = scmp.lt.s32.totalorder %s15, 1
        %s3692 = scalar_select %p3691, %s15, 1
        %s3693 = smul.addr %s3692, 8
        %s3694 = smul.addr %s3693, 4
        %s3695 = scalar_lea.vmem %s3, %s3694
      $region44: #{basic_block_forward.2} parent=39 // pred_fallthru
        _
    $region40: #{basic_block_forward.2} parent=5 // pred_fallthru
      _
  $region6: #{basic_block_forward.2} parent=0 // loop_footer
    %s13 = sadd.s32 1, %s9
  $region7: #{basic_block_forward.2} parent=0 // loop_footer_branch
    %8 = sbr.rel target = $region3
  $region8: #{basic_block_forward.2} parent=0 // loop_exit
    _

// kernel: basic_block_forward.3
$region0: #{basic_block_forward.3}
  #allocation0 [shape = 'u32[]', space=smem, size = 0x4, offset = 0x4, fixed_abs, tag = 'smem constant byte address 0x4 - core index']
  #allocation1 [shape = 'u32[144,128]{1,0:T(1,128)}', space=vmem, size = 0x12000, scoped, tag = 'internal scratch']
  #allocation2 [shape = 'bf16[10,10,8]{2,1,0:T(8,128)(2,1)}', space=vmem, size = 0xa000, scoped, tag = 'scratch operand']
  %s0 = inlined_call_operand.vmem [shape: bf16[2,8,8,8], index: 0, kind: input, shape index: {}]
  %s1 = inlined_call_operand.vmem [shape: bf16[3,3,8,8], index: 1, kind: input, shape index: {}]
  %s2 = inlined_call_operand.vmem [shape: f32[1,8], index: 2, kind: input, shape index: {}]
  %s3 = inlined_call_operand.vmem [shape: bf16[2,8,8,4], index: 3, kind: input, shape index: {}]
  %s4 = inlined_call_operand.vmem [shape: bf16[4,8], index: 4, kind: input, shape index: {}]
  %s5 = inlined_call_operand.vmem [shape: f32[1,8], index: 5, kind: input, shape index: {}]
  %s6 = inlined_call_operand.vmem [shape: f32[2,8,8,8], index: 6, kind: output, shape index: {}]
  %s7 = sld [smem:[#allocation0]]
  $region57: #{basic_block_forward.3} parent=0
    _
  %s9 = ssub.s32 1, %s7
  %s10 = scalar_select 0, %s9, %s7
  loop: start=0, step=1, limit=4
  $region2: #{basic_block_forward.3} parent=0 // loop_pre_header
    _
  $region3: #{basic_block_forward.3} parent=0 // loop_header
    %s12 = sphi 0, %s16
    %p13 = scmp.ge.s32.totalorder %s12, 4
    %s22 = sphi 0, %s24
    %s25 = sphi 0, %s22
    %s26 = sphi 0, %s25
    %s42 = sphi 0, %s26
    %s46 = sphi 0, %s46
    %s48 = sphi 0, %s46
    %s49 = sphi 0, %s48
    %s63 = sphi 0, %s49
    %s67 = sphi 0, %s67
    %s69 = sphi 0, %s67
    %s70 = sphi 0, %s69
    %s84 = sphi 0, %s70
    %s90 = sphi 0, %s92
    %s93 = sphi 0, %s90
    %s94 = sphi 0, %s93
    %s110 = sphi 0, %s94
    %s114 = sphi 0, %s114
    %s116 = sphi 0, %s114
    %s117 = sphi 0, %s116
    %s131 = sphi 0, %s117
    %s135 = sphi 0, %s135
    %s137 = sphi 0, %s135
    %s138 = sphi 0, %s137
    %s152 = sphi 0, %s138
    %s158 = sphi 0, %s160
    %s161 = sphi 0, %s158
    %s162 = sphi 0, %s161
    %s178 = sphi 0, %s162
  $region4: #{basic_block_forward.3} parent=0 // loop_header_branch
    %15 = sbr.rel (%p13) target = $region8
  $region5: #{basic_block_forward.3} parent=0 // loop_body
    %s17 = ssub.s32 %s12, 1
    %s18 = ssub.s32 %s12, 2
    %s19 = sadd.s32 %s12, 1
    %s20 = ssub.s32 %s12, %s19
    %p21 = scmp.eq.s32.totalorder %s20, 0
    %s23 = sadd.s32 %s22, 1
    %s24 = scalar_select %p21, %s22, %s23
    %p27 = pneg %p21
    %p28 = scmp.eq.s32.totalorder %s12, 1
    %p29 = por %p27, %p28
    %p30 = scmp.ne.s32.totalorder %s22, %s25
    %p31 = scmp.eq.s32.totalorder %s12, 0
    %p32 = por %p30, %p31
    %p33 = scmp.ne.s32.totalorder %s22, %s25
    %p34 = scmp.eq.s32.totalorder %s17, 1
    %p35 = por %p33, %p34
    %p36 = scmp.ne.s32.totalorder %s25, %s26
    %p37 = scmp.eq.s32.totalorder %s17, 0
    %p38 = por %p36, %p37
    %p39 = scmp.ne.s32.totalorder %s25, %s26
    %p40 = scmp.eq.s32.totalorder %s18, 1
    %p41 = por %p39, %p40
    %p43 = scmp.ne.s32.totalorder %s26, %s42
    %p44 = scmp.eq.s32.totalorder %s18, 0
    %p45 = por %p43, %p44
    %s47 = sadd.s32 %s46, 1
    %p50 = scmp.eq.s32.totalorder %s12, 1
    %p51 = scmp.ne.s32.totalorder %s46, %s48
    %p52 = scmp.eq.s32.totalorder %s12, 0
    %p53 = por %p51, %p52
    %p54 = scmp.ne.s32.totalorder %s46, %s48
    %p55 = scmp.eq.s32.totalorder %s17, 1
    %p56 = por %p54, %p55
    %p57 = scmp.ne.s32.totalorder %s48, %s49
    %p58 = scmp.eq.s32.totalorder %s17, 0
    %p59 = por %p57, %p58
    %p60 = scmp.ne.s32.totalorder %s48, %s49
    %p61 = scmp.eq.s32.totalorder %s18, 1
    %p62 = por %p60, %p61
    %p64 = scmp.ne.s32.totalorder %s49, %s63
    %p65 = scmp.eq.s32.totalorder %s18, 0
    %p66 = por %p64, %p65
    %s68 = sadd.s32 %s67, 1
    %p71 = scmp.eq.s32.totalorder %s12, 1
    %p72 = scmp.ne.s32.totalorder %s67, %s69
    %p73 = scmp.eq.s32.totalorder %s12, 0
    %p74 = por %p72, %p73
    %p75 = scmp.ne.s32.totalorder %s67, %s69
    %p76 = scmp.eq.s32.totalorder %s17, 1
    %p77 = por %p75, %p76
    %p78 = scmp.ne.s32.totalorder %s69, %s70
    %p79 = scmp.eq.s32.totalorder %s17, 0
    %p80 = por %p78, %p79
    %p81 = scmp.ne.s32.totalorder %s69, %s70
    %p82 = scmp.eq.s32.totalorder %s18, 1
    %p83 = por %p81, %p82
    %p85 = scmp.ne.s32.totalorder %s70, %s84
    %p86 = scmp.eq.s32.totalorder %s18, 0
    %p87 = por %p85, %p86
    %s88 = ssub.s32 %s12, %s19
    %p89 = scmp.eq.s32.totalorder %s88, 0
    %s91 = sadd.s32 %s90, 1
    %s92 = scalar_select %p89, %s90, %s91
    %p95 = pneg %p89
    %p96 = scmp.eq.s32.totalorder %s12, 1
    %p97 = por %p95, %p96
    %p98 = scmp.ne.s32.totalorder %s90, %s93
    %p99 = scmp.eq.s32.totalorder %s12, 0
    %p100 = por %p98, %p99
    %p101 = scmp.ne.s32.totalorder %s90, %s93
    %p102 = scmp.eq.s32.totalorder %s17, 1
    %p103 = por %p101, %p102
    %p104 = scmp.ne.s32.totalorder %s93, %s94
    %p105 = scmp.eq.s32.totalorder %s17, 0
    %p106 = por %p104, %p105
    %p107 = scmp.ne.s32.totalorder %s93, %s94
    %p108 = scmp.eq.s32.totalorder %s18, 1
    %p109 = por %p107, %p108
    %p111 = scmp.ne.s32.totalorder %s94, %s110
    %p112 = scmp.eq.s32.totalorder %s18, 0
    %p113 = por %p111, %p112
    %s115 = sadd.s32 %s114, 1
    %p118 = scmp.eq.s32.totalorder %s12, 1
    %p119 = scmp.ne.s32.totalorder %s114, %s116
    %p120 = scmp.eq.s32.totalorder %s12, 0
    %p121 = por %p119, %p120
    %p122 = scmp.ne.s32.totalorder %s114, %s116
    %p123 = scmp.eq.s32.totalorder %s17, 1
    %p124 = por %p122, %p123
    %p125 = scmp.ne.s32.totalorder %s116, %s117
    %p126 = scmp.eq.s32.totalorder %s17, 0
    %p127 = por %p125, %p126
    %p128 = scmp.ne.s32.totalorder %s116, %s117
    %p129 = scmp.eq.s32.totalorder %s18, 1
    %p130 = por %p128, %p129
    %p132 = scmp.ne.s32.totalorder %s117, %s131
    %p133 = scmp.eq.s32.totalorder %s18, 0
    %p134 = por %p132, %p133
    %s136 = sadd.s32 %s135, 1
    %p139 = scmp.eq.s32.totalorder %s12, 1
    %p140 = scmp.ne.s32.totalorder %s135, %s137
    %p141 = scmp.eq.s32.totalorder %s12, 0
    %p142 = por %p140, %p141
    %p143 = scmp.ne.s32.totalorder %s135, %s137
    %p144 = scmp.eq.s32.totalorder %s17, 1
    %p145 = por %p143, %p144
    %p146 = scmp.ne.s32.totalorder %s137, %s138
    %p147 = scmp.eq.s32.totalorder %s17, 0
    %p148 = por %p146, %p147
    %p149 = scmp.ne.s32.totalorder %s137, %s138
    %p150 = scmp.eq.s32.totalorder %s18, 1
    %p151 = por %p149, %p150
    %p153 = scmp.ne.s32.totalorder %s138, %s152
    %p154 = scmp.eq.s32.totalorder %s18, 0
    %p155 = por %p153, %p154
    %s156 = ssub.s32 %s12, %s19
    %p157 = scmp.eq.s32.totalorder %s156, 0
    %s159 = sadd.s32 %s158, 1
    %s160 = scalar_select %p157, %s158, %s159
    %p163 = pneg %p157
    %p164 = scmp.eq.s32.totalorder %s12, 1
    %p165 = por %p163, %p164
    %p166 = scmp.ne.s32.totalorder %s158, %s161
    %p167 = scmp.eq.s32.totalorder %s12, 0
    %p168 = por %p166, %p167
    %p169 = scmp.ne.s32.totalorder %s158, %s161
    %p170 = scmp.eq.s32.totalorder %s17, 1
    %p171 = por %p169, %p170
    %p172 = scmp.ne.s32.totalorder %s161, %s162
    %p173 = scmp.eq.s32.totalorder %s17, 0
    %p174 = por %p172, %p173
    %p175 = scmp.ne.s32.totalorder %s161, %s162
    %p176 = scmp.eq.s32.totalorder %s18, 1
    %p177 = por %p175, %p176
    %p179 = scmp.ne.s32.totalorder %s162, %s178
    %p180 = scmp.eq.s32.totalorder %s18, 0
    %p181 = por %p179, %p180
    %p182 = scmp.le.s32.totalorder 1, %s12
    %p183 = scmp.lt.s32.totalorder %s12, 3
    %p184 = pnand %p182, %p183
    %p185 = pneg %p184
    // Predicated region
    $region9: #{basic_block_forward.3} parent=5 // pred_check
      _
    $region10: #{basic_block_forward.3} parent=5 // pred_check_branch
      %187 = sbr.rel (%p184) target = $region12
    $region11: #{basic_block_forward.3} parent=5 // pred_region
      %s188 = ssub.s32 %s12, 1
      // Predicated region
      $region13: #{basic_block_forward.3} parent=11 // pred_check
        %p189 = pneg %p59
      $region14: #{basic_block_forward.3} parent=11 // pred_check_branch
        %191 = sbr.rel (%p189) target = $region16
      $region15: #{basic_block_forward.3} parent=11 // pred_region
        _
      $region16: #{basic_block_forward.3} parent=11 // pred_fallthru
        _
      // Predicated region
      $region17: #{basic_block_forward.3} parent=11 // pred_check
        %p192 = pneg %p80
      $region18: #{basic_block_forward.3} parent=11 // pred_check_branch
        %194 = sbr.rel (%p192) target = $region20
      $region19: #{basic_block_forward.3} parent=11 // pred_region
        _
      $region20: #{basic_block_forward.3} parent=11 // pred_fallthru
        _
      // Predicated region
      $region21: #{basic_block_forward.3} parent=11 // pred_check
        %p195 = pneg %p127
      $region22: #{basic_block_forward.3} parent=11 // pred_check_branch
        %197 = sbr.rel (%p195) target = $region24
      $region23: #{basic_block_forward.3} parent=11 // pred_region
        _
      $region24: #{basic_block_forward.3} parent=11 // pred_fallthru
        _
      // Predicated region
      $region25: #{basic_block_forward.3} parent=11 // pred_check
        %p198 = pneg %p148
      $region26: #{basic_block_forward.3} parent=11 // pred_check_branch
        %200 = sbr.rel (%p198) target = $region28
      $region27: #{basic_block_forward.3} parent=11 // pred_region
        _
      $region28: #{basic_block_forward.3} parent=11 // pred_fallthru
        _
    $region12: #{basic_block_forward.3} parent=5 // pred_fallthru
      _
    %p201 = scmp.lt.s32.totalorder %s12, 2
    // Predicated region
    $region29: #{basic_block_forward.3} parent=5 // pred_check
      %p202 = pneg %p201
    $region30: #{basic_block_forward.3} parent=5 // pred_check_branch
      %204 = sbr.rel (%p202) target = $region32
    $region31: #{basic_block_forward.3} parent=5 // pred_region
      // Predicated region
      $region33: #{basic_block_forward.3} parent=31 // pred_check
        %p205 = pneg %p32
      $region34: #{basic_block_forward.3} parent=31 // pred_check_branch
        %207 = sbr.rel (%p205) target = $region36
      $region35: #{basic_block_forward.3} parent=31 // pred_region
        %p208 = scmp.lt.s32.totalorder %s12, 1
        %s209 = scalar_select %p208, %s12, 1
        %s210 = smul.addr %s209, 8
        %s211 = smul.addr %s210, 4
        %s212 = scalar_lea.vmem %s0, %s211
      $region36: #{basic_block_forward.3} parent=31 // pred_fallthru
        _
      // Predicated region
      $region37: #{basic_block_forward.3} parent=31 // pred_check
        %p213 = pneg %p100
      $region38: #{basic_block_forward.3} parent=31 // pred_check_branch
        %215 = sbr.rel (%p213) target = $region40
      $region39: #{basic_block_forward.3} parent=31 // pred_region
        %p216 = scmp.lt.s32.totalorder %s12, 1
        %s217 = scalar_select %p216, %s12, 1
        %s218 = smul.addr %s217, 8
        %s219 = smul.addr %s218, 4
        %s220 = scalar_lea.vmem %s3, %s219
      $region40: #{basic_block_forward.3} parent=31 // pred_fallthru
        _
    $region32: #{basic_block_forward.3} parent=5 // pred_fallthru
      _
    %p221 = scmp.le.s32.totalorder 1, %s12
    %p222 = scmp.lt.s32.totalorder %s12, 3
    %p223 = pnand %p221, %p222
    %p224 = pneg %p223
    // Predicated region
    $region41: #{basic_block_forward.3} parent=5 // pred_check
      _
    $region42: #{basic_block_forward.3} parent=5 // pred_check_branch
      %226 = sbr.rel (%p223) target = $region44
    $region43: #{basic_block_forward.3} parent=5 // pred_region
      %s227 = ssub.s32 %s12, 1
      %p228 = scmp.lt.s32.totalorder %s17, 1
      %s229 = scalar_select %p228, %s17, 1
      %s230 = smul.addr %s229, 8
      %s231 = smul.addr %s230, 4
      %s232 = scalar_lea.vmem %s0, %s231
      %p233 = pneg %p38
      %p234 = pneg %p35
      %p235 = pneg %p59
      %p236 = pneg %p56
      %p237 = pneg %p80
      %p238 = pneg %p77
      %p239 = scmp.lt.s32.totalorder %s17, 1
      %s240 = scalar_select %p239, %s17, 1
      %s241 = smul.addr %s240, 8
      %s242 = smul.addr %s241, 4
      %s243 = scalar_lea.vmem %s3, %s242
      %p244 = pneg %p106
      %p245 = pneg %p103
      %p246 = pneg %p127
      %p247 = pneg %p124
      %p248 = pneg %p148
      %p249 = pneg %p145
      %p250 = pneg %p174
      %p251 = pneg %p171
      %p252 = scmp.lt.s32.totalorder %s17, 1
      %s253 = scalar_select %p252, %s17, 1
      %s254 = smul.addr %s253, 8
      %s255 = smul.addr %s254, 8
      %s256 = scalar_lea.vmem %s6, %s255
      %p257 = scmp.lt.s32.totalorder %s17, 1
      %s258 = scalar_select %p257, %s17, 1
      %s259 = smul.addr %s258, 8
      %s260 = smul.addr %s259, 4
      %s261 = scalar_lea.vmem %s0, %s260
      %p262 = scmp.lt.s32.totalorder %s17, 1
      %s263 = scalar_select %p262, %s17, 1
      %s264 = smul.addr %s263, 8
      %s265 = smul.addr %s264, 4
      %s266 = scalar_lea.vmem %s3, %s265
      %p267 = scmp.lt.s32.totalorder %s17, 1
      %s268 = scalar_select %p267, %s17, 1
      %s269 = smul.addr %s268, 8
      %s270 = smul.addr %s269, 8
      %s271 = scalar_lea.vmem %s6, %s270
      %vm273 = vcmask 60416
      %274 = vst.msk [vmem:[#allocation2] sm:$0xf] %vm273, 0
      %vm275 = vcmask 57344
      %276 = vst.msk [vmem:[#allocation2 + $0x4] sm:$0x1] %vm275, 0
      %277 = vst.msk [vmem:[#allocation2 + $0x8] sm:$0xf] %vm273, 0
      %278 = vst.msk [vmem:[#allocation2 + $0xc] sm:$0x1] %vm275, 0
      %279 = vst.msk [vmem:[#allocation2 + $0x10] sm:$0xf] %vm273, 0
      %280 = vst.msk [vmem:[#allocation2 + $0x14] sm:$0x1] %vm275, 0
      %281 = vst.msk [vmem:[#allocation2 + $0x18] sm:$0xf] %vm273, 0
      %282 = vst.msk [vmem:[#allocation2 + $0x1c] sm:$0x1] %vm275, 0
      %283 = vst.msk [vmem:[#allocation2 + $0x20] sm:$0xf] %vm273, 0
      %284 = vst.msk [vmem:[#allocation2 + $0x24] sm:$0x1] %vm275, 0
      %285 = vst.msk [vmem:[#allocation2 + $0x28] sm:$0xf] %vm273, 0
      %286 = vst.msk [vmem:[#allocation2 + $0x2c] sm:$0x1] %vm275, 0
      %287 = vst.msk [vmem:[#allocation2 + $0x30] sm:$0xf] %vm273, 0
      %288 = vst.msk [vmem:[#allocation2 + $0x34] sm:$0x1] %vm275, 0
      %289 = vst.msk [vmem:[#allocation2 + $0x38] sm:$0xf] %vm273, 0
      %290 = vst.msk [vmem:[#allocation2 + $0x3c] sm:$0x1] %vm275, 0
      %291 = vst.msk [vmem:[#allocation2 + $0x40] sm:$0xf] %vm273, 0
      %292 = vst.msk [vmem:[#allocation2 + $0x44] sm:$0x1] %vm275, 0
      %293 = vst.msk [vmem:[#allocation2 + $0x48] sm:$0xf] %vm273, 0
      %294 = vst.msk [vmem:[#allocation2 + $0x4c] sm:$0x1] %vm275, 0
      %v295 = vld [vmem:[%s261] sm:$0xf]
      %v296 = vld [vmem:[%s261 + $0x4] sm:$0xf]
      %v297 = vld [vmem:[%s261 + $0x8] sm:$0xf]
      %v298 = vld [vmem:[%s261 + $0xc] sm:$0xf]
      %v299 = vld [vmem:[%s261 + $0x10] sm:$0xf]
      %v300 = vld [vmem:[%s261 + $0x14] sm:$0xf]
      %v301 = vld [vmem:[%s261 + $0x18] sm:$0xf]
      %v302 = vld [vmem:[%s261 + $0x1c] sm:$0xf]
      %v304 = vshrl.u32 %v295, 16
      %v306 = vrot.slane %v304, 7
      %v307 = vshll.u32 %v295, 16
      %v309 = vor.u32 %v306, %v307
      %v310 = vrot.slane %v306, 4
      %v312 = vshrl.u32 %v296, 16
      %v314 = vrot.slane %v312, 7
      %v315 = vshll.u32 %v296, 16
      %v317 = vor.u32 %v314, %v315
      %v318 = vrot.slane %v314, 4
      %v320 = vshrl.u32 %v297, 16
      %v322 = vrot.slane %v320, 7
      %v323 = vshll.u32 %v297, 16
      %v325 = vor.u32 %v322, %v323
      %v326 = vrot.slane %v322, 4
      %v328 = vshrl.u32 %v298, 16
      %v330 = vrot.slane %v328, 7
      %v331 = vshll.u32 %v298, 16
      %v333 = vor.u32 %v330, %v331
      %v334 = vrot.slane %v330, 4
      %v336 = vshrl.u32 %v299, 16
      %v338 = vrot.slane %v336, 7
      %v339 = vshll.u32 %v299, 16
      %v341 = vor.u32 %v338, %v339
      %v342 = vrot.slane %v338, 4
      %v344 = vshrl.u32 %v300, 16
      %v346 = vrot.slane %v344, 7
      %v347 = vshll.u32 %v300, 16
      %v349 = vor.u32 %v346, %v347
      %v350 = vrot.slane %v346, 4
      %v352 = vshrl.u32 %v301, 16
      %v354 = vrot.slane %v352, 7
      %v355 = vshll.u32 %v301, 16
      %v357 = vor.u32 %v354, %v355
      %v358 = vrot.slane %v354, 4
      %v360 = vshrl.u32 %v302, 16
      %v362 = vrot.slane %v360, 7
      %v363 = vshll.u32 %v302, 16
      %v365 = vor.u32 %v362, %v363
      %v366 = vrot.slane %v362, 4
      %s383 = scalar_lea.vmem [#allocation2], 8
      %vm384 = vcmask 60416
      %vm385 = vsmask.f32 7938
      %vm386 = vmand %vm384, %vm385
      %v387 = vld [vmem:[%s383] sm:$0xf]
      %v388 = vsel %vm386, %v309, %v387
      %389 = vst [vmem:[%s383] sm:$0xf] %v388
      %vm390 = vcmask 57344
      %vm391 = vsmask.f32 256
      %vm392 = vmand %vm390, %vm391
      %v393 = vld [vmem:[%s383 + $0x4] sm:$0x1]
      %v394 = vsel %vm392, %v310, %v393
      %395 = vst [vmem:[%s383 + $0x4] sm:$0x1] %v394
      %v396 = vld [vmem:[%s383 + $0x8] sm:$0xf]
      %v397 = vsel %vm386, %v317, %v396
      %398 = vst [vmem:[%s383 + $0x8] sm:$0xf] %v397
      %v399 = vld [vmem:[%s383 + $0xc] sm:$0x1]
      %v400 = vsel %vm392, %v318, %v399
      %401 = vst [vmem:[%s383 + $0xc] sm:$0x1] %v400
      %v402 = vld [vmem:[%s383 + $0x10] sm:$0xf]
      %v403 = vsel %vm386, %v325, %v402
      %404 = vst [vmem:[%s383 + $0x10] sm:$0xf] %v403
      %v405 = vld [vmem:[%s383 + $0x14] sm:$0x1]
      %v406 = vsel %vm392, %v326, %v405
      %407 = vst [vmem:[%s383 + $0x14] sm:$0x1] %v406
      %v408 = vld [vmem:[%s383 + $0x18] sm:$0xf]
      %v409 = vsel %vm386, %v333, %v408
      %410 = vst [vmem:[%s383 + $0x18] sm:$0xf] %v409
      %v411 = vld [vmem:[%s383 + $0x1c] sm:$0x1]
      %v412 = vsel %vm392, %v334, %v411
      %413 = vst [vmem:[%s383 + $0x1c] sm:$0x1] %v412
      %v414 = vld [vmem:[%s383 + $0x20] sm:$0xf]
      %v415 = vsel %vm386, %v341, %v414
      %416 = vst [vmem:[%s383 + $0x20] sm:$0xf] %v415
      %v417 = vld [vmem:[%s383 + $0x24] sm:$0x1]
      %v418 = vsel %vm392, %v342, %v417
      %419 = vst [vmem:[%s383 + $0x24] sm:$0x1] %v418
      %v420 = vld [vmem:[%s383 + $0x28] sm:$0xf]
      %v421 = vsel %vm386, %v349, %v420
      %422 = vst [vmem:[%s383 + $0x28] sm:$0xf] %v421
      %v423 = vld [vmem:[%s383 + $0x2c] sm:$0x1]
      %v424 = vsel %vm392, %v350, %v423
      %425 = vst [vmem:[%s383 + $0x2c] sm:$0x1] %v424
      %v426 = vld [vmem:[%s383 + $0x30] sm:$0xf]
      %v427 = vsel %vm386, %v357, %v426
      %428 = vst [vmem:[%s383 + $0x30] sm:$0xf] %v427
      %v429 = vld [vmem:[%s383 + $0x34] sm:$0x1]
      %v430 = vsel %vm392, %v358, %v429
      %431 = vst [vmem:[%s383 + $0x34] sm:$0x1] %v430
      %v432 = vld [vmem:[%s383 + $0x38] sm:$0xf]
      %v433 = vsel %vm386, %v365, %v432
      %434 = vst [vmem:[%s383 + $0x38] sm:$0xf] %v433
      %v435 = vld [vmem:[%s383 + $0x3c] sm:$0x1]
      %v436 = vsel %vm392, %v366, %v435
      %437 = vst [vmem:[%s383 + $0x3c] sm:$0x1] %v436
      %v438 = vld [vmem:[#allocation2] sm:$0xf]
      %v439 = vld [vmem:[#allocation2 + $0x4] sm:$0x1]
      %v440 = vld [vmem:[#allocation2 + $0x8] sm:$0xf]
      %v441 = vld [vmem:[#allocation2 + $0xc] sm:$0x1]
      %v442 = vld [vmem:[#allocation2 + $0x10] sm:$0xf]
      %v443 = vld [vmem:[#allocation2 + $0x14] sm:$0x1]
      %v444 = vld [vmem:[#allocation2 + $0x18] sm:$0xf]
      %v445 = vld [vmem:[#allocation2 + $0x1c] sm:$0x1]
      %v446 = vld [vmem:[#allocation2 + $0x20] sm:$0xf]
      %v447 = vld [vmem:[#allocation2 + $0x24] sm:$0x1]
      %v448 = vld [vmem:[#allocation2 + $0x28] sm:$0xf]
      %v449 = vld [vmem:[#allocation2 + $0x2c] sm:$0x1]
      %v450 = vld [vmem:[#allocation2 + $0x30] sm:$0xf]
      %v451 = vld [vmem:[#allocation2 + $0x34] sm:$0x1]
      %v452 = vld [vmem:[#allocation2 + $0x38] sm:$0xf]
      %v453 = vld [vmem:[#allocation2 + $0x3c] sm:$0x1]
      %v471 = vunpack.c.l.s4 1966171168
      %v472 = vunpack.c.0.s8 %v471
      %v473 = vlaneseq
      %v474 = vshrl.u32 %v473, 7
      %v475 = vsub.s32 %v472, %v474
      %v476 = vrot.slane %v438, %v475
      %v477 = vcombine.high %v476, %v476
      %v479 = vunpack.c.l.s4 1966171168
      %v480 = vunpack.c.0.s8 %v479
      %v481 = vlaneseq
      %v482 = vshrl.u32 %v481, 7
      %v483 = vsub.s32 %v480, %v482
      %v484 = vrot.slane %v476, %v483
      %v486 = vunpack.c.l.s4 1966171168
      %v487 = vunpack.c.0.s8 %v486
      %v488 = vlaneseq
      %v489 = vshrl.u32 %v488, 7
      %v490 = vsub.s32 %v487, %v489
      %v491 = vrot.slane %v477, %v490
      %v492 = vcombine.high %v484, %v484
      %v493 = vcombine.high %v491, %v491
      %v495 = vunpack.c.l.s4 1966171168
      %v496 = vunpack.c.0.s8 %v495
      %v497 = vlaneseq
      %v498 = vshrl.u32 %v497, 7
      %v499 = vsub.s32 %v496, %v498
      %v500 = vrot.slane %v439, %v499
      %v502 = vunpack.c.l.s4 1966171168
      %v503 = vunpack.c.0.s8 %v502
      %v504 = vlaneseq
      %v505 = vshrl.u32 %v504, 7
      %v506 = vsub.s32 %v503, %v505
      %v507 = vrot.slane %v500, %v506
      %v509 = vunpack.c.l.s4 1966171168
      %v510 = vunpack.c.0.s8 %v509
      %v511 = vlaneseq
      %v512 = vshrl.u32 %v511, 7
      %v513 = vsub.s32 %v510, %v512
      %v514 = vrot.slane %v440, %v513
      %v515 = vcombine.high %v514, %v514
      %v517 = vunpack.c.l.s4 1966171168
      %v518 = vunpack.c.0.s8 %v517
      %v519 = vlaneseq
      %v520 = vshrl.u32 %v519, 7
      %v521 = vsub.s32 %v518, %v520
      %v522 = vrot.slane %v514, %v521
      %v524 = vunpack.c.l.s4 1966171168
      %v525 = vunpack.c.0.s8 %v524
      %v526 = vlaneseq
      %v527 = vshrl.u32 %v526, 7
      %v528 = vsub.s32 %v525, %v527
      %v529 = vrot.slane %v515, %v528
      %v530 = vcombine.high %v522, %v522
      %v531 = vcombine.high %v529, %v529
      %v533 = vunpack.c.l.s4 1966171168
      %v534 = vunpack.c.0.s8 %v533
      %v535 = vlaneseq
      %v536 = vshrl.u32 %v535, 7
      %v537 = vsub.s32 %v534, %v536
      %v538 = vrot.slane %v441, %v537
      %v540 = vunpack.c.l.s4 1966171168
      %v541 = vunpack.c.0.s8 %v540
      %v542 = vlaneseq
      %v543 = vshrl.u32 %v542, 7
      %v544 = vsub.s32 %v541, %v543
      %v545 = vrot.slane %v538, %v544
      %v547 = vunpack.c.l.s4 1966171168
      %v548 = vunpack.c.0.s8 %v547
      %v549 = vlaneseq
      %v550 = vshrl.u32 %v549, 7
      %v551 = vsub.s32 %v548, %v550
      %v552 = vrot.slane %v442, %v551
      %v553 = vcombine.high %v552, %v552
      %v555 = vunpack.c.l.s4 1966171168
      %v556 = vunpack.c.0.s8 %v555
      %v557 = vlaneseq
      %v558 = vshrl.u32 %v557, 7
      %v559 = vsub.s32 %v556, %v558
      %v560 = vrot.slane %v552, %v559
      %v562 = vunpack.c.l.s4 1966171168
      %v563 = vunpack.c.0.s8 %v562
      %v564 = vlaneseq
      %v565 = vshrl.u32 %v564, 7
      %v566 = vsub.s32 %v563, %v565
      %v567 = vrot.slane %v553, %v566
      %v568 = vcombine.high %v560, %v560
      %v569 = vcombine.high %v567, %v567
      %v571 = vunpack.c.l.s4 1966171168
      %v572 = vunpack.c.0.s8 %v571
      %v573 = vlaneseq
      %v574 = vshrl.u32 %v573, 7
      %v575 = vsub.s32 %v572, %v574
      %v576 = vrot.slane %v443, %v575
      %v578 = vunpack.c.l.s4 1966171168
      %v579 = vunpack.c.0.s8 %v578
      %v580 = vlaneseq
      %v581 = vshrl.u32 %v580, 7
      %v582 = vsub.s32 %v579, %v581
      %v583 = vrot.slane %v576, %v582
      %v585 = vunpack.c.l.s4 1966171168
      %v586 = vunpack.c.0.s8 %v585
      %v587 = vlaneseq
      %v588 = vshrl.u32 %v587, 7
      %v589 = vsub.s32 %v586, %v588
      %v590 = vrot.slane %v444, %v589
      %v591 = vcombine.high %v590, %v590
      %v593 = vunpack.c.l.s4 1966171168
      %v594 = vunpack.c.0.s8 %v593
      %v595 = vlaneseq
      %v596 = vshrl.u32 %v595, 7
      %v597 = vsub.s32 %v594, %v596
      %v598 = vrot.slane %v590, %v597
      %v600 = vunpack.c.l.s4 1966171168
      %v601 = vunpack.c.0.s8 %v600
      %v602 = vlaneseq
      %v603 = vshrl.u32 %v602, 7
      %v604 = vsub.s32 %v601, %v603
      %v605 = vrot.slane %v591, %v604
      %v606 = vcombine.high %v598, %v598
      %v607 = vcombine.high %v605, %v605
      %v609 = vunpack.c.l.s4 1966171168
      %v610 = vunpack.c.0.s8 %v609
      %v611 = vlaneseq
      %v612 = vshrl.u32 %v611, 7
      %v613 = vsub.s32 %v610, %v612
      %v614 = vrot.slane %v445, %v613
      %v616 = vunpack.c.l.s4 1966171168
      %v617 = vunpack.c.0.s8 %v616
      %v618 = vlaneseq
      %v619 = vshrl.u32 %v618, 7
      %v620 = vsub.s32 %v617, %v619
      %v621 = vrot.slane %v614, %v620
      %v623 = vunpack.c.l.s4 1966171168
      %v624 = vunpack.c.0.s8 %v623
      %v625 = vlaneseq
      %v626 = vshrl.u32 %v625, 7
      %v627 = vsub.s32 %v624, %v626
      %v628 = vrot.slane %v446, %v627
      %v629 = vcombine.high %v628, %v628
      %v631 = vunpack.c.l.s4 1966171168
      %v632 = vunpack.c.0.s8 %v631
      %v633 = vlaneseq
      %v634 = vshrl.u32 %v633, 7
      %v635 = vsub.s32 %v632, %v634
      %v636 = vrot.slane %v628, %v635
      %v638 = vunpack.c.l.s4 1966171168
      %v639 = vunpack.c.0.s8 %v638
      %v640 = vlaneseq
      %v641 = vshrl.u32 %v640, 7
      %v642 = vsub.s32 %v639, %v641
      %v643 = vrot.slane %v629, %v642
      %v644 = vcombine.high %v636, %v636
      %v645 = vcombine.high %v643, %v643
      %v647 = vunpack.c.l.s4 1966171168
      %v648 = vunpack.c.0.s8 %v647
      %v649 = vlaneseq
      %v650 = vshrl.u32 %v649, 7
      %v651 = vsub.s32 %v648, %v650
      %v652 = vrot.slane %v447, %v651
      %v654 = vunpack.c.l.s4 1966171168
      %v655 = vunpack.c.0.s8 %v654
      %v656 = vlaneseq
      %v657 = vshrl.u32 %v656, 7
      %v658 = vsub.s32 %v655, %v657
      %v659 = vrot.slane %v652, %v658
      %v661 = vunpack.c.l.s4 1966171168
      %v662 = vunpack.c.0.s8 %v661
      %v663 = vlaneseq
      %v664 = vshrl.u32 %v663, 7
      %v665 = vsub.s32 %v662, %v664
      %v666 = vrot.slane %v448, %v665
      %v667 = vcombine.high %v666, %v666
      %v669 = vunpack.c.l.s4 1966171168
      %v670 = vunpack.c.0.s8 %v669
      %v671 = vlaneseq
      %v672 = vshrl.u32 %v671, 7
      %v673 = vsub.s32 %v670, %v672
      %v674 = vrot.slane %v666, %v673
      %v676 = vunpack.c.l.s4 1966171168
      %v677 = vunpack.c.0.s8 %v676
      %v678 = vlaneseq
      %v679 = vshrl.u32 %v678, 7
      %v680 = vsub.s32 %v677, %v679
      %v681 = vrot.slane %v667, %v680
      %v682 = vcombine.high %v674, %v674
      %v683 = vcombine.high %v681, %v681
      %v685 = vunpack.c.l.s4 1966171168
      %v686 = vunpack.c.0.s8 %v685
      %v687 = vlaneseq
      %v688 = vshrl.u32 %v687, 7
      %v689 = vsub.s32 %v686, %v688
      %v690 = vrot.slane %v449, %v689
      %v692 = vunpack.c.l.s4 1966171168
      %v693 = vunpack.c.0.s8 %v692
      %v694 = vlaneseq
      %v695 = vshrl.u32 %v694, 7
      %v696 = vsub.s32 %v693, %v695
      %v697 = vrot.slane %v690, %v696
      %v699 = vunpack.c.l.s4 1966171168
      %v700 = vunpack.c.0.s8 %v699
      %v701 = vlaneseq
      %v702 = vshrl.u32 %v701, 7
      %v703 = vsub.s32 %v700, %v702
      %v704 = vrot.slane %v450, %v703
      %v705 = vcombine.high %v704, %v704
      %v707 = vunpack.c.l.s4 1966171168
      %v708 = vunpack.c.0.s8 %v707
      %v709 = vlaneseq
      %v710 = vshrl.u32 %v709, 7
      %v711 = vsub.s32 %v708, %v710
      %v712 = vrot.slane %v704, %v711
      %v714 = vunpack.c.l.s4 1966171168
      %v715 = vunpack.c.0.s8 %v714
      %v716 = vlaneseq
      %v717 = vshrl.u32 %v716, 7
      %v718 = vsub.s32 %v715, %v717
      %v719 = vrot.slane %v705, %v718
      %v720 = vcombine.high %v712, %v712
      %v721 = vcombine.high %v719, %v719
      %v723 = vunpack.c.l.s4 1966171168
      %v724 = vunpack.c.0.s8 %v723
      %v725 = vlaneseq
      %v726 = vshrl.u32 %v725, 7
      %v727 = vsub.s32 %v724, %v726
      %v728 = vrot.slane %v451, %v727
      %v730 = vunpack.c.l.s4 1966171168
      %v731 = vunpack.c.0.s8 %v730
      %v732 = vlaneseq
      %v733 = vshrl.u32 %v732, 7
      %v734 = vsub.s32 %v731, %v733
      %v735 = vrot.slane %v728, %v734
      %v737 = vunpack.c.l.s4 1966171168
      %v738 = vunpack.c.0.s8 %v737
      %v739 = vlaneseq
      %v740 = vshrl.u32 %v739, 7
      %v741 = vsub.s32 %v738, %v740
      %v742 = vrot.slane %v452, %v741
      %v743 = vcombine.high %v742, %v742
      %v745 = vunpack.c.l.s4 1966171168
      %v746 = vunpack.c.0.s8 %v745
      %v747 = vlaneseq
      %v748 = vshrl.u32 %v747, 7
      %v749 = vsub.s32 %v746, %v748
      %v750 = vrot.slane %v742, %v749
      %v752 = vunpack.c.l.s4 1966171168
      %v753 = vunpack.c.0.s8 %v752
      %v754 = vlaneseq
      %v755 = vshrl.u32 %v754, 7
      %v756 = vsub.s32 %v753, %v755
      %v757 = vrot.slane %v743, %v756
      %v758 = vcombine.high %v750, %v750
      %v759 = vcombine.high %v757, %v757
      %v761 = vunpack.c.l.s4 1966171168
      %v762 = vunpack.c.0.s8 %v761
      %v763 = vlaneseq
      %v764 = vshrl.u32 %v763, 7
      %v765 = vsub.s32 %v762, %v764
      %v766 = vrot.slane %v453, %v765
      %v768 = vunpack.c.l.s4 1966171168
      %v769 = vunpack.c.0.s8 %v768
      %v770 = vlaneseq
      %v771 = vshrl.u32 %v770, 7
      %v772 = vsub.s32 %v769, %v771
      %v773 = vrot.slane %v766, %v772
      %v774 = vld [vmem:[%s1] sm:$0xf]
      %s775 = scalar_lea.vmem %s1, 4
      %v776 = vld [vmem:[%s775] sm:$0xf]
      %s777 = scalar_lea.vmem %s1, 8
      %v778 = vld [vmem:[%s777] sm:$0xf]
      %v779 = vld [vmem:[%s383] sm:$0xf]
      %v780 = vld [vmem:[%s383 + $0x4] sm:$0x1]
      %v781 = vld [vmem:[%s383 + $0x8] sm:$0xf]
      %v782 = vld [vmem:[%s383 + $0xc] sm:$0x1]
      %v783 = vld [vmem:[%s383 + $0x10] sm:$0xf]
      %v784 = vld [vmem:[%s383 + $0x14] sm:$0x1]
      %v785 = vld [vmem:[%s383 + $0x18] sm:$0xf]
      %v786 = vld [vmem:[%s383 + $0x1c] sm:$0x1]
      %v787 = vld [vmem:[%s383 + $0x20] sm:$0xf]
      %v788 = vld [vmem:[%s383 + $0x24] sm:$0x1]
      %v789 = vld [vmem:[%s383 + $0x28] sm:$0xf]
      %v790 = vld [vmem:[%s383 + $0x2c] sm:$0x1]
      %v791 = vld [vmem:[%s383 + $0x30] sm:$0xf]
      %v792 = vld [vmem:[%s383 + $0x34] sm:$0x1]
      %v793 = vld [vmem:[%s383 + $0x38] sm:$0xf]
      %v794 = vld [vmem:[%s383 + $0x3c] sm:$0x1]
      %v812 = vunpack.c.l.s4 1966171168
      %v813 = vunpack.c.0.s8 %v812
      %v814 = vlaneseq
      %v815 = vshrl.u32 %v814, 7
      %v816 = vsub.s32 %v813, %v815
      %v817 = vrot.slane %v779, %v816
      %v818 = vcombine.high %v817, %v817
      %v820 = vunpack.c.l.s4 1966171168
      %v821 = vunpack.c.0.s8 %v820
      %v822 = vlaneseq
      %v823 = vshrl.u32 %v822, 7
      %v824 = vsub.s32 %v821, %v823
      %v825 = vrot.slane %v817, %v824
      %v827 = vunpack.c.l.s4 1966171168
      %v828 = vunpack.c.0.s8 %v827
      %v829 = vlaneseq
      %v830 = vshrl.u32 %v829, 7
      %v831 = vsub.s32 %v828, %v830
      %v832 = vrot.slane %v818, %v831
      %v833 = vcombine.high %v825, %v825
      %v834 = vcombine.high %v832, %v832
      %v836 = vunpack.c.l.s4 1966171168
      %v837 = vunpack.c.0.s8 %v836
      %v838 = vlaneseq
      %v839 = vshrl.u32 %v838, 7
      %v840 = vsub.s32 %v837, %v839
      %v841 = vrot.slane %v780, %v840
      %v843 = vunpack.c.l.s4 1966171168
      %v844 = vunpack.c.0.s8 %v843
      %v845 = vlaneseq
      %v846 = vshrl.u32 %v845, 7
      %v847 = vsub.s32 %v844, %v846
      %v848 = vrot.slane %v841, %v847
      %v850 = vunpack.c.l.s4 1966171168
      %v851 = vunpack.c.0.s8 %v850
      %v852 = vlaneseq
      %v853 = vshrl.u32 %v852, 7
      %v854 = vsub.s32 %v851, %v853
      %v855 = vrot.slane %v781, %v854
      %v856 = vcombine.high %v855, %v855
      %v858 = vunpack.c.l.s4 1966171168
      %v859 = vunpack.c.0.s8 %v858
      %v860 = vlaneseq
      %v861 = vshrl.u32 %v860, 7
      %v862 = vsub.s32 %v859, %v861
      %v863 = vrot.slane %v855, %v862
      %v865 = vunpack.c.l.s4 1966171168
      %v866 = vunpack.c.0.s8 %v865
      %v867 = vlaneseq
      %v868 = vshrl.u32 %v867, 7
      %v869 = vsub.s32 %v866, %v868
      %v870 = vrot.slane %v856, %v869
      %v871 = vcombine.high %v863, %v863
      %v872 = vcombine.high %v870, %v870
      %v874 = vunpack.c.l.s4 1966171168
      %v875 = vunpack.c.0.s8 %v874
      %v876 = vlaneseq
      %v877 = vshrl.u32 %v876, 7
      %v878 = vsub.s32 %v875, %v877
      %v879 = vrot.slane %v782, %v878
      %v881 = vunpack.c.l.s4 1966171168
      %v882 = vunpack.c.0.s8 %v881
      %v883 = vlaneseq
      %v884 = vshrl.u32 %v883, 7
      %v885 = vsub.s32 %v882, %v884
      %v886 = vrot.slane %v879, %v885
      %v888 = vunpack.c.l.s4 1966171168
      %v889 = vunpack.c.0.s8 %v888
      %v890 = vlaneseq
      %v891 = vshrl.u32 %v890, 7
      %v892 = vsub.s32 %v889, %v891
      %v893 = vrot.slane %v783, %v892
      %v894 = vcombine.high %v893, %v893
      %v896 = vunpack.c.l.s4 1966171168
      %v897 = vunpack.c.0.s8 %v896
      %v898 = vlaneseq
      %v899 = vshrl.u32 %v898, 7
      %v900 = vsub.s32 %v897, %v899
      %v901 = vrot.slane %v893, %v900
      %v903 = vunpack.c.l.s4 1966171168
      %v904 = vunpack.c.0.s8 %v903
      %v905 = vlaneseq
      %v906 = vshrl.u32 %v905, 7
      %v907 = vsub.s32 %v904, %v906
      %v908 = vrot.slane %v894, %v907
      %v909 = vcombine.high %v901, %v901
      %v910 = vcombine.high %v908, %v908
      %v912 = vunpack.c.l.s4 1966171168
      %v913 = vunpack.c.0.s8 %v912
      %v914 = vlaneseq
      %v915 = vshrl.u32 %v914, 7
      %v916 = vsub.s32 %v913, %v915
      %v917 = vrot.slane %v784, %v916
      %v919 = vunpack.c.l.s4 1966171168
      %v920 = vunpack.c.0.s8 %v919
      %v921 = vlaneseq
      %v922 = vshrl.u32 %v921, 7
      %v923 = vsub.s32 %v920, %v922
      %v924 = vrot.slane %v917, %v923
      %v926 = vunpack.c.l.s4 1966171168
      %v927 = vunpack.c.0.s8 %v926
      %v928 = vlaneseq
      %v929 = vshrl.u32 %v928, 7
      %v930 = vsub.s32 %v927, %v929
      %v931 = vrot.slane %v785, %v930
      %v932 = vcombine.high %v931, %v931
      %v934 = vunpack.c.l.s4 1966171168
      %v935 = vunpack.c.0.s8 %v934
      %v936 = vlaneseq
      %v937 = vshrl.u32 %v936, 7
      %v938 = vsub.s32 %v935, %v937
      %v939 = vrot.slane %v931, %v938
      %v941 = vunpack.c.l.s4 1966171168
      %v942 = vunpack.c.0.s8 %v941
      %v943 = vlaneseq
      %v944 = vshrl.u32 %v943, 7
      %v945 = vsub.s32 %v942, %v944
      %v946 = vrot.slane %v932, %v945
      %v947 = vcombine.high %v939, %v939
      %v948 = vcombine.high %v946, %v946
      %v950 = vunpack.c.l.s4 1966171168
      %v951 = vunpack.c.0.s8 %v950
      %v952 = vlaneseq
      %v953 = vshrl.u32 %v952, 7
      %v954 = vsub.s32 %v951, %v953
      %v955 = vrot.slane %v786, %v954
      %v957 = vunpack.c.l.s4 1966171168
      %v958 = vunpack.c.0.s8 %v957
      %v959 = vlaneseq
      %v960 = vshrl.u32 %v959, 7
      %v961 = vsub.s32 %v958, %v960
      %v962 = vrot.slane %v955, %v961
      %v964 = vunpack.c.l.s4 1966171168
      %v965 = vunpack.c.0.s8 %v964
      %v966 = vlaneseq
      %v967 = vshrl.u32 %v966, 7
      %v968 = vsub.s32 %v965, %v967
      %v969 = vrot.slane %v787, %v968
      %v970 = vcombine.high %v969, %v969
      %v972 = vunpack.c.l.s4 1966171168
      %v973 = vunpack.c.0.s8 %v972
      %v974 = vlaneseq
      %v975 = vshrl.u32 %v974, 7
      %v976 = vsub.s32 %v973, %v975
      %v977 = vrot.slane %v969, %v976
      %v979 = vunpack.c.l.s4 1966171168
      %v980 = vunpack.c.0.s8 %v979
      %v981 = vlaneseq
      %v982 = vshrl.u32 %v981, 7
      %v983 = vsub.s32 %v980, %v982
      %v984 = vrot.slane %v970, %v983
      %v985 = vcombine.high %v977, %v977
      %v986 = vcombine.high %v984, %v984
      %v988 = vunpack.c.l.s4 1966171168
      %v989 = vunpack.c.0.s8 %v988
      %v990 = vlaneseq
      %v991 = vshrl.u32 %v990, 7
      %v992 = vsub.s32 %v989, %v991
      %v993 = vrot.slane %v788, %v992
      %v995 = vunpack.c.l.s4 1966171168
      %v996 = vunpack.c.0.s8 %v995
      %v997 = vlaneseq
      %v998 = vshrl.u32 %v997, 7
      %v999 = vsub.s32 %v996, %v998
      %v1000 = vrot.slane %v993, %v999
      %v1002 = vunpack.c.l.s4 1966171168
      %v1003 = vunpack.c.0.s8 %v1002
      %v1004 = vlaneseq
      %v1005 = vshrl.u32 %v1004, 7
      %v1006 = vsub.s32 %v1003, %v1005
      %v1007 = vrot.slane %v789, %v1006
      %v1008 = vcombine.high %v1007, %v1007
      %v1010 = vunpack.c.l.s4 1966171168
      %v1011 = vunpack.c.0.s8 %v1010
      %v1012 = vlaneseq
      %v1013 = vshrl.u32 %v1012, 7
      %v1014 = vsub.s32 %v1011, %v1013
      %v1015 = vrot.slane %v1007, %v1014
      %v1017 = vunpack.c.l.s4 1966171168
      %v1018 = vunpack.c.0.s8 %v1017
      %v1019 = vlaneseq
      %v1020 = vshrl.u32 %v1019, 7
      %v1021 = vsub.s32 %v1018, %v1020
      %v1022 = vrot.slane %v1008, %v1021
      %v1023 = vcombine.high %v1015, %v1015
      %v1024 = vcombine.high %v1022, %v1022
      %v1026 = vunpack.c.l.s4 1966171168
      %v1027 = vunpack.c.0.s8 %v1026
      %v1028 = vlaneseq
      %v1029 = vshrl.u32 %v1028, 7
      %v1030 = vsub.s32 %v1027, %v1029
      %v1031 = vrot.slane %v790, %v1030
      %v1033 = vunpack.c.l.s4 1966171168
      %v1034 = vunpack.c.0.s8 %v1033
      %v1035 = vlaneseq
      %v1036 = vshrl.u32 %v1035, 7
      %v1037 = vsub.s32 %v1034, %v1036
      %v1038 = vrot.slane %v1031, %v1037
      %v1040 = vunpack.c.l.s4 1966171168
      %v1041 = vunpack.c.0.s8 %v1040
      %v1042 = vlaneseq
      %v1043 = vshrl.u32 %v1042, 7
      %v1044 = vsub.s32 %v1041, %v1043
      %v1045 = vrot.slane %v791, %v1044
      %v1046 = vcombine.high %v1045, %v1045
      %v1048 = vunpack.c.l.s4 1966171168
      %v1049 = vunpack.c.0.s8 %v1048
      %v1050 = vlaneseq
      %v1051 = vshrl.u32 %v1050, 7
      %v1052 = vsub.s32 %v1049, %v1051
      %v1053 = vrot.slane %v1045, %v1052
      %v1055 = vunpack.c.l.s4 1966171168
      %v1056 = vunpack.c.0.s8 %v1055
      %v1057 = vlaneseq
      %v1058 = vshrl.u32 %v1057, 7
      %v1059 = vsub.s32 %v1056, %v1058
      %v1060 = vrot.slane %v1046, %v1059
      %v1061 = vcombine.high %v1053, %v1053
      %v1062 = vcombine.high %v1060, %v1060
      %v1064 = vunpack.c.l.s4 1966171168
      %v1065 = vunpack.c.0.s8 %v1064
      %v1066 = vlaneseq
      %v1067 = vshrl.u32 %v1066, 7
      %v1068 = vsub.s32 %v1065, %v1067
      %v1069 = vrot.slane %v792, %v1068
      %v1071 = vunpack.c.l.s4 1966171168
      %v1072 = vunpack.c.0.s8 %v1071
      %v1073 = vlaneseq
      %v1074 = vshrl.u32 %v1073, 7
      %v1075 = vsub.s32 %v1072, %v1074
      %v1076 = vrot.slane %v1069, %v1075
      %v1078 = vunpack.c.l.s4 1966171168
      %v1079 = vunpack.c.0.s8 %v1078
      %v1080 = vlaneseq
      %v1081 = vshrl.u32 %v1080, 7
      %v1082 = vsub.s32 %v1079, %v1081
      %v1083 = vrot.slane %v793, %v1082
      %v1084 = vcombine.high %v1083, %v1083
      %v1086 = vunpack.c.l.s4 1966171168
      %v1087 = vunpack.c.0.s8 %v1086
      %v1088 = vlaneseq
      %v1089 = vshrl.u32 %v1088, 7
      %v1090 = vsub.s32 %v1087, %v1089
      %v1091 = vrot.slane %v1083, %v1090
      %v1093 = vunpack.c.l.s4 1966171168
      %v1094 = vunpack.c.0.s8 %v1093
      %v1095 = vlaneseq
      %v1096 = vshrl.u32 %v1095, 7
      %v1097 = vsub.s32 %v1094, %v1096
      %v1098 = vrot.slane %v1084, %v1097
      %v1099 = vcombine.high %v1091, %v1091
      %v1100 = vcombine.high %v1098, %v1098
      %v1102 = vunpack.c.l.s4 1966171168
      %v1103 = vunpack.c.0.s8 %v1102
      %v1104 = vlaneseq
      %v1105 = vshrl.u32 %v1104, 7
      %v1106 = vsub.s32 %v1103, %v1105
      %v1107 = vrot.slane %v794, %v1106
      %v1109 = vunpack.c.l.s4 1966171168
      %v1110 = vunpack.c.0.s8 %v1109
      %v1111 = vlaneseq
      %v1112 = vshrl.u32 %v1111, 7
      %v1113 = vsub.s32 %v1110, %v1112
      %v1114 = vrot.slane %v1107, %v1113
      %s1115 = scalar_lea.vmem %s1, 12
      %v1116 = vld [vmem:[%s1115] sm:$0xf]
      %v1117 = vcombine.low %v825, %v832
      %v1118 = vcombine.low %v833, %v834
      %v1119 = vcombine.low %v848, %v863
      %v1120 = vcombine.low %v870, %v871
      %v1122 = vunpack.c.l.s4 1966171168
      %v1123 = vunpack.c.0.s8 %v1122
      %v1124 = vlaneseq
      %v1125 = vshrl.u32 %v1124, 7
      %v1126 = vsub.s32 %v1123, %v1125
      %v1127 = vrot.slane %v1117, %v1126
      %v1129 = vunpack.c.l.s4 1966171168
      %v1130 = vunpack.c.0.s8 %v1129
      %v1131 = vlaneseq
      %v1132 = vshrl.u32 %v1131, 7
      %v1133 = vsub.s32 %v1130, %v1132
      %v1134 = vrot.slane %v1118, %v1133
      %v1136 = vunpack.c.l.s4 1966171168
      %v1137 = vunpack.c.0.s8 %v1136
      %v1138 = vlaneseq
      %v1139 = vshrl.u32 %v1138, 7
      %v1140 = vsub.s32 %v1137, %v1139
      %v1141 = vrot.slane %v1119, %v1140
      %v1143 = vunpack.c.l.s4 1966171168
      %v1144 = vunpack.c.0.s8 %v1143
      %v1145 = vlaneseq
      %v1146 = vshrl.u32 %v1145, 7
      %v1147 = vsub.s32 %v1144, %v1146
      %v1148 = vrot.slane %v1120, %v1147
      %v1149 = vcombine.low %v1127, %v1134
      %v1150 = vcombine.low %v1141, %v1148
      %v1152 = vunpack.c.l.s4 1966171168
      %v1153 = vunpack.c.0.s8 %v1152
      %v1154 = vlaneseq
      %v1155 = vshrl.u32 %v1154, 7
      %v1156 = vsub.s32 %v1153, %v1155
      %v1157 = vrot.slane %v1149, %v1156
      %v1159 = vunpack.c.l.s4 1966171168
      %v1160 = vunpack.c.0.s8 %v1159
      %v1161 = vlaneseq
      %v1162 = vshrl.u32 %v1161, 7
      %v1163 = vsub.s32 %v1160, %v1162
      %v1164 = vrot.slane %v1150, %v1163
      %v1165 = vcombine.low %v1157, %v1164
      %v1166 = vcombine.low %v872, %v886
      %v1167 = vcombine.low %v901, %v908
      %v1168 = vcombine.low %v909, %v910
      %v1169 = vcombine.low %v924, %v939
      %v1171 = vunpack.c.l.s4 1966171168
      %v1172 = vunpack.c.0.s8 %v1171
      %v1173 = vlaneseq
      %v1174 = vshrl.u32 %v1173, 7
      %v1175 = vsub.s32 %v1172, %v1174
      %v1176 = vrot.slane %v1166, %v1175
      %v1178 = vunpack.c.l.s4 1966171168
      %v1179 = vunpack.c.0.s8 %v1178
      %v1180 = vlaneseq
      %v1181 = vshrl.u32 %v1180, 7
      %v1182 = vsub.s32 %v1179, %v1181
      %v1183 = vrot.slane %v1167, %v1182
      %v1185 = vunpack.c.l.s4 1966171168
      %v1186 = vunpack.c.0.s8 %v1185
      %v1187 = vlaneseq
      %v1188 = vshrl.u32 %v1187, 7
      %v1189 = vsub.s32 %v1186, %v1188
      %v1190 = vrot.slane %v1168, %v1189
      %v1192 = vunpack.c.l.s4 1966171168
      %v1193 = vunpack.c.0.s8 %v1192
      %v1194 = vlaneseq
      %v1195 = vshrl.u32 %v1194, 7
      %v1196 = vsub.s32 %v1193, %v1195
      %v1197 = vrot.slane %v1169, %v1196
      %v1198 = vcombine.low %v1176, %v1183
      %v1199 = vcombine.low %v1190, %v1197
      %v1201 = vunpack.c.l.s4 1966171168
      %v1202 = vunpack.c.0.s8 %v1201
      %v1203 = vlaneseq
      %v1204 = vshrl.u32 %v1203, 7
      %v1205 = vsub.s32 %v1202, %v1204
      %v1206 = vrot.slane %v1198, %v1205
      %v1208 = vunpack.c.l.s4 1966171168
      %v1209 = vunpack.c.0.s8 %v1208
      %v1210 = vlaneseq
      %v1211 = vshrl.u32 %v1210, 7
      %v1212 = vsub.s32 %v1209, %v1211
      %v1213 = vrot.slane %v1199, %v1212
      %v1214 = vcombine.low %v1206, %v1213
      %v1215 = vcombine.low %v946, %v947
      %v1216 = vcombine.low %v948, %v962
      %v1217 = vcombine.low %v977, %v984
      %v1218 = vcombine.low %v985, %v986
      %v1220 = vunpack.c.l.s4 1966171168
      %v1221 = vunpack.c.0.s8 %v1220
      %v1222 = vlaneseq
      %v1223 = vshrl.u32 %v1222, 7
      %v1224 = vsub.s32 %v1221, %v1223
      %v1225 = vrot.slane %v1215, %v1224
      %v1227 = vunpack.c.l.s4 1966171168
      %v1228 = vunpack.c.0.s8 %v1227
      %v1229 = vlaneseq
      %v1230 = vshrl.u32 %v1229, 7
      %v1231 = vsub.s32 %v1228, %v1230
      %v1232 = vrot.slane %v1216, %v1231
      %v1234 = vunpack.c.l.s4 1966171168
      %v1235 = vunpack.c.0.s8 %v1234
      %v1236 = vlaneseq
      %v1237 = vshrl.u32 %v1236, 7
      %v1238 = vsub.s32 %v1235, %v1237
      %v1239 = vrot.slane %v1217, %v1238
      %v1241 = vunpack.c.l.s4 1966171168
      %v1242 = vunpack.c.0.s8 %v1241
      %v1243 = vlaneseq
      %v1244 = vshrl.u32 %v1243, 7
      %v1245 = vsub.s32 %v1242, %v1244
      %v1246 = vrot.slane %v1218, %v1245
      %v1247 = vcombine.low %v1225, %v1232
      %v1248 = vcombine.low %v1239, %v1246
      %v1250 = vunpack.c.l.s4 1966171168
      %v1251 = vunpack.c.0.s8 %v1250
      %v1252 = vlaneseq
      %v1253 = vshrl.u32 %v1252, 7
      %v1254 = vsub.s32 %v1251, %v1253
      %v1255 = vrot.slane %v1247, %v1254
      %v1257 = vunpack.c.l.s4 1966171168
      %v1258 = vunpack.c.0.s8 %v1257
      %v1259 = vlaneseq
      %v1260 = vshrl.u32 %v1259, 7
      %v1261 = vsub.s32 %v1258, %v1260
      %v1262 = vrot.slane %v1248, %v1261
      %v1263 = vcombine.low %v1255, %v1262
      %v1264 = vcombine.low %v1000, %v1015
      %v1265 = vcombine.low %v1022, %v1023
      %v1266 = vcombine.low %v1024, %v1038
      %v1267 = vcombine.low %v1053, %v1060
      %v1269 = vunpack.c.l.s4 1966171168
      %v1270 = vunpack.c.0.s8 %v1269
      %v1271 = vlaneseq
      %v1272 = vshrl.u32 %v1271, 7
      %v1273 = vsub.s32 %v1270, %v1272
      %v1274 = vrot.slane %v1264, %v1273
      %v1276 = vunpack.c.l.s4 1966171168
      %v1277 = vunpack.c.0.s8 %v1276
      %v1278 = vlaneseq
      %v1279 = vshrl.u32 %v1278, 7
      %v1280 = vsub.s32 %v1277, %v1279
      %v1281 = vrot.slane %v1265, %v1280
      %v1283 = vunpack.c.l.s4 1966171168
      %v1284 = vunpack.c.0.s8 %v1283
      %v1285 = vlaneseq
      %v1286 = vshrl.u32 %v1285, 7
      %v1287 = vsub.s32 %v1284, %v1286
      %v1288 = vrot.slane %v1266, %v1287
      %v1290 = vunpack.c.l.s4 1966171168
      %v1291 = vunpack.c.0.s8 %v1290
      %v1292 = vlaneseq
      %v1293 = vshrl.u32 %v1292, 7
      %v1294 = vsub.s32 %v1291, %v1293
      %v1295 = vrot.slane %v1267, %v1294
      %v1296 = vcombine.low %v1274, %v1281
      %v1297 = vcombine.low %v1288, %v1295
      %v1299 = vunpack.c.l.s4 1966171168
      %v1300 = vunpack.c.0.s8 %v1299
      %v1301 = vlaneseq
      %v1302 = vshrl.u32 %v1301, 7
      %v1303 = vsub.s32 %v1300, %v1302
      %v1304 = vrot.slane %v1296, %v1303
      %v1306 = vunpack.c.l.s4 1966171168
      %v1307 = vunpack.c.0.s8 %v1306
      %v1308 = vlaneseq
      %v1309 = vshrl.u32 %v1308, 7
      %v1310 = vsub.s32 %v1307, %v1309
      %v1311 = vrot.slane %v1297, %v1310
      %v1312 = vcombine.low %v1304, %v1311
      %v1313 = vcombine.low %v1061, %v1062
      %v1314 = vcombine.low %v1076, %v1091
      %v1315 = vcombine.low %v1098, %v1099
      %v1316 = vcombine.low %v1100, %v1114
      %v1318 = vunpack.c.l.s4 1966171168
      %v1319 = vunpack.c.0.s8 %v1318
      %v1320 = vlaneseq
      %v1321 = vshrl.u32 %v1320, 7
      %v1322 = vsub.s32 %v1319, %v1321
      %v1323 = vrot.slane %v1313, %v1322
      %v1325 = vunpack.c.l.s4 1966171168
      %v1326 = vunpack.c.0.s8 %v1325
      %v1327 = vlaneseq
      %v1328 = vshrl.u32 %v1327, 7
      %v1329 = vsub.s32 %v1326, %v1328
      %v1330 = vrot.slane %v1314, %v1329
      %v1332 = vunpack.c.l.s4 1966171168
      %v1333 = vunpack.c.0.s8 %v1332
      %v1334 = vlaneseq
      %v1335 = vshrl.u32 %v1334, 7
      %v1336 = vsub.s32 %v1333, %v1335
      %v1337 = vrot.slane %v1315, %v1336
      %v1339 = vunpack.c.l.s4 1966171168
      %v1340 = vunpack.c.0.s8 %v1339
      %v1341 = vlaneseq
      %v1342 = vshrl.u32 %v1341, 7
      %v1343 = vsub.s32 %v1340, %v1342
      %v1344 = vrot.slane %v1316, %v1343
      %v1345 = vcombine.low %v1323, %v1330
      %v1346 = vcombine.low %v1337, %v1344
      %v1348 = vunpack.c.l.s4 1966171168
      %v1349 = vunpack.c.0.s8 %v1348
      %v1350 = vlaneseq
      %v1351 = vshrl.u32 %v1350, 7
      %v1352 = vsub.s32 %v1349, %v1351
      %v1353 = vrot.slane %v1345, %v1352
      %v1355 = vunpack.c.l.s4 1966171168
      %v1356 = vunpack.c.0.s8 %v1355
      %v1357 = vlaneseq
      %v1358 = vshrl.u32 %v1357, 7
      %v1359 = vsub.s32 %v1356, %v1358
      %v1360 = vrot.slane %v1346, %v1359
      %v1361 = vcombine.low %v1353, %v1360
      %vm1362 = vcmask 64512
      %v1364 = vsel %vm1362, %v1165, 0
      %v1367 = vsel %vm1362, %v1214, 0
      %v1370 = vsel %vm1362, %v1263, 0
      %v1373 = vsel %vm1362, %v1312, 0
      %v1376 = vsel %vm1362, %v1361, 0
      %vm1378 = vcmask 1043456
      %v1380 = vsel %vm1378, %v1116, 0
      %1382 = vmatprep.subr.bf16.mxu0 0
      %1383 = vmatpush1.bf16.msra.mxu0 %v1380
      %1384 = vmatprep.subr.bf16.mxu0 0
      %1385 = vmatpush1.bf16.msra.mxu0 0
      %1386 = vmatprep.subr.bf16.mxu0 0
      %1387 = vmatpush1.bf16.msra.mxu0 0
      %1388 = vmatprep.subr.bf16.mxu0 0
      %1389 = vmatpush1.bf16.msra.mxu0 0
      %1390 = vmatprep.subr.bf16.mxu0 0
      %1391 = vmatpush1.bf16.msra.mxu0 0
      %1392 = vmatprep.subr.bf16.mxu0 0
      %1393 = vmatpush1.bf16.msra.mxu0 0
      %1394 = vmatprep.subr.bf16.mxu0 0
      %1395 = vmatpush1.bf16.msra.mxu0 0
      %1396 = vmatprep.subr.bf16.mxu0 0
      %1397 = vmatpush1.bf16.msra.mxu0 0
      %1398 = vmatprep.subr.bf16.mxu0 0
      %1399 = vmatpush1.bf16.msra.mxu0 0
      %1400 = vmatprep.subr.bf16.mxu0 0
      %1401 = vmatpush1.bf16.msra.mxu0 0
      %1402 = vmatprep.subr.bf16.mxu0 0
      %1403 = vmatpush1.bf16.msra.mxu0 0
      %1404 = vmatprep.subr.bf16.mxu0 0
      %1405 = vmatpush1.bf16.msra.mxu0 0
      %1406 = vmatprep.subr.bf16.mxu0 0
      %1407 = vmatpush1.bf16.msra.mxu0 0
      %1408 = vmatprep.subr.bf16.mxu0 0
      %1409 = vmatpush1.bf16.msra.mxu0 0
      %1410 = vmatprep.subr.bf16.mxu0 0
      %1411 = vmatpush1.bf16.msra.mxu0 0
      %1412 = vmatprep.subr.bf16.mxu0 0
      %1413 = vmatpush1.bf16.msra.mxu0 0
      %1414 = vmatprep.mubr.bf16.mxu0 0
      %1415 = vmatmul.mubr.bf16.gmra.mrb[0].mxu0 %v1364
      %v1416 = vpop.f32.mrb[0].mxu0
      %v1417 = vadd.f32 0.0, %v1416
      %v1418 = vpop.f32.mrb[0].mxu0
      %v1419 = vpop.f32.mrb[0].mxu0
      %v1420 = vadd.f32 0.0, %v1419
      %v1421 = vpop.f32.mrb[0].mxu0
      %1422 = vmatprep.mubr.bf16.mxu0 0
      %1423 = vmatmul.mubr.bf16.gmra.mrb[0].mxu0 %v1367
      %v1424 = vpop.f32.mrb[0].mxu0
      %v1425 = vadd.f32 0.0, %v1424
      %v1426 = vpop.f32.mrb[0].mxu0
      %v1427 = vpop.f32.mrb[0].mxu0
      %v1428 = vadd.f32 0.0, %v1427
      %v1429 = vpop.f32.mrb[0].mxu0
      %1430 = vmatprep.mubr.bf16.mxu0 0
      %1431 = vmatmul.mubr.bf16.gmra.mrb[0].mxu0 %v1370
      %v1432 = vpop.f32.mrb[0].mxu0
      %v1433 = vadd.f32 0.0, %v1432
      %v1434 = vpop.f32.mrb[0].mxu0
      %v1435 = vpop.f32.mrb[0].mxu0
      %v1436 = vadd.f32 0.0, %v1435
      %v1437 = vpop.f32.mrb[0].mxu0
      %1438 = vmatprep.mubr.bf16.mxu0 0
      %1439 = vmatmul.mubr.bf16.gmra.mrb[0].mxu0 %v1373
      %v1440 = vpop.f32.mrb[0].mxu0
      %v1441 = vadd.f32 0.0, %v1440
      %v1442 = vpop.f32.mrb[0].mxu0
      %v1443 = vpop.f32.mrb[0].mxu0
      %v1444 = vadd.f32 0.0, %v1443
      %v1445 = vpop.f32.mrb[0].mxu0
      %1446 = vmatprep.mubr.bf16.mxu0 0
      %1447 = vmatmul.mubr.bf16.gmra.mrb[0].mxu0 %v1376
      %v1448 = vpop.f32.mrb[0].mxu0
      %v1449 = vadd.f32 0.0, %v1448
      %v1450 = vpop.f32.mrb[0].mxu0
      %v1451 = vpop.f32.mrb[0].mxu0
      %v1452 = vadd.f32 0.0, %v1451
      %v1453 = vpop.f32.mrb[0].mxu0
      %1454 = vdwg.mxu0
      %v1455 = vcombine.low %v484, %v491
      %v1456 = vcombine.low %v492, %v493
      %v1457 = vcombine.low %v507, %v522
      %v1458 = vcombine.low %v529, %v530
      %v1460 = vunpack.c.l.s4 1966171168
      %v1461 = vunpack.c.0.s8 %v1460
      %v1462 = vlaneseq
      %v1463 = vshrl.u32 %v1462, 7
      %v1464 = vsub.s32 %v1461, %v1463
      %v1465 = vrot.slane %v1455, %v1464
      %v1467 = vunpack.c.l.s4 1966171168
      %v1468 = vunpack.c.0.s8 %v1467
      %v1469 = vlaneseq
      %v1470 = vshrl.u32 %v1469, 7
      %v1471 = vsub.s32 %v1468, %v1470
      %v1472 = vrot.slane %v1456, %v1471
      %v1474 = vunpack.c.l.s4 1966171168
      %v1475 = vunpack.c.0.s8 %v1474
      %v1476 = vlaneseq
      %v1477 = vshrl.u32 %v1476, 7
      %v1478 = vsub.s32 %v1475, %v1477
      %v1479 = vrot.slane %v1457, %v1478
      %v1481 = vunpack.c.l.s4 1966171168
      %v1482 = vunpack.c.0.s8 %v1481
      %v1483 = vlaneseq
      %v1484 = vshrl.u32 %v1483, 7
      %v1485 = vsub.s32 %v1482, %v1484
      %v1486 = vrot.slane %v1458, %v1485
      %v1487 = vcombine.low %v1465, %v1472
      %v1488 = vcombine.low %v1479, %v1486
      %v1490 = vunpack.c.l.s4 1966171168
      %v1491 = vunpack.c.0.s8 %v1490
      %v1492 = vlaneseq
      %v1493 = vshrl.u32 %v1492, 7
      %v1494 = vsub.s32 %v1491, %v1493
      %v1495 = vrot.slane %v1487, %v1494
      %v1497 = vunpack.c.l.s4 1966171168
      %v1498 = vunpack.c.0.s8 %v1497
      %v1499 = vlaneseq
      %v1500 = vshrl.u32 %v1499, 7
      %v1501 = vsub.s32 %v1498, %v1500
      %v1502 = vrot.slane %v1488, %v1501
      %v1503 = vcombine.low %v1495, %v1502
      %v1504 = vcombine.low %v531, %v545
      %v1505 = vcombine.low %v560, %v567
      %v1506 = vcombine.low %v568, %v569
      %v1507 = vcombine.low %v583, %v598
      %v1509 = vunpack.c.l.s4 1966171168
      %v1510 = vunpack.c.0.s8 %v1509
      %v1511 = vlaneseq
      %v1512 = vshrl.u32 %v1511, 7
      %v1513 = vsub.s32 %v1510, %v1512
      %v1514 = vrot.slane %v1504, %v1513
      %v1516 = vunpack.c.l.s4 1966171168
      %v1517 = vunpack.c.0.s8 %v1516
      %v1518 = vlaneseq
      %v1519 = vshrl.u32 %v1518, 7
      %v1520 = vsub.s32 %v1517, %v1519
      %v1521 = vrot.slane %v1505, %v1520
      %v1523 = vunpack.c.l.s4 1966171168
      %v1524 = vunpack.c.0.s8 %v1523
      %v1525 = vlaneseq
      %v1526 = vshrl.u32 %v1525, 7
      %v1527 = vsub.s32 %v1524, %v1526
      %v1528 = vrot.slane %v1506, %v1527
      %v1530 = vunpack.c.l.s4 1966171168
      %v1531 = vunpack.c.0.s8 %v1530
      %v1532 = vlaneseq
      %v1533 = vshrl.u32 %v1532, 7
      %v1534 = vsub.s32 %v1531, %v1533
      %v1535 = vrot.slane %v1507, %v1534
      %v1536 = vcombine.low %v1514, %v1521
      %v1537 = vcombine.low %v1528, %v1535
      %v1539 = vunpack.c.l.s4 1966171168
      %v1540 = vunpack.c.0.s8 %v1539
      %v1541 = vlaneseq
      %v1542 = vshrl.u32 %v1541, 7
      %v1543 = vsub.s32 %v1540, %v1542
      %v1544 = vrot.slane %v1536, %v1543
      %v1546 = vunpack.c.l.s4 1966171168
      %v1547 = vunpack.c.0.s8 %v1546
      %v1548 = vlaneseq
      %v1549 = vshrl.u32 %v1548, 7
      %v1550 = vsub.s32 %v1547, %v1549
      %v1551 = vrot.slane %v1537, %v1550
      %v1552 = vcombine.low %v1544, %v1551
      %v1553 = vcombine.low %v605, %v606
      %v1554 = vcombine.low %v607, %v621
      %v1555 = vcombine.low %v636, %v643
      %v1556 = vcombine.low %v644, %v645
      %v1558 = vunpack.c.l.s4 1966171168
      %v1559 = vunpack.c.0.s8 %v1558
      %v1560 = vlaneseq
      %v1561 = vshrl.u32 %v1560, 7
      %v1562 = vsub.s32 %v1559, %v1561
      %v1563 = vrot.slane %v1553, %v1562
      %v1565 = vunpack.c.l.s4 1966171168
      %v1566 = vunpack.c.0.s8 %v1565
      %v1567 = vlaneseq
      %v1568 = vshrl.u32 %v1567, 7
      %v1569 = vsub.s32 %v1566, %v1568
      %v1570 = vrot.slane %v1554, %v1569
      %v1572 = vunpack.c.l.s4 1966171168
      %v1573 = vunpack.c.0.s8 %v1572
      %v1574 = vlaneseq
      %v1575 = vshrl.u32 %v1574, 7
      %v1576 = vsub.s32 %v1573, %v1575
      %v1577 = vrot.slane %v1555, %v1576
      %v1579 = vunpack.c.l.s4 1966171168
      %v1580 = vunpack.c.0.s8 %v1579
      %v1581 = vlaneseq
      %v1582 = vshrl.u32 %v1581, 7
      %v1583 = vsub.s32 %v1580, %v1582
      %v1584 = vrot.slane %v1556, %v1583
      %v1585 = vcombine.low %v1563, %v1570
      %v1586 = vcombine.low %v1577, %v1584
      %v1588 = vunpack.c.l.s4 1966171168
      %v1589 = vunpack.c.0.s8 %v1588
      %v1590 = vlaneseq
      %v1591 = vshrl.u32 %v1590, 7
      %v1592 = vsub.s32 %v1589, %v1591
      %v1593 = vrot.slane %v1585, %v1592
      %v1595 = vunpack.c.l.s4 1966171168
      %v1596 = vunpack.c.0.s8 %v1595
      %v1597 = vlaneseq
      %v1598 = vshrl.u32 %v1597, 7
      %v1599 = vsub.s32 %v1596, %v1598
      %v1600 = vrot.slane %v1586, %v1599
      %v1601 = vcombine.low %v1593, %v1600
      %v1602 = vcombine.low %v659, %v674
      %v1603 = vcombine.low %v681, %v682
      %v1604 = vcombine.low %v683, %v697
      %v1605 = vcombine.low %v712, %v719
      %v1607 = vunpack.c.l.s4 1966171168
      %v1608 = vunpack.c.0.s8 %v1607
      %v1609 = vlaneseq
      %v1610 = vshrl.u32 %v1609, 7
      %v1611 = vsub.s32 %v1608, %v1610
      %v1612 = vrot.slane %v1602, %v1611
      %v1614 = vunpack.c.l.s4 1966171168
      %v1615 = vunpack.c.0.s8 %v1614
      %v1616 = vlaneseq
      %v1617 = vshrl.u32 %v1616, 7
      %v1618 = vsub.s32 %v1615, %v1617
      %v1619 = vrot.slane %v1603, %v1618
      %v1621 = vunpack.c.l.s4 1966171168
      %v1622 = vunpack.c.0.s8 %v1621
      %v1623 = vlaneseq
      %v1624 = vshrl.u32 %v1623, 7
      %v1625 = vsub.s32 %v1622, %v1624
      %v1626 = vrot.slane %v1604, %v1625
      %v1628 = vunpack.c.l.s4 1966171168
      %v1629 = vunpack.c.0.s8 %v1628
      %v1630 = vlaneseq
      %v1631 = vshrl.u32 %v1630, 7
      %v1632 = vsub.s32 %v1629, %v1631
      %v1633 = vrot.slane %v1605, %v1632
      %v1634 = vcombine.low %v1612, %v1619
      %v1635 = vcombine.low %v1626, %v1633
      %v1637 = vunpack.c.l.s4 1966171168
      %v1638 = vunpack.c.0.s8 %v1637
      %v1639 = vlaneseq
      %v1640 = vshrl.u32 %v1639, 7
      %v1641 = vsub.s32 %v1638, %v1640
      %v1642 = vrot.slane %v1634, %v1641
      %v1644 = vunpack.c.l.s4 1966171168
      %v1645 = vunpack.c.0.s8 %v1644
      %v1646 = vlaneseq
      %v1647 = vshrl.u32 %v1646, 7
      %v1648 = vsub.s32 %v1645, %v1647
      %v1649 = vrot.slane %v1635, %v1648
      %v1650 = vcombine.low %v1642, %v1649
      %v1651 = vcombine.low %v720, %v721
      %v1652 = vcombine.low %v735, %v750
      %v1653 = vcombine.low %v757, %v758
      %v1654 = vcombine.low %v759, %v773
      %v1656 = vunpack.c.l.s4 1966171168
      %v1657 = vunpack.c.0.s8 %v1656
      %v1658 = vlaneseq
      %v1659 = vshrl.u32 %v1658, 7
      %v1660 = vsub.s32 %v1657, %v1659
      %v1661 = vrot.slane %v1651, %v1660
      %v1663 = vunpack.c.l.s4 1966171168
      %v1664 = vunpack.c.0.s8 %v1663
      %v1665 = vlaneseq
      %v1666 = vshrl.u32 %v1665, 7
      %v1667 = vsub.s32 %v1664, %v1666
      %v1668 = vrot.slane %v1652, %v1667
      %v1670 = vunpack.c.l.s4 1966171168
      %v1671 = vunpack.c.0.s8 %v1670
      %v1672 = vlaneseq
      %v1673 = vshrl.u32 %v1672, 7
      %v1674 = vsub.s32 %v1671, %v1673
      %v1675 = vrot.slane %v1653, %v1674
      %v1677 = vunpack.c.l.s4 1966171168
      %v1678 = vunpack.c.0.s8 %v1677
      %v1679 = vlaneseq
      %v1680 = vshrl.u32 %v1679, 7
      %v1681 = vsub.s32 %v1678, %v1680
      %v1682 = vrot.slane %v1654, %v1681
      %v1683 = vcombine.low %v1661, %v1668
      %v1684 = vcombine.low %v1675, %v1682
      %v1686 = vunpack.c.l.s4 1966171168
      %v1687 = vunpack.c.0.s8 %v1686
      %v1688 = vlaneseq
      %v1689 = vshrl.u32 %v1688, 7
      %v1690 = vsub.s32 %v1687, %v1689
      %v1691 = vrot.slane %v1683, %v1690
      %v1693 = vunpack.c.l.s4 1966171168
      %v1694 = vunpack.c.0.s8 %v1693
      %v1695 = vlaneseq
      %v1696 = vshrl.u32 %v1695, 7
      %v1697 = vsub.s32 %v1694, %v1696
      %v1698 = vrot.slane %v1684, %v1697
      %v1699 = vcombine.low %v1691, %v1698
      %v1701 = vsel %vm1362, %v1503, 0
      %v1704 = vsel %vm1362, %v1552, 0
      %v1707 = vsel %vm1362, %v1601, 0
      %v1710 = vsel %vm1362, %v1650, 0
      %v1713 = vsel %vm1362, %v1699, 0
      %v1716 = vsel %vm1378, %v774, 0
      %1718 = vmatprep.subr.bf16.mxu0 0
      %1719 = vmatpush1.bf16.msra.mxu0 %v1716
      %1720 = vmatprep.subr.bf16.mxu0 0
      %1721 = vmatpush1.bf16.msra.mxu0 0
      %1722 = vmatprep.subr.bf16.mxu0 0
      %1723 = vmatpush1.bf16.msra.mxu0 0
      %1724 = vmatprep.subr.bf16.mxu0 0
      %1725 = vmatpush1.bf16.msra.mxu0 0
      %1726 = vmatprep.subr.bf16.mxu0 0
      %1727 = vmatpush1.bf16.msra.mxu0 0
      %1728 = vmatprep.subr.bf16.mxu0 0
      %1729 = vmatpush1.bf16.msra.mxu0 0
      %1730 = vmatprep.subr.bf16.mxu0 0
      %1731 = vmatpush1.bf16.msra.mxu0 0
      %1732 = vmatprep.subr.bf16.mxu0 0
      %1733 = vmatpush1.bf16.msra.mxu0 0
      %1734 = vmatprep.subr.bf16.mxu0 0
      %1735 = vmatpush1.bf16.msra.mxu0 0
      %1736 = vmatprep.subr.bf16.mxu0 0
      %1737 = vmatpush1.bf16.msra.mxu0 0
      %1738 = vmatprep.subr.bf16.mxu0 0
      %1739 = vmatpush1.bf16.msra.mxu0 0
      %1740 = vmatprep.subr.bf16.mxu0 0
      %1741 = vmatpush1.bf16.msra.mxu0 0
      %1742 = vmatprep.subr.bf16.mxu0 0
      %1743 = vmatpush1.bf16.msra.mxu0 0
      %1744 = vmatprep.subr.bf16.mxu0 0
      %1745 = vmatpush1.bf16.msra.mxu0 0
      %1746 = vmatprep.subr.bf16.mxu0 0
      %1747 = vmatpush1.bf16.msra.mxu0 0
      %1748 = vmatprep.subr.bf16.mxu0 0
      %1749 = vmatpush1.bf16.msra.mxu0 0
      %1750 = vmatprep.mubr.bf16.mxu0 0
      %1751 = vmatmul.mubr.bf16.gmra.mrb[0].mxu0 %v1701
      %v1752 = vpop.f32.mrb[0].mxu0
      %v1753 = vadd.f32 %v1417, %v1752
      %v1754 = vpop.f32.mrb[0].mxu0
      %v1755 = vpop.f32.mrb[0].mxu0
      %v1756 = vadd.f32 %v1420, %v1755
      %v1757 = vpop.f32.mrb[0].mxu0
      %1758 = vmatprep.mubr.bf16.mxu0 0
      %1759 = vmatmul.mubr.bf16.gmra.mrb[0].mxu0 %v1704
      %v1760 = vpop.f32.mrb[0].mxu0
      %v1761 = vadd.f32 %v1425, %v1760
      %v1762 = vpop.f32.mrb[0].mxu0
      %v1763 = vpop.f32.mrb[0].mxu0
      %v1764 = vadd.f32 %v1428, %v1763
      %v1765 = vpop.f32.mrb[0].mxu0
      %1766 = vmatprep.mubr.bf16.mxu0 0
      %1767 = vmatmul.mubr.bf16.gmra.mrb[0].mxu0 %v1707
      %v1768 = vpop.f32.mrb[0].mxu0
      %v1769 = vadd.f32 %v1433, %v1768
      %v1770 = vpop.f32.mrb[0].mxu0
      %v1771 = vpop.f32.mrb[0].mxu0
      %v1772 = vadd.f32 %v1436, %v1771
      %v1773 = vpop.f32.mrb[0].mxu0
      %1774 = vmatprep.mubr.bf16.mxu0 0
      %1775 = vmatmul.mubr.bf16.gmra.mrb[0].mxu0 %v1710
      %v1776 = vpop.f32.mrb[0].mxu0
      %v1777 = vadd.f32 %v1441, %v1776
      %v1778 = vpop.f32.mrb[0].mxu0
      %v1779 = vpop.f32.mrb[0].mxu0
      %v1780 = vadd.f32 %v1444, %v1779
      %v1781 = vpop.f32.mrb[0].mxu0
      %1782 = vmatprep.mubr.bf16.mxu0 0
      %1783 = vmatmul.mubr.bf16.gmra.mrb[0].mxu0 %v1713
      %v1784 = vpop.f32.mrb[0].mxu0
      %v1785 = vadd.f32 %v1449, %v1784
      %v1786 = vpop.f32.mrb[0].mxu0
      %v1787 = vpop.f32.mrb[0].mxu0
      %v1788 = vadd.f32 %v1452, %v1787
      %v1789 = vpop.f32.mrb[0].mxu0
      %1790 = vdwg.mxu0
      %s1791 = scalar_lea.vmem %s1, 16
      %v1792 = vld [vmem:[%s1791] sm:$0xf]
      %v1794 = vsel %vm1378, %v1792, 0
      %1796 = vmatprep.subr.bf16.mxu0 0
      %1797 = vmatpush1.bf16.msra.mxu0 %v1794
      %1798 = vmatprep.subr.bf16.mxu0 0
      %1799 = vmatpush1.bf16.msra.mxu0 0
      %1800 = vmatprep.subr.bf16.mxu0 0
      %1801 = vmatpush1.bf16.msra.mxu0 0
      %1802 = vmatprep.subr.bf16.mxu0 0
      %1803 = vmatpush1.bf16.msra.mxu0 0
      %1804 = vmatprep.subr.bf16.mxu0 0
      %1805 = vmatpush1.bf16.msra.mxu0 0
      %1806 = vmatprep.subr.bf16.mxu0 0
      %1807 = vmatpush1.bf16.msra.mxu0 0
      %1808 = vmatprep.subr.bf16.mxu0 0
      %1809 = vmatpush1.bf16.msra.mxu0 0
      %1810 = vmatprep.subr.bf16.mxu0 0
      %1811 = vmatpush1.bf16.msra.mxu0 0
      %1812 = vmatprep.subr.bf16.mxu0 0
      %1813 = vmatpush1.bf16.msra.mxu0 0
      %1814 = vmatprep.subr.bf16.mxu0 0
      %1815 = vmatpush1.bf16.msra.mxu0 0
      %1816 = vmatprep.subr.bf16.mxu0 0
      %1817 = vmatpush1.bf16.msra.mxu0 0
      %1818 = vmatprep.subr.bf16.mxu0 0
      %1819 = vmatpush1.bf16.msra.mxu0 0
      %1820 = vmatprep.subr.bf16.mxu0 0
      %1821 = vmatpush1.bf16.msra.mxu0 0
      %1822 = vmatprep.subr.bf16.mxu0 0
      %1823 = vmatpush1.bf16.msra.mxu0 0
      %1824 = vmatprep.subr.bf16.mxu0 0
      %1825 = vmatpush1.bf16.msra.mxu0 0
      %1826 = vmatprep.subr.bf16.mxu0 0
      %1827 = vmatpush1.bf16.msra.mxu0 0
      %1828 = vmatprep.mubr.bf16.mxu0 0
      %1829 = vmatmul.mubr.bf16.gmra.mrb[0].mxu0 %v1364
      %v1830 = vpop.f32.mrb[0].mxu0
      %v1831 = vadd.f32 0.0, %v1830
      %v1832 = vpop.f32.mrb[0].mxu0
      %v1833 = vpop.f32.mrb[0].mxu0
      %v1834 = vadd.f32 0.0, %v1833
      %v1835 = vpop.f32.mrb[0].mxu0
      %1836 = vmatprep.mubr.bf16.mxu0 0
      %1837 = vmatmul.mubr.bf16.gmra.mrb[0].mxu0 %v1367
      %v1838 = vpop.f32.mrb[0].mxu0
      %v1839 = vadd.f32 0.0, %v1838
      %v1840 = vpop.f32.mrb[0].mxu0
      %v1841 = vpop.f32.mrb[0].mxu0
      %v1842 = vadd.f32 0.0, %v1841
      %v1843 = vpop.f32.mrb[0].mxu0
      %1844 = vmatprep.mubr.bf16.mxu0 0
      %1845 = vmatmul.mubr.bf16.gmra.mrb[0].mxu0 %v1370
      %v1846 = vpop.f32.mrb[0].mxu0
      %v1847 = vadd.f32 0.0, %v1846
      %v1848 = vpop.f32.mrb[0].mxu0
      %v1849 = vpop.f32.mrb[0].mxu0
      %v1850 = vadd.f32 0.0, %v1849
      %v1851 = vpop.f32.mrb[0].mxu0
      %1852 = vmatprep.mubr.bf16.mxu0 0
      %1853 = vmatmul.mubr.bf16.gmra.mrb[0].mxu0 %v1373
      %v1854 = vpop.f32.mrb[0].mxu0
      %v1855 = vadd.f32 0.0, %v1854
      %v1856 = vpop.f32.mrb[0].mxu0
      %v1857 = vpop.f32.mrb[0].mxu0
      %v1858 = vadd.f32 0.0, %v1857
      %v1859 = vpop.f32.mrb[0].mxu0
      %1860 = vmatprep.mubr.bf16.mxu0 0
      %1861 = vmatmul.mubr.bf16.gmra.mrb[0].mxu0 %v1376
      %v1862 = vpop.f32.mrb[0].mxu0
      %v1863 = vadd.f32 0.0, %v1862
      %v1864 = vpop.f32.mrb[0].mxu0
      %v1865 = vpop.f32.mrb[0].mxu0
      %v1866 = vadd.f32 0.0, %v1865
      %v1867 = vpop.f32.mrb[0].mxu0
      %1868 = vdwg.mxu0
      %v1870 = vsel %vm1378, %v776, 0
      %1872 = vmatprep.subr.bf16.mxu0 0
      %1873 = vmatpush1.bf16.msra.mxu0 %v1870
      %1874 = vmatprep.subr.bf16.mxu0 0
      %1875 = vmatpush1.bf16.msra.mxu0 0
      %1876 = vmatprep.subr.bf16.mxu0 0
      %1877 = vmatpush1.bf16.msra.mxu0 0
      %1878 = vmatprep.subr.bf16.mxu0 0
      %1879 = vmatpush1.bf16.msra.mxu0 0
      %1880 = vmatprep.subr.bf16.mxu0 0
      %1881 = vmatpush1.bf16.msra.mxu0 0
      %1882 = vmatprep.subr.bf16.mxu0 0
      %1883 = vmatpush1.bf16.msra.mxu0 0
      %1884 = vmatprep.subr.bf16.mxu0 0
      %1885 = vmatpush1.bf16.msra.mxu0 0
      %1886 = vmatprep.subr.bf16.mxu0 0
      %1887 = vmatpush1.bf16.msra.mxu0 0
      %1888 = vmatprep.subr.bf16.mxu0 0
      %1889 = vmatpush1.bf16.msra.mxu0 0
      %1890 = vmatprep.subr.bf16.mxu0 0
      %1891 = vmatpush1.bf16.msra.mxu0 0
      %1892 = vmatprep.subr.bf16.mxu0 0
      %1893 = vmatpush1.bf16.msra.mxu0 0
      %1894 = vmatprep.subr.bf16.mxu0 0
      %1895 = vmatpush1.bf16.msra.mxu0 0
      %1896 = vmatprep.subr.bf16.mxu0 0
      %1897 = vmatpush1.bf16.msra.mxu0 0
      %1898 = vmatprep.subr.bf16.mxu0 0
      %1899 = vmatpush1.bf16.msra.mxu0 0
      %1900 = vmatprep.subr.bf16.mxu0 0
      %1901 = vmatpush1.bf16.msra.mxu0 0
      %1902 = vmatprep.subr.bf16.mxu0 0
      %1903 = vmatpush1.bf16.msra.mxu0 0
      %1904 = vmatprep.mubr.bf16.mxu0 0
      %1905 = vmatmul.mubr.bf16.gmra.mrb[0].mxu0 %v1701
      %v1906 = vpop.f32.mrb[0].mxu0
      %v1907 = vadd.f32 %v1831, %v1906
      %v1908 = vpop.f32.mrb[0].mxu0
      %v1909 = vpop.f32.mrb[0].mxu0
      %v1910 = vadd.f32 %v1834, %v1909
      %v1911 = vpop.f32.mrb[0].mxu0
      %1912 = vmatprep.mubr.bf16.mxu0 0
      %1913 = vmatmul.mubr.bf16.gmra.mrb[0].mxu0 %v1704
      %v1914 = vpop.f32.mrb[0].mxu0
      %v1915 = vadd.f32 %v1839, %v1914
      %v1916 = vpop.f32.mrb[0].mxu0
      %v1917 = vpop.f32.mrb[0].mxu0
      %v1918 = vadd.f32 %v1842, %v1917
      %v1919 = vpop.f32.mrb[0].mxu0
      %1920 = vmatprep.mubr.bf16.mxu0 0
      %1921 = vmatmul.mubr.bf16.gmra.mrb[0].mxu0 %v1707
      %v1922 = vpop.f32.mrb[0].mxu0
      %v1923 = vadd.f32 %v1847, %v1922
      %v1924 = vpop.f32.mrb[0].mxu0
      %v1925 = vpop.f32.mrb[0].mxu0
      %v1926 = vadd.f32 %v1850, %v1925
      %v1927 = vpop.f32.mrb[0].mxu0
      %1928 = vmatprep.mubr.bf16.mxu0 0
      %1929 = vmatmul.mubr.bf16.gmra.mrb[0].mxu0 %v1710
      %v1930 = vpop.f32.mrb[0].mxu0
      %v1931 = vadd.f32 %v1855, %v1930
      %v1932 = vpop.f32.mrb[0].mxu0
      %v1933 = vpop.f32.mrb[0].mxu0
      %v1934 = vadd.f32 %v1858, %v1933
      %v1935 = vpop.f32.mrb[0].mxu0
      %1936 = vmatprep.mubr.bf16.mxu0 0
      %1937 = vmatmul.mubr.bf16.gmra.mrb[0].mxu0 %v1713
      %v1938 = vpop.f32.mrb[0].mxu0
      %v1939 = vadd.f32 %v1863, %v1938
      %v1940 = vpop.f32.mrb[0].mxu0
      %v1941 = vpop.f32.mrb[0].mxu0
      %v1942 = vadd.f32 %v1866, %v1941
      %v1943 = vpop.f32.mrb[0].mxu0
      %1944 = vdwg.mxu0
      %s1945 = scalar_lea.vmem %s1, 20
      %v1946 = vld [vmem:[%s1945] sm:$0xf]
      %v1948 = vsel %vm1378, %v1946, 0
      %1950 = vmatprep.subr.bf16.mxu0 0
      %1951 = vmatpush1.bf16.msra.mxu0 %v1948
      %1952 = vmatprep.subr.bf16.mxu0 0
      %1953 = vmatpush1.bf16.msra.mxu0 0
      %1954 = vmatprep.subr.bf16.mxu0 0
      %1955 = vmatpush1.bf16.msra.mxu0 0
      %1956 = vmatprep.subr.bf16.mxu0 0
      %1957 = vmatpush1.bf16.msra.mxu0 0
      %1958 = vmatprep.subr.bf16.mxu0 0
      %1959 = vmatpush1.bf16.msra.mxu0 0
      %1960 = vmatprep.subr.bf16.mxu0 0
      %1961 = vmatpush1.bf16.msra.mxu0 0
      %1962 = vmatprep.subr.bf16.mxu0 0
      %1963 = vmatpush1.bf16.msra.mxu0 0
      %1964 = vmatprep.subr.bf16.mxu0 0
      %1965 = vmatpush1.bf16.msra.mxu0 0
      %1966 = vmatprep.subr.bf16.mxu0 0
      %1967 = vmatpush1.bf16.msra.mxu0 0
      %1968 = vmatprep.subr.bf16.mxu0 0
      %1969 = vmatpush1.bf16.msra.mxu0 0
      %1970 = vmatprep.subr.bf16.mxu0 0
      %1971 = vmatpush1.bf16.msra.mxu0 0
      %1972 = vmatprep.subr.bf16.mxu0 0
      %1973 = vmatpush1.bf16.msra.mxu0 0
      %1974 = vmatprep.subr.bf16.mxu0 0
      %1975 = vmatpush1.bf16.msra.mxu0 0
      %1976 = vmatprep.subr.bf16.mxu0 0
      %1977 = vmatpush1.bf16.msra.mxu0 0
      %1978 = vmatprep.subr.bf16.mxu0 0
      %1979 = vmatpush1.bf16.msra.mxu0 0
      %1980 = vmatprep.subr.bf16.mxu0 0
      %1981 = vmatpush1.bf16.msra.mxu0 0
      %1982 = vmatprep.mubr.bf16.mxu0 0
      %1983 = vmatmul.mubr.bf16.gmra.mrb[0].mxu0 %v1364
      %v1984 = vpop.f32.mrb[0].mxu0
      %v1985 = vadd.f32 0.0, %v1984
      %v1986 = vpop.f32.mrb[0].mxu0
      %v1987 = vpop.f32.mrb[0].mxu0
      %v1988 = vadd.f32 0.0, %v1987
      %v1989 = vpop.f32.mrb[0].mxu0
      %1990 = vmatprep.mubr.bf16.mxu0 0
      %1991 = vmatmul.mubr.bf16.gmra.mrb[0].mxu0 %v1367
      %v1992 = vpop.f32.mrb[0].mxu0
      %v1993 = vadd.f32 0.0, %v1992
      %v1994 = vpop.f32.mrb[0].mxu0
      %v1995 = vpop.f32.mrb[0].mxu0
      %v1996 = vadd.f32 0.0, %v1995
      %v1997 = vpop.f32.mrb[0].mxu0
      %1998 = vmatprep.mubr.bf16.mxu0 0
      %1999 = vmatmul.mubr.bf16.gmra.mrb[0].mxu0 %v1370
      %v2000 = vpop.f32.mrb[0].mxu0
      %v2001 = vadd.f32 0.0, %v2000
      %v2002 = vpop.f32.mrb[0].mxu0
      %v2003 = vpop.f32.mrb[0].mxu0
      %v2004 = vadd.f32 0.0, %v2003
      %v2005 = vpop.f32.mrb[0].mxu0
      %2006 = vmatprep.mubr.bf16.mxu0 0
      %2007 = vmatmul.mubr.bf16.gmra.mrb[0].mxu0 %v1373
      %v2008 = vpop.f32.mrb[0].mxu0
      %v2009 = vadd.f32 0.0, %v2008
      %v2010 = vpop.f32.mrb[0].mxu0
      %v2011 = vpop.f32.mrb[0].mxu0
      %v2012 = vadd.f32 0.0, %v2011
      %v2013 = vpop.f32.mrb[0].mxu0
      %2014 = vmatprep.mubr.bf16.mxu0 0
      %2015 = vmatmul.mubr.bf16.gmra.mrb[0].mxu0 %v1376
      %v2016 = vpop.f32.mrb[0].mxu0
      %v2017 = vadd.f32 0.0, %v2016
      %v2018 = vpop.f32.mrb[0].mxu0
      %v2019 = vpop.f32.mrb[0].mxu0
      %v2020 = vadd.f32 0.0, %v2019
      %v2021 = vpop.f32.mrb[0].mxu0
      %2022 = vdwg.mxu0
      %v2024 = vsel %vm1378, %v778, 0
      %2026 = vmatprep.subr.bf16.mxu0 0
      %2027 = vmatpush1.bf16.msra.mxu0 %v2024
      %2028 = vmatprep.subr.bf16.mxu0 0
      %2029 = vmatpush1.bf16.msra.mxu0 0
      %2030 = vmatprep.subr.bf16.mxu0 0
      %2031 = vmatpush1.bf16.msra.mxu0 0
      %2032 = vmatprep.subr.bf16.mxu0 0
      %2033 = vmatpush1.bf16.msra.mxu0 0
      %2034 = vmatprep.subr.bf16.mxu0 0
      %2035 = vmatpush1.bf16.msra.mxu0 0
      %2036 = vmatprep.subr.bf16.mxu0 0
      %2037 = vmatpush1.bf16.msra.mxu0 0
      %2038 = vmatprep.subr.bf16.mxu0 0
      %2039 = vmatpush1.bf16.msra.mxu0 0
      %2040 = vmatprep.subr.bf16.mxu0 0
      %2041 = vmatpush1.bf16.msra.mxu0 0
      %2042 = vmatprep.subr.bf16.mxu0 0
      %2043 = vmatpush1.bf16.msra.mxu0 0
      %2044 = vmatprep.subr.bf16.mxu0 0
      %2045 = vmatpush1.bf16.msra.mxu0 0
      %2046 = vmatprep.subr.bf16.mxu0 0
      %2047 = vmatpush1.bf16.msra.mxu0 0
      %2048 = vmatprep.subr.bf16.mxu0 0
      %2049 = vmatpush1.bf16.msra.mxu0 0
      %2050 = vmatprep.subr.bf16.mxu0 0
      %2051 = vmatpush1.bf16.msra.mxu0 0
      %2052 = vmatprep.subr.bf16.mxu0 0
      %2053 = vmatpush1.bf16.msra.mxu0 0
      %2054 = vmatprep.subr.bf16.mxu0 0
      %2055 = vmatpush1.bf16.msra.mxu0 0
      %2056 = vmatprep.subr.bf16.mxu0 0
      %2057 = vmatpush1.bf16.msra.mxu0 0
      %2058 = vmatprep.mubr.bf16.mxu0 0
      %2059 = vmatmul.mubr.bf16.gmra.mrb[0].mxu0 %v1701
      %v2060 = vpop.f32.mrb[0].mxu0
      %v2061 = vadd.f32 %v1985, %v2060
      %v2062 = vpop.f32.mrb[0].mxu0
      %v2063 = vpop.f32.mrb[0].mxu0
      %v2064 = vadd.f32 %v1988, %v2063
      %v2065 = vpop.f32.mrb[0].mxu0
      %2066 = vmatprep.mubr.bf16.mxu0 0
      %2067 = vmatmul.mubr.bf16.gmra.mrb[0].mxu0 %v1704
      %v2068 = vpop.f32.mrb[0].mxu0
      %v2069 = vadd.f32 %v1993, %v2068
      %v2070 = vpop.f32.mrb[0].mxu0
      %v2071 = vpop.f32.mrb[0].mxu0
      %v2072 = vadd.f32 %v1996, %v2071
      %v2073 = vpop.f32.mrb[0].mxu0
      %2074 = vmatprep.mubr.bf16.mxu0 0
      %2075 = vmatmul.mubr.bf16.gmra.mrb[0].mxu0 %v1707
      %v2076 = vpop.f32.mrb[0].mxu0
      %v2077 = vadd.f32 %v2001, %v2076
      %v2078 = vpop.f32.mrb[0].mxu0
      %v2079 = vpop.f32.mrb[0].mxu0
      %v2080 = vadd.f32 %v2004, %v2079
      %v2081 = vpop.f32.mrb[0].mxu0
      %2082 = vmatprep.mubr.bf16.mxu0 0
      %2083 = vmatmul.mubr.bf16.gmra.mrb[0].mxu0 %v1710
      %v2084 = vpop.f32.mrb[0].mxu0
      %v2085 = vadd.f32 %v2009, %v2084
      %v2086 = vpop.f32.mrb[0].mxu0
      %v2087 = vpop.f32.mrb[0].mxu0
      %v2088 = vadd.f32 %v2012, %v2087
      %v2089 = vpop.f32.mrb[0].mxu0
      %2090 = vmatprep.mubr.bf16.mxu0 0
      %2091 = vmatmul.mubr.bf16.gmra.mrb[0].mxu0 %v1713
      %v2092 = vpop.f32.mrb[0].mxu0
      %v2093 = vadd.f32 %v2017, %v2092
      %v2094 = vpop.f32.mrb[0].mxu0
      %v2095 = vpop.f32.mrb[0].mxu0
      %v2096 = vadd.f32 %v2020, %v2095
      %v2097 = vpop.f32.mrb[0].mxu0
      %2098 = vdwg.mxu0
      %s2099 = scalar_lea.vmem [#allocation2], 16
      %v2100 = vld [vmem:[%s2099] sm:$0xf]
      %v2101 = vld [vmem:[%s2099 + $0x4] sm:$0x1]
      %v2102 = vld [vmem:[%s2099 + $0x8] sm:$0xf]
      %v2103 = vld [vmem:[%s2099 + $0xc] sm:$0x1]
      %v2104 = vld [vmem:[%s2099 + $0x10] sm:$0xf]
      %v2105 = vld [vmem:[%s2099 + $0x14] sm:$0x1]
      %v2106 = vld [vmem:[%s2099 + $0x18] sm:$0xf]
      %v2107 = vld [vmem:[%s2099 + $0x1c] sm:$0x1]
      %v2108 = vld [vmem:[%s2099 + $0x20] sm:$0xf]
      %v2109 = vld [vmem:[%s2099 + $0x24] sm:$0x1]
      %v2110 = vld [vmem:[%s2099 + $0x28] sm:$0xf]
      %v2111 = vld [vmem:[%s2099 + $0x2c] sm:$0x1]
      %v2112 = vld [vmem:[%s2099 + $0x30] sm:$0xf]
      %v2113 = vld [vmem:[%s2099 + $0x34] sm:$0x1]
      %v2114 = vld [vmem:[%s2099 + $0x38] sm:$0xf]
      %v2115 = vld [vmem:[%s2099 + $0x3c] sm:$0x1]
      %v2133 = vunpack.c.l.s4 1966171168
      %v2134 = vunpack.c.0.s8 %v2133
      %v2135 = vlaneseq
      %v2136 = vshrl.u32 %v2135, 7
      %v2137 = vsub.s32 %v2134, %v2136
      %v2138 = vrot.slane %v2100, %v2137
      %v2139 = vcombine.high %v2138, %v2138
      %v2141 = vunpack.c.l.s4 1966171168
      %v2142 = vunpack.c.0.s8 %v2141
      %v2143 = vlaneseq
      %v2144 = vshrl.u32 %v2143, 7
      %v2145 = vsub.s32 %v2142, %v2144
      %v2146 = vrot.slane %v2138, %v2145
      %v2148 = vunpack.c.l.s4 1966171168
      %v2149 = vunpack.c.0.s8 %v2148
      %v2150 = vlaneseq
      %v2151 = vshrl.u32 %v2150, 7
      %v2152 = vsub.s32 %v2149, %v2151
      %v2153 = vrot.slane %v2139, %v2152
      %v2154 = vcombine.high %v2146, %v2146
      %v2155 = vcombine.high %v2153, %v2153
      %v2157 = vunpack.c.l.s4 1966171168
      %v2158 = vunpack.c.0.s8 %v2157
      %v2159 = vlaneseq
      %v2160 = vshrl.u32 %v2159, 7
      %v2161 = vsub.s32 %v2158, %v2160
      %v2162 = vrot.slane %v2101, %v2161
      %v2164 = vunpack.c.l.s4 1966171168
      %v2165 = vunpack.c.0.s8 %v2164
      %v2166 = vlaneseq
      %v2167 = vshrl.u32 %v2166, 7
      %v2168 = vsub.s32 %v2165, %v2167
      %v2169 = vrot.slane %v2162, %v2168
      %v2171 = vunpack.c.l.s4 1966171168
      %v2172 = vunpack.c.0.s8 %v2171
      %v2173 = vlaneseq
      %v2174 = vshrl.u32 %v2173, 7
      %v2175 = vsub.s32 %v2172, %v2174
      %v2176 = vrot.slane %v2102, %v2175
      %v2177 = vcombine.high %v2176, %v2176
      %v2179 = vunpack.c.l.s4 1966171168
      %v2180 = vunpack.c.0.s8 %v2179
      %v2181 = vlaneseq
      %v2182 = vshrl.u32 %v2181, 7
      %v2183 = vsub.s32 %v2180, %v2182
      %v2184 = vrot.slane %v2176, %v2183
      %v2186 = vunpack.c.l.s4 1966171168
      %v2187 = vunpack.c.0.s8 %v2186
      %v2188 = vlaneseq
      %v2189 = vshrl.u32 %v2188, 7
      %v2190 = vsub.s32 %v2187, %v2189
      %v2191 = vrot.slane %v2177, %v2190
      %v2192 = vcombine.high %v2184, %v2184
      %v2193 = vcombine.high %v2191, %v2191
      %v2195 = vunpack.c.l.s4 1966171168
      %v2196 = vunpack.c.0.s8 %v2195
      %v2197 = vlaneseq
      %v2198 = vshrl.u32 %v2197, 7
      %v2199 = vsub.s32 %v2196, %v2198
      %v2200 = vrot.slane %v2103, %v2199
      %v2202 = vunpack.c.l.s4 1966171168
      %v2203 = vunpack.c.0.s8 %v2202
      %v2204 = vlaneseq
      %v2205 = vshrl.u32 %v2204, 7
      %v2206 = vsub.s32 %v2203, %v2205
      %v2207 = vrot.slane %v2200, %v2206
      %v2209 = vunpack.c.l.s4 1966171168
      %v2210 = vunpack.c.0.s8 %v2209
      %v2211 = vlaneseq
      %v2212 = vshrl.u32 %v2211, 7
      %v2213 = vsub.s32 %v2210, %v2212
      %v2214 = vrot.slane %v2104, %v2213
      %v2215 = vcombine.high %v2214, %v2214
      %v2217 = vunpack.c.l.s4 1966171168
      %v2218 = vunpack.c.0.s8 %v2217
      %v2219 = vlaneseq
      %v2220 = vshrl.u32 %v2219, 7
      %v2221 = vsub.s32 %v2218, %v2220
      %v2222 = vrot.slane %v2214, %v2221
      %v2224 = vunpack.c.l.s4 1966171168
      %v2225 = vunpack.c.0.s8 %v2224
      %v2226 = vlaneseq
      %v2227 = vshrl.u32 %v2226, 7
      %v2228 = vsub.s32 %v2225, %v2227
      %v2229 = vrot.slane %v2215, %v2228
      %v2230 = vcombine.high %v2222, %v2222
      %v2231 = vcombine.high %v2229, %v2229
      %v2233 = vunpack.c.l.s4 1966171168
      %v2234 = vunpack.c.0.s8 %v2233
      %v2235 = vlaneseq
      %v2236 = vshrl.u32 %v2235, 7
      %v2237 = vsub.s32 %v2234, %v2236
      %v2238 = vrot.slane %v2105, %v2237
      %v2240 = vunpack.c.l.s4 1966171168
      %v2241 = vunpack.c.0.s8 %v2240
      %v2242 = vlaneseq
      %v2243 = vshrl.u32 %v2242, 7
      %v2244 = vsub.s32 %v2241, %v2243
      %v2245 = vrot.slane %v2238, %v2244
      %v2247 = vunpack.c.l.s4 1966171168
      %v2248 = vunpack.c.0.s8 %v2247
      %v2249 = vlaneseq
      %v2250 = vshrl.u32 %v2249, 7
      %v2251 = vsub.s32 %v2248, %v2250
      %v2252 = vrot.slane %v2106, %v2251
      %v2253 = vcombine.high %v2252, %v2252
      %v2255 = vunpack.c.l.s4 1966171168
      %v2256 = vunpack.c.0.s8 %v2255
      %v2257 = vlaneseq
      %v2258 = vshrl.u32 %v2257, 7
      %v2259 = vsub.s32 %v2256, %v2258
      %v2260 = vrot.slane %v2252, %v2259
      %v2262 = vunpack.c.l.s4 1966171168
      %v2263 = vunpack.c.0.s8 %v2262
      %v2264 = vlaneseq
      %v2265 = vshrl.u32 %v2264, 7
      %v2266 = vsub.s32 %v2263, %v2265
      %v2267 = vrot.slane %v2253, %v2266
      %v2268 = vcombine.high %v2260, %v2260
      %v2269 = vcombine.high %v2267, %v2267
      %v2271 = vunpack.c.l.s4 1966171168
      %v2272 = vunpack.c.0.s8 %v2271
      %v2273 = vlaneseq
      %v2274 = vshrl.u32 %v2273, 7
      %v2275 = vsub.s32 %v2272, %v2274
      %v2276 = vrot.slane %v2107, %v2275
      %v2278 = vunpack.c.l.s4 1966171168
      %v2279 = vunpack.c.0.s8 %v2278
      %v2280 = vlaneseq
      %v2281 = vshrl.u32 %v2280, 7
      %v2282 = vsub.s32 %v2279, %v2281
      %v2283 = vrot.slane %v2276, %v2282
      %v2285 = vunpack.c.l.s4 1966171168
      %v2286 = vunpack.c.0.s8 %v2285
      %v2287 = vlaneseq
      %v2288 = vshrl.u32 %v2287, 7
      %v2289 = vsub.s32 %v2286, %v2288
      %v2290 = vrot.slane %v2108, %v2289
      %v2291 = vcombine.high %v2290, %v2290
      %v2293 = vunpack.c.l.s4 1966171168
      %v2294 = vunpack.c.0.s8 %v2293
      %v2295 = vlaneseq
      %v2296 = vshrl.u32 %v2295, 7
      %v2297 = vsub.s32 %v2294, %v2296
      %v2298 = vrot.slane %v2290, %v2297
      %v2300 = vunpack.c.l.s4 1966171168
      %v2301 = vunpack.c.0.s8 %v2300
      %v2302 = vlaneseq
      %v2303 = vshrl.u32 %v2302, 7
      %v2304 = vsub.s32 %v2301, %v2303
      %v2305 = vrot.slane %v2291, %v2304
      %v2306 = vcombine.high %v2298, %v2298
      %v2307 = vcombine.high %v2305, %v2305
      %v2309 = vunpack.c.l.s4 1966171168
      %v2310 = vunpack.c.0.s8 %v2309
      %v2311 = vlaneseq
      %v2312 = vshrl.u32 %v2311, 7
      %v2313 = vsub.s32 %v2310, %v2312
      %v2314 = vrot.slane %v2109, %v2313
      %v2316 = vunpack.c.l.s4 1966171168
      %v2317 = vunpack.c.0.s8 %v2316
      %v2318 = vlaneseq
      %v2319 = vshrl.u32 %v2318, 7
      %v2320 = vsub.s32 %v2317, %v2319
      %v2321 = vrot.slane %v2314, %v2320
      %v2323 = vunpack.c.l.s4 1966171168
      %v2324 = vunpack.c.0.s8 %v2323
      %v2325 = vlaneseq
      %v2326 = vshrl.u32 %v2325, 7
      %v2327 = vsub.s32 %v2324, %v2326
      %v2328 = vrot.slane %v2110, %v2327
      %v2329 = vcombine.high %v2328, %v2328
      %v2331 = vunpack.c.l.s4 1966171168
      %v2332 = vunpack.c.0.s8 %v2331
      %v2333 = vlaneseq
      %v2334 = vshrl.u32 %v2333, 7
      %v2335 = vsub.s32 %v2332, %v2334
      %v2336 = vrot.slane %v2328, %v2335
      %v2338 = vunpack.c.l.s4 1966171168
      %v2339 = vunpack.c.0.s8 %v2338
      %v2340 = vlaneseq
      %v2341 = vshrl.u32 %v2340, 7
      %v2342 = vsub.s32 %v2339, %v2341
      %v2343 = vrot.slane %v2329, %v2342
      %v2344 = vcombine.high %v2336, %v2336
      %v2345 = vcombine.high %v2343, %v2343
      %v2347 = vunpack.c.l.s4 1966171168
      %v2348 = vunpack.c.0.s8 %v2347
      %v2349 = vlaneseq
      %v2350 = vshrl.u32 %v2349, 7
      %v2351 = vsub.s32 %v2348, %v2350
      %v2352 = vrot.slane %v2111, %v2351
      %v2354 = vunpack.c.l.s4 1966171168
      %v2355 = vunpack.c.0.s8 %v2354
      %v2356 = vlaneseq
      %v2357 = vshrl.u32 %v2356, 7
      %v2358 = vsub.s32 %v2355, %v2357
      %v2359 = vrot.slane %v2352, %v2358
      %v2361 = vunpack.c.l.s4 1966171168
      %v2362 = vunpack.c.0.s8 %v2361
      %v2363 = vlaneseq
      %v2364 = vshrl.u32 %v2363, 7
      %v2365 = vsub.s32 %v2362, %v2364
      %v2366 = vrot.slane %v2112, %v2365
      %v2367 = vcombine.high %v2366, %v2366
      %v2369 = vunpack.c.l.s4 1966171168
      %v2370 = vunpack.c.0.s8 %v2369
      %v2371 = vlaneseq
      %v2372 = vshrl.u32 %v2371, 7
      %v2373 = vsub.s32 %v2370, %v2372
      %v2374 = vrot.slane %v2366, %v2373
      %v2376 = vunpack.c.l.s4 1966171168
      %v2377 = vunpack.c.0.s8 %v2376
      %v2378 = vlaneseq
      %v2379 = vshrl.u32 %v2378, 7
      %v2380 = vsub.s32 %v2377, %v2379
      %v2381 = vrot.slane %v2367, %v2380
      %v2382 = vcombine.high %v2374, %v2374
      %v2383 = vcombine.high %v2381, %v2381
      %v2385 = vunpack.c.l.s4 1966171168
      %v2386 = vunpack.c.0.s8 %v2385
      %v2387 = vlaneseq
      %v2388 = vshrl.u32 %v2387, 7
      %v2389 = vsub.s32 %v2386, %v2388
      %v2390 = vrot.slane %v2113, %v2389
      %v2392 = vunpack.c.l.s4 1966171168
      %v2393 = vunpack.c.0.s8 %v2392
      %v2394 = vlaneseq
      %v2395 = vshrl.u32 %v2394, 7
      %v2396 = vsub.s32 %v2393, %v2395
      %v2397 = vrot.slane %v2390, %v2396
      %v2399 = vunpack.c.l.s4 1966171168
      %v2400 = vunpack.c.0.s8 %v2399
      %v2401 = vlaneseq
      %v2402 = vshrl.u32 %v2401, 7
      %v2403 = vsub.s32 %v2400, %v2402
      %v2404 = vrot.slane %v2114, %v2403
      %v2405 = vcombine.high %v2404, %v2404
      %v2407 = vunpack.c.l.s4 1966171168
      %v2408 = vunpack.c.0.s8 %v2407
      %v2409 = vlaneseq
      %v2410 = vshrl.u32 %v2409, 7
      %v2411 = vsub.s32 %v2408, %v2410
      %v2412 = vrot.slane %v2404, %v2411
      %v2414 = vunpack.c.l.s4 1966171168
      %v2415 = vunpack.c.0.s8 %v2414
      %v2416 = vlaneseq
      %v2417 = vshrl.u32 %v2416, 7
      %v2418 = vsub.s32 %v2415, %v2417
      %v2419 = vrot.slane %v2405, %v2418
      %v2420 = vcombine.high %v2412, %v2412
      %v2421 = vcombine.high %v2419, %v2419
      %v2423 = vunpack.c.l.s4 1966171168
      %v2424 = vunpack.c.0.s8 %v2423
      %v2425 = vlaneseq
      %v2426 = vshrl.u32 %v2425, 7
      %v2427 = vsub.s32 %v2424, %v2426
      %v2428 = vrot.slane %v2115, %v2427
      %v2430 = vunpack.c.l.s4 1966171168
      %v2431 = vunpack.c.0.s8 %v2430
      %v2432 = vlaneseq
      %v2433 = vshrl.u32 %v2432, 7
      %v2434 = vsub.s32 %v2431, %v2433
      %v2435 = vrot.slane %v2428, %v2434
      %s2436 = scalar_lea.vmem %s1, 24
      %v2437 = vld [vmem:[%s2436] sm:$0xf]
      %v2438 = vcombine.low %v2146, %v2153
      %v2439 = vcombine.low %v2154, %v2155
      %v2440 = vcombine.low %v2169, %v2184
      %v2441 = vcombine.low %v2191, %v2192
      %v2443 = vunpack.c.l.s4 1966171168
      %v2444 = vunpack.c.0.s8 %v2443
      %v2445 = vlaneseq
      %v2446 = vshrl.u32 %v2445, 7
      %v2447 = vsub.s32 %v2444, %v2446
      %v2448 = vrot.slane %v2438, %v2447
      %v2450 = vunpack.c.l.s4 1966171168
      %v2451 = vunpack.c.0.s8 %v2450
      %v2452 = vlaneseq
      %v2453 = vshrl.u32 %v2452, 7
      %v2454 = vsub.s32 %v2451, %v2453
      %v2455 = vrot.slane %v2439, %v2454
      %v2457 = vunpack.c.l.s4 1966171168
      %v2458 = vunpack.c.0.s8 %v2457
      %v2459 = vlaneseq
      %v2460 = vshrl.u32 %v2459, 7
      %v2461 = vsub.s32 %v2458, %v2460
      %v2462 = vrot.slane %v2440, %v2461
      %v2464 = vunpack.c.l.s4 1966171168
      %v2465 = vunpack.c.0.s8 %v2464
      %v2466 = vlaneseq
      %v2467 = vshrl.u32 %v2466, 7
      %v2468 = vsub.s32 %v2465, %v2467
      %v2469 = vrot.slane %v2441, %v2468
      %v2470 = vcombine.low %v2448, %v2455
      %v2471 = vcombine.low %v2462, %v2469
      %v2473 = vunpack.c.l.s4 1966171168
      %v2474 = vunpack.c.0.s8 %v2473
      %v2475 = vlaneseq
      %v2476 = vshrl.u32 %v2475, 7
      %v2477 = vsub.s32 %v2474, %v2476
      %v2478 = vrot.slane %v2470, %v2477
      %v2480 = vunpack.c.l.s4 1966171168
      %v2481 = vunpack.c.0.s8 %v2480
      %v2482 = vlaneseq
      %v2483 = vshrl.u32 %v2482, 7
      %v2484 = vsub.s32 %v2481, %v2483
      %v2485 = vrot.slane %v2471, %v2484
      %v2486 = vcombine.low %v2478, %v2485
      %v2487 = vcombine.low %v2193, %v2207
      %v2488 = vcombine.low %v2222, %v2229
      %v2489 = vcombine.low %v2230, %v2231
      %v2490 = vcombine.low %v2245, %v2260
      %v2492 = vunpack.c.l.s4 1966171168
      %v2493 = vunpack.c.0.s8 %v2492
      %v2494 = vlaneseq
      %v2495 = vshrl.u32 %v2494, 7
      %v2496 = vsub.s32 %v2493, %v2495
      %v2497 = vrot.slane %v2487, %v2496
      %v2499 = vunpack.c.l.s4 1966171168
      %v2500 = vunpack.c.0.s8 %v2499
      %v2501 = vlaneseq
      %v2502 = vshrl.u32 %v2501, 7
      %v2503 = vsub.s32 %v2500, %v2502
      %v2504 = vrot.slane %v2488, %v2503
      %v2506 = vunpack.c.l.s4 1966171168
      %v2507 = vunpack.c.0.s8 %v2506
      %v2508 = vlaneseq
      %v2509 = vshrl.u32 %v2508, 7
      %v2510 = vsub.s32 %v2507, %v2509
      %v2511 = vrot.slane %v2489, %v2510
      %v2513 = vunpack.c.l.s4 1966171168
      %v2514 = vunpack.c.0.s8 %v2513
      %v2515 = vlaneseq
      %v2516 = vshrl.u32 %v2515, 7
      %v2517 = vsub.s32 %v2514, %v2516
      %v2518 = vrot.slane %v2490, %v2517
      %v2519 = vcombine.low %v2497, %v2504
      %v2520 = vcombine.low %v2511, %v2518
      %v2522 = vunpack.c.l.s4 1966171168
      %v2523 = vunpack.c.0.s8 %v2522
      %v2524 = vlaneseq
      %v2525 = vshrl.u32 %v2524, 7
      %v2526 = vsub.s32 %v2523, %v2525
      %v2527 = vrot.slane %v2519, %v2526
      %v2529 = vunpack.c.l.s4 1966171168
      %v2530 = vunpack.c.0.s8 %v2529
      %v2531 = vlaneseq
      %v2532 = vshrl.u32 %v2531, 7
      %v2533 = vsub.s32 %v2530, %v2532
      %v2534 = vrot.slane %v2520, %v2533
      %v2535 = vcombine.low %v2527, %v2534
      %v2536 = vcombine.low %v2267, %v2268
      %v2537 = vcombine.low %v2269, %v2283
      %v2538 = vcombine.low %v2298, %v2305
      %v2539 = vcombine.low %v2306, %v2307
      %v2541 = vunpack.c.l.s4 1966171168
      %v2542 = vunpack.c.0.s8 %v2541
      %v2543 = vlaneseq
      %v2544 = vshrl.u32 %v2543, 7
      %v2545 = vsub.s32 %v2542, %v2544
      %v2546 = vrot.slane %v2536, %v2545
      %v2548 = vunpack.c.l.s4 1966171168
      %v2549 = vunpack.c.0.s8 %v2548
      %v2550 = vlaneseq
      %v2551 = vshrl.u32 %v2550, 7
      %v2552 = vsub.s32 %v2549, %v2551
      %v2553 = vrot.slane %v2537, %v2552
      %v2555 = vunpack.c.l.s4 1966171168
      %v2556 = vunpack.c.0.s8 %v2555
      %v2557 = vlaneseq
      %v2558 = vshrl.u32 %v2557, 7
      %v2559 = vsub.s32 %v2556, %v2558
      %v2560 = vrot.slane %v2538, %v2559
      %v2562 = vunpack.c.l.s4 1966171168
      %v2563 = vunpack.c.0.s8 %v2562
      %v2564 = vlaneseq
      %v2565 = vshrl.u32 %v2564, 7
      %v2566 = vsub.s32 %v2563, %v2565
      %v2567 = vrot.slane %v2539, %v2566
      %v2568 = vcombine.low %v2546, %v2553
      %v2569 = vcombine.low %v2560, %v2567
      %v2571 = vunpack.c.l.s4 1966171168
      %v2572 = vunpack.c.0.s8 %v2571
      %v2573 = vlaneseq
      %v2574 = vshrl.u32 %v2573, 7
      %v2575 = vsub.s32 %v2572, %v2574
      %v2576 = vrot.slane %v2568, %v2575
      %v2578 = vunpack.c.l.s4 1966171168
      %v2579 = vunpack.c.0.s8 %v2578
      %v2580 = vlaneseq
      %v2581 = vshrl.u32 %v2580, 7
      %v2582 = vsub.s32 %v2579, %v2581
      %v2583 = vrot.slane %v2569, %v2582
      %v2584 = vcombine.low %v2576, %v2583
      %v2585 = vcombine.low %v2321, %v2336
      %v2586 = vcombine.low %v2343, %v2344
      %v2587 = vcombine.low %v2345, %v2359
      %v2588 = vcombine.low %v2374, %v2381
      %v2590 = vunpack.c.l.s4 1966171168
      %v2591 = vunpack.c.0.s8 %v2590
      %v2592 = vlaneseq
      %v2593 = vshrl.u32 %v2592, 7
      %v2594 = vsub.s32 %v2591, %v2593
      %v2595 = vrot.slane %v2585, %v2594
      %v2597 = vunpack.c.l.s4 1966171168
      %v2598 = vunpack.c.0.s8 %v2597
      %v2599 = vlaneseq
      %v2600 = vshrl.u32 %v2599, 7
      %v2601 = vsub.s32 %v2598, %v2600
      %v2602 = vrot.slane %v2586, %v2601
      %v2604 = vunpack.c.l.s4 1966171168
      %v2605 = vunpack.c.0.s8 %v2604
      %v2606 = vlaneseq
      %v2607 = vshrl.u32 %v2606, 7
      %v2608 = vsub.s32 %v2605, %v2607
      %v2609 = vrot.slane %v2587, %v2608
      %v2611 = vunpack.c.l.s4 1966171168
      %v2612 = vunpack.c.0.s8 %v2611
      %v2613 = vlaneseq
      %v2614 = vshrl.u32 %v2613, 7
      %v2615 = vsub.s32 %v2612, %v2614
      %v2616 = vrot.slane %v2588, %v2615
      %v2617 = vcombine.low %v2595, %v2602
      %v2618 = vcombine.low %v2609, %v2616
      %v2620 = vunpack.c.l.s4 1966171168
      %v2621 = vunpack.c.0.s8 %v2620
      %v2622 = vlaneseq
      %v2623 = vshrl.u32 %v2622, 7
      %v2624 = vsub.s32 %v2621, %v2623
      %v2625 = vrot.slane %v2617, %v2624
      %v2627 = vunpack.c.l.s4 1966171168
      %v2628 = vunpack.c.0.s8 %v2627
      %v2629 = vlaneseq
      %v2630 = vshrl.u32 %v2629, 7
      %v2631 = vsub.s32 %v2628, %v2630
      %v2632 = vrot.slane %v2618, %v2631
      %v2633 = vcombine.low %v2625, %v2632
      %v2634 = vcombine.low %v2382, %v2383
      %v2635 = vcombine.low %v2397, %v2412
      %v2636 = vcombine.low %v2419, %v2420
      %v2637 = vcombine.low %v2421, %v2435
      %v2639 = vunpack.c.l.s4 1966171168
      %v2640 = vunpack.c.0.s8 %v2639
      %v2641 = vlaneseq
      %v2642 = vshrl.u32 %v2641, 7
      %v2643 = vsub.s32 %v2640, %v2642
      %v2644 = vrot.slane %v2634, %v2643
      %v2646 = vunpack.c.l.s4 1966171168
      %v2647 = vunpack.c.0.s8 %v2646
      %v2648 = vlaneseq
      %v2649 = vshrl.u32 %v2648, 7
      %v2650 = vsub.s32 %v2647, %v2649
      %v2651 = vrot.slane %v2635, %v2650
      %v2653 = vunpack.c.l.s4 1966171168
      %v2654 = vunpack.c.0.s8 %v2653
      %v2655 = vlaneseq
      %v2656 = vshrl.u32 %v2655, 7
      %v2657 = vsub.s32 %v2654, %v2656
      %v2658 = vrot.slane %v2636, %v2657
      %v2660 = vunpack.c.l.s4 1966171168
      %v2661 = vunpack.c.0.s8 %v2660
      %v2662 = vlaneseq
      %v2663 = vshrl.u32 %v2662, 7
      %v2664 = vsub.s32 %v2661, %v2663
      %v2665 = vrot.slane %v2637, %v2664
      %v2666 = vcombine.low %v2644, %v2651
      %v2667 = vcombine.low %v2658, %v2665
      %v2669 = vunpack.c.l.s4 1966171168
      %v2670 = vunpack.c.0.s8 %v2669
      %v2671 = vlaneseq
      %v2672 = vshrl.u32 %v2671, 7
      %v2673 = vsub.s32 %v2670, %v2672
      %v2674 = vrot.slane %v2666, %v2673
      %v2676 = vunpack.c.l.s4 1966171168
      %v2677 = vunpack.c.0.s8 %v2676
      %v2678 = vlaneseq
      %v2679 = vshrl.u32 %v2678, 7
      %v2680 = vsub.s32 %v2677, %v2679
      %v2681 = vrot.slane %v2667, %v2680
      %v2682 = vcombine.low %v2674, %v2681
      %v2684 = vsel %vm1362, %v2486, 0
      %v2687 = vsel %vm1362, %v2535, 0
      %v2690 = vsel %vm1362, %v2584, 0
      %v2693 = vsel %vm1362, %v2633, 0
      %v2696 = vsel %vm1362, %v2682, 0
      %v2699 = vsel %vm1378, %v2437, 0
      %2701 = vmatprep.subr.bf16.mxu0 0
      %2702 = vmatpush1.bf16.msra.mxu0 %v2699
      %2703 = vmatprep.subr.bf16.mxu0 0
      %2704 = vmatpush1.bf16.msra.mxu0 0
      %2705 = vmatprep.subr.bf16.mxu0 0
      %2706 = vmatpush1.bf16.msra.mxu0 0
      %2707 = vmatprep.subr.bf16.mxu0 0
      %2708 = vmatpush1.bf16.msra.mxu0 0
      %2709 = vmatprep.subr.bf16.mxu0 0
      %2710 = vmatpush1.bf16.msra.mxu0 0
      %2711 = vmatprep.subr.bf16.mxu0 0
      %2712 = vmatpush1.bf16.msra.mxu0 0
      %2713 = vmatprep.subr.bf16.mxu0 0
      %2714 = vmatpush1.bf16.msra.mxu0 0
      %2715 = vmatprep.subr.bf16.mxu0 0
      %2716 = vmatpush1.bf16.msra.mxu0 0
      %2717 = vmatprep.subr.bf16.mxu0 0
      %2718 = vmatpush1.bf16.msra.mxu0 0
      %2719 = vmatprep.subr.bf16.mxu0 0
      %2720 = vmatpush1.bf16.msra.mxu0 0
      %2721 = vmatprep.subr.bf16.mxu0 0
      %2722 = vmatpush1.bf16.msra.mxu0 0
      %2723 = vmatprep.subr.bf16.mxu0 0
      %2724 = vmatpush1.bf16.msra.mxu0 0
      %2725 = vmatprep.subr.bf16.mxu0 0
      %2726 = vmatpush1.bf16.msra.mxu0 0
      %2727 = vmatprep.subr.bf16.mxu0 0
      %2728 = vmatpush1.bf16.msra.mxu0 0
      %2729 = vmatprep.subr.bf16.mxu0 0
      %2730 = vmatpush1.bf16.msra.mxu0 0
      %2731 = vmatprep.subr.bf16.mxu0 0
      %2732 = vmatpush1.bf16.msra.mxu0 0
      %2733 = vmatprep.mubr.bf16.mxu0 0
      %2734 = vmatmul.mubr.bf16.gmra.mrb[0].mxu0 %v2684
      %v2735 = vpop.f32.mrb[0].mxu0
      %v2736 = vadd.f32 0.0, %v2735
      %v2737 = vpop.f32.mrb[0].mxu0
      %v2738 = vpop.f32.mrb[0].mxu0
      %v2739 = vadd.f32 0.0, %v2738
      %v2740 = vpop.f32.mrb[0].mxu0
      %2741 = vmatprep.mubr.bf16.mxu0 0
      %2742 = vmatmul.mubr.bf16.gmra.mrb[0].mxu0 %v2687
      %v2743 = vpop.f32.mrb[0].mxu0
      %v2744 = vadd.f32 0.0, %v2743
      %v2745 = vpop.f32.mrb[0].mxu0
      %v2746 = vpop.f32.mrb[0].mxu0
      %v2747 = vadd.f32 0.0, %v2746
      %v2748 = vpop.f32.mrb[0].mxu0
      %2749 = vmatprep.mubr.bf16.mxu0 0
      %2750 = vmatmul.mubr.bf16.gmra.mrb[0].mxu0 %v2690
      %v2751 = vpop.f32.mrb[0].mxu0
      %v2752 = vadd.f32 0.0, %v2751
      %v2753 = vpop.f32.mrb[0].mxu0
      %v2754 = vpop.f32.mrb[0].mxu0
      %v2755 = vadd.f32 0.0, %v2754
      %v2756 = vpop.f32.mrb[0].mxu0
      %2757 = vmatprep.mubr.bf16.mxu0 0
      %2758 = vmatmul.mubr.bf16.gmra.mrb[0].mxu0 %v2693
      %v2759 = vpop.f32.mrb[0].mxu0
      %v2760 = vadd.f32 0.0, %v2759
      %v2761 = vpop.f32.mrb[0].mxu0
      %v2762 = vpop.f32.mrb[0].mxu0
      %v2763 = vadd.f32 0.0, %v2762
      %v2764 = vpop.f32.mrb[0].mxu0
      %2765 = vmatprep.mubr.bf16.mxu0 0
      %2766 = vmatmul.mubr.bf16.gmra.mrb[0].mxu0 %v2696
      %v2767 = vpop.f32.mrb[0].mxu0
      %v2768 = vadd.f32 0.0, %v2767
      %v2769 = vpop.f32.mrb[0].mxu0
      %v2770 = vpop.f32.mrb[0].mxu0
      %v2771 = vadd.f32 0.0, %v2770
      %v2772 = vpop.f32.mrb[0].mxu0
      %2773 = vdwg.mxu0
      %v2774 = vadd.f32 %v1753, %v2736
      %v2775 = vadd.f32 %v1756, %v2739
      %v2776 = vadd.f32 %v1761, %v2744
      %v2777 = vadd.f32 %v1764, %v2747
      %v2778 = vadd.f32 %v1769, %v2752
      %v2779 = vadd.f32 %v1772, %v2755
      %v2780 = vadd.f32 %v1777, %v2760
      %v2781 = vadd.f32 %v1780, %v2763
      %v2782 = vadd.f32 %v1785, %v2768
      %v2783 = vadd.f32 %v1788, %v2771
      %s2784 = scalar_lea.vmem %s1, 28
      %v2785 = vld [vmem:[%s2784] sm:$0xf]
      %v2787 = vsel %vm1378, %v2785, 0
      %2789 = vmatprep.subr.bf16.mxu0 0
      %2790 = vmatpush1.bf16.msra.mxu0 %v2787
      %2791 = vmatprep.subr.bf16.mxu0 0
      %2792 = vmatpush1.bf16.msra.mxu0 0
      %2793 = vmatprep.subr.bf16.mxu0 0
      %2794 = vmatpush1.bf16.msra.mxu0 0
      %2795 = vmatprep.subr.bf16.mxu0 0
      %2796 = vmatpush1.bf16.msra.mxu0 0
      %2797 = vmatprep.subr.bf16.mxu0 0
      %2798 = vmatpush1.bf16.msra.mxu0 0
      %2799 = vmatprep.subr.bf16.mxu0 0
      %2800 = vmatpush1.bf16.msra.mxu0 0
      %2801 = vmatprep.subr.bf16.mxu0 0
      %2802 = vmatpush1.bf16.msra.mxu0 0
      %2803 = vmatprep.subr.bf16.mxu0 0
      %2804 = vmatpush1.bf16.msra.mxu0 0
      %2805 = vmatprep.subr.bf16.mxu0 0
      %2806 = vmatpush1.bf16.msra.mxu0 0
      %2807 = vmatprep.subr.bf16.mxu0 0
      %2808 = vmatpush1.bf16.msra.mxu0 0
      %2809 = vmatprep.subr.bf16.mxu0 0
      %2810 = vmatpush1.bf16.msra.mxu0 0
      %2811 = vmatprep.subr.bf16.mxu0 0
      %2812 = vmatpush1.bf16.msra.mxu0 0
      %2813 = vmatprep.subr.bf16.mxu0 0
      %2814 = vmatpush1.bf16.msra.mxu0 0
      %2815 = vmatprep.subr.bf16.mxu0 0
      %2816 = vmatpush1.bf16.msra.mxu0 0
      %2817 = vmatprep.subr.bf16.mxu0 0
      %2818 = vmatpush1.bf16.msra.mxu0 0
      %2819 = vmatprep.subr.bf16.mxu0 0
      %2820 = vmatpush1.bf16.msra.mxu0 0
      %2821 = vmatprep.mubr.bf16.mxu0 0
      %2822 = vmatmul.mubr.bf16.gmra.mrb[0].mxu0 %v2684
      %v2823 = vpop.f32.mrb[0].mxu0
      %v2824 = vadd.f32 0.0, %v2823
      %v2825 = vpop.f32.mrb[0].mxu0
      %v2826 = vpop.f32.mrb[0].mxu0
      %v2827 = vadd.f32 0.0, %v2826
      %v2828 = vpop.f32.mrb[0].mxu0
      %2829 = vmatprep.mubr.bf16.mxu0 0
      %2830 = vmatmul.mubr.bf16.gmra.mrb[0].mxu0 %v2687
      %v2831 = vpop.f32.mrb[0].mxu0
      %v2832 = vadd.f32 0.0, %v2831
      %v2833 = vpop.f32.mrb[0].mxu0
      %v2834 = vpop.f32.mrb[0].mxu0
      %v2835 = vadd.f32 0.0, %v2834
      %v2836 = vpop.f32.mrb[0].mxu0
      %2837 = vmatprep.mubr.bf16.mxu0 0
      %2838 = vmatmul.mubr.bf16.gmra.mrb[0].mxu0 %v2690
      %v2839 = vpop.f32.mrb[0].mxu0
      %v2840 = vadd.f32 0.0, %v2839
      %v2841 = vpop.f32.mrb[0].mxu0
      %v2842 = vpop.f32.mrb[0].mxu0
      %v2843 = vadd.f32 0.0, %v2842
      %v2844 = vpop.f32.mrb[0].mxu0
      %2845 = vmatprep.mubr.bf16.mxu0 0
      %2846 = vmatmul.mubr.bf16.gmra.mrb[0].mxu0 %v2693
      %v2847 = vpop.f32.mrb[0].mxu0
      %v2848 = vadd.f32 0.0, %v2847
      %v2849 = vpop.f32.mrb[0].mxu0
      %v2850 = vpop.f32.mrb[0].mxu0
      %v2851 = vadd.f32 0.0, %v2850
      %v2852 = vpop.f32.mrb[0].mxu0
      %2853 = vmatprep.mubr.bf16.mxu0 0
      %2854 = vmatmul.mubr.bf16.gmra.mrb[0].mxu0 %v2696
      %v2855 = vpop.f32.mrb[0].mxu0
      %v2856 = vadd.f32 0.0, %v2855
      %v2857 = vpop.f32.mrb[0].mxu0
      %v2858 = vpop.f32.mrb[0].mxu0
      %v2859 = vadd.f32 0.0, %v2858
      %v2860 = vpop.f32.mrb[0].mxu0
      %2861 = vdwg.mxu0
      %v2862 = vadd.f32 %v1907, %v2824
      %v2863 = vadd.f32 %v1910, %v2827
      %v2864 = vadd.f32 %v1915, %v2832
      %v2865 = vadd.f32 %v1918, %v2835
      %v2866 = vadd.f32 %v1923, %v2840
      %v2867 = vadd.f32 %v1926, %v2843
      %v2868 = vadd.f32 %v1931, %v2848
      %v2869 = vadd.f32 %v1934, %v2851
      %v2870 = vadd.f32 %v1939, %v2856
      %v2871 = vadd.f32 %v1942, %v2859
      %s2872 = scalar_lea.vmem %s1, 32
      %v2873 = vld [vmem:[%s2872] sm:$0xf]
      %v2875 = vsel %vm1378, %v2873, 0
      %2877 = vmatprep.subr.bf16.mxu0 0
      %2878 = vmatpush1.bf16.msra.mxu0 %v2875
      %2879 = vmatprep.subr.bf16.mxu0 0
      %2880 = vmatpush1.bf16.msra.mxu0 0
      %2881 = vmatprep.subr.bf16.mxu0 0
      %2882 = vmatpush1.bf16.msra.mxu0 0
      %2883 = vmatprep.subr.bf16.mxu0 0
      %2884 = vmatpush1.bf16.msra.mxu0 0
      %2885 = vmatprep.subr.bf16.mxu0 0
      %2886 = vmatpush1.bf16.msra.mxu0 0
      %2887 = vmatprep.subr.bf16.mxu0 0
      %2888 = vmatpush1.bf16.msra.mxu0 0
      %2889 = vmatprep.subr.bf16.mxu0 0
      %2890 = vmatpush1.bf16.msra.mxu0 0
      %2891 = vmatprep.subr.bf16.mxu0 0
      %2892 = vmatpush1.bf16.msra.mxu0 0
      %2893 = vmatprep.subr.bf16.mxu0 0
      %2894 = vmatpush1.bf16.msra.mxu0 0
      %2895 = vmatprep.subr.bf16.mxu0 0
      %2896 = vmatpush1.bf16.msra.mxu0 0
      %2897 = vmatprep.subr.bf16.mxu0 0
      %2898 = vmatpush1.bf16.msra.mxu0 0
      %2899 = vmatprep.subr.bf16.mxu0 0
      %2900 = vmatpush1.bf16.msra.mxu0 0
      %2901 = vmatprep.subr.bf16.mxu0 0
      %2902 = vmatpush1.bf16.msra.mxu0 0
      %2903 = vmatprep.subr.bf16.mxu0 0
      %2904 = vmatpush1.bf16.msra.mxu0 0
      %2905 = vmatprep.subr.bf16.mxu0 0
      %2906 = vmatpush1.bf16.msra.mxu0 0
      %2907 = vmatprep.subr.bf16.mxu0 0
      %2908 = vmatpush1.bf16.msra.mxu0 0
      %2909 = vmatprep.mubr.bf16.mxu0 0
      %2910 = vmatmul.mubr.bf16.gmra.mrb[0].mxu0 %v2684
      %v2911 = vpop.f32.mrb[0].mxu0
      %v2912 = vadd.f32 0.0, %v2911
      %v2913 = vpop.f32.mrb[0].mxu0
      %v2914 = vpop.f32.mrb[0].mxu0
      %v2915 = vadd.f32 0.0, %v2914
      %v2916 = vpop.f32.mrb[0].mxu0
      %2917 = vmatprep.mubr.bf16.mxu0 0
      %2918 = vmatmul.mubr.bf16.gmra.mrb[0].mxu0 %v2687
      %v2919 = vpop.f32.mrb[0].mxu0
      %v2920 = vadd.f32 0.0, %v2919
      %v2921 = vpop.f32.mrb[0].mxu0
      %v2922 = vpop.f32.mrb[0].mxu0
      %v2923 = vadd.f32 0.0, %v2922
      %v2924 = vpop.f32.mrb[0].mxu0
      %2925 = vmatprep.mubr.bf16.mxu0 0
      %2926 = vmatmul.mubr.bf16.gmra.mrb[0].mxu0 %v2690
      %v2927 = vpop.f32.mrb[0].mxu0
      %v2928 = vadd.f32 0.0, %v2927
      %v2929 = vpop.f32.mrb[0].mxu0
      %v2930 = vpop.f32.mrb[0].mxu0
      %v2931 = vadd.f32 0.0, %v2930
      %v2932 = vpop.f32.mrb[0].mxu0
      %2933 = vmatprep.mubr.bf16.mxu0 0
      %2934 = vmatmul.mubr.bf16.gmra.mrb[0].mxu0 %v2693
      %v2935 = vpop.f32.mrb[0].mxu0
      %v2936 = vadd.f32 0.0, %v2935
      %v2937 = vpop.f32.mrb[0].mxu0
      %v2938 = vpop.f32.mrb[0].mxu0
      %v2939 = vadd.f32 0.0, %v2938
      %v2940 = vpop.f32.mrb[0].mxu0
      %2941 = vmatprep.mubr.bf16.mxu0 0
      %2942 = vmatmul.mubr.bf16.gmra.mrb[0].mxu0 %v2696
      %v2943 = vpop.f32.mrb[0].mxu0
      %v2944 = vadd.f32 0.0, %v2943
      %v2945 = vpop.f32.mrb[0].mxu0
      %v2946 = vpop.f32.mrb[0].mxu0
      %v2947 = vadd.f32 0.0, %v2946
      %v2948 = vpop.f32.mrb[0].mxu0
      %2949 = vdwg.mxu0
      %v2950 = vadd.f32 %v2061, %v2912
      %v2951 = vadd.f32 %v2064, %v2915
      %v2952 = vadd.f32 %v2069, %v2920
      %v2953 = vadd.f32 %v2072, %v2923
      %v2954 = vadd.f32 %v2077, %v2928
      %v2955 = vadd.f32 %v2080, %v2931
      %v2956 = vadd.f32 %v2085, %v2936
      %v2957 = vadd.f32 %v2088, %v2939
      %v2958 = vadd.f32 %v2093, %v2944
      %v2959 = vadd.f32 %v2096, %v2947
      %v2970 = vcombine.high %v2774, %v2774
      %v2972 = vunpack.c.l.s4 1983009808
      %v2973 = vunpack.c.0.s8 %v2972
      %v2974 = vlaneseq
      %v2975 = vshrl.u32 %v2974, 7
      %v2976 = vsub.s32 %v2973, %v2975
      %v2977 = vrot.slane %v2774, %v2976
      %v2979 = vunpack.c.l.s4 1983009808
      %v2980 = vunpack.c.0.s8 %v2979
      %v2981 = vlaneseq
      %v2982 = vshrl.u32 %v2981, 7
      %v2983 = vsub.s32 %v2980, %v2982
      %v2984 = vrot.slane %v2970, %v2983
      %v2985 = vcombine.high %v2977, %v2977
      %v2986 = vcombine.high %v2984, %v2984
      %v2987 = vcombine.high %v2775, %v2775
      %v2989 = vunpack.c.l.s4 1983009808
      %v2990 = vunpack.c.0.s8 %v2989
      %v2991 = vlaneseq
      %v2992 = vshrl.u32 %v2991, 7
      %v2993 = vsub.s32 %v2990, %v2992
      %v2994 = vrot.slane %v2775, %v2993
      %v2996 = vunpack.c.l.s4 1983009808
      %v2997 = vunpack.c.0.s8 %v2996
      %v2998 = vlaneseq
      %v2999 = vshrl.u32 %v2998, 7
      %v3000 = vsub.s32 %v2997, %v2999
      %v3001 = vrot.slane %v2987, %v3000
      %v3002 = vcombine.high %v2994, %v2994
      %v3003 = vcombine.high %v3001, %v3001
      %v3004 = vcombine.high %v2776, %v2776
      %v3006 = vunpack.c.l.s4 1983009808
      %v3007 = vunpack.c.0.s8 %v3006
      %v3008 = vlaneseq
      %v3009 = vshrl.u32 %v3008, 7
      %v3010 = vsub.s32 %v3007, %v3009
      %v3011 = vrot.slane %v2776, %v3010
      %v3013 = vunpack.c.l.s4 1983009808
      %v3014 = vunpack.c.0.s8 %v3013
      %v3015 = vlaneseq
      %v3016 = vshrl.u32 %v3015, 7
      %v3017 = vsub.s32 %v3014, %v3016
      %v3018 = vrot.slane %v3004, %v3017
      %v3019 = vcombine.high %v3018, %v3018
      %v3020 = vcombine.high %v2777, %v2777
      %v3022 = vunpack.c.l.s4 1983009808
      %v3023 = vunpack.c.0.s8 %v3022
      %v3024 = vlaneseq
      %v3025 = vshrl.u32 %v3024, 7
      %v3026 = vsub.s32 %v3023, %v3025
      %v3027 = vrot.slane %v2777, %v3026
      %v3029 = vunpack.c.l.s4 1983009808
      %v3030 = vunpack.c.0.s8 %v3029
      %v3031 = vlaneseq
      %v3032 = vshrl.u32 %v3031, 7
      %v3033 = vsub.s32 %v3030, %v3032
      %v3034 = vrot.slane %v3020, %v3033
      %v3035 = vcombine.high %v3027, %v3027
      %v3036 = vcombine.high %v3034, %v3034
      %v3037 = vcombine.high %v2778, %v2778
      %v3039 = vunpack.c.l.s4 1983009808
      %v3040 = vunpack.c.0.s8 %v3039
      %v3041 = vlaneseq
      %v3042 = vshrl.u32 %v3041, 7
      %v3043 = vsub.s32 %v3040, %v3042
      %v3044 = vrot.slane %v2778, %v3043
      %v3046 = vunpack.c.l.s4 1983009808
      %v3047 = vunpack.c.0.s8 %v3046
      %v3048 = vlaneseq
      %v3049 = vshrl.u32 %v3048, 7
      %v3050 = vsub.s32 %v3047, %v3049
      %v3051 = vrot.slane %v3037, %v3050
      %v3052 = vcombine.high %v3044, %v3044
      %v3053 = vcombine.high %v2779, %v2779
      %v3055 = vunpack.c.l.s4 1983009808
      %v3056 = vunpack.c.0.s8 %v3055
      %v3057 = vlaneseq
      %v3058 = vshrl.u32 %v3057, 7
      %v3059 = vsub.s32 %v3056, %v3058
      %v3060 = vrot.slane %v2779, %v3059
      %v3062 = vunpack.c.l.s4 1983009808
      %v3063 = vunpack.c.0.s8 %v3062
      %v3064 = vlaneseq
      %v3065 = vshrl.u32 %v3064, 7
      %v3066 = vsub.s32 %v3063, %v3065
      %v3067 = vrot.slane %v3053, %v3066
      %v3068 = vcombine.high %v3060, %v3060
      %v3069 = vcombine.high %v3067, %v3067
      %v3070 = vcombine.high %v2780, %v2780
      %v3072 = vunpack.c.l.s4 1983009808
      %v3073 = vunpack.c.0.s8 %v3072
      %v3074 = vlaneseq
      %v3075 = vshrl.u32 %v3074, 7
      %v3076 = vsub.s32 %v3073, %v3075
      %v3077 = vrot.slane %v2780, %v3076
      %v3079 = vunpack.c.l.s4 1983009808
      %v3080 = vunpack.c.0.s8 %v3079
      %v3081 = vlaneseq
      %v3082 = vshrl.u32 %v3081, 7
      %v3083 = vsub.s32 %v3080, %v3082
      %v3084 = vrot.slane %v3070, %v3083
      %v3085 = vcombine.high %v3077, %v3077
      %v3086 = vcombine.high %v3084, %v3084
      %v3087 = vcombine.high %v2781, %v2781
      %v3089 = vunpack.c.l.s4 1983009808
      %v3090 = vunpack.c.0.s8 %v3089
      %v3091 = vlaneseq
      %v3092 = vshrl.u32 %v3091, 7
      %v3093 = vsub.s32 %v3090, %v3092
      %v3094 = vrot.slane %v2781, %v3093
      %v3096 = vunpack.c.l.s4 1983009808
      %v3097 = vunpack.c.0.s8 %v3096
      %v3098 = vlaneseq
      %v3099 = vshrl.u32 %v3098, 7
      %v3100 = vsub.s32 %v3097, %v3099
      %v3101 = vrot.slane %v3087, %v3100
      %v3102 = vcombine.high %v3101, %v3101
      %v3103 = vcombine.high %v2782, %v2782
      %v3105 = vunpack.c.l.s4 1983009808
      %v3106 = vunpack.c.0.s8 %v3105
      %v3107 = vlaneseq
      %v3108 = vshrl.u32 %v3107, 7
      %v3109 = vsub.s32 %v3106, %v3108
      %v3110 = vrot.slane %v2782, %v3109
      %v3112 = vunpack.c.l.s4 1983009808
      %v3113 = vunpack.c.0.s8 %v3112
      %v3114 = vlaneseq
      %v3115 = vshrl.u32 %v3114, 7
      %v3116 = vsub.s32 %v3113, %v3115
      %v3117 = vrot.slane %v3103, %v3116
      %v3118 = vcombine.high %v3110, %v3110
      %v3119 = vcombine.high %v3117, %v3117
      %v3120 = vcombine.high %v2783, %v2783
      %v3122 = vunpack.c.l.s4 1983009808
      %v3123 = vunpack.c.0.s8 %v3122
      %v3124 = vlaneseq
      %v3125 = vshrl.u32 %v3124, 7
      %v3126 = vsub.s32 %v3123, %v3125
      %v3127 = vrot.slane %v2783, %v3126
      %v3129 = vunpack.c.l.s4 1983009808
      %v3130 = vunpack.c.0.s8 %v3129
      %v3131 = vlaneseq
      %v3132 = vshrl.u32 %v3131, 7
      %v3133 = vsub.s32 %v3130, %v3132
      %v3134 = vrot.slane %v3120, %v3133
      %v3135 = vcombine.high %v3127, %v3127
      %v3168 = vadd.f32 %v2977, 0.0
      %v3169 = vadd.f32 %v2985, 0.0
      %v3170 = vadd.f32 %v2984, 0.0
      %v3171 = vadd.f32 %v2986, 0.0
      %v3172 = vadd.f32 %v3002, 0.0
      %v3173 = vadd.f32 %v3001, 0.0
      %v3174 = vadd.f32 %v3003, 0.0
      %v3175 = vadd.f32 %v3011, 0.0
      %v3176 = vadd.f32 %v3018, 0.0
      %v3177 = vadd.f32 %v3019, 0.0
      %v3178 = vadd.f32 %v3027, 0.0
      %v3179 = vadd.f32 %v3035, 0.0
      %v3180 = vadd.f32 %v3036, 0.0
      %v3181 = vadd.f32 %v3044, 0.0
      %v3182 = vadd.f32 %v3052, 0.0
      %v3183 = vadd.f32 %v3051, 0.0
      %v3184 = vadd.f32 %v3060, 0.0
      %v3185 = vadd.f32 %v3068, 0.0
      %v3186 = vadd.f32 %v3067, 0.0
      %v3187 = vadd.f32 %v3069, 0.0
      %v3188 = vadd.f32 %v3085, 0.0
      %v3189 = vadd.f32 %v3084, 0.0
      %v3190 = vadd.f32 %v3086, 0.0
      %v3191 = vadd.f32 %v3094, 0.0
      %v3192 = vadd.f32 %v3101, 0.0
      %v3193 = vadd.f32 %v3102, 0.0
      %v3194 = vadd.f32 %v3110, 0.0
      %v3195 = vadd.f32 %v3118, 0.0
      %v3196 = vadd.f32 %v3119, 0.0
      %v3197 = vadd.f32 %v3127, 0.0
      %v3198 = vadd.f32 %v3135, 0.0
      %v3199 = vadd.f32 %v3134, 0.0
      %v3210 = vcombine.high %v2862, %v2862
      %v3212 = vunpack.c.l.s4 1983009808
      %v3213 = vunpack.c.0.s8 %v3212
      %v3214 = vlaneseq
      %v3215 = vshrl.u32 %v3214, 7
      %v3216 = vsub.s32 %v3213, %v3215
      %v3217 = vrot.slane %v2862, %v3216
      %v3219 = vunpack.c.l.s4 1983009808
      %v3220 = vunpack.c.0.s8 %v3219
      %v3221 = vlaneseq
      %v3222 = vshrl.u32 %v3221, 7
      %v3223 = vsub.s32 %v3220, %v3222
      %v3224 = vrot.slane %v3210, %v3223
      %v3225 = vcombine.high %v3217, %v3217
      %v3226 = vcombine.high %v3224, %v3224
      %v3227 = vcombine.high %v2863, %v2863
      %v3229 = vunpack.c.l.s4 1983009808
      %v3230 = vunpack.c.0.s8 %v3229
      %v3231 = vlaneseq
      %v3232 = vshrl.u32 %v3231, 7
      %v3233 = vsub.s32 %v3230, %v3232
      %v3234 = vrot.slane %v2863, %v3233
      %v3236 = vunpack.c.l.s4 1983009808
      %v3237 = vunpack.c.0.s8 %v3236
      %v3238 = vlaneseq
      %v3239 = vshrl.u32 %v3238, 7
      %v3240 = vsub.s32 %v3237, %v3239
      %v3241 = vrot.slane %v3227, %v3240
      %v3242 = vcombine.high %v3234, %v3234
      %v3243 = vcombine.high %v3241, %v3241
      %v3244 = vcombine.high %v2864, %v2864
      %v3246 = vunpack.c.l.s4 1983009808
      %v3247 = vunpack.c.0.s8 %v3246
      %v3248 = vlaneseq
      %v3249 = vshrl.u32 %v3248, 7
      %v3250 = vsub.s32 %v3247, %v3249
      %v3251 = vrot.slane %v2864, %v3250
      %v3253 = vunpack.c.l.s4 1983009808
      %v3254 = vunpack.c.0.s8 %v3253
      %v3255 = vlaneseq
      %v3256 = vshrl.u32 %v3255, 7
      %v3257 = vsub.s32 %v3254, %v3256
      %v3258 = vrot.slane %v3244, %v3257
      %v3259 = vcombine.high %v3251, %v3251
      %v3260 = vcombine.high %v3258, %v3258
      %v3261 = vcombine.high %v2865, %v2865
      %v3263 = vunpack.c.l.s4 1983009808
      %v3264 = vunpack.c.0.s8 %v3263
      %v3265 = vlaneseq
      %v3266 = vshrl.u32 %v3265, 7
      %v3267 = vsub.s32 %v3264, %v3266
      %v3268 = vrot.slane %v2865, %v3267
      %v3270 = vunpack.c.l.s4 1983009808
      %v3271 = vunpack.c.0.s8 %v3270
      %v3272 = vlaneseq
      %v3273 = vshrl.u32 %v3272, 7
      %v3274 = vsub.s32 %v3271, %v3273
      %v3275 = vrot.slane %v3261, %v3274
      %v3276 = vcombine.high %v3268, %v3268
      %v3277 = vcombine.high %v3275, %v3275
      %v3278 = vcombine.high %v2866, %v2866
      %v3280 = vunpack.c.l.s4 1983009808
      %v3281 = vunpack.c.0.s8 %v3280
      %v3282 = vlaneseq
      %v3283 = vshrl.u32 %v3282, 7
      %v3284 = vsub.s32 %v3281, %v3283
      %v3285 = vrot.slane %v2866, %v3284
      %v3287 = vunpack.c.l.s4 1983009808
      %v3288 = vunpack.c.0.s8 %v3287
      %v3289 = vlaneseq
      %v3290 = vshrl.u32 %v3289, 7
      %v3291 = vsub.s32 %v3288, %v3290
      %v3292 = vrot.slane %v3278, %v3291
      %v3293 = vcombine.high %v3285, %v3285
      %v3294 = vcombine.high %v3292, %v3292
      %v3295 = vcombine.high %v2867, %v2867
      %v3297 = vunpack.c.l.s4 1983009808
      %v3298 = vunpack.c.0.s8 %v3297
      %v3299 = vlaneseq
      %v3300 = vshrl.u32 %v3299, 7
      %v3301 = vsub.s32 %v3298, %v3300
      %v3302 = vrot.slane %v2867, %v3301
      %v3304 = vunpack.c.l.s4 1983009808
      %v3305 = vunpack.c.0.s8 %v3304
      %v3306 = vlaneseq
      %v3307 = vshrl.u32 %v3306, 7
      %v3308 = vsub.s32 %v3305, %v3307
      %v3309 = vrot.slane %v3295, %v3308
      %v3310 = vcombine.high %v3302, %v3302
      %v3311 = vcombine.high %v3309, %v3309
      %v3312 = vcombine.high %v2868, %v2868
      %v3314 = vunpack.c.l.s4 1983009808
      %v3315 = vunpack.c.0.s8 %v3314
      %v3316 = vlaneseq
      %v3317 = vshrl.u32 %v3316, 7
      %v3318 = vsub.s32 %v3315, %v3317
      %v3319 = vrot.slane %v2868, %v3318
      %v3321 = vunpack.c.l.s4 1983009808
      %v3322 = vunpack.c.0.s8 %v3321
      %v3323 = vlaneseq
      %v3324 = vshrl.u32 %v3323, 7
      %v3325 = vsub.s32 %v3322, %v3324
      %v3326 = vrot.slane %v3312, %v3325
      %v3327 = vcombine.high %v3319, %v3319
      %v3328 = vcombine.high %v3326, %v3326
      %v3329 = vcombine.high %v2869, %v2869
      %v3331 = vunpack.c.l.s4 1983009808
      %v3332 = vunpack.c.0.s8 %v3331
      %v3333 = vlaneseq
      %v3334 = vshrl.u32 %v3333, 7
      %v3335 = vsub.s32 %v3332, %v3334
      %v3336 = vrot.slane %v2869, %v3335
      %v3338 = vunpack.c.l.s4 1983009808
      %v3339 = vunpack.c.0.s8 %v3338
      %v3340 = vlaneseq
      %v3341 = vshrl.u32 %v3340, 7
      %v3342 = vsub.s32 %v3339, %v3341
      %v3343 = vrot.slane %v3329, %v3342
      %v3344 = vcombine.high %v3336, %v3336
      %v3345 = vcombine.high %v3343, %v3343
      %v3346 = vcombine.high %v2870, %v2870
      %v3348 = vunpack.c.l.s4 1983009808
      %v3349 = vunpack.c.0.s8 %v3348
      %v3350 = vlaneseq
      %v3351 = vshrl.u32 %v3350, 7
      %v3352 = vsub.s32 %v3349, %v3351
      %v3353 = vrot.slane %v2870, %v3352
      %v3355 = vunpack.c.l.s4 1983009808
      %v3356 = vunpack.c.0.s8 %v3355
      %v3357 = vlaneseq
      %v3358 = vshrl.u32 %v3357, 7
      %v3359 = vsub.s32 %v3356, %v3358
      %v3360 = vrot.slane %v3346, %v3359
      %v3361 = vcombine.high %v3353, %v3353
      %v3362 = vcombine.high %v3360, %v3360
      %v3363 = vcombine.high %v2871, %v2871
      %v3365 = vunpack.c.l.s4 1983009808
      %v3366 = vunpack.c.0.s8 %v3365
      %v3367 = vlaneseq
      %v3368 = vshrl.u32 %v3367, 7
      %v3369 = vsub.s32 %v3366, %v3368
      %v3370 = vrot.slane %v2871, %v3369
      %v3372 = vunpack.c.l.s4 1983009808
      %v3373 = vunpack.c.0.s8 %v3372
      %v3374 = vlaneseq
      %v3375 = vshrl.u32 %v3374, 7
      %v3376 = vsub.s32 %v3373, %v3375
      %v3377 = vrot.slane %v3363, %v3376
      %v3378 = vcombine.high %v3370, %v3370
      %v3379 = vcombine.high %v3377, %v3377
      %vm3380 = vcmask 1040384
      %vm3381 = vcmask 1042434
      %vm3382 = vmor %vm3380, %vm3381
      %vm3383 = vcmask 1044484
      %vm3384 = vmor %vm3382, %vm3383
      %vm3385 = vcmask 1046534
      %vm3386 = vmor %vm3384, %vm3385
      %v3387 = vrot.slane %v3217, 7
      %v3388 = vrot.slane %v3387, 2
      %v3389 = vrot.slane %v3225, 7
      %v3390 = vsel %vm3386, %v3388, %v3389
      %v3391 = vrot.slane %v3389, 2
      %v3392 = vrot.slane %v3224, 7
      %v3393 = vsel %vm3386, %v3391, %v3392
      %v3394 = vrot.slane %v3392, 2
      %v3395 = vrot.slane %v3226, 7
      %v3396 = vsel %vm3386, %v3394, %v3395
      %v3397 = vrot.slane %v3395, 2
      %v3398 = vrot.slane %v3234, 7
      %v3399 = vsel %vm3386, %v3397, %v3398
      %v3400 = vrot.slane %v3242, 7
      %v3401 = vrot.slane %v3400, 2
      %v3402 = vrot.slane %v3241, 7
      %v3403 = vsel %vm3386, %v3401, %v3402
      %v3404 = vrot.slane %v3402, 2
      %v3405 = vrot.slane %v3243, 7
      %v3406 = vsel %vm3386, %v3404, %v3405
      %v3407 = vrot.slane %v3405, 2
      %v3408 = vrot.slane %v3251, 7
      %v3409 = vsel %vm3386, %v3407, %v3408
      %v3410 = vrot.slane %v3408, 2
      %v3411 = vrot.slane %v3259, 7
      %v3412 = vsel %vm3386, %v3410, %v3411
      %v3413 = vrot.slane %v3258, 7
      %v3414 = vrot.slane %v3413, 2
      %v3415 = vrot.slane %v3260, 7
      %v3416 = vsel %vm3386, %v3414, %v3415
      %v3417 = vrot.slane %v3415, 2
      %v3418 = vrot.slane %v3268, 7
      %v3419 = vsel %vm3386, %v3417, %v3418
      %v3420 = vrot.slane %v3418, 2
      %v3421 = vrot.slane %v3276, 7
      %v3422 = vsel %vm3386, %v3420, %v3421
      %v3423 = vrot.slane %v3421, 2
      %v3424 = vrot.slane %v3275, 7
      %v3425 = vsel %vm3386, %v3423, %v3424
      %v3426 = vrot.slane %v3277, 7
      %v3427 = vrot.slane %v3426, 2
      %v3428 = vrot.slane %v3285, 7
      %v3429 = vsel %vm3386, %v3427, %v3428
      %v3430 = vrot.slane %v3428, 2
      %v3431 = vrot.slane %v3293, 7
      %v3432 = vsel %vm3386, %v3430, %v3431
      %v3433 = vrot.slane %v3431, 2
      %v3434 = vrot.slane %v3292, 7
      %v3435 = vsel %vm3386, %v3433, %v3434
      %v3436 = vrot.slane %v3434, 2
      %v3437 = vrot.slane %v3294, 7
      %v3438 = vsel %vm3386, %v3436, %v3437
      %v3439 = vrot.slane %v3302, 7
      %v3440 = vrot.slane %v3439, 2
      %v3441 = vrot.slane %v3310, 7
      %v3442 = vsel %vm3386, %v3440, %v3441
      %v3443 = vrot.slane %v3441, 2
      %v3444 = vrot.slane %v3309, 7
      %v3445 = vsel %vm3386, %v3443, %v3444
      %v3446 = vrot.slane %v3444, 2
      %v3447 = vrot.slane %v3311, 7
      %v3448 = vsel %vm3386, %v3446, %v3447
      %v3449 = vrot.slane %v3447, 2
      %v3450 = vrot.slane %v3319, 7
      %v3451 = vsel %vm3386, %v3449, %v3450
      %v3452 = vrot.slane %v3327, 7
      %v3453 = vrot.slane %v3452, 2
      %v3454 = vrot.slane %v3326, 7
      %v3455 = vsel %vm3386, %v3453, %v3454
      %v3456 = vrot.slane %v3454, 2
      %v3457 = vrot.slane %v3328, 7
      %v3458 = vsel %vm3386, %v3456, %v3457
      %v3459 = vrot.slane %v3457, 2
      %v3460 = vrot.slane %v3336, 7
      %v3461 = vsel %vm3386, %v3459, %v3460
      %v3462 = vrot.slane %v3460, 2
      %v3463 = vrot.slane %v3344, 7
      %v3464 = vsel %vm3386, %v3462, %v3463
      %v3465 = vrot.slane %v3343, 7
      %v3466 = vrot.slane %v3465, 2
      %v3467 = vrot.slane %v3345, 7
      %v3468 = vsel %vm3386, %v3466, %v3467
      %v3469 = vrot.slane %v3467, 2
      %v3470 = vrot.slane %v3353, 7
      %v3471 = vsel %vm3386, %v3469, %v3470
      %v3472 = vrot.slane %v3470, 2
      %v3473 = vrot.slane %v3361, 7
      %v3474 = vsel %vm3386, %v3472, %v3473
      %v3475 = vrot.slane %v3473, 2
      %v3476 = vrot.slane %v3360, 7
      %v3477 = vsel %vm3386, %v3475, %v3476
      %v3478 = vrot.slane %v3362, 7
      %v3479 = vrot.slane %v3478, 2
      %v3480 = vrot.slane %v3370, 7
      %v3481 = vsel %vm3386, %v3479, %v3480
      %v3482 = vrot.slane %v3480, 2
      %v3483 = vrot.slane %v3378, 7
      %v3484 = vsel %vm3386, %v3482, %v3483
      %v3485 = vrot.slane %v3483, 2
      %v3486 = vrot.slane %v3377, 7
      %v3487 = vsel %vm3386, %v3485, %v3486
      %v3488 = vrot.slane %v3486, 2
      %v3489 = vrot.slane %v3379, 7
      %v3490 = vsel %vm3386, %v3488, %v3489
      %v3523 = vadd.f32 %v3168, %v3390
      %v3524 = vadd.f32 %v3169, %v3393
      %v3525 = vadd.f32 %v3170, %v3396
      %v3526 = vadd.f32 %v3171, %v3399
      %v3527 = vadd.f32 %v3172, %v3403
      %v3528 = vadd.f32 %v3173, %v3406
      %v3529 = vadd.f32 %v3174, %v3409
      %v3530 = vadd.f32 %v3175, %v3412
      %v3531 = vadd.f32 %v3176, %v3416
      %v3532 = vadd.f32 %v3177, %v3419
      %v3533 = vadd.f32 %v3178, %v3422
      %v3534 = vadd.f32 %v3179, %v3425
      %v3535 = vadd.f32 %v3180, %v3429
      %v3536 = vadd.f32 %v3181, %v3432
      %v3537 = vadd.f32 %v3182, %v3435
      %v3538 = vadd.f32 %v3183, %v3438
      %v3539 = vadd.f32 %v3184, %v3442
      %v3540 = vadd.f32 %v3185, %v3445
      %v3541 = vadd.f32 %v3186, %v3448
      %v3542 = vadd.f32 %v3187, %v3451
      %v3543 = vadd.f32 %v3188, %v3455
      %v3544 = vadd.f32 %v3189, %v3458
      %v3545 = vadd.f32 %v3190, %v3461
      %v3546 = vadd.f32 %v3191, %v3464
      %v3547 = vadd.f32 %v3192, %v3468
      %v3548 = vadd.f32 %v3193, %v3471
      %v3549 = vadd.f32 %v3194, %v3474
      %v3550 = vadd.f32 %v3195, %v3477
      %v3551 = vadd.f32 %v3196, %v3481
      %v3552 = vadd.f32 %v3197, %v3484
      %v3553 = vadd.f32 %v3198, %v3487
      %v3554 = vadd.f32 %v3199, %v3490
      %v3565 = vcombine.high %v2950, %v2950
      %v3567 = vunpack.c.l.s4 1983009808
      %v3568 = vunpack.c.0.s8 %v3567
      %v3569 = vlaneseq
      %v3570 = vshrl.u32 %v3569, 7
      %v3571 = vsub.s32 %v3568, %v3570
      %v3572 = vrot.slane %v2950, %v3571
      %v3574 = vunpack.c.l.s4 1983009808
      %v3575 = vunpack.c.0.s8 %v3574
      %v3576 = vlaneseq
      %v3577 = vshrl.u32 %v3576, 7
      %v3578 = vsub.s32 %v3575, %v3577
      %v3579 = vrot.slane %v3565, %v3578
      %v3580 = vcombine.high %v3572, %v3572
      %v3581 = vcombine.high %v3579, %v3579
      %v3582 = vcombine.high %v2951, %v2951
      %v3584 = vunpack.c.l.s4 1983009808
      %v3585 = vunpack.c.0.s8 %v3584
      %v3586 = vlaneseq
      %v3587 = vshrl.u32 %v3586, 7
      %v3588 = vsub.s32 %v3585, %v3587
      %v3589 = vrot.slane %v2951, %v3588
      %v3591 = vunpack.c.l.s4 1983009808
      %v3592 = vunpack.c.0.s8 %v3591
      %v3593 = vlaneseq
      %v3594 = vshrl.u32 %v3593, 7
      %v3595 = vsub.s32 %v3592, %v3594
      %v3596 = vrot.slane %v3582, %v3595
      %v3597 = vcombine.high %v3596, %v3596
      %v3598 = vcombine.high %v2952, %v2952
      %v3600 = vunpack.c.l.s4 1983009808
      %v3601 = vunpack.c.0.s8 %v3600
      %v3602 = vlaneseq
      %v3603 = vshrl.u32 %v3602, 7
      %v3604 = vsub.s32 %v3601, %v3603
      %v3605 = vrot.slane %v2952, %v3604
      %v3607 = vunpack.c.l.s4 1983009808
      %v3608 = vunpack.c.0.s8 %v3607
      %v3609 = vlaneseq
      %v3610 = vshrl.u32 %v3609, 7
      %v3611 = vsub.s32 %v3608, %v3610
      %v3612 = vrot.slane %v3598, %v3611
      %v3613 = vcombine.high %v3605, %v3605
      %v3614 = vcombine.high %v3612, %v3612
      %v3615 = vcombine.high %v2953, %v2953
      %v3617 = vunpack.c.l.s4 1983009808
      %v3618 = vunpack.c.0.s8 %v3617
      %v3619 = vlaneseq
      %v3620 = vshrl.u32 %v3619, 7
      %v3621 = vsub.s32 %v3618, %v3620
      %v3622 = vrot.slane %v2953, %v3621
      %v3624 = vunpack.c.l.s4 1983009808
      %v3625 = vunpack.c.0.s8 %v3624
      %v3626 = vlaneseq
      %v3627 = vshrl.u32 %v3626, 7
      %v3628 = vsub.s32 %v3625, %v3627
      %v3629 = vrot.slane %v3615, %v3628
      %v3630 = vcombine.high %v3622, %v3622
      %v3631 = vcombine.high %v2954, %v2954
      %v3633 = vunpack.c.l.s4 1983009808
      %v3634 = vunpack.c.0.s8 %v3633
      %v3635 = vlaneseq
      %v3636 = vshrl.u32 %v3635, 7
      %v3637 = vsub.s32 %v3634, %v3636
      %v3638 = vrot.slane %v2954, %v3637
      %v3640 = vunpack.c.l.s4 1983009808
      %v3641 = vunpack.c.0.s8 %v3640
      %v3642 = vlaneseq
      %v3643 = vshrl.u32 %v3642, 7
      %v3644 = vsub.s32 %v3641, %v3643
      %v3645 = vrot.slane %v3631, %v3644
      %v3646 = vcombine.high %v3638, %v3638
      %v3647 = vcombine.high %v3645, %v3645
      %v3648 = vcombine.high %v2955, %v2955
      %v3650 = vunpack.c.l.s4 1983009808
      %v3651 = vunpack.c.0.s8 %v3650
      %v3652 = vlaneseq
      %v3653 = vshrl.u32 %v3652, 7
      %v3654 = vsub.s32 %v3651, %v3653
      %v3655 = vrot.slane %v2955, %v3654
      %v3657 = vunpack.c.l.s4 1983009808
      %v3658 = vunpack.c.0.s8 %v3657
      %v3659 = vlaneseq
      %v3660 = vshrl.u32 %v3659, 7
      %v3661 = vsub.s32 %v3658, %v3660
      %v3662 = vrot.slane %v3648, %v3661
      %v3663 = vcombine.high %v3655, %v3655
      %v3664 = vcombine.high %v3662, %v3662
      %v3665 = vcombine.high %v2956, %v2956
      %v3667 = vunpack.c.l.s4 1983009808
      %v3668 = vunpack.c.0.s8 %v3667
      %v3669 = vlaneseq
      %v3670 = vshrl.u32 %v3669, 7
      %v3671 = vsub.s32 %v3668, %v3670
      %v3672 = vrot.slane %v2956, %v3671
      %v3674 = vunpack.c.l.s4 1983009808
      %v3675 = vunpack.c.0.s8 %v3674
      %v3676 = vlaneseq
      %v3677 = vshrl.u32 %v3676, 7
      %v3678 = vsub.s32 %v3675, %v3677
      %v3679 = vrot.slane %v3665, %v3678
      %v3680 = vcombine.high %v3679, %v3679
      %v3681 = vcombine.high %v2957, %v2957
      %v3683 = vunpack.c.l.s4 1983009808
      %v3684 = vunpack.c.0.s8 %v3683
      %v3685 = vlaneseq
      %v3686 = vshrl.u32 %v3685, 7
      %v3687 = vsub.s32 %v3684, %v3686
      %v3688 = vrot.slane %v2957, %v3687
      %v3690 = vunpack.c.l.s4 1983009808
      %v3691 = vunpack.c.0.s8 %v3690
      %v3692 = vlaneseq
      %v3693 = vshrl.u32 %v3692, 7
      %v3694 = vsub.s32 %v3691, %v3693
      %v3695 = vrot.slane %v3681, %v3694
      %v3696 = vcombine.high %v3688, %v3688
      %v3697 = vcombine.high %v3695, %v3695
      %v3698 = vcombine.high %v2958, %v2958
      %v3700 = vunpack.c.l.s4 1983009808
      %v3701 = vunpack.c.0.s8 %v3700
      %v3702 = vlaneseq
      %v3703 = vshrl.u32 %v3702, 7
      %v3704 = vsub.s32 %v3701, %v3703
      %v3705 = vrot.slane %v2958, %v3704
      %v3707 = vunpack.c.l.s4 1983009808
      %v3708 = vunpack.c.0.s8 %v3707
      %v3709 = vlaneseq
      %v3710 = vshrl.u32 %v3709, 7
      %v3711 = vsub.s32 %v3708, %v3710
      %v3712 = vrot.slane %v3698, %v3711
      %v3713 = vcombine.high %v3705, %v3705
      %v3714 = vcombine.high %v2959, %v2959
      %v3716 = vunpack.c.l.s4 1983009808
      %v3717 = vunpack.c.0.s8 %v3716
      %v3718 = vlaneseq
      %v3719 = vshrl.u32 %v3718, 7
      %v3720 = vsub.s32 %v3717, %v3719
      %v3721 = vrot.slane %v2959, %v3720
      %v3723 = vunpack.c.l.s4 1983009808
      %v3724 = vunpack.c.0.s8 %v3723
      %v3725 = vlaneseq
      %v3726 = vshrl.u32 %v3725, 7
      %v3727 = vsub.s32 %v3724, %v3726
      %v3728 = vrot.slane %v3714, %v3727
      %v3729 = vcombine.high %v3721, %v3721
      %v3730 = vcombine.high %v3728, %v3728
      %v3763 = vadd.f32 %v3523, %v3580
      %v3764 = vadd.f32 %v3524, %v3579
      %v3765 = vadd.f32 %v3525, %v3581
      %v3766 = vadd.f32 %v3526, %v3589
      %v3767 = vadd.f32 %v3527, %v3596
      %v3768 = vadd.f32 %v3528, %v3597
      %v3769 = vadd.f32 %v3529, %v3605
      %v3770 = vadd.f32 %v3530, %v3613
      %v3771 = vadd.f32 %v3531, %v3614
      %v3772 = vadd.f32 %v3532, %v3622
      %v3773 = vadd.f32 %v3533, %v3630
      %v3774 = vadd.f32 %v3534, %v3629
      %v3775 = vadd.f32 %v3535, %v3638
      %v3776 = vadd.f32 %v3536, %v3646
      %v3777 = vadd.f32 %v3537, %v3645
      %v3778 = vadd.f32 %v3538, %v3647
      %v3779 = vadd.f32 %v3539, %v3663
      %v3780 = vadd.f32 %v3540, %v3662
      %v3781 = vadd.f32 %v3541, %v3664
      %v3782 = vadd.f32 %v3542, %v3672
      %v3783 = vadd.f32 %v3543, %v3679
      %v3784 = vadd.f32 %v3544, %v3680
      %v3785 = vadd.f32 %v3545, %v3688
      %v3786 = vadd.f32 %v3546, %v3696
      %v3787 = vadd.f32 %v3547, %v3697
      %v3788 = vadd.f32 %v3548, %v3705
      %v3789 = vadd.f32 %v3549, %v3713
      %v3790 = vadd.f32 %v3550, %v3712
      %v3791 = vadd.f32 %v3551, %v3721
      %v3792 = vadd.f32 %v3552, %v3729
      %v3793 = vadd.f32 %v3553, %v3728
      %v3794 = vadd.f32 %v3554, %v3730
      %v3795 = vld [vmem:[%s2] sm:$0x1]
      %v3797 = vlaneseq
      %v3798 = vshrl.u32 %v3797, 7
      %v3799 = vsub.s32 0, %v3798
      %v3800 = vrot.slane %v3795, %v3799
      %v3801 = vcombine.high %v3800, %v3800
      %v3803 = vunpack.c.l.s4 1983009808
      %v3804 = vunpack.c.0.s8 %v3803
      %v3805 = vlaneseq
      %v3806 = vshrl.u32 %v3805, 7
      %v3807 = vsub.s32 %v3804, %v3806
      %v3808 = vrot.slane %v3800, %v3807
      %v3810 = vunpack.c.l.s4 1983009808
      %v3811 = vunpack.c.0.s8 %v3810
      %v3812 = vlaneseq
      %v3813 = vshrl.u32 %v3812, 7
      %v3814 = vsub.s32 %v3811, %v3813
      %v3815 = vrot.slane %v3801, %v3814
      %v3816 = vcombine.high %v3808, %v3808
      %v3817 = vcombine.high %v3815, %v3815
      %v3822 = vadd.f32 %v3763, %v3808
      %v3823 = vadd.f32 %v3764, %v3816
      %v3824 = vadd.f32 %v3765, %v3815
      %v3825 = vadd.f32 %v3766, %v3817
      %v3826 = vadd.f32 %v3767, %v3808
      %v3827 = vadd.f32 %v3768, %v3816
      %v3828 = vadd.f32 %v3769, %v3815
      %v3829 = vadd.f32 %v3770, %v3817
      %v3830 = vadd.f32 %v3771, %v3808
      %v3831 = vadd.f32 %v3772, %v3816
      %v3832 = vadd.f32 %v3773, %v3815
      %v3833 = vadd.f32 %v3774, %v3817
      %v3834 = vadd.f32 %v3775, %v3808
      %v3835 = vadd.f32 %v3776, %v3816
      %v3836 = vadd.f32 %v3777, %v3815
      %v3837 = vadd.f32 %v3778, %v3817
      %v3838 = vadd.f32 %v3779, %v3808
      %v3839 = vadd.f32 %v3780, %v3816
      %v3840 = vadd.f32 %v3781, %v3815
      %v3841 = vadd.f32 %v3782, %v3817
      %v3842 = vadd.f32 %v3783, %v3808
      %v3843 = vadd.f32 %v3784, %v3816
      %v3844 = vadd.f32 %v3785, %v3815
      %v3845 = vadd.f32 %v3786, %v3817
      %v3846 = vadd.f32 %v3787, %v3808
      %v3847 = vadd.f32 %v3788, %v3816
      %v3848 = vadd.f32 %v3789, %v3815
      %v3849 = vadd.f32 %v3790, %v3817
      %v3850 = vadd.f32 %v3791, %v3808
      %v3851 = vadd.f32 %v3792, %v3816
      %v3852 = vadd.f32 %v3793, %v3815
      %v3853 = vadd.f32 %v3794, %v3817
      %v3854 = vld [vmem:[%s266] sm:$0xf]
      %v3855 = vld [vmem:[%s266 + $0x4] sm:$0xf]
      %v3856 = vld [vmem:[%s266 + $0x8] sm:$0xf]
      %v3857 = vld [vmem:[%s266 + $0xc] sm:$0xf]
      %v3858 = vld [vmem:[%s266 + $0x10] sm:$0xf]
      %v3859 = vld [vmem:[%s266 + $0x14] sm:$0xf]
      %v3860 = vld [vmem:[%s266 + $0x18] sm:$0xf]
      %v3861 = vld [vmem:[%s266 + $0x1c] sm:$0xf]
      %v3862 = vld [vmem:[%s4] sm:$0x3]
      %v3871 = vunpack.c.l.b16 %v3854
      %v3872 = vunpack.c.l.b16 %v3855
      %v3873 = vunpack.c.l.b16 %v3856
      %v3874 = vunpack.c.l.b16 %v3857
      %v3875 = vunpack.c.l.b16 %v3858
      %v3876 = vunpack.c.l.b16 %v3859
      %v3877 = vunpack.c.l.b16 %v3860
      %v3878 = vunpack.c.l.b16 %v3861
      %v3879 = vpack.c.b16 %v3872, %v3871
      %v3880 = vpack.c.b16 %v3874, %v3873
      %v3881 = vpack.c.b16 %v3876, %v3875
      %v3882 = vpack.c.b16 %v3878, %v3877
      %vm3883 = vcmask 31744
      %v3885 = vsel %vm3883, %v3879, 0
      %v3888 = vsel %vm3883, %v3880, 0
      %v3891 = vsel %vm3883, %v3881, 0
      %v3894 = vsel %vm3883, %v3882, 0
      %vm3896 = vcmask 1041408
      %v3898 = vsel %vm3896, %v3862, 0
      %3900 = vmatprep.subr.bf16.mxu0 0
      %3901 = vmatpush1.bf16.msra.mxu0 %v3898
      %3902 = vmatprep.subr.bf16.mxu0 0
      %3903 = vmatpush1.bf16.msra.mxu0 0
      %3904 = vmatprep.subr.bf16.mxu0 0
      %3905 = vmatpush1.bf16.msra.mxu0 0
      %3906 = vmatprep.subr.bf16.mxu0 0
      %3907 = vmatpush1.bf16.msra.mxu0 0
      %3908 = vmatprep.subr.bf16.mxu0 0
      %3909 = vmatpush1.bf16.msra.mxu0 0
      %3910 = vmatprep.subr.bf16.mxu0 0
      %3911 = vmatpush1.bf16.msra.mxu0 0
      %3912 = vmatprep.subr.bf16.mxu0 0
      %3913 = vmatpush1.bf16.msra.mxu0 0
      %3914 = vmatprep.subr.bf16.mxu0 0
      %3915 = vmatpush1.bf16.msra.mxu0 0
      %3916 = vmatprep.subr.bf16.mxu0 0
      %3917 = vmatpush1.bf16.msra.mxu0 0
      %3918 = vmatprep.subr.bf16.mxu0 0
      %3919 = vmatpush1.bf16.msra.mxu0 0
      %3920 = vmatprep.subr.bf16.mxu0 0
      %3921 = vmatpush1.bf16.msra.mxu0 0
      %3922 = vmatprep.subr.bf16.mxu0 0
      %3923 = vmatpush1.bf16.msra.mxu0 0
      %3924 = vmatprep.subr.bf16.mxu0 0
      %3925 = vmatpush1.bf16.msra.mxu0 0
      %3926 = vmatprep.subr.bf16.mxu0 0
      %3927 = vmatpush1.bf16.msra.mxu0 0
      %3928 = vmatprep.subr.bf16.mxu0 0
      %3929 = vmatpush1.bf16.msra.mxu0 0
      %3930 = vmatprep.subr.bf16.mxu0 0
      %3931 = vmatpush1.bf16.msra.mxu0 0
      %3932 = vmatprep.mubr.bf16.mxu0 0
      %3933 = vmatmul.mubr.bf16.gmra.mrb[0].mxu0 %v3885
      %v3934 = vpop.f32.mrb[0].mxu0
      %v3935 = vadd.f32 0.0, %v3934
      %v3936 = vpop.f32.mrb[0].mxu0
      %v3937 = vpop.f32.mrb[0].mxu0
      %v3938 = vadd.f32 0.0, %v3937
      %v3939 = vpop.f32.mrb[0].mxu0
      %3940 = vmatprep.mubr.bf16.mxu0 0
      %3941 = vmatmul.mubr.bf16.gmra.mrb[0].mxu0 %v3888
      %v3942 = vpop.f32.mrb[0].mxu0
      %v3943 = vadd.f32 0.0, %v3942
      %v3944 = vpop.f32.mrb[0].mxu0
      %v3945 = vpop.f32.mrb[0].mxu0
      %v3946 = vadd.f32 0.0, %v3945
      %v3947 = vpop.f32.mrb[0].mxu0
      %3948 = vmatprep.mubr.bf16.mxu0 0
      %3949 = vmatmul.mubr.bf16.gmra.mrb[0].mxu0 %v3891
      %v3950 = vpop.f32.mrb[0].mxu0
      %v3951 = vadd.f32 0.0, %v3950
      %v3952 = vpop.f32.mrb[0].mxu0
      %v3953 = vpop.f32.mrb[0].mxu0
      %v3954 = vadd.f32 0.0, %v3953
      %v3955 = vpop.f32.mrb[0].mxu0
      %3956 = vmatprep.mubr.bf16.mxu0 0
      %3957 = vmatmul.mubr.bf16.gmra.mrb[0].mxu0 %v3894
      %v3958 = vpop.f32.mrb[0].mxu0
      %v3959 = vadd.f32 0.0, %v3958
      %v3960 = vpop.f32.mrb[0].mxu0
      %v3961 = vpop.f32.mrb[0].mxu0
      %v3962 = vadd.f32 0.0, %v3961
      %v3963 = vpop.f32.mrb[0].mxu0
      %3964 = vdwg.mxu0
      %v3973 = vcombine.high %v3935, %v3935
      %v3975 = vunpack.c.l.s4 1983009808
      %v3976 = vunpack.c.0.s8 %v3975
      %v3977 = vlaneseq
      %v3978 = vshrl.u32 %v3977, 7
      %v3979 = vsub.s32 %v3976, %v3978
      %v3980 = vrot.slane %v3935, %v3979
      %v3982 = vunpack.c.l.s4 1983009808
      %v3983 = vunpack.c.0.s8 %v3982
      %v3984 = vlaneseq
      %v3985 = vshrl.u32 %v3984, 7
      %v3986 = vsub.s32 %v3983, %v3985
      %v3987 = vrot.slane %v3973, %v3986
      %v3988 = vcombine.high %v3980, %v3980
      %v3989 = vcombine.high %v3987, %v3987
      %v3990 = vcombine.high %v3938, %v3938
      %v3992 = vunpack.c.l.s4 1983009808
      %v3993 = vunpack.c.0.s8 %v3992
      %v3994 = vlaneseq
      %v3995 = vshrl.u32 %v3994, 7
      %v3996 = vsub.s32 %v3993, %v3995
      %v3997 = vrot.slane %v3938, %v3996
      %v3999 = vunpack.c.l.s4 1983009808
      %v4000 = vunpack.c.0.s8 %v3999
      %v4001 = vlaneseq
      %v4002 = vshrl.u32 %v4001, 7
      %v4003 = vsub.s32 %v4000, %v4002
      %v4004 = vrot.slane %v3990, %v4003
      %v4005 = vcombine.high %v3997, %v3997
      %v4006 = vcombine.high %v4004, %v4004
      %v4007 = vcombine.high %v3943, %v3943
      %v4009 = vunpack.c.l.s4 1983009808
      %v4010 = vunpack.c.0.s8 %v4009
      %v4011 = vlaneseq
      %v4012 = vshrl.u32 %v4011, 7
      %v4013 = vsub.s32 %v4010, %v4012
      %v4014 = vrot.slane %v3943, %v4013
      %v4016 = vunpack.c.l.s4 1983009808
      %v4017 = vunpack.c.0.s8 %v4016
      %v4018 = vlaneseq
      %v4019 = vshrl.u32 %v4018, 7
      %v4020 = vsub.s32 %v4017, %v4019
      %v4021 = vrot.slane %v4007, %v4020
      %v4022 = vcombine.high %v4014, %v4014
      %v4023 = vcombine.high %v4021, %v4021
      %v4024 = vcombine.high %v3946, %v3946
      %v4026 = vunpack.c.l.s4 1983009808
      %v4027 = vunpack.c.0.s8 %v4026
      %v4028 = vlaneseq
      %v4029 = vshrl.u32 %v4028, 7
      %v4030 = vsub.s32 %v4027, %v4029
      %v4031 = vrot.slane %v3946, %v4030
      %v4033 = vunpack.c.l.s4 1983009808
      %v4034 = vunpack.c.0.s8 %v4033
      %v4035 = vlaneseq
      %v4036 = vshrl.u32 %v4035, 7
      %v4037 = vsub.s32 %v4034, %v4036
      %v4038 = vrot.slane %v4024, %v4037
      %v4039 = vcombine.high %v4031, %v4031
      %v4040 = vcombine.high %v4038, %v4038
      %v4041 = vcombine.high %v3951, %v3951
      %v4043 = vunpack.c.l.s4 1983009808
      %v4044 = vunpack.c.0.s8 %v4043
      %v4045 = vlaneseq
      %v4046 = vshrl.u32 %v4045, 7
      %v4047 = vsub.s32 %v4044, %v4046
      %v4048 = vrot.slane %v3951, %v4047
      %v4050 = vunpack.c.l.s4 1983009808
      %v4051 = vunpack.c.0.s8 %v4050
      %v4052 = vlaneseq
      %v4053 = vshrl.u32 %v4052, 7
      %v4054 = vsub.s32 %v4051, %v4053
      %v4055 = vrot.slane %v4041, %v4054
      %v4056 = vcombine.high %v4048, %v4048
      %v4057 = vcombine.high %v4055, %v4055
      %v4058 = vcombine.high %v3954, %v3954
      %v4060 = vunpack.c.l.s4 1983009808
      %v4061 = vunpack.c.0.s8 %v4060
      %v4062 = vlaneseq
      %v4063 = vshrl.u32 %v4062, 7
      %v4064 = vsub.s32 %v4061, %v4063
      %v4065 = vrot.slane %v3954, %v4064
      %v4067 = vunpack.c.l.s4 1983009808
      %v4068 = vunpack.c.0.s8 %v4067
      %v4069 = vlaneseq
      %v4070 = vshrl.u32 %v4069, 7
      %v4071 = vsub.s32 %v4068, %v4070
      %v4072 = vrot.slane %v4058, %v4071
      %v4073 = vcombine.high %v4065, %v4065
      %v4074 = vcombine.high %v4072, %v4072
      %v4075 = vcombine.high %v3959, %v3959
      %v4077 = vunpack.c.l.s4 1983009808
      %v4078 = vunpack.c.0.s8 %v4077
      %v4079 = vlaneseq
      %v4080 = vshrl.u32 %v4079, 7
      %v4081 = vsub.s32 %v4078, %v4080
      %v4082 = vrot.slane %v3959, %v4081
      %v4084 = vunpack.c.l.s4 1983009808
      %v4085 = vunpack.c.0.s8 %v4084
      %v4086 = vlaneseq
      %v4087 = vshrl.u32 %v4086, 7
      %v4088 = vsub.s32 %v4085, %v4087
      %v4089 = vrot.slane %v4075, %v4088
      %v4090 = vcombine.high %v4082, %v4082
      %v4091 = vcombine.high %v4089, %v4089
      %v4092 = vcombine.high %v3962, %v3962
      %v4094 = vunpack.c.l.s4 1983009808
      %v4095 = vunpack.c.0.s8 %v4094
      %v4096 = vlaneseq
      %v4097 = vshrl.u32 %v4096, 7
      %v4098 = vsub.s32 %v4095, %v4097
      %v4099 = vrot.slane %v3962, %v4098
      %v4101 = vunpack.c.l.s4 1983009808
      %v4102 = vunpack.c.0.s8 %v4101
      %v4103 = vlaneseq
      %v4104 = vshrl.u32 %v4103, 7
      %v4105 = vsub.s32 %v4102, %v4104
      %v4106 = vrot.slane %v4092, %v4105
      %v4107 = vcombine.high %v4099, %v4099
      %v4108 = vcombine.high %v4106, %v4106
      %v4141 = vadd.f32 %v3822, %v3980
      %v4142 = vadd.f32 %v3823, %v3988
      %v4143 = vadd.f32 %v3824, %v3987
      %v4144 = vadd.f32 %v3825, %v3989
      %v4145 = vadd.f32 %v3826, %v3997
      %v4146 = vadd.f32 %v3827, %v4005
      %v4147 = vadd.f32 %v3828, %v4004
      %v4148 = vadd.f32 %v3829, %v4006
      %v4149 = vadd.f32 %v3830, %v4014
      %v4150 = vadd.f32 %v3831, %v4022
      %v4151 = vadd.f32 %v3832, %v4021
      %v4152 = vadd.f32 %v3833, %v4023
      %v4153 = vadd.f32 %v3834, %v4031
      %v4154 = vadd.f32 %v3835, %v4039
      %v4155 = vadd.f32 %v3836, %v4038
      %v4156 = vadd.f32 %v3837, %v4040
      %v4157 = vadd.f32 %v3838, %v4048
      %v4158 = vadd.f32 %v3839, %v4056
      %v4159 = vadd.f32 %v3840, %v4055
      %v4160 = vadd.f32 %v3841, %v4057
      %v4161 = vadd.f32 %v3842, %v4065
      %v4162 = vadd.f32 %v3843, %v4073
      %v4163 = vadd.f32 %v3844, %v4072
      %v4164 = vadd.f32 %v3845, %v4074
      %v4165 = vadd.f32 %v3846, %v4082
      %v4166 = vadd.f32 %v3847, %v4090
      %v4167 = vadd.f32 %v3848, %v4089
      %v4168 = vadd.f32 %v3849, %v4091
      %v4169 = vadd.f32 %v3850, %v4099
      %v4170 = vadd.f32 %v3851, %v4107
      %v4171 = vadd.f32 %v3852, %v4106
      %v4172 = vadd.f32 %v3853, %v4108
      %v4173 = vld [vmem:[%s5] sm:$0x1]
      %v4175 = vlaneseq
      %v4176 = vshrl.u32 %v4175, 7
      %v4177 = vsub.s32 0, %v4176
      %v4178 = vrot.slane %v4173, %v4177
      %v4179 = vcombine.high %v4178, %v4178
      %v4181 = vunpack.c.l.s4 1983009808
      %v4182 = vunpack.c.0.s8 %v4181
      %v4183 = vlaneseq
      %v4184 = vshrl.u32 %v4183, 7
      %v4185 = vsub.s32 %v4182, %v4184
      %v4186 = vrot.slane %v4178, %v4185
      %v4188 = vunpack.c.l.s4 1983009808
      %v4189 = vunpack.c.0.s8 %v4188
      %v4190 = vlaneseq
      %v4191 = vshrl.u32 %v4190, 7
      %v4192 = vsub.s32 %v4189, %v4191
      %v4193 = vrot.slane %v4179, %v4192
      %v4194 = vcombine.high %v4186, %v4186
      %v4195 = vcombine.high %v4193, %v4193
      %v4200 = vadd.f32 %v4141, %v4186
      %v4201 = vadd.f32 %v4142, %v4194
      %v4202 = vadd.f32 %v4143, %v4193
      %v4203 = vadd.f32 %v4144, %v4195
      %v4204 = vadd.f32 %v4145, %v4186
      %v4205 = vadd.f32 %v4146, %v4194
      %v4206 = vadd.f32 %v4147, %v4193
      %v4207 = vadd.f32 %v4148, %v4195
      %v4208 = vadd.f32 %v4149, %v4186
      %v4209 = vadd.f32 %v4150, %v4194
      %v4210 = vadd.f32 %v4151, %v4193
      %v4211 = vadd.f32 %v4152, %v4195
      %v4212 = vadd.f32 %v4153, %v4186
      %v4213 = vadd.f32 %v4154, %v4194
      %v4214 = vadd.f32 %v4155, %v4193
      %v4215 = vadd.f32 %v4156, %v4195
      %v4216 = vadd.f32 %v4157, %v4186
      %v4217 = vadd.f32 %v4158, %v4194
      %v4218 = vadd.f32 %v4159, %v4193
      %v4219 = vadd.f32 %v4160, %v4195
      %v4220 = vadd.f32 %v4161, %v4186
      %v4221 = vadd.f32 %v4162, %v4194
      %v4222 = vadd.f32 %v4163, %v4193
      %v4223 = vadd.f32 %v4164, %v4195
      %v4224 = vadd.f32 %v4165, %v4186
      %v4225 = vadd.f32 %v4166, %v4194
      %v4226 = vadd.f32 %v4167, %v4193
      %v4227 = vadd.f32 %v4168, %v4195
      %v4228 = vadd.f32 %v4169, %v4186
      %v4229 = vadd.f32 %v4170, %v4194
      %v4230 = vadd.f32 %v4171, %v4193
      %v4231 = vadd.f32 %v4172, %v4195
      %v4232 = vmax.f32 %v4200, 0.0
      %v4233 = vmax.f32 %v4201, 0.0
      %v4234 = vmax.f32 %v4202, 0.0
      %v4235 = vmax.f32 %v4203, 0.0
      %v4236 = vmax.f32 %v4204, 0.0
      %v4237 = vmax.f32 %v4205, 0.0
      %v4238 = vmax.f32 %v4206, 0.0
      %v4239 = vmax.f32 %v4207, 0.0
      %v4240 = vmax.f32 %v4208, 0.0
      %v4241 = vmax.f32 %v4209, 0.0
      %v4242 = vmax.f32 %v4210, 0.0
      %v4243 = vmax.f32 %v4211, 0.0
      %v4244 = vmax.f32 %v4212, 0.0
      %v4245 = vmax.f32 %v4213, 0.0
      %v4246 = vmax.f32 %v4214, 0.0
      %v4247 = vmax.f32 %v4215, 0.0
      %v4248 = vmax.f32 %v4216, 0.0
      %v4249 = vmax.f32 %v4217, 0.0
      %v4250 = vmax.f32 %v4218, 0.0
      %v4251 = vmax.f32 %v4219, 0.0
      %v4252 = vmax.f32 %v4220, 0.0
      %v4253 = vmax.f32 %v4221, 0.0
      %v4254 = vmax.f32 %v4222, 0.0
      %v4255 = vmax.f32 %v4223, 0.0
      %v4256 = vmax.f32 %v4224, 0.0
      %v4257 = vmax.f32 %v4225, 0.0
      %v4258 = vmax.f32 %v4226, 0.0
      %v4259 = vmax.f32 %v4227, 0.0
      %v4260 = vmax.f32 %v4228, 0.0
      %v4261 = vmax.f32 %v4229, 0.0
      %v4262 = vmax.f32 %v4230, 0.0
      %v4263 = vmax.f32 %v4231, 0.0
      %v4296 = vcombine.low %v4232, %v4233
      %v4297 = vcombine.low %v4234, %v4235
      %v4299 = vunpack.c.l.s4 1983009808
      %v4300 = vunpack.c.0.s8 %v4299
      %v4301 = vlaneseq
      %v4302 = vshrl.u32 %v4301, 7
      %v4303 = vsub.s32 %v4300, %v4302
      %v4304 = vrot.slane %v4296, %v4303
      %v4306 = vunpack.c.l.s4 1983009808
      %v4307 = vunpack.c.0.s8 %v4306
      %v4308 = vlaneseq
      %v4309 = vshrl.u32 %v4308, 7
      %v4310 = vsub.s32 %v4307, %v4309
      %v4311 = vrot.slane %v4297, %v4310
      %v4312 = vcombine.low %v4304, %v4311
      %v4313 = vcombine.low %v4236, %v4237
      %v4314 = vcombine.low %v4238, %v4239
      %v4316 = vunpack.c.l.s4 1983009808
      %v4317 = vunpack.c.0.s8 %v4316
      %v4318 = vlaneseq
      %v4319 = vshrl.u32 %v4318, 7
      %v4320 = vsub.s32 %v4317, %v4319
      %v4321 = vrot.slane %v4313, %v4320
      %v4323 = vunpack.c.l.s4 1983009808
      %v4324 = vunpack.c.0.s8 %v4323
      %v4325 = vlaneseq
      %v4326 = vshrl.u32 %v4325, 7
      %v4327 = vsub.s32 %v4324, %v4326
      %v4328 = vrot.slane %v4314, %v4327
      %v4329 = vcombine.low %v4321, %v4328
      %v4330 = vcombine.low %v4240, %v4241
      %v4331 = vcombine.low %v4242, %v4243
      %v4333 = vunpack.c.l.s4 1983009808
      %v4334 = vunpack.c.0.s8 %v4333
      %v4335 = vlaneseq
      %v4336 = vshrl.u32 %v4335, 7
      %v4337 = vsub.s32 %v4334, %v4336
      %v4338 = vrot.slane %v4330, %v4337
      %v4340 = vunpack.c.l.s4 1983009808
      %v4341 = vunpack.c.0.s8 %v4340
      %v4342 = vlaneseq
      %v4343 = vshrl.u32 %v4342, 7
      %v4344 = vsub.s32 %v4341, %v4343
      %v4345 = vrot.slane %v4331, %v4344
      %v4346 = vcombine.low %v4338, %v4345
      %v4347 = vcombine.low %v4244, %v4245
      %v4348 = vcombine.low %v4246, %v4247
      %v4350 = vunpack.c.l.s4 1983009808
      %v4351 = vunpack.c.0.s8 %v4350
      %v4352 = vlaneseq
      %v4353 = vshrl.u32 %v4352, 7
      %v4354 = vsub.s32 %v4351, %v4353
      %v4355 = vrot.slane %v4347, %v4354
      %v4357 = vunpack.c.l.s4 1983009808
      %v4358 = vunpack.c.0.s8 %v4357
      %v4359 = vlaneseq
      %v4360 = vshrl.u32 %v4359, 7
      %v4361 = vsub.s32 %v4358, %v4360
      %v4362 = vrot.slane %v4348, %v4361
      %v4363 = vcombine.low %v4355, %v4362
      %v4364 = vcombine.low %v4248, %v4249
      %v4365 = vcombine.low %v4250, %v4251
      %v4367 = vunpack.c.l.s4 1983009808
      %v4368 = vunpack.c.0.s8 %v4367
      %v4369 = vlaneseq
      %v4370 = vshrl.u32 %v4369, 7
      %v4371 = vsub.s32 %v4368, %v4370
      %v4372 = vrot.slane %v4364, %v4371
      %v4374 = vunpack.c.l.s4 1983009808
      %v4375 = vunpack.c.0.s8 %v4374
      %v4376 = vlaneseq
      %v4377 = vshrl.u32 %v4376, 7
      %v4378 = vsub.s32 %v4375, %v4377
      %v4379 = vrot.slane %v4365, %v4378
      %v4380 = vcombine.low %v4372, %v4379
      %v4381 = vcombine.low %v4252, %v4253
      %v4382 = vcombine.low %v4254, %v4255
      %v4384 = vunpack.c.l.s4 1983009808
      %v4385 = vunpack.c.0.s8 %v4384
      %v4386 = vlaneseq
      %v4387 = vshrl.u32 %v4386, 7
      %v4388 = vsub.s32 %v4385, %v4387
      %v4389 = vrot.slane %v4381, %v4388
      %v4391 = vunpack.c.l.s4 1983009808
      %v4392 = vunpack.c.0.s8 %v4391
      %v4393 = vlaneseq
      %v4394 = vshrl.u32 %v4393, 7
      %v4395 = vsub.s32 %v4392, %v4394
      %v4396 = vrot.slane %v4382, %v4395
      %v4397 = vcombine.low %v4389, %v4396
      %v4398 = vcombine.low %v4256, %v4257
      %v4399 = vcombine.low %v4258, %v4259
      %v4401 = vunpack.c.l.s4 1983009808
      %v4402 = vunpack.c.0.s8 %v4401
      %v4403 = vlaneseq
      %v4404 = vshrl.u32 %v4403, 7
      %v4405 = vsub.s32 %v4402, %v4404
      %v4406 = vrot.slane %v4398, %v4405
      %v4408 = vunpack.c.l.s4 1983009808
      %v4409 = vunpack.c.0.s8 %v4408
      %v4410 = vlaneseq
      %v4411 = vshrl.u32 %v4410, 7
      %v4412 = vsub.s32 %v4409, %v4411
      %v4413 = vrot.slane %v4399, %v4412
      %v4414 = vcombine.low %v4406, %v4413
      %v4415 = vcombine.low %v4260, %v4261
      %v4416 = vcombine.low %v4262, %v4263
      %v4418 = vunpack.c.l.s4 1983009808
      %v4419 = vunpack.c.0.s8 %v4418
      %v4420 = vlaneseq
      %v4421 = vshrl.u32 %v4420, 7
      %v4422 = vsub.s32 %v4419, %v4421
      %v4423 = vrot.slane %v4415, %v4422
      %v4425 = vunpack.c.l.s4 1983009808
      %v4426 = vunpack.c.0.s8 %v4425
      %v4427 = vlaneseq
      %v4428 = vshrl.u32 %v4427, 7
      %v4429 = vsub.s32 %v4426, %v4428
      %v4430 = vrot.slane %v4416, %v4429
      %v4431 = vcombine.low %v4423, %v4430
      %4440 = vst.msk [vmem:[%s271] sm:$0xff] %vm1362, %v4312
      %4441 = vst.msk [vmem:[%s271 + $0x8] sm:$0xff] %vm1362, %v4329
      %4442 = vst.msk [vmem:[%s271 + $0x10] sm:$0xff] %vm1362, %v4346
      %4443 = vst.msk [vmem:[%s271 + $0x18] sm:$0xff] %vm1362, %v4363
      %4444 = vst.msk [vmem:[%s271 + $0x20] sm:$0xff] %vm1362, %v4380
      %4445 = vst.msk [vmem:[%s271 + $0x28] sm:$0xff] %vm1362, %v4397
      %4446 = vst.msk [vmem:[%s271 + $0x30] sm:$0xff] %vm1362, %v4414
      %4447 = vst.msk [vmem:[%s271 + $0x38] sm:$0xff] %vm1362, %v4431
      %p4448 = scmp.lt.s32.totalorder %s17, 1
      %s4449 = scalar_select %p4448, %s17, 1
      %s4450 = smul.addr %s4449, 8
      %s4451 = smul.addr %s4450, 8
      %s4452 = scalar_lea.vmem %s6, %s4451
      // Predicated region
      $region45: #{basic_block_forward.3} parent=43 // pred_check
        %p4453 = pneg %p171
      $region46: #{basic_block_forward.3} parent=43 // pred_check_branch
        %4455 = sbr.rel (%p4453) target = $region48
      $region47: #{basic_block_forward.3} parent=43 // pred_region
        _
      $region48: #{basic_block_forward.3} parent=43 // pred_fallthru
        _
    $region44: #{basic_block_forward.3} parent=5 // pred_fallthru
      _
    %p4456 = scmp.le.s32.totalorder 2, %s12
    // Predicated region
    $region49: #{basic_block_forward.3} parent=5 // pred_check
      %p4457 = pneg %p4456
    $region50: #{basic_block_forward.3} parent=5 // pred_check_branch
      %4459 = sbr.rel (%p4457) target = $region52
    $region51: #{basic_block_forward.3} parent=5 // pred_region
      %s4460 = ssub.s32 %s12, 2
      // Predicated region
      $region53: #{basic_block_forward.3} parent=51 // pred_check
        %p4461 = pneg %p177
      $region54: #{basic_block_forward.3} parent=51 // pred_check_branch
        %4463 = sbr.rel (%p4461) target = $region56
      $region55: #{basic_block_forward.3} parent=51 // pred_region
        %p4464 = scmp.lt.s32.totalorder %s18, 1
        %s4465 = scalar_select %p4464, %s18, 1
        %s4466 = smul.addr %s4465, 8
        %s4467 = smul.addr %s4466, 8
        %s4468 = scalar_lea.vmem %s6, %s4467
      $region56: #{basic_block_forward.3} parent=51 // pred_fallthru
        _
    $region52: #{basic_block_forward.3} parent=5 // pred_fallthru
      _
  $region6: #{basic_block_forward.3} parent=0 // loop_footer
    %s16 = sadd.s32 1, %s12
  $region7: #{basic_block_forward.3} parent=0 // loop_footer_branch
    %11 = sbr.rel target = $region3
  $region8: #{basic_block_forward.3} parent=0 // loop_exit
    _

</llo_original>
